<compile_context>
chip_gen: v7x
topology: tpu7x:2x2x1
jax: 0.10.0
libtpu: 0.0.40
codegen_flags: <defaults>
</compile_context>

<pallas_src>
import jax
import jax.numpy as jnp
from jax import lax
from jax.experimental import pallas as pl
from jax.experimental.pallas import tpu as pltpu

CHUNK = 64                              # scan block height (power of two)
assert CHUNK & (CHUNK - 1) == 0
_SCAN_STEPS = tuple(1 << i for i in range(CHUNK.bit_length() - 1))  # 1..CHUNK/2


def _round_up(x, m):
    return ((x + m - 1) // m) * m


def _vmem_limit_bytes():
    cap = 64 * 1024 * 1024              # conservative default (v7x per-core)
    try:
        info = pltpu.get_tpu_info()
        c = int(getattr(info, "vmem_capacity_bytes", 0) or 0)
        if c > 0:
            cap = c
    except Exception:
        pass
    # leave headroom for compiler-internal scratch
    return int(max(cap - 16 * 1024 * 1024, 32 * 1024 * 1024))


_VMEM_LIMIT = _vmem_limit_bytes()


# ----------------------------------------------------------------------------
# Kernel A: "exp" branch = 1x1 conv -> SiLU -> 1x1 conv   (pure MXU path)
# ----------------------------------------------------------------------------
def _exp_kernel(x_ref, a_ref, w1x_ref, w1a_ref, b1_ref, w2_ref, b2_ref, o_ref):
    h = (jnp.dot(x_ref[...], w1x_ref[...], preferred_element_type=jnp.float32)
         + jnp.dot(a_ref[...], w1a_ref[...], preferred_element_type=jnp.float32)
         + b1_ref[...])
    h = h * jax.nn.sigmoid(h)                                   # SiLU
    o_ref[...] = (jnp.dot(h.astype(jnp.bfloat16), w2_ref[...],
                          preferred_element_type=jnp.float32)
                  + b2_ref[...]).astype(o_ref.dtype)


def exp_branch(x, a, w1x, w1a, b1, w2, b2, *, target_tile=1024):
    """x: (N, h_dim) bf16, a: (N, a_dim) bf16 -> (N, 2H) bf16."""
    n = x.shape[0]
    h2 = w1x.shape[1]
    tn = min(target_tile, _round_up(n, CHUNK))
    n_pad = _round_up(n, tn)
    if n_pad != n:                       # never silently drop trailing rows
        x = jnp.pad(x, ((0, n_pad - n), (0, 0)))
        a = jnp.pad(a, ((0, n_pad - n), (0, 0)))
    y = pl.pallas_call(
        _exp_kernel,
        out_shape=jax.ShapeDtypeStruct((n_pad, h2), jnp.bfloat16),
        grid=(n_pad // tn,),
        in_specs=[
            pl.BlockSpec((tn, x.shape[1]), lambda i: (i, 0)),
            pl.BlockSpec((tn, a.shape[1]), lambda i: (i, 0)),
            pl.BlockSpec(w1x.shape, lambda i: (0, 0)),
            pl.BlockSpec(w1a.shape, lambda i: (0, 0)),
            pl.BlockSpec(b1.shape, lambda i: (0, 0)),
            pl.BlockSpec(w2.shape, lambda i: (0, 0)),
            pl.BlockSpec(b2.shape, lambda i: (0, 0)),
        ],
        out_specs=pl.BlockSpec((tn, h2), lambda i: (i, 0)),
        compiler_params=pltpu.CompilerParams(
            dimension_semantics=("parallel",),
            vmem_limit_bytes=_VMEM_LIMIT),
    )(x, a, w1x, w1a, b1, w2, b2)
    return y[:n] if n_pad != n else y


# ----------------------------------------------------------------------------
# Kernel B (fused): per batch element
#   for u in (h, g): depthwise conv3 -> SiLU -> 1x1 conv (H->2H, fused) ->
#                    bidirectional minGRU (hoisted blocked parallel scan)
#   out = (gru(h)*silu(g) + gru(g)*silu(h)) @ W_out + b_out
# ----------------------------------------------------------------------------
def gru_gate_out(y, dw, db, whz, bhz, wo, bo, *, l_true):
    """y: (B, L_pad, 2H) bf16 exp output -> (B, L_pad, c_out) f32."""
    b_sz, l_pad, h2 = y.shape
    hh = h2 // 2
    c_out = wo.shape[1]
    assert l_pad % CHUNK == 0
    n_chunks = l_pad // CHUNK

    def kernel(y_ref, dw_ref, db_ref, whz_ref, bhz_ref, wo_ref, bo_ref,
               o_ref, af_s, bf_s, ab_s, bb_s, comb_s):
        f32, bf16 = jnp.float32, jnp.bfloat16

        # -- loop-invariant loads / index helpers (hoisted out of the r loop) --
        row_l = lax.broadcasted_iota(jnp.int32, (l_pad, hh), 0)
        row_mod = jnp.bitwise_and(row_l, CHUNK - 1)    # index within a chunk
        dw0 = dw_ref[0:1, :]
        dw1 = dw_ref[1:2, :]
        dw2 = dw_ref[2:3, :]
        db_v = db_ref[...]
        whz_v = whz_ref[...]
        bhz_v = bhz_ref[...]
        valid = row_l < l_true

        for r in range(2):                  # r=0 -> h stream, r=1 -> g stream
            lo, hi = r * hh, (r + 1) * hh
            olo, ohi = (1 - r) * hh, (2 - r) * hh

            u = y_ref[:, lo:hi].astype(f32)                       # (L_pad, H)

            # depthwise Conv1d(H, H, 3, padding=1, groups=H) along time axis
            u_prev = jnp.where(row_l == 0, 0.0, pltpu.roll(u, shift=1, axis=0))
            u_next = jnp.where(row_l == l_true - 1, 0.0,
                               pltpu.roll(u, shift=l_pad - 1, axis=0))
            c = u_prev * dw0 + u * dw1 + u_next * dw2 + db_v
            c = c * jax.nn.sigmoid(c)                             # SiLU

            # fused 1x1 conv H -> 2H on the MXU: columns = (h_candidate | z)
            hz = (jnp.dot(c.astype(bf16), whz_v,
                          preferred_element_type=f32) + bhz_v)
            hcand = hz[:, :hh]
            z = jax.nn.sigmoid(hz[:, hh:])
            a_all = 1.0 - z                  # h_t = a_t * h_{t-1} + b_t
            b_all = z * hcand
            if l_pad != l_true:
                # Padded tail is ABSORBING (a=0, b=0): forward results are 0 on
                # pad rows and the backward scan correctly starts from 0 at
                # t = l_true - 1.  Do NOT change this to identity (a=1, b=0).
                a_all = jnp.where(valid, a_all, 0.0)
                b_all = jnp.where(valid, b_all, 0.0)

            # ---- within-chunk prefixes, hoisted out of the serial loops ----
            ac, bc = a_all, b_all
            for d in _SCAN_STEPS:
                ok = row_mod >= d
                a_p = jnp.where(ok, pltpu.roll(ac, shift=d, axis=0), 1.0)
                b_p = jnp.where(ok, pltpu.roll(bc, shift=d, axis=0), 0.0)
                bc = bc + ac * b_p
                ac = ac * a_p
            af_s[...] = ac
            bf_s[...] = bc

            ac, bc = a_all, b_all
            for d in _SCAN_STEPS:
                ok = row_mod < CHUNK - d
                a_n = jnp.where(ok, pltpu.roll(ac, shift=l_pad - d, axis=0), 1.0)
                b_n = jnp.where(ok, pltpu.roll(bc, shift=l_pad - d, axis=0), 0.0)
                bc = bc + ac * b_n
                ac = ac * a_n
            ab_s[...] = ac
            bb_s[...] = bc

            # ---- forward serial carry: FMA + store + row extract only ----
            def fwd_chunk(ci, carry):
                s = pl.multiple_of(ci * CHUNK, CHUNK)
                hf = af_s[pl.ds(s, CHUNK), :] * carry + bf_s[pl.ds(s, CHUNK), :]
                af_s[pl.ds(s, CHUNK), :] = hf       # af_s now holds fwd gru(u)
                return hf[CHUNK - 1:CHUNK, :]

            lax.fori_loop(0, n_chunks, fwd_chunk, jnp.zeros((1, hh), f32))

            # ---- backward serial carry + gating combine (off the carry path)
            def bwd_chunk(ci, carry):
                s = pl.multiple_of((n_chunks - 1 - ci) * CHUNK, CHUNK)
                hb = ab_s[pl.ds(s, CHUNK), :] * carry + bb_s[pl.ds(s, CHUNK), :]
                other = y_ref[pl.ds(s, CHUNK), olo:ohi].astype(f32)
                contrib = ((af_s[pl.ds(s, CHUNK), :] + hb)
                           * (other * jax.nn.sigmoid(other)))
                if r == 0:
                    comb_s[pl.ds(s, CHUNK), :] = contrib
                else:
                    comb_s[pl.ds(s, CHUNK), :] = (comb_s[pl.ds(s, CHUNK), :]
                                                  + contrib)
                return hb[0:1, :]

            lax.fori_loop(0, n_chunks, bwd_chunk, jnp.zeros((1, hh), f32))

        # ---- output 1x1 conv, single lane-dense store ----
        o_ref[...] = (jnp.dot(comb_s[...].astype(bf16), wo_ref[...],
                              preferred_element_type=f32)
                      + bo_ref[...]).astype(o_ref.dtype)

    return pl.pallas_call(
        kernel,
        out_shape=jax.ShapeDtypeStruct((b_sz, l_pad, c_out), jnp.float32),
        grid=(b_sz,),
        in_specs=[
            pl.BlockSpec((None, l_pad, h2), lambda b: (b, 0, 0)),
            pl.BlockSpec(dw.shape, lambda b: (0, 0)),
            pl.BlockSpec(db.shape, lambda b: (0, 0)),
            pl.BlockSpec(whz.shape, lambda b: (0, 0)),
            pl.BlockSpec(bhz.shape, lambda b: (0, 0)),
            pl.BlockSpec(wo.shape, lambda b: (0, 0)),
            pl.BlockSpec(bo.shape, lambda b: (0, 0)),
        ],
        out_specs=pl.BlockSpec((None, l_pad, c_out), lambda b: (b, 0, 0)),
        scratch_shapes=[pltpu.VMEM((l_pad, hh), jnp.float32)
                        for _ in range(5)],
        compiler_params=pltpu.CompilerParams(
            dimension_semantics=("parallel",),
            vmem_limit_bytes=_VMEM_LIMIT),
    )(y, dw, db, whz, bhz, wo, bo)


# ----------------------------------------------------------------------------
# Parameter container + full forward
# ----------------------------------------------------------------------------
def init_params(key, h_dim, a_dim, expand):
    H = h_dim * expand
    ks = jax.random.split(key, 11)

    def w(k, shape, fan_in):
        return jax.random.normal(k, shape, jnp.float32) / jnp.sqrt(fan_in)

    def b(k, shape):
        return 0.01 * jax.random.normal(k, shape, jnp.float32)

    return dict(
        # exp branch: Conv1d(h_dim+a_dim, 2H, 1) -> SiLU -> Conv1d(2H, 2H, 1)
        w1x=w(ks[0], (h_dim, 2 * H), h_dim + a_dim),
        w1a=w(ks[1], (a_dim, 2 * H), h_dim + a_dim),
        b1=b(ks[2], (1, 2 * H)),
        w2=w(ks[3], (2 * H, 2 * H), 2 * H),
        b2=b(ks[4], (1, 2 * H)),
        # gru branch: depthwise Conv1d(H,H,3,groups=H) -> SiLU ->
        #             Conv1d(H, 2H, 1) fused (h_candidate | z) -> minGRU
        dw=w(ks[5], (3, H), 3.0),
        db=b(ks[6], (1, H)),
        whz=w(ks[7], (H, 2 * H), H),
        bhz=b(ks[8], (1, 2 * H)),
        # out: Conv1d(H, 2*h_dim, 1)
        wo=w(ks[9], (H, 2 * h_dim), H),
        bo=b(ks[10], (1, 2 * h_dim)),
    )


@jax.jit
def gated_layer_forward(params, X, A):
    """X: (B, h_dim, L), A: (B, a_dim, L) -> (B, 2*h_dim, L)   (PyTorch NCL)."""
    hh = params["whz"].shape[0]
    b_sz, h_dim, l_true = X.shape
    a_dim = A.shape[1]
    bf16 = jnp.bfloat16

    # NCL -> NLC (channels on the lane axis); bf16 cast folded into this pass;
    # pad time to a scan-chunk multiple.
    x = jnp.transpose(X, (0, 2, 1)).astype(bf16)
    a = jnp.transpose(A, (0, 2, 1)).astype(bf16)
    l_pad = _round_up(l_true, CHUNK)
    if l_pad != l_true:
        x = jnp.pad(x, ((0, 0), (0, l_pad - l_true), (0, 0)))
        a = jnp.pad(a, ((0, 0), (0, l_pad - l_true), (0, 0)))

    # exp branch (batch*length rows; bf16 in / bf16 out halves HBM traffic)
    y = exp_branch(x.reshape(b_sz * l_pad, h_dim),
                   a.reshape(b_sz * l_pad, a_dim),
                   params["w1x"].astype(bf16), params["w1a"].astype(bf16),
                   params["b1"],
                   params["w2"].astype(bf16), params["b2"])
    y = y.reshape(b_sz, l_pad, 2 * hh)

    # pad the output projection to lane-dense (multiple of 128) channels
    c_out = params["wo"].shape[1]
    c_pad = _round_up(c_out, 128)
    wo = params["wo"].astype(bf16)
    bo = params["bo"]
    if c_pad != c_out:
        wo = jnp.pad(wo, ((0, 0), (0, c_pad - c_out)))
        bo = jnp.pad(bo, ((0, 0), (0, c_pad - c_out)))

    # fused gru + gating + output projection
    out = gru_gate_out(y, params["dw"], params["db"],
                       params["whz"].astype(bf16), params["bhz"],
                       wo, bo, l_true=l_true)
    out = out[:, :l_true, :c_out]
    return jnp.transpose(out, (0, 2, 1))            # back to NCL


# ----------------------------------------------------------------------------
# Pure-JAX reference (same bf16 cast points) for a correctness self-check
# ----------------------------------------------------------------------------
def reference_forward(params, X, A):
    bf16, f32 = jnp.bfloat16, jnp.float32
    H = params["whz"].shape[0]
    x = jnp.transpose(X, (0, 2, 1)).astype(bf16)
    a = jnp.transpose(A, (0, 2, 1)).astype(bf16)
    h1 = (jnp.dot(x, params["w1x"].astype(bf16), preferred_element_type=f32)
          + jnp.dot(a, params["w1a"].astype(bf16), preferred_element_type=f32)
          + params["b1"])
    h1 = h1 * jax.nn.sigmoid(h1)
    y = (jnp.dot(h1.astype(bf16), params["w2"].astype(bf16),
                 preferred_element_type=f32) + params["b2"]).astype(bf16)
    h = y[..., :H].astype(f32)
    g = y[..., H:].astype(f32)

    def gru(u):
        u_prev = jnp.pad(u, ((0, 0), (1, 0), (0, 0)))[:, :-1]
        u_next = jnp.pad(u, ((0, 0), (0, 1), (0, 0)))[:, 1:]
        c = (u_prev * params["dw"][0] + u * params["dw"][1]
             + u_next * params["dw"][2] + params["db"])
        c = c * jax.nn.sigmoid(c)
        hz = jnp.dot(c.astype(bf16), params["whz"].astype(bf16),
                     preferred_element_type=f32) + params["bhz"]
        hc, z = hz[..., :H], jax.nn.sigmoid(hz[..., H:])
        av, bv = 1.0 - z, z * hc

        def step(hprev, ab):
            ht = ab[0] * hprev + ab[1]
            return ht, ht

        init = jnp.zeros((u.shape[0], H), f32)
        av_t, bv_t = jnp.swapaxes(av, 0, 1), jnp.swapaxes(bv, 0, 1)
        _, fwd = lax.scan(step, init, (av_t, bv_t))
        _, bwd = lax.scan(step, init, (av_t[::-1], bv_t[::-1]))
        return jnp.swapaxes(fwd, 0, 1) + jnp.swapaxes(bwd[::-1], 0, 1)

    gh, gg = gru(h), gru(g)
    comb = gh * (g * jax.nn.sigmoid(g)) + gg * (h * jax.nn.sigmoid(h))
    out = jnp.dot(comb.astype(bf16), params["wo"].astype(bf16),
                  preferred_element_type=f32) + params["bo"]
    return jnp.transpose(out, (0, 2, 1))


if __name__ == "__main__":
    B, h_dim, a_dim, L, expand = 2, 8, 4, 16, 2

    key = jax.random.PRNGKey(0)
    kx, ka, kp = jax.random.split(key, 3)
    X = jax.random.normal(kx, (B, h_dim, L), jnp.float32)
    A = jax.random.normal(ka, (B, a_dim, L), jnp.float32)
    params = init_params(kp, h_dim, a_dim, expand)

    out = gated_layer_forward(params, X, A)
    out = jax.block_until_ready(out)

    assert out.shape == (B, 2 * h_dim, L), out.shape
    assert bool(jnp.all(jnp.isfinite(out)))

    ref = reference_forward(params, X, A)
    assert bool(jnp.allclose(out, ref, atol=2e-2, rtol=2e-2)), (
        float(jnp.max(jnp.abs(out - ref))))
    print("KERNEL_OK")
</pallas_src>

<mosaic_0001>
module attributes {stable_mosaic.version = 11 : i64} {
  func.func @_exp_kernel(%arg0: i32, %arg1: memref<128x8xbf16, #tpu.memory_space<vmem>>, %arg2: memref<128x4xbf16, #tpu.memory_space<vmem>>, %arg3: memref<8x32xbf16, #tpu.memory_space<vmem>>, %arg4: memref<4x32xbf16, #tpu.memory_space<vmem>>, %arg5: memref<1x32xf32, #tpu.memory_space<vmem>>, %arg6: memref<32x32xbf16, #tpu.memory_space<vmem>>, %arg7: memref<1x32xf32, #tpu.memory_space<vmem>>, %arg8: memref<128x32xbf16, #tpu.memory_space<vmem>>) attributes {dimension_semantics = [#tpu.dimension_semantics<parallel>], iteration_bounds = array<i64: 1>, scalar_prefetch = 0 : i64, scratch_operands = 0 : i64, tpu.core_type = #tpu.core_type<tc>, window_params = [{transform_indices = @transform_0, window_bounds = array<i64: 128, 8>}, {transform_indices = @transform_1, window_bounds = array<i64: 128, 4>}, {pipeline_mode = #tpu.pipeline_mode<synchronous>, transform_indices = @transform_2, window_bounds = array<i64: 8, 32>}, {pipeline_mode = #tpu.pipeline_mode<synchronous>, transform_indices = @transform_3, window_bounds = array<i64: 4, 32>}, {pipeline_mode = #tpu.pipeline_mode<synchronous>, transform_indices = @transform_4, window_bounds = array<i64: 1, 32>}, {pipeline_mode = #tpu.pipeline_mode<synchronous>, transform_indices = @transform_5, window_bounds = array<i64: 32, 32>}, {pipeline_mode = #tpu.pipeline_mode<synchronous>, transform_indices = @transform_6, window_bounds = array<i64: 1, 32>}, {transform_indices = @transform_7, window_bounds = array<i64: 128, 32>}]} {
    %c0 = arith.constant 0 : index
    %c0_0 = arith.constant 0 : index
    %0 = vector.load %arg1[%c0, %c0_0] : memref<128x8xbf16, #tpu.memory_space<vmem>>, vector<128x8xbf16>
    %c0_1 = arith.constant 0 : index
    %c0_2 = arith.constant 0 : index
    %1 = vector.load %arg3[%c0_1, %c0_2] : memref<8x32xbf16, #tpu.memory_space<vmem>>, vector<8x32xbf16>
    %cst = arith.constant dense<0.000000e+00> : vector<128x32xf32>
    %2 = tpu.matmul %0, %1, %cst {dimension_numbers = #tpu.dot_dimension_numbers<[1], [0], [0], [1], [0, 0, 1, 1], [], []>} : vector<128x8xbf16>, vector<8x32xbf16>, vector<128x32xf32> -> vector<128x32xf32>
    %c0_3 = arith.constant 0 : index
    %c0_4 = arith.constant 0 : index
    %3 = vector.load %arg2[%c0_3, %c0_4] : memref<128x4xbf16, #tpu.memory_space<vmem>>, vector<128x4xbf16>
    %c0_5 = arith.constant 0 : index
    %c0_6 = arith.constant 0 : index
    %4 = vector.load %arg4[%c0_5, %c0_6] : memref<4x32xbf16, #tpu.memory_space<vmem>>, vector<4x32xbf16>
    %cst_7 = arith.constant dense<0.000000e+00> : vector<128x32xf32>
    %5 = tpu.matmul %3, %4, %cst_7 {dimension_numbers = #tpu.dot_dimension_numbers<[1], [0], [0], [1], [0, 0, 1, 1], [], []>} : vector<128x4xbf16>, vector<4x32xbf16>, vector<128x32xf32> -> vector<128x32xf32>
    %6 = arith.addf %2, %5 : vector<128x32xf32>
    %c0_8 = arith.constant 0 : index
    %c0_9 = arith.constant 0 : index
    %7 = vector.load %arg5[%c0_8, %c0_9] : memref<1x32xf32, #tpu.memory_space<vmem>>, vector<1x32xf32>
    %8 = vector.broadcast %7 : vector<1x32xf32> to vector<128x32xf32>
    %9 = arith.addf %6, %8 : vector<128x32xf32>
    %10 = arith.negf %9 : vector<128x32xf32>
    %11 = math.exp %10 : vector<128x32xf32>
    %cst_10 = arith.constant 1.000000e+00 : f32
    %12 = vector.broadcast %cst_10 : f32 to vector<128x32xf32>
    %13 = arith.addf %12, %11 : vector<128x32xf32>
    %14 = arith.divf %12, %13 : vector<128x32xf32>
    %15 = arith.mulf %9, %14 : vector<128x32xf32>
    %16 = arith.truncf %15 : vector<128x32xf32> to vector<128x32xbf16>
    %c0_11 = arith.constant 0 : index
    %c0_12 = arith.constant 0 : index
    %17 = vector.load %arg6[%c0_11, %c0_12] : memref<32x32xbf16, #tpu.memory_space<vmem>>, vector<32x32xbf16>
    %cst_13 = arith.constant dense<0.000000e+00> : vector<128x32xf32>
    %18 = tpu.matmul %16, %17, %cst_13 {dimension_numbers = #tpu.dot_dimension_numbers<[1], [0], [0], [1], [0, 0, 1, 1], [], []>} : vector<128x32xbf16>, vector<32x32xbf16>, vector<128x32xf32> -> vector<128x32xf32>
    %c0_14 = arith.constant 0 : index
    %c0_15 = arith.constant 0 : index
    %19 = vector.load %arg7[%c0_14, %c0_15] : memref<1x32xf32, #tpu.memory_space<vmem>>, vector<1x32xf32>
    %20 = vector.broadcast %19 : vector<1x32xf32> to vector<128x32xf32>
    %21 = arith.addf %18, %20 : vector<128x32xf32>
    %22 = arith.truncf %21 : vector<128x32xf32> to vector<128x32xbf16>
    %c0_16 = arith.constant 0 : index
    %c0_17 = arith.constant 0 : index
    %23 = vector.load %arg8[%c0_16, %c0_17] : memref<128x32xbf16, #tpu.memory_space<vmem>>, vector<128x32xbf16>
    tpu.vector_store %arg8[%c0_16, %c0_17], %22 {strides = array<i32>} : memref<128x32xbf16, #tpu.memory_space<vmem>>, vector<128x32xbf16>,
    return
  }
  func.func @transform_0(%arg0: i32) -> (i32, i32) {
    %c0_i32 = arith.constant 0 : i32
    %c0_i32_0 = arith.constant 0 : i32
    return %arg0, %c0_i32 : i32, i32
  }
  func.func @transform_1(%arg0: i32) -> (i32, i32) {
    %c0_i32 = arith.constant 0 : i32
    %c0_i32_0 = arith.constant 0 : i32
    return %arg0, %c0_i32 : i32, i32
  }
  func.func @transform_2(%arg0: i32) -> (i32, i32) {
    %c0_i32 = arith.constant 0 : i32
    %c0_i32_0 = arith.constant 0 : i32
    %c0_i32_1 = arith.constant 0 : i32
    return %c0_i32, %c0_i32_0 : i32, i32
  }
  func.func @transform_3(%arg0: i32) -> (i32, i32) {
    %c0_i32 = arith.constant 0 : i32
    %c0_i32_0 = arith.constant 0 : i32
    %c0_i32_1 = arith.constant 0 : i32
    return %c0_i32, %c0_i32_0 : i32, i32
  }
  func.func @transform_4(%arg0: i32) -> (i32, i32) {
    %c0_i32 = arith.constant 0 : i32
    %c0_i32_0 = arith.constant 0 : i32
    %c0_i32_1 = arith.constant 0 : i32
    return %c0_i32, %c0_i32_0 : i32, i32
  }
  func.func @transform_5(%arg0: i32) -> (i32, i32) {
    %c0_i32 = arith.constant 0 : i32
    %c0_i32_0 = arith.constant 0 : i32
    %c0_i32_1 = arith.constant 0 : i32
    return %c0_i32, %c0_i32_0 : i32, i32
  }
  func.func @transform_6(%arg0: i32) -> (i32, i32) {
    %c0_i32 = arith.constant 0 : i32
    %c0_i32_0 = arith.constant 0 : i32
    %c0_i32_1 = arith.constant 0 : i32
    return %c0_i32, %c0_i32_0 : i32, i32
  }
  func.func @transform_7(%arg0: i32) -> (i32, i32) {
    %c0_i32 = arith.constant 0 : i32
    %c0_i32_0 = arith.constant 0 : i32
    return %arg0, %c0_i32 : i32, i32
  }
}

module attributes {stable_mosaic.version = 11 : i64} {
  func.func @kernel(%arg0: i32, %arg1: memref<1x64x32xbf16, #tpu.memory_space<vmem>>, %arg2: memref<3x16xf32, #tpu.memory_space<vmem>>, %arg3: memref<1x16xf32, #tpu.memory_space<vmem>>, %arg4: memref<16x32xbf16, #tpu.memory_space<vmem>>, %arg5: memref<1x32xf32, #tpu.memory_space<vmem>>, %arg6: memref<16x128xbf16, #tpu.memory_space<vmem>>, %arg7: memref<1x128xf32, #tpu.memory_space<vmem>>, %arg8: memref<1x64x128xf32, #tpu.memory_space<vmem>>, %arg9: memref<64x16xf32, #tpu.memory_space<vmem>>, %arg10: memref<64x16xf32, #tpu.memory_space<vmem>>, %arg11: memref<64x16xf32, #tpu.memory_space<vmem>>, %arg12: memref<64x16xf32, #tpu.memory_space<vmem>>, %arg13: memref<64x16xf32, #tpu.memory_space<vmem>>) attributes {dimension_semantics = [#tpu.dimension_semantics<parallel>], iteration_bounds = array<i64: 2>, scalar_prefetch = 0 : i64, scratch_operands = 5 : i64, tpu.core_type = #tpu.core_type<tc>, window_params = [{transform_indices = @transform_0, window_bounds = array<i64: 1, 64, 32>}, {pipeline_mode = #tpu.pipeline_mode<synchronous>, transform_indices = @transform_1, window_bounds = array<i64: 3, 16>}, {pipeline_mode = #tpu.pipeline_mode<synchronous>, transform_indices = @transform_2, window_bounds = array<i64: 1, 16>}, {pipeline_mode = #tpu.pipeline_mode<synchronous>, transform_indices = @transform_3, window_bounds = array<i64: 16, 32>}, {pipeline_mode = #tpu.pipeline_mode<synchronous>, transform_indices = @transform_4, window_bounds = array<i64: 1, 32>}, {pipeline_mode = #tpu.pipeline_mode<synchronous>, transform_indices = @transform_5, window_bounds = array<i64: 16, 128>}, {pipeline_mode = #tpu.pipeline_mode<synchronous>, transform_indices = @transform_6, window_bounds = array<i64: 1, 128>}, {transform_indices = @transform_7, window_bounds = array<i64: 1, 64, 128>}]} {
    %0 = tpu.iota {dimensions = array<i32: 0>} : vector<64x16xi32>
    %c63_i32 = arith.constant 63 : i32
    %1 = vector.broadcast %c63_i32 : i32 to vector<64x16xi32>
    %2 = arith.andi %0, %1 : vector<64x16xi32>
    %c0 = arith.constant 0 : index
    %c0_0 = arith.constant 0 : index
    %3 = vector.load %arg2[%c0, %c0_0] : memref<3x16xf32, #tpu.memory_space<vmem>>, vector<1x16xf32>
    %c1 = arith.constant 1 : index
    %c0_1 = arith.constant 0 : index
    %4 = vector.load %arg2[%c1, %c0_1] : memref<3x16xf32, #tpu.memory_space<vmem>>, vector<1x16xf32>
    %c2 = arith.constant 2 : index
    %c0_2 = arith.constant 0 : index
    %5 = vector.load %arg2[%c2, %c0_2] : memref<3x16xf32, #tpu.memory_space<vmem>>, vector<1x16xf32>
    %c0_3 = arith.constant 0 : index
    %c0_4 = arith.constant 0 : index
    %6 = vector.load %arg3[%c0_3, %c0_4] : memref<1x16xf32, #tpu.memory_space<vmem>>, vector<1x16xf32>
    %c0_5 = arith.constant 0 : index
    %c0_6 = arith.constant 0 : index
    %7 = vector.load %arg4[%c0_5, %c0_6] : memref<16x32xbf16, #tpu.memory_space<vmem>>, vector<16x32xbf16>
    %c0_7 = arith.constant 0 : index
    %c0_8 = arith.constant 0 : index
    %8 = vector.load %arg5[%c0_7, %c0_8] : memref<1x32xf32, #tpu.memory_space<vmem>>, vector<1x32xf32>
    %c16_i32 = arith.constant 16 : i32
    %9 = vector.broadcast %c16_i32 : i32 to vector<64x16xi32>
    %10 = arith.cmpi slt, %0, %9 : vector<64x16xi32>
    %c0_9 = arith.constant 0 : index
    %c0_10 = arith.constant 0 : index
    %c0_11 = arith.constant 0 : index
    %11 = vector.load %arg1[%c0_9, %c0_10, %c0_11] : memref<1x64x32xbf16, #tpu.memory_space<vmem>>, vector<1x64x16xbf16>
    %12 = vector.shape_cast %11 : vector<1x64x16xbf16> to vector<64x16xbf16>
    %13 = arith.extf %12 : vector<64x16xbf16> to vector<64x16xf32>
    %c0_i32 = arith.constant 0 : i32
    %14 = vector.broadcast %c0_i32 : i32 to vector<64x16xi32>
    %15 = arith.cmpi eq, %0, %14 : vector<64x16xi32>
    %c1_i32 = arith.constant 1 : i32
    %16 = tpu.dynamic_rotate %13 by %c1_i32 dim 0 : vector<64x16xf32>, i32 -> vector<64x16xf32>
    %cst = arith.constant 0.000000e+00 : f32
    %17 = vector.broadcast %cst : f32 to vector<64x16xf32>
    %18 = arith.select %15, %17, %16 : vector<64x16xi1>, vector<64x16xf32>
    %c15_i32 = arith.constant 15 : i32
    %19 = vector.broadcast %c15_i32 : i32 to vector<64x16xi32>
    %20 = arith.cmpi eq, %0, %19 : vector<64x16xi32>
    %c63_i32_12 = arith.constant 63 : i32
    %21 = tpu.dynamic_rotate %13 by %c63_i32_12 dim 0 : vector<64x16xf32>, i32 -> vector<64x16xf32>
    %cst_13 = arith.constant 0.000000e+00 : f32
    %22 = vector.broadcast %cst_13 : f32 to vector<64x16xf32>
    %23 = arith.select %20, %22, %21 : vector<64x16xi1>, vector<64x16xf32>
    %24 = vector.broadcast %3 : vector<1x16xf32> to vector<64x16xf32>
    %25 = arith.mulf %18, %24 : vector<64x16xf32>
    %26 = vector.broadcast %4 : vector<1x16xf32> to vector<64x16xf32>
    %27 = arith.mulf %13, %26 : vector<64x16xf32>
    %28 = arith.addf %25, %27 : vector<64x16xf32>
    %29 = vector.broadcast %5 : vector<1x16xf32> to vector<64x16xf32>
    %30 = arith.mulf %23, %29 : vector<64x16xf32>
    %31 = arith.addf %28, %30 : vector<64x16xf32>
    %32 = vector.broadcast %6 : vector<1x16xf32> to vector<64x16xf32>
    %33 = arith.addf %31, %32 : vector<64x16xf32>
    %34 = arith.negf %33 : vector<64x16xf32>
    %35 = math.exp %34 : vector<64x16xf32>
    %cst_14 = arith.constant 1.000000e+00 : f32
    %36 = vector.broadcast %cst_14 : f32 to vector<64x16xf32>
    %37 = arith.addf %36, %35 : vector<64x16xf32>
    %38 = arith.divf %36, %37 : vector<64x16xf32>
    %39 = arith.mulf %33, %38 : vector<64x16xf32>
    %40 = arith.truncf %39 : vector<64x16xf32> to vector<64x16xbf16>
    %cst_15 = arith.constant dense<0.000000e+00> : vector<64x32xf32>
    %41 = tpu.matmul %40, %7, %cst_15 {dimension_numbers = #tpu.dot_dimension_numbers<[1], [0], [0], [1], [0, 0, 1, 1], [], []>} : vector<64x16xbf16>, vector<16x32xbf16>, vector<64x32xf32> -> vector<64x32xf32>
    %42 = vector.broadcast %8 : vector<1x32xf32> to vector<64x32xf32>
    %43 = arith.addf %41, %42 : vector<64x32xf32>
    %44 = vector.extract_strided_slice %43 {offsets = [0, 0], sizes = [64, 16], strides = [1, 1]} : vector<64x32xf32> to vector<64x16xf32>
    %45 = vector.extract_strided_slice %43 {offsets = [0, 16], sizes = [64, 16], strides = [1, 1]} : vector<64x32xf32> to vector<64x16xf32>
    %46 = arith.negf %45 : vector<64x16xf32>
    %47 = math.exp %46 : vector<64x16xf32>
    %cst_16 = arith.constant 1.000000e+00 : f32
    %48 = vector.broadcast %cst_16 : f32 to vector<64x16xf32>
    %49 = arith.addf %48, %47 : vector<64x16xf32>
    %50 = arith.divf %48, %49 : vector<64x16xf32>
    %cst_17 = arith.constant 1.000000e+00 : f32
    %51 = vector.broadcast %cst_17 : f32 to vector<64x16xf32>
    %52 = arith.subf %51, %50 : vector<64x16xf32>
    %53 = arith.mulf %50, %44 : vector<64x16xf32>
    %cst_18 = arith.constant 0.000000e+00 : f32
    %54 = vector.broadcast %cst_18 : f32 to vector<64x16xf32>
    %55 = arith.select %10, %52, %54 : vector<64x16xi1>, vector<64x16xf32>
    %cst_19 = arith.constant 0.000000e+00 : f32
    %56 = vector.broadcast %cst_19 : f32 to vector<64x16xf32>
    %57 = arith.select %10, %53, %56 : vector<64x16xi1>, vector<64x16xf32>
    %c1_i32_20 = arith.constant 1 : i32
    %58 = vector.broadcast %c1_i32_20 : i32 to vector<64x16xi32>
    %59 = arith.cmpi sge, %2, %58 : vector<64x16xi32>
    %c1_i32_21 = arith.constant 1 : i32
    %60 = tpu.dynamic_rotate %55 by %c1_i32_21 dim 0 : vector<64x16xf32>, i32 -> vector<64x16xf32>
    %cst_22 = arith.constant 1.000000e+00 : f32
    %61 = vector.broadcast %cst_22 : f32 to vector<64x16xf32>
    %62 = arith.select %59, %60, %61 : vector<64x16xi1>, vector<64x16xf32>
    %c1_i32_23 = arith.constant 1 : i32
    %63 = tpu.dynamic_rotate %57 by %c1_i32_23 dim 0 : vector<64x16xf32>, i32 -> vector<64x16xf32>
    %cst_24 = arith.constant 0.000000e+00 : f32
    %64 = vector.broadcast %cst_24 : f32 to vector<64x16xf32>
    %65 = arith.select %59, %63, %64 : vector<64x16xi1>, vector<64x16xf32>
    %66 = arith.mulf %55, %65 : vector<64x16xf32>
    %67 = arith.addf %57, %66 : vector<64x16xf32>
    %68 = arith.mulf %55, %62 : vector<64x16xf32>
    %c2_i32 = arith.constant 2 : i32
    %69 = vector.broadcast %c2_i32 : i32 to vector<64x16xi32>
    %70 = arith.cmpi sge, %2, %69 : vector<64x16xi32>
    %c2_i32_25 = arith.constant 2 : i32
    %71 = tpu.dynamic_rotate %68 by %c2_i32_25 dim 0 : vector<64x16xf32>, i32 -> vector<64x16xf32>
    %cst_26 = arith.constant 1.000000e+00 : f32
    %72 = vector.broadcast %cst_26 : f32 to vector<64x16xf32>
    %73 = arith.select %70, %71, %72 : vector<64x16xi1>, vector<64x16xf32>
    %c2_i32_27 = arith.constant 2 : i32
    %74 = tpu.dynamic_rotate %67 by %c2_i32_27 dim 0 : vector<64x16xf32>, i32 -> vector<64x16xf32>
    %cst_28 = arith.constant 0.000000e+00 : f32
    %75 = vector.broadcast %cst_28 : f32 to vector<64x16xf32>
    %76 = arith.select %70, %74, %75 : vector<64x16xi1>, vector<64x16xf32>
    %77 = arith.mulf %68, %76 : vector<64x16xf32>
    %78 = arith.addf %67, %77 : vector<64x16xf32>
    %79 = arith.mulf %68, %73 : vector<64x16xf32>
    %c4_i32 = arith.constant 4 : i32
    %80 = vector.broadcast %c4_i32 : i32 to vector<64x16xi32>
    %81 = arith.cmpi sge, %2, %80 : vector<64x16xi32>
    %c4_i32_29 = arith.constant 4 : i32
    %82 = tpu.dynamic_rotate %79 by %c4_i32_29 dim 0 : vector<64x16xf32>, i32 -> vector<64x16xf32>
    %cst_30 = arith.constant 1.000000e+00 : f32
    %83 = vector.broadcast %cst_30 : f32 to vector<64x16xf32>
    %84 = arith.select %81, %82, %83 : vector<64x16xi1>, vector<64x16xf32>
    %c4_i32_31 = arith.constant 4 : i32
    %85 = tpu.dynamic_rotate %78 by %c4_i32_31 dim 0 : vector<64x16xf32>, i32 -> vector<64x16xf32>
    %cst_32 = arith.constant 0.000000e+00 : f32
    %86 = vector.broadcast %cst_32 : f32 to vector<64x16xf32>
    %87 = arith.select %81, %85, %86 : vector<64x16xi1>, vector<64x16xf32>
    %88 = arith.mulf %79, %87 : vector<64x16xf32>
    %89 = arith.addf %78, %88 : vector<64x16xf32>
    %90 = arith.mulf %79, %84 : vector<64x16xf32>
    %c8_i32 = arith.constant 8 : i32
    %91 = vector.broadcast %c8_i32 : i32 to vector<64x16xi32>
    %92 = arith.cmpi sge, %2, %91 : vector<64x16xi32>
    %c8_i32_33 = arith.constant 8 : i32
    %93 = tpu.dynamic_rotate %90 by %c8_i32_33 dim 0 : vector<64x16xf32>, i32 -> vector<64x16xf32>
    %cst_34 = arith.constant 1.000000e+00 : f32
    %94 = vector.broadcast %cst_34 : f32 to vector<64x16xf32>
    %95 = arith.select %92, %93, %94 : vector<64x16xi1>, vector<64x16xf32>
    %c8_i32_35 = arith.constant 8 : i32
    %96 = tpu.dynamic_rotate %89 by %c8_i32_35 dim 0 : vector<64x16xf32>, i32 -> vector<64x16xf32>
    %cst_36 = arith.constant 0.000000e+00 : f32
    %97 = vector.broadcast %cst_36 : f32 to vector<64x16xf32>
    %98 = arith.select %92, %96, %97 : vector<64x16xi1>, vector<64x16xf32>
    %99 = arith.mulf %90, %98 : vector<64x16xf32>
    %100 = arith.addf %89, %99 : vector<64x16xf32>
    %101 = arith.mulf %90, %95 : vector<64x16xf32>
    %c16_i32_37 = arith.constant 16 : i32
    %102 = vector.broadcast %c16_i32_37 : i32 to vector<64x16xi32>
    %103 = arith.cmpi sge, %2, %102 : vector<64x16xi32>
    %c16_i32_38 = arith.constant 16 : i32
    %104 = tpu.dynamic_rotate %101 by %c16_i32_38 dim 0 : vector<64x16xf32>, i32 -> vector<64x16xf32>
    %cst_39 = arith.constant 1.000000e+00 : f32
    %105 = vector.broadcast %cst_39 : f32 to vector<64x16xf32>
    %106 = arith.select %103, %104, %105 : vector<64x16xi1>, vector<64x16xf32>
    %c16_i32_40 = arith.constant 16 : i32
    %107 = tpu.dynamic_rotate %100 by %c16_i32_40 dim 0 : vector<64x16xf32>, i32 -> vector<64x16xf32>
    %cst_41 = arith.constant 0.000000e+00 : f32
    %108 = vector.broadcast %cst_41 : f32 to vector<64x16xf32>
    %109 = arith.select %103, %107, %108 : vector<64x16xi1>, vector<64x16xf32>
    %110 = arith.mulf %101, %109 : vector<64x16xf32>
    %111 = arith.addf %100, %110 : vector<64x16xf32>
    %112 = arith.mulf %101, %106 : vector<64x16xf32>
    %c32_i32 = arith.constant 32 : i32
    %113 = vector.broadcast %c32_i32 : i32 to vector<64x16xi32>
    %114 = arith.cmpi sge, %2, %113 : vector<64x16xi32>
    %c32_i32_42 = arith.constant 32 : i32
    %115 = tpu.dynamic_rotate %112 by %c32_i32_42 dim 0 : vector<64x16xf32>, i32 -> vector<64x16xf32>
    %cst_43 = arith.constant 1.000000e+00 : f32
    %116 = vector.broadcast %cst_43 : f32 to vector<64x16xf32>
    %117 = arith.select %114, %115, %116 : vector<64x16xi1>, vector<64x16xf32>
    %c32_i32_44 = arith.constant 32 : i32
    %118 = tpu.dynamic_rotate %111 by %c32_i32_44 dim 0 : vector<64x16xf32>, i32 -> vector<64x16xf32>
    %cst_45 = arith.constant 0.000000e+00 : f32
    %119 = vector.broadcast %cst_45 : f32 to vector<64x16xf32>
    %120 = arith.select %114, %118, %119 : vector<64x16xi1>, vector<64x16xf32>
    %121 = arith.mulf %112, %120 : vector<64x16xf32>
    %122 = arith.addf %111, %121 : vector<64x16xf32>
    %123 = arith.mulf %112, %117 : vector<64x16xf32>
    %c0_46 = arith.constant 0 : index
    %c0_47 = arith.constant 0 : index
    %124 = vector.load %arg9[%c0_46, %c0_47] : memref<64x16xf32, #tpu.memory_space<vmem>>, vector<64x16xf32>
    tpu.vector_store %arg9[%c0_46, %c0_47], %123 {strides = array<i32>} : memref<64x16xf32, #tpu.memory_space<vmem>>, vector<64x16xf32>,
    %c0_48 = arith.constant 0 : index
    %c0_49 = arith.constant 0 : index
    %125 = vector.load %arg10[%c0_48, %c0_49] : memref<64x16xf32, #tpu.memory_space<vmem>>, vector<64x16xf32>
    tpu.vector_store %arg10[%c0_48, %c0_49], %122 {strides = array<i32>} : memref<64x16xf32, #tpu.memory_space<vmem>>, vector<64x16xf32>,
    %c63_i32_50 = arith.constant 63 : i32
    %126 = vector.broadcast %c63_i32_50 : i32 to vector<64x16xi32>
    %127 = arith.cmpi slt, %2, %126 : vector<64x16xi32>
    %c63_i32_51 = arith.constant 63 : i32
    %128 = tpu.dynamic_rotate %55 by %c63_i32_51 dim 0 : vector<64x16xf32>, i32 -> vector<64x16xf32>
    %cst_52 = arith.constant 1.000000e+00 : f32
    %129 = vector.broadcast %cst_52 : f32 to vector<64x16xf32>
    %130 = arith.select %127, %128, %129 : vector<64x16xi1>, vector<64x16xf32>
    %c63_i32_53 = arith.constant 63 : i32
    %131 = tpu.dynamic_rotate %57 by %c63_i32_53 dim 0 : vector<64x16xf32>, i32 -> vector<64x16xf32>
    %cst_54 = arith.constant 0.000000e+00 : f32
    %132 = vector.broadcast %cst_54 : f32 to vector<64x16xf32>
    %133 = arith.select %127, %131, %132 : vector<64x16xi1>, vector<64x16xf32>
    %134 = arith.mulf %55, %133 : vector<64x16xf32>
    %135 = arith.addf %57, %134 : vector<64x16xf32>
    %136 = arith.mulf %55, %130 : vector<64x16xf32>
    %c62_i32 = arith.constant 62 : i32
    %137 = vector.broadcast %c62_i32 : i32 to vector<64x16xi32>
    %138 = arith.cmpi slt, %2, %137 : vector<64x16xi32>
    %c62_i32_55 = arith.constant 62 : i32
    %139 = tpu.dynamic_rotate %136 by %c62_i32_55 dim 0 : vector<64x16xf32>, i32 -> vector<64x16xf32>
    %cst_56 = arith.constant 1.000000e+00 : f32
    %140 = vector.broadcast %cst_56 : f32 to vector<64x16xf32>
    %141 = arith.select %138, %139, %140 : vector<64x16xi1>, vector<64x16xf32>
    %c62_i32_57 = arith.constant 62 : i32
    %142 = tpu.dynamic_rotate %135 by %c62_i32_57 dim 0 : vector<64x16xf32>, i32 -> vector<64x16xf32>
    %cst_58 = arith.constant 0.000000e+00 : f32
    %143 = vector.broadcast %cst_58 : f32 to vector<64x16xf32>
    %144 = arith.select %138, %142, %143 : vector<64x16xi1>, vector<64x16xf32>
    %145 = arith.mulf %136, %144 : vector<64x16xf32>
    %146 = arith.addf %135, %145 : vector<64x16xf32>
    %147 = arith.mulf %136, %141 : vector<64x16xf32>
    %c60_i32 = arith.constant 60 : i32
    %148 = vector.broadcast %c60_i32 : i32 to vector<64x16xi32>
    %149 = arith.cmpi slt, %2, %148 : vector<64x16xi32>
    %c60_i32_59 = arith.constant 60 : i32
    %150 = tpu.dynamic_rotate %147 by %c60_i32_59 dim 0 : vector<64x16xf32>, i32 -> vector<64x16xf32>
    %cst_60 = arith.constant 1.000000e+00 : f32
    %151 = vector.broadcast %cst_60 : f32 to vector<64x16xf32>
    %152 = arith.select %149, %150, %151 : vector<64x16xi1>, vector<64x16xf32>
    %c60_i32_61 = arith.constant 60 : i32
    %153 = tpu.dynamic_rotate %146 by %c60_i32_61 dim 0 : vector<64x16xf32>, i32 -> vector<64x16xf32>
    %cst_62 = arith.constant 0.000000e+00 : f32
    %154 = vector.broadcast %cst_62 : f32 to vector<64x16xf32>
    %155 = arith.select %149, %153, %154 : vector<64x16xi1>, vector<64x16xf32>
    %156 = arith.mulf %147, %155 : vector<64x16xf32>
    %157 = arith.addf %146, %156 : vector<64x16xf32>
    %158 = arith.mulf %147, %152 : vector<64x16xf32>
    %c56_i32 = arith.constant 56 : i32
    %159 = vector.broadcast %c56_i32 : i32 to vector<64x16xi32>
    %160 = arith.cmpi slt, %2, %159 : vector<64x16xi32>
    %c56_i32_63 = arith.constant 56 : i32
    %161 = tpu.dynamic_rotate %158 by %c56_i32_63 dim 0 : vector<64x16xf32>, i32 -> vector<64x16xf32>
    %cst_64 = arith.constant 1.000000e+00 : f32
    %162 = vector.broadcast %cst_64 : f32 to vector<64x16xf32>
    %163 = arith.select %160, %161, %162 : vector<64x16xi1>, vector<64x16xf32>
    %c56_i32_65 = arith.constant 56 : i32
    %164 = tpu.dynamic_rotate %157 by %c56_i32_65 dim 0 : vector<64x16xf32>, i32 -> vector<64x16xf32>
    %cst_66 = arith.constant 0.000000e+00 : f32
    %165 = vector.broadcast %cst_66 : f32 to vector<64x16xf32>
    %166 = arith.select %160, %164, %165 : vector<64x16xi1>, vector<64x16xf32>
    %167 = arith.mulf %158, %166 : vector<64x16xf32>
    %168 = arith.addf %157, %167 : vector<64x16xf32>
    %169 = arith.mulf %158, %163 : vector<64x16xf32>
    %c48_i32 = arith.constant 48 : i32
    %170 = vector.broadcast %c48_i32 : i32 to vector<64x16xi32>
    %171 = arith.cmpi slt, %2, %170 : vector<64x16xi32>
    %c48_i32_67 = arith.constant 48 : i32
    %172 = tpu.dynamic_rotate %169 by %c48_i32_67 dim 0 : vector<64x16xf32>, i32 -> vector<64x16xf32>
    %cst_68 = arith.constant 1.000000e+00 : f32
    %173 = vector.broadcast %cst_68 : f32 to vector<64x16xf32>
    %174 = arith.select %171, %172, %173 : vector<64x16xi1>, vector<64x16xf32>
    %c48_i32_69 = arith.constant 48 : i32
    %175 = tpu.dynamic_rotate %168 by %c48_i32_69 dim 0 : vector<64x16xf32>, i32 -> vector<64x16xf32>
    %cst_70 = arith.constant 0.000000e+00 : f32
    %176 = vector.broadcast %cst_70 : f32 to vector<64x16xf32>
    %177 = arith.select %171, %175, %176 : vector<64x16xi1>, vector<64x16xf32>
    %178 = arith.mulf %169, %177 : vector<64x16xf32>
    %179 = arith.addf %168, %178 : vector<64x16xf32>
    %180 = arith.mulf %169, %174 : vector<64x16xf32>
    %c32_i32_71 = arith.constant 32 : i32
    %181 = vector.broadcast %c32_i32_71 : i32 to vector<64x16xi32>
    %182 = arith.cmpi slt, %2, %181 : vector<64x16xi32>
    %c32_i32_72 = arith.constant 32 : i32
    %183 = tpu.dynamic_rotate %180 by %c32_i32_72 dim 0 : vector<64x16xf32>, i32 -> vector<64x16xf32>
    %cst_73 = arith.constant 1.000000e+00 : f32
    %184 = vector.broadcast %cst_73 : f32 to vector<64x16xf32>
    %185 = arith.select %182, %183, %184 : vector<64x16xi1>, vector<64x16xf32>
    %c32_i32_74 = arith.constant 32 : i32
    %186 = tpu.dynamic_rotate %179 by %c32_i32_74 dim 0 : vector<64x16xf32>, i32 -> vector<64x16xf32>
    %cst_75 = arith.constant 0.000000e+00 : f32
    %187 = vector.broadcast %cst_75 : f32 to vector<64x16xf32>
    %188 = arith.select %182, %186, %187 : vector<64x16xi1>, vector<64x16xf32>
    %189 = arith.mulf %180, %188 : vector<64x16xf32>
    %190 = arith.addf %179, %189 : vector<64x16xf32>
    %191 = arith.mulf %180, %185 : vector<64x16xf32>
    %c0_76 = arith.constant 0 : index
    %c0_77 = arith.constant 0 : index
    %192 = vector.load %arg11[%c0_76, %c0_77] : memref<64x16xf32, #tpu.memory_space<vmem>>, vector<64x16xf32>
    tpu.vector_store %arg11[%c0_76, %c0_77], %191 {strides = array<i32>} : memref<64x16xf32, #tpu.memory_space<vmem>>, vector<64x16xf32>,
    %c0_78 = arith.constant 0 : index
    %c0_79 = arith.constant 0 : index
    %193 = vector.load %arg12[%c0_78, %c0_79] : memref<64x16xf32, #tpu.memory_space<vmem>>, vector<64x16xf32>
    tpu.vector_store %arg12[%c0_78, %c0_79], %190 {strides = array<i32>} : memref<64x16xf32, #tpu.memory_space<vmem>>, vector<64x16xf32>,
    %cst_80 = arith.constant 0.000000e+00 : f32
    %194 = vector.broadcast %cst_80 : f32 to vector<1x16xf32>
    %c0_i32_81 = arith.constant 0 : i32
    %c64_i32 = arith.constant 64 : i32
    %195 = arith.muli %c0_i32_81, %c64_i32 : i32
    %196 = tpu.assume_multiple %195, 64 : i32
    %197 = arith.index_cast %196 : i32 to index
    %c0_82 = arith.constant 0 : index
    %198 = vector.load %arg9[%197, %c0_82] : memref<64x16xf32, #tpu.memory_space<vmem>>, vector<64x16xf32>
    %199 = vector.broadcast %194 : vector<1x16xf32> to vector<64x16xf32>
    %200 = arith.mulf %198, %199 : vector<64x16xf32>
    %201 = arith.index_cast %196 : i32 to index
    %c0_83 = arith.constant 0 : index
    %202 = vector.load %arg10[%201, %c0_83] : memref<64x16xf32, #tpu.memory_space<vmem>>, vector<64x16xf32>
    %203 = arith.addf %200, %202 : vector<64x16xf32>
    %204 = arith.index_cast %196 : i32 to index
    %c0_84 = arith.constant 0 : index
    %205 = vector.load %arg9[%204, %c0_84] : memref<64x16xf32, #tpu.memory_space<vmem>>, vector<64x16xf32>
    tpu.vector_store %arg9[%204, %c0_84], %203 {strides = array<i32>} : memref<64x16xf32, #tpu.memory_space<vmem>>, vector<64x16xf32>,
    %206 = vector.extract_strided_slice %203 {offsets = [63, 0], sizes = [1, 16], strides = [1, 1]} : vector<64x16xf32> to vector<1x16xf32>
    %c1_i32_85 = arith.constant 1 : i32
    %cst_86 = arith.constant 0.000000e+00 : f32
    %207 = vector.broadcast %cst_86 : f32 to vector<1x16xf32>
    %c0_i32_87 = arith.constant 0 : i32
    %c0_i32_88 = arith.constant 0 : i32
    %208 = arith.subi %c0_i32_88, %c0_i32_87 : i32
    %c64_i32_89 = arith.constant 64 : i32
    %209 = arith.muli %208, %c64_i32_89 : i32
    %210 = tpu.assume_multiple %209, 64 : i32
    %211 = arith.index_cast %210 : i32 to index
    %c0_90 = arith.constant 0 : index
    %212 = vector.load %arg11[%211, %c0_90] : memref<64x16xf32, #tpu.memory_space<vmem>>, vector<64x16xf32>
    %213 = vector.broadcast %207 : vector<1x16xf32> to vector<64x16xf32>
    %214 = arith.mulf %212, %213 : vector<64x16xf32>
    %215 = arith.index_cast %210 : i32 to index
    %c0_91 = arith.constant 0 : index
    %216 = vector.load %arg12[%215, %c0_91] : memref<64x16xf32, #tpu.memory_space<vmem>>, vector<64x16xf32>
    %217 = arith.addf %214, %216 : vector<64x16xf32>
    %c0_92 = arith.constant 0 : index
    %218 = arith.index_cast %210 : i32 to index
    %c16 = arith.constant 16 : index
    %219 = vector.load %arg1[%c0_92, %218, %c16] : memref<1x64x32xbf16, #tpu.memory_space<vmem>>, vector<1x64x16xbf16>
    %220 = vector.shape_cast %219 : vector<1x64x16xbf16> to vector<64x16xbf16>
    %221 = arith.extf %220 : vector<64x16xbf16> to vector<64x16xf32>
    %222 = arith.index_cast %210 : i32 to index
    %c0_93 = arith.constant 0 : index
    %223 = vector.load %arg9[%222, %c0_93] : memref<64x16xf32, #tpu.memory_space<vmem>>, vector<64x16xf32>
    %224 = arith.addf %223, %217 : vector<64x16xf32>
    %225 = arith.negf %221 : vector<64x16xf32>
    %226 = math.exp %225 : vector<64x16xf32>
    %cst_94 = arith.constant 1.000000e+00 : f32
    %227 = vector.broadcast %cst_94 : f32 to vector<64x16xf32>
    %228 = arith.addf %227, %226 : vector<64x16xf32>
    %229 = arith.divf %227, %228 : vector<64x16xf32>
    %230 = arith.mulf %221, %229 : vector<64x16xf32>
    %231 = arith.mulf %224, %230 : vector<64x16xf32>
    %232 = arith.index_cast %210 : i32 to index
    %c0_95 = arith.constant 0 : index
    %233 = vector.load %arg13[%232, %c0_95] : memref<64x16xf32, #tpu.memory_space<vmem>>, vector<64x16xf32>
    tpu.vector_store %arg13[%232, %c0_95], %231 {strides = array<i32>} : memref<64x16xf32, #tpu.memory_space<vmem>>, vector<64x16xf32>,
    %234 = vector.extract_strided_slice %217 {offsets = [0, 0], sizes = [1, 16], strides = [1, 1]} : vector<64x16xf32> to vector<1x16xf32>
    %c1_i32_96 = arith.constant 1 : i32
    %c0_97 = arith.constant 0 : index
    %c0_98 = arith.constant 0 : index
    %c16_99 = arith.constant 16 : index
    %235 = vector.load %arg1[%c0_97, %c0_98, %c16_99] : memref<1x64x32xbf16, #tpu.memory_space<vmem>>, vector<1x64x16xbf16>
    %236 = vector.shape_cast %235 : vector<1x64x16xbf16> to vector<64x16xbf16>
    %237 = arith.extf %236 : vector<64x16xbf16> to vector<64x16xf32>
    %c0_i32_100 = arith.constant 0 : i32
    %238 = vector.broadcast %c0_i32_100 : i32 to vector<64x16xi32>
    %239 = arith.cmpi eq, %0, %238 : vector<64x16xi32>
    %c1_i32_101 = arith.constant 1 : i32
    %240 = tpu.dynamic_rotate %237 by %c1_i32_101 dim 0 : vector<64x16xf32>, i32 -> vector<64x16xf32>
    %cst_102 = arith.constant 0.000000e+00 : f32
    %241 = vector.broadcast %cst_102 : f32 to vector<64x16xf32>
    %242 = arith.select %239, %241, %240 : vector<64x16xi1>, vector<64x16xf32>
    %c15_i32_103 = arith.constant 15 : i32
    %243 = vector.broadcast %c15_i32_103 : i32 to vector<64x16xi32>
    %244 = arith.cmpi eq, %0, %243 : vector<64x16xi32>
    %c63_i32_104 = arith.constant 63 : i32
    %245 = tpu.dynamic_rotate %237 by %c63_i32_104 dim 0 : vector<64x16xf32>, i32 -> vector<64x16xf32>
    %cst_105 = arith.constant 0.000000e+00 : f32
    %246 = vector.broadcast %cst_105 : f32 to vector<64x16xf32>
    %247 = arith.select %244, %246, %245 : vector<64x16xi1>, vector<64x16xf32>
    %248 = vector.broadcast %3 : vector<1x16xf32> to vector<64x16xf32>
    %249 = arith.mulf %242, %248 : vector<64x16xf32>
    %250 = vector.broadcast %4 : vector<1x16xf32> to vector<64x16xf32>
    %251 = arith.mulf %237, %250 : vector<64x16xf32>
    %252 = arith.addf %249, %251 : vector<64x16xf32>
    %253 = vector.broadcast %5 : vector<1x16xf32> to vector<64x16xf32>
    %254 = arith.mulf %247, %253 : vector<64x16xf32>
    %255 = arith.addf %252, %254 : vector<64x16xf32>
    %256 = vector.broadcast %6 : vector<1x16xf32> to vector<64x16xf32>
    %257 = arith.addf %255, %256 : vector<64x16xf32>
    %258 = arith.negf %257 : vector<64x16xf32>
    %259 = math.exp %258 : vector<64x16xf32>
    %cst_106 = arith.constant 1.000000e+00 : f32
    %260 = vector.broadcast %cst_106 : f32 to vector<64x16xf32>
    %261 = arith.addf %260, %259 : vector<64x16xf32>
    %262 = arith.divf %260, %261 : vector<64x16xf32>
    %263 = arith.mulf %257, %262 : vector<64x16xf32>
    %264 = arith.truncf %263 : vector<64x16xf32> to vector<64x16xbf16>
    %cst_107 = arith.constant dense<0.000000e+00> : vector<64x32xf32>
    %265 = tpu.matmul %264, %7, %cst_107 {dimension_numbers = #tpu.dot_dimension_numbers<[1], [0], [0], [1], [0, 0, 1, 1], [], []>} : vector<64x16xbf16>, vector<16x32xbf16>, vector<64x32xf32> -> vector<64x32xf32>
    %266 = vector.broadcast %8 : vector<1x32xf32> to vector<64x32xf32>
    %267 = arith.addf %265, %266 : vector<64x32xf32>
    %268 = vector.extract_strided_slice %267 {offsets = [0, 0], sizes = [64, 16], strides = [1, 1]} : vector<64x32xf32> to vector<64x16xf32>
    %269 = vector.extract_strided_slice %267 {offsets = [0, 16], sizes = [64, 16], strides = [1, 1]} : vector<64x32xf32> to vector<64x16xf32>
    %270 = arith.negf %269 : vector<64x16xf32>
    %271 = math.exp %270 : vector<64x16xf32>
    %cst_108 = arith.constant 1.000000e+00 : f32
    %272 = vector.broadcast %cst_108 : f32 to vector<64x16xf32>
    %273 = arith.addf %272, %271 : vector<64x16xf32>
    %274 = arith.divf %272, %273 : vector<64x16xf32>
    %cst_109 = arith.constant 1.000000e+00 : f32
    %275 = vector.broadcast %cst_109 : f32 to vector<64x16xf32>
    %276 = arith.subf %275, %274 : vector<64x16xf32>
    %277 = arith.mulf %274, %268 : vector<64x16xf32>
    %cst_110 = arith.constant 0.000000e+00 : f32
    %278 = vector.broadcast %cst_110 : f32 to vector<64x16xf32>
    %279 = arith.select %10, %276, %278 : vector<64x16xi1>, vector<64x16xf32>
    %cst_111 = arith.constant 0.000000e+00 : f32
    %280 = vector.broadcast %cst_111 : f32 to vector<64x16xf32>
    %281 = arith.select %10, %277, %280 : vector<64x16xi1>, vector<64x16xf32>
    %c1_i32_112 = arith.constant 1 : i32
    %282 = vector.broadcast %c1_i32_112 : i32 to vector<64x16xi32>
    %283 = arith.cmpi sge, %2, %282 : vector<64x16xi32>
    %c1_i32_113 = arith.constant 1 : i32
    %284 = tpu.dynamic_rotate %279 by %c1_i32_113 dim 0 : vector<64x16xf32>, i32 -> vector<64x16xf32>
    %cst_114 = arith.constant 1.000000e+00 : f32
    %285 = vector.broadcast %cst_114 : f32 to vector<64x16xf32>
    %286 = arith.select %283, %284, %285 : vector<64x16xi1>, vector<64x16xf32>
    %c1_i32_115 = arith.constant 1 : i32
    %287 = tpu.dynamic_rotate %281 by %c1_i32_115 dim 0 : vector<64x16xf32>, i32 -> vector<64x16xf32>
    %cst_116 = arith.constant 0.000000e+00 : f32
    %288 = vector.broadcast %cst_116 : f32 to vector<64x16xf32>
    %289 = arith.select %283, %287, %288 : vector<64x16xi1>, vector<64x16xf32>
    %290 = arith.mulf %279, %289 : vector<64x16xf32>
    %291 = arith.addf %281, %290 : vector<64x16xf32>
    %292 = arith.mulf %279, %286 : vector<64x16xf32>
    %c2_i32_117 = arith.constant 2 : i32
    %293 = vector.broadcast %c2_i32_117 : i32 to vector<64x16xi32>
    %294 = arith.cmpi sge, %2, %293 : vector<64x16xi32>
    %c2_i32_118 = arith.constant 2 : i32
    %295 = tpu.dynamic_rotate %292 by %c2_i32_118 dim 0 : vector<64x16xf32>, i32 -> vector<64x16xf32>
    %cst_119 = arith.constant 1.000000e+00 : f32
    %296 = vector.broadcast %cst_119 : f32 to vector<64x16xf32>
    %297 = arith.select %294, %295, %296 : vector<64x16xi1>, vector<64x16xf32>
    %c2_i32_120 = arith.constant 2 : i32
    %298 = tpu.dynamic_rotate %291 by %c2_i32_120 dim 0 : vector<64x16xf32>, i32 -> vector<64x16xf32>
    %cst_121 = arith.constant 0.000000e+00 : f32
    %299 = vector.broadcast %cst_121 : f32 to vector<64x16xf32>
    %300 = arith.select %294, %298, %299 : vector<64x16xi1>, vector<64x16xf32>
    %301 = arith.mulf %292, %300 : vector<64x16xf32>
    %302 = arith.addf %291, %301 : vector<64x16xf32>
    %303 = arith.mulf %292, %297 : vector<64x16xf32>
    %c4_i32_122 = arith.constant 4 : i32
    %304 = vector.broadcast %c4_i32_122 : i32 to vector<64x16xi32>
    %305 = arith.cmpi sge, %2, %304 : vector<64x16xi32>
    %c4_i32_123 = arith.constant 4 : i32
    %306 = tpu.dynamic_rotate %303 by %c4_i32_123 dim 0 : vector<64x16xf32>, i32 -> vector<64x16xf32>
    %cst_124 = arith.constant 1.000000e+00 : f32
    %307 = vector.broadcast %cst_124 : f32 to vector<64x16xf32>
    %308 = arith.select %305, %306, %307 : vector<64x16xi1>, vector<64x16xf32>
    %c4_i32_125 = arith.constant 4 : i32
    %309 = tpu.dynamic_rotate %302 by %c4_i32_125 dim 0 : vector<64x16xf32>, i32 -> vector<64x16xf32>
    %cst_126 = arith.constant 0.000000e+00 : f32
    %310 = vector.broadcast %cst_126 : f32 to vector<64x16xf32>
    %311 = arith.select %305, %309, %310 : vector<64x16xi1>, vector<64x16xf32>
    %312 = arith.mulf %303, %311 : vector<64x16xf32>
    %313 = arith.addf %302, %312 : vector<64x16xf32>
    %314 = arith.mulf %303, %308 : vector<64x16xf32>
    %c8_i32_127 = arith.constant 8 : i32
    %315 = vector.broadcast %c8_i32_127 : i32 to vector<64x16xi32>
    %316 = arith.cmpi sge, %2, %315 : vector<64x16xi32>
    %c8_i32_128 = arith.constant 8 : i32
    %317 = tpu.dynamic_rotate %314 by %c8_i32_128 dim 0 : vector<64x16xf32>, i32 -> vector<64x16xf32>
    %cst_129 = arith.constant 1.000000e+00 : f32
    %318 = vector.broadcast %cst_129 : f32 to vector<64x16xf32>
    %319 = arith.select %316, %317, %318 : vector<64x16xi1>, vector<64x16xf32>
    %c8_i32_130 = arith.constant 8 : i32
    %320 = tpu.dynamic_rotate %313 by %c8_i32_130 dim 0 : vector<64x16xf32>, i32 -> vector<64x16xf32>
    %cst_131 = arith.constant 0.000000e+00 : f32
    %321 = vector.broadcast %cst_131 : f32 to vector<64x16xf32>
    %322 = arith.select %316, %320, %321 : vector<64x16xi1>, vector<64x16xf32>
    %323 = arith.mulf %314, %322 : vector<64x16xf32>
    %324 = arith.addf %313, %323 : vector<64x16xf32>
    %325 = arith.mulf %314, %319 : vector<64x16xf32>
    %c16_i32_132 = arith.constant 16 : i32
    %326 = vector.broadcast %c16_i32_132 : i32 to vector<64x16xi32>
    %327 = arith.cmpi sge, %2, %326 : vector<64x16xi32>
    %c16_i32_133 = arith.constant 16 : i32
    %328 = tpu.dynamic_rotate %325 by %c16_i32_133 dim 0 : vector<64x16xf32>, i32 -> vector<64x16xf32>
    %cst_134 = arith.constant 1.000000e+00 : f32
    %329 = vector.broadcast %cst_134 : f32 to vector<64x16xf32>
    %330 = arith.select %327, %328, %329 : vector<64x16xi1>, vector<64x16xf32>
    %c16_i32_135 = arith.constant 16 : i32
    %331 = tpu.dynamic_rotate %324 by %c16_i32_135 dim 0 : vector<64x16xf32>, i32 -> vector<64x16xf32>
    %cst_136 = arith.constant 0.000000e+00 : f32
    %332 = vector.broadcast %cst_136 : f32 to vector<64x16xf32>
    %333 = arith.select %327, %331, %332 : vector<64x16xi1>, vector<64x16xf32>
    %334 = arith.mulf %325, %333 : vector<64x16xf32>
    %335 = arith.addf %324, %334 : vector<64x16xf32>
    %336 = arith.mulf %325, %330 : vector<64x16xf32>
    %c32_i32_137 = arith.constant 32 : i32
    %337 = vector.broadcast %c32_i32_137 : i32 to vector<64x16xi32>
    %338 = arith.cmpi sge, %2, %337 : vector<64x16xi32>
    %c32_i32_138 = arith.constant 32 : i32
    %339 = tpu.dynamic_rotate %336 by %c32_i32_138 dim 0 : vector<64x16xf32>, i32 -> vector<64x16xf32>
    %cst_139 = arith.constant 1.000000e+00 : f32
    %340 = vector.broadcast %cst_139 : f32 to vector<64x16xf32>
    %341 = arith.select %338, %339, %340 : vector<64x16xi1>, vector<64x16xf32>
    %c32_i32_140 = arith.constant 32 : i32
    %342 = tpu.dynamic_rotate %335 by %c32_i32_140 dim 0 : vector<64x16xf32>, i32 -> vector<64x16xf32>
    %cst_141 = arith.constant 0.000000e+00 : f32
    %343 = vector.broadcast %cst_141 : f32 to vector<64x16xf32>
    %344 = arith.select %338, %342, %343 : vector<64x16xi1>, vector<64x16xf32>
    %345 = arith.mulf %336, %344 : vector<64x16xf32>
    %346 = arith.addf %335, %345 : vector<64x16xf32>
    %347 = arith.mulf %336, %341 : vector<64x16xf32>
    %c0_142 = arith.constant 0 : index
    %c0_143 = arith.constant 0 : index
    %348 = vector.load %arg9[%c0_142, %c0_143] : memref<64x16xf32, #tpu.memory_space<vmem>>, vector<64x16xf32>
    tpu.vector_store %arg9[%c0_142, %c0_143], %347 {strides = array<i32>} : memref<64x16xf32, #tpu.memory_space<vmem>>, vector<64x16xf32>,
    %c0_144 = arith.constant 0 : index
    %c0_145 = arith.constant 0 : index
    %349 = vector.load %arg10[%c0_144, %c0_145] : memref<64x16xf32, #tpu.memory_space<vmem>>, vector<64x16xf32>
    tpu.vector_store %arg10[%c0_144, %c0_145], %346 {strides = array<i32>} : memref<64x16xf32, #tpu.memory_space<vmem>>, vector<64x16xf32>,
    %c63_i32_146 = arith.constant 63 : i32
    %350 = vector.broadcast %c63_i32_146 : i32 to vector<64x16xi32>
    %351 = arith.cmpi slt, %2, %350 : vector<64x16xi32>
    %c63_i32_147 = arith.constant 63 : i32
    %352 = tpu.dynamic_rotate %279 by %c63_i32_147 dim 0 : vector<64x16xf32>, i32 -> vector<64x16xf32>
    %cst_148 = arith.constant 1.000000e+00 : f32
    %353 = vector.broadcast %cst_148 : f32 to vector<64x16xf32>
    %354 = arith.select %351, %352, %353 : vector<64x16xi1>, vector<64x16xf32>
    %c63_i32_149 = arith.constant 63 : i32
    %355 = tpu.dynamic_rotate %281 by %c63_i32_149 dim 0 : vector<64x16xf32>, i32 -> vector<64x16xf32>
    %cst_150 = arith.constant 0.000000e+00 : f32
    %356 = vector.broadcast %cst_150 : f32 to vector<64x16xf32>
    %357 = arith.select %351, %355, %356 : vector<64x16xi1>, vector<64x16xf32>
    %358 = arith.mulf %279, %357 : vector<64x16xf32>
    %359 = arith.addf %281, %358 : vector<64x16xf32>
    %360 = arith.mulf %279, %354 : vector<64x16xf32>
    %c62_i32_151 = arith.constant 62 : i32
    %361 = vector.broadcast %c62_i32_151 : i32 to vector<64x16xi32>
    %362 = arith.cmpi slt, %2, %361 : vector<64x16xi32>
    %c62_i32_152 = arith.constant 62 : i32
    %363 = tpu.dynamic_rotate %360 by %c62_i32_152 dim 0 : vector<64x16xf32>, i32 -> vector<64x16xf32>
    %cst_153 = arith.constant 1.000000e+00 : f32
    %364 = vector.broadcast %cst_153 : f32 to vector<64x16xf32>
    %365 = arith.select %362, %363, %364 : vector<64x16xi1>, vector<64x16xf32>
    %c62_i32_154 = arith.constant 62 : i32
    %366 = tpu.dynamic_rotate %359 by %c62_i32_154 dim 0 : vector<64x16xf32>, i32 -> vector<64x16xf32>
    %cst_155 = arith.constant 0.000000e+00 : f32
    %367 = vector.broadcast %cst_155 : f32 to vector<64x16xf32>
    %368 = arith.select %362, %366, %367 : vector<64x16xi1>, vector<64x16xf32>
    %369 = arith.mulf %360, %368 : vector<64x16xf32>
    %370 = arith.addf %359, %369 : vector<64x16xf32>
    %371 = arith.mulf %360, %365 : vector<64x16xf32>
    %c60_i32_156 = arith.constant 60 : i32
    %372 = vector.broadcast %c60_i32_156 : i32 to vector<64x16xi32>
    %373 = arith.cmpi slt, %2, %372 : vector<64x16xi32>
    %c60_i32_157 = arith.constant 60 : i32
    %374 = tpu.dynamic_rotate %371 by %c60_i32_157 dim 0 : vector<64x16xf32>, i32 -> vector<64x16xf32>
    %cst_158 = arith.constant 1.000000e+00 : f32
    %375 = vector.broadcast %cst_158 : f32 to vector<64x16xf32>
    %376 = arith.select %373, %374, %375 : vector<64x16xi1>, vector<64x16xf32>
    %c60_i32_159 = arith.constant 60 : i32
    %377 = tpu.dynamic_rotate %370 by %c60_i32_159 dim 0 : vector<64x16xf32>, i32 -> vector<64x16xf32>
    %cst_160 = arith.constant 0.000000e+00 : f32
    %378 = vector.broadcast %cst_160 : f32 to vector<64x16xf32>
    %379 = arith.select %373, %377, %378 : vector<64x16xi1>, vector<64x16xf32>
    %380 = arith.mulf %371, %379 : vector<64x16xf32>
    %381 = arith.addf %370, %380 : vector<64x16xf32>
    %382 = arith.mulf %371, %376 : vector<64x16xf32>
    %c56_i32_161 = arith.constant 56 : i32
    %383 = vector.broadcast %c56_i32_161 : i32 to vector<64x16xi32>
    %384 = arith.cmpi slt, %2, %383 : vector<64x16xi32>
    %c56_i32_162 = arith.constant 56 : i32
    %385 = tpu.dynamic_rotate %382 by %c56_i32_162 dim 0 : vector<64x16xf32>, i32 -> vector<64x16xf32>
    %cst_163 = arith.constant 1.000000e+00 : f32
    %386 = vector.broadcast %cst_163 : f32 to vector<64x16xf32>
    %387 = arith.select %384, %385, %386 : vector<64x16xi1>, vector<64x16xf32>
    %c56_i32_164 = arith.constant 56 : i32
    %388 = tpu.dynamic_rotate %381 by %c56_i32_164 dim 0 : vector<64x16xf32>, i32 -> vector<64x16xf32>
    %cst_165 = arith.constant 0.000000e+00 : f32
    %389 = vector.broadcast %cst_165 : f32 to vector<64x16xf32>
    %390 = arith.select %384, %388, %389 : vector<64x16xi1>, vector<64x16xf32>
    %391 = arith.mulf %382, %390 : vector<64x16xf32>
    %392 = arith.addf %381, %391 : vector<64x16xf32>
    %393 = arith.mulf %382, %387 : vector<64x16xf32>
    %c48_i32_166 = arith.constant 48 : i32
    %394 = vector.broadcast %c48_i32_166 : i32 to vector<64x16xi32>
    %395 = arith.cmpi slt, %2, %394 : vector<64x16xi32>
    %c48_i32_167 = arith.constant 48 : i32
    %396 = tpu.dynamic_rotate %393 by %c48_i32_167 dim 0 : vector<64x16xf32>, i32 -> vector<64x16xf32>
    %cst_168 = arith.constant 1.000000e+00 : f32
    %397 = vector.broadcast %cst_168 : f32 to vector<64x16xf32>
    %398 = arith.select %395, %396, %397 : vector<64x16xi1>, vector<64x16xf32>
    %c48_i32_169 = arith.constant 48 : i32
    %399 = tpu.dynamic_rotate %392 by %c48_i32_169 dim 0 : vector<64x16xf32>, i32 -> vector<64x16xf32>
    %cst_170 = arith.constant 0.000000e+00 : f32
    %400 = vector.broadcast %cst_170 : f32 to vector<64x16xf32>
    %401 = arith.select %395, %399, %400 : vector<64x16xi1>, vector<64x16xf32>
    %402 = arith.mulf %393, %401 : vector<64x16xf32>
    %403 = arith.addf %392, %402 : vector<64x16xf32>
    %404 = arith.mulf %393, %398 : vector<64x16xf32>
    %c32_i32_171 = arith.constant 32 : i32
    %405 = vector.broadcast %c32_i32_171 : i32 to vector<64x16xi32>
    %406 = arith.cmpi slt, %2, %405 : vector<64x16xi32>
    %c32_i32_172 = arith.constant 32 : i32
    %407 = tpu.dynamic_rotate %404 by %c32_i32_172 dim 0 : vector<64x16xf32>, i32 -> vector<64x16xf32>
    %cst_173 = arith.constant 1.000000e+00 : f32
    %408 = vector.broadcast %cst_173 : f32 to vector<64x16xf32>
    %409 = arith.select %406, %407, %408 : vector<64x16xi1>, vector<64x16xf32>
    %c32_i32_174 = arith.constant 32 : i32
    %410 = tpu.dynamic_rotate %403 by %c32_i32_174 dim 0 : vector<64x16xf32>, i32 -> vector<64x16xf32>
    %cst_175 = arith.constant 0.000000e+00 : f32
    %411 = vector.broadcast %cst_175 : f32 to vector<64x16xf32>
    %412 = arith.select %406, %410, %411 : vector<64x16xi1>, vector<64x16xf32>
    %413 = arith.mulf %404, %412 : vector<64x16xf32>
    %414 = arith.addf %403, %413 : vector<64x16xf32>
    %415 = arith.mulf %404, %409 : vector<64x16xf32>
    %c0_176 = arith.constant 0 : index
    %c0_177 = arith.constant 0 : index
    %416 = vector.load %arg11[%c0_176, %c0_177] : memref<64x16xf32, #tpu.memory_space<vmem>>, vector<64x16xf32>
    tpu.vector_store %arg11[%c0_176, %c0_177], %415 {strides = array<i32>} : memref<64x16xf32, #tpu.memory_space<vmem>>, vector<64x16xf32>,
    %c0_178 = arith.constant 0 : index
    %c0_179 = arith.constant 0 : index
    %417 = vector.load %arg12[%c0_178, %c0_179] : memref<64x16xf32, #tpu.memory_space<vmem>>, vector<64x16xf32>
    tpu.vector_store %arg12[%c0_178, %c0_179], %414 {strides = array<i32>} : memref<64x16xf32, #tpu.memory_space<vmem>>, vector<64x16xf32>,
    %cst_180 = arith.constant 0.000000e+00 : f32
    %418 = vector.broadcast %cst_180 : f32 to vector<1x16xf32>
    %c0_i32_181 = arith.constant 0 : i32
    %c64_i32_182 = arith.constant 64 : i32
    %419 = arith.muli %c0_i32_181, %c64_i32_182 : i32
    %420 = tpu.assume_multiple %419, 64 : i32
    %421 = arith.index_cast %420 : i32 to index
    %c0_183 = arith.constant 0 : index
    %422 = vector.load %arg9[%421, %c0_183] : memref<64x16xf32, #tpu.memory_space<vmem>>, vector<64x16xf32>
    %423 = vector.broadcast %418 : vector<1x16xf32> to vector<64x16xf32>
    %424 = arith.mulf %422, %423 : vector<64x16xf32>
    %425 = arith.index_cast %420 : i32 to index
    %c0_184 = arith.constant 0 : index
    %426 = vector.load %arg10[%425, %c0_184] : memref<64x16xf32, #tpu.memory_space<vmem>>, vector<64x16xf32>
    %427 = arith.addf %424, %426 : vector<64x16xf32>
    %428 = arith.index_cast %420 : i32 to index
    %c0_185 = arith.constant 0 : index
    %429 = vector.load %arg9[%428, %c0_185] : memref<64x16xf32, #tpu.memory_space<vmem>>, vector<64x16xf32>
    tpu.vector_store %arg9[%428, %c0_185], %427 {strides = array<i32>} : memref<64x16xf32, #tpu.memory_space<vmem>>, vector<64x16xf32>,
    %430 = vector.extract_strided_slice %427 {offsets = [63, 0], sizes = [1, 16], strides = [1, 1]} : vector<64x16xf32> to vector<1x16xf32>
    %c1_i32_186 = arith.constant 1 : i32
    %cst_187 = arith.constant 0.000000e+00 : f32
    %431 = vector.broadcast %cst_187 : f32 to vector<1x16xf32>
    %c0_i32_188 = arith.constant 0 : i32
    %c0_i32_189 = arith.constant 0 : i32
    %432 = arith.subi %c0_i32_189, %c0_i32_188 : i32
    %c64_i32_190 = arith.constant 64 : i32
    %433 = arith.muli %432, %c64_i32_190 : i32
    %434 = tpu.assume_multiple %433, 64 : i32
    %435 = arith.index_cast %434 : i32 to index
    %c0_191 = arith.constant 0 : index
    %436 = vector.load %arg11[%435, %c0_191] : memref<64x16xf32, #tpu.memory_space<vmem>>, vector<64x16xf32>
    %437 = vector.broadcast %431 : vector<1x16xf32> to vector<64x16xf32>
    %438 = arith.mulf %436, %437 : vector<64x16xf32>
    %439 = arith.index_cast %434 : i32 to index
    %c0_192 = arith.constant 0 : index
    %440 = vector.load %arg12[%439, %c0_192] : memref<64x16xf32, #tpu.memory_space<vmem>>, vector<64x16xf32>
    %441 = arith.addf %438, %440 : vector<64x16xf32>
    %c0_193 = arith.constant 0 : index
    %442 = arith.index_cast %434 : i32 to index
    %c0_194 = arith.constant 0 : index
    %443 = vector.load %arg1[%c0_193, %442, %c0_194] : memref<1x64x32xbf16, #tpu.memory_space<vmem>>, vector<1x64x16xbf16>
    %444 = vector.shape_cast %443 : vector<1x64x16xbf16> to vector<64x16xbf16>
    %445 = arith.extf %444 : vector<64x16xbf16> to vector<64x16xf32>
    %446 = arith.index_cast %434 : i32 to index
    %c0_195 = arith.constant 0 : index
    %447 = vector.load %arg9[%446, %c0_195] : memref<64x16xf32, #tpu.memory_space<vmem>>, vector<64x16xf32>
    %448 = arith.addf %447, %441 : vector<64x16xf32>
    %449 = arith.negf %445 : vector<64x16xf32>
    %450 = math.exp %449 : vector<64x16xf32>
    %cst_196 = arith.constant 1.000000e+00 : f32
    %451 = vector.broadcast %cst_196 : f32 to vector<64x16xf32>
    %452 = arith.addf %451, %450 : vector<64x16xf32>
    %453 = arith.divf %451, %452 : vector<64x16xf32>
    %454 = arith.mulf %445, %453 : vector<64x16xf32>
    %455 = arith.mulf %448, %454 : vector<64x16xf32>
    %456 = arith.index_cast %434 : i32 to index
    %c0_197 = arith.constant 0 : index
    %457 = vector.load %arg13[%456, %c0_197] : memref<64x16xf32, #tpu.memory_space<vmem>>, vector<64x16xf32>
    %458 = arith.addf %457, %455 : vector<64x16xf32>
    %459 = arith.index_cast %434 : i32 to index
    %c0_198 = arith.constant 0 : index
    %460 = vector.load %arg13[%459, %c0_198] : memref<64x16xf32, #tpu.memory_space<vmem>>, vector<64x16xf32>
    tpu.vector_store %arg13[%459, %c0_198], %458 {strides = array<i32>} : memref<64x16xf32, #tpu.memory_space<vmem>>, vector<64x16xf32>,
    %461 = vector.extract_strided_slice %441 {offsets = [0, 0], sizes = [1, 16], strides = [1, 1]} : vector<64x16xf32> to vector<1x16xf32>
    %c1_i32_199 = arith.constant 1 : i32
    %c0_200 = arith.constant 0 : index
    %c0_201 = arith.constant 0 : index
    %462 = vector.load %arg13[%c0_200, %c0_201] : memref<64x16xf32, #tpu.memory_space<vmem>>, vector<64x16xf32>
    %463 = arith.truncf %462 : vector<64x16xf32> to vector<64x16xbf16>
    %c0_202 = arith.constant 0 : index
    %c0_203 = arith.constant 0 : index
    %464 = vector.load %arg6[%c0_202, %c0_203] : memref<16x128xbf16, #tpu.memory_space<vmem>>, vector<16x128xbf16>
    %cst_204 = arith.constant dense<0.000000e+00> : vector<64x128xf32>
    %465 = tpu.matmul %463, %464, %cst_204 {dimension_numbers = #tpu.dot_dimension_numbers<[1], [0], [0], [1], [0, 0, 1, 1], [], []>} : vector<64x16xbf16>, vector<16x128xbf16>, vector<64x128xf32> -> vector<64x128xf32>
    %c0_205 = arith.constant 0 : index
    %c0_206 = arith.constant 0 : index
    %466 = vector.load %arg7[%c0_205, %c0_206] : memref<1x128xf32, #tpu.memory_space<vmem>>, vector<1x128xf32>
    %467 = vector.broadcast %466 : vector<1x128xf32> to vector<64x128xf32>
    %468 = arith.addf %465, %467 : vector<64x128xf32>
    %c0_207 = arith.constant 0 : index
    %c0_208 = arith.constant 0 : index
    %c0_209 = arith.constant 0 : index
    %469 = vector.load %arg8[%c0_207, %c0_208, %c0_209] : memref<1x64x128xf32, #tpu.memory_space<vmem>>, vector<1x64x128xf32>
    %470 = vector.shape_cast %469 : vector<1x64x128xf32> to vector<64x128xf32>
    %471 = vector.shape_cast %468 : vector<64x128xf32> to vector<1x64x128xf32>
    tpu.vector_store %arg8[%c0_207, %c0_208, %c0_209], %471 {strides = array<i32>} : memref<1x64x128xf32, #tpu.memory_space<vmem>>, vector<1x64x128xf32>,
    return
  }
  func.func @transform_0(%arg0: i32) -> (i32, i32, i32) {
    %c0_i32 = arith.constant 0 : i32
    %c0_i32_0 = arith.constant 0 : i32
    %c0_i32_1 = arith.constant 0 : i32
    return %arg0, %c0_i32, %c0_i32_0 : i32, i32, i32
  }
  func.func @transform_1(%arg0: i32) -> (i32, i32) {
    %c0_i32 = arith.constant 0 : i32
    %c0_i32_0 = arith.constant 0 : i32
    %c0_i32_1 = arith.constant 0 : i32
    return %c0_i32, %c0_i32_0 : i32, i32
  }
  func.func @transform_2(%arg0: i32) -> (i32, i32) {
    %c0_i32 = arith.constant 0 : i32
    %c0_i32_0 = arith.constant 0 : i32
    %c0_i32_1 = arith.constant 0 : i32
    return %c0_i32, %c0_i32_0 : i32, i32
  }
  func.func @transform_3(%arg0: i32) -> (i32, i32) {
    %c0_i32 = arith.constant 0 : i32
    %c0_i32_0 = arith.constant 0 : i32
    %c0_i32_1 = arith.constant 0 : i32
    return %c0_i32, %c0_i32_0 : i32, i32
  }
  func.func @transform_4(%arg0: i32) -> (i32, i32) {
    %c0_i32 = arith.constant 0 : i32
    %c0_i32_0 = arith.constant 0 : i32
    %c0_i32_1 = arith.constant 0 : i32
    return %c0_i32, %c0_i32_0 : i32, i32
  }
  func.func @transform_5(%arg0: i32) -> (i32, i32) {
    %c0_i32 = arith.constant 0 : i32
    %c0_i32_0 = arith.constant 0 : i32
    %c0_i32_1 = arith.constant 0 : i32
    return %c0_i32, %c0_i32_0 : i32, i32
  }
  func.func @transform_6(%arg0: i32) -> (i32, i32) {
    %c0_i32 = arith.constant 0 : i32
    %c0_i32_0 = arith.constant 0 : i32
    %c0_i32_1 = arith.constant 0 : i32
    return %c0_i32, %c0_i32_0 : i32, i32
  }
  func.func @transform_7(%arg0: i32) -> (i32, i32, i32) {
    %c0_i32 = arith.constant 0 : i32
    %c0_i32_0 = arith.constant 0 : i32
    %c0_i32_1 = arith.constant 0 : i32
    return %arg0, %c0_i32, %c0_i32_0 : i32, i32, i32
  }
}

</mosaic_0001>

<llo_original>
// kernel: gated_layer_forward.2
$region0: #{gated_layer_forward.2}
  #allocation0 [shape = 'u32[]', space=smem, size = 0x4, offset = 0x4, fixed_abs, tag = 'smem constant byte address 0x4 - core index']
  #allocation1 [shape = 'u32[144,128]{1,0:T(1,128)}', space=vmem, size = 0x12000, scoped, tag = 'internal scratch']
  %s0 = inlined_call_operand.vmem [shape: bf16[128,8], index: 0, kind: input, shape index: {}]
  %s1 = inlined_call_operand.vmem [shape: bf16[128,4], index: 1, kind: input, shape index: {}]
  %s2 = inlined_call_operand.vmem [shape: bf16[8,32], index: 2, kind: input, shape index: {}]
  %s3 = inlined_call_operand.vmem [shape: bf16[4,32], index: 3, kind: input, shape index: {}]
  %s4 = inlined_call_operand.vmem [shape: f32[1,32], index: 4, kind: input, shape index: {}]
  %s5 = inlined_call_operand.vmem [shape: bf16[32,32], index: 5, kind: input, shape index: {}]
  %s6 = inlined_call_operand.vmem [shape: f32[1,32], index: 6, kind: input, shape index: {}]
  %s7 = inlined_call_operand.vmem [shape: bf16[128,32], index: 7, kind: output, shape index: {}]
  %s8 = sld [smem:[#allocation0]]
  $region38: #{gated_layer_forward.2} parent=0
    _
  %s10 = ssub.s32 1, %s8
  %s11 = scalar_select 0, %s10, %s8
  // Predicated region
  $region2: #{gated_layer_forward.2} parent=0 // pred_check
    _
  $region3: #{gated_layer_forward.2} parent=0 // pred_check_branch
    %13 = sbr.rel (0) target = $region5
  $region4: #{gated_layer_forward.2} parent=0 // pred_region
    _
  $region5: #{gated_layer_forward.2} parent=0 // pred_fallthru
    _
  // Predicated region
  $region6: #{gated_layer_forward.2} parent=0 // pred_check
    _
  $region7: #{gated_layer_forward.2} parent=0 // pred_check_branch
    %15 = sbr.rel (0) target = $region9
  $region8: #{gated_layer_forward.2} parent=0 // pred_region
    _
  $region9: #{gated_layer_forward.2} parent=0 // pred_fallthru
    _
  // Predicated region
  $region10: #{gated_layer_forward.2} parent=0 // pred_check
    _
  $region11: #{gated_layer_forward.2} parent=0 // pred_check_branch
    %17 = sbr.rel (0) target = $region13
  $region12: #{gated_layer_forward.2} parent=0 // pred_region
    _
  $region13: #{gated_layer_forward.2} parent=0 // pred_fallthru
    _
  // Predicated region
  $region14: #{gated_layer_forward.2} parent=0 // pred_check
    _
  $region15: #{gated_layer_forward.2} parent=0 // pred_check_branch
    %19 = sbr.rel (0) target = $region17
  $region16: #{gated_layer_forward.2} parent=0 // pred_region
    _
  $region17: #{gated_layer_forward.2} parent=0 // pred_fallthru
    _
  // Predicated region
  $region18: #{gated_layer_forward.2} parent=0 // pred_check
    _
  $region19: #{gated_layer_forward.2} parent=0 // pred_check_branch
    %21 = sbr.rel (0) target = $region21
  $region20: #{gated_layer_forward.2} parent=0 // pred_region
    _
  $region21: #{gated_layer_forward.2} parent=0 // pred_fallthru
    _
  // Predicated region
  $region22: #{gated_layer_forward.2} parent=0 // pred_check
    _
  $region23: #{gated_layer_forward.2} parent=0 // pred_check_branch
    %23 = sbr.rel (0) target = $region25
  $region24: #{gated_layer_forward.2} parent=0 // pred_region
    _
  $region25: #{gated_layer_forward.2} parent=0 // pred_fallthru
    _
  // Predicated region
  $region26: #{gated_layer_forward.2} parent=0 // pred_check
    _
  $region27: #{gated_layer_forward.2} parent=0 // pred_check_branch
    %25 = sbr.rel (0) target = $region29
  $region28: #{gated_layer_forward.2} parent=0 // pred_region
    _
  $region29: #{gated_layer_forward.2} parent=0 // pred_fallthru
    _
  %v27 = vld [vmem:[%s0] sm:$0xf]
  %v28 = vld [vmem:[%s0 + $0x4] sm:$0xf]
  %v29 = vld [vmem:[%s0 + $0x8] sm:$0xf]
  %v30 = vld [vmem:[%s0 + $0xc] sm:$0xf]
  %v31 = vld [vmem:[%s0 + $0x10] sm:$0xf]
  %v32 = vld [vmem:[%s0 + $0x14] sm:$0xf]
  %v33 = vld [vmem:[%s0 + $0x18] sm:$0xf]
  %v34 = vld [vmem:[%s0 + $0x1c] sm:$0xf]
  %v35 = vld [vmem:[%s0 + $0x20] sm:$0xf]
  %v36 = vld [vmem:[%s0 + $0x24] sm:$0xf]
  %v37 = vld [vmem:[%s0 + $0x28] sm:$0xf]
  %v38 = vld [vmem:[%s0 + $0x2c] sm:$0xf]
  %v39 = vld [vmem:[%s0 + $0x30] sm:$0xf]
  %v40 = vld [vmem:[%s0 + $0x34] sm:$0xf]
  %v41 = vld [vmem:[%s0 + $0x38] sm:$0xf]
  %v42 = vld [vmem:[%s0 + $0x3c] sm:$0xf]
  %v43 = vld [vmem:[%s2] sm:$0xf]
  %v44 = vld [vmem:[%s1] sm:$0xf]
  %v45 = vld [vmem:[%s1 + $0x4] sm:$0xf]
  %v46 = vld [vmem:[%s1 + $0x8] sm:$0xf]
  %v47 = vld [vmem:[%s1 + $0xc] sm:$0xf]
  %v48 = vld [vmem:[%s1 + $0x10] sm:$0xf]
  %v49 = vld [vmem:[%s1 + $0x14] sm:$0xf]
  %v50 = vld [vmem:[%s1 + $0x18] sm:$0xf]
  %v51 = vld [vmem:[%s1 + $0x1c] sm:$0xf]
  %v52 = vld [vmem:[%s1 + $0x20] sm:$0xf]
  %v53 = vld [vmem:[%s1 + $0x24] sm:$0xf]
  %v54 = vld [vmem:[%s1 + $0x28] sm:$0xf]
  %v55 = vld [vmem:[%s1 + $0x2c] sm:$0xf]
  %v56 = vld [vmem:[%s1 + $0x30] sm:$0xf]
  %v57 = vld [vmem:[%s1 + $0x34] sm:$0xf]
  %v58 = vld [vmem:[%s1 + $0x38] sm:$0xf]
  %v59 = vld [vmem:[%s1 + $0x3c] sm:$0xf]
  %v60 = vld [vmem:[%s3] sm:$0x3]
  %v77 = vunpack.c.l.b16 %v44
  %v78 = vunpack.c.l.b16 %v45
  %v79 = vunpack.c.l.b16 %v46
  %v80 = vunpack.c.l.b16 %v47
  %v81 = vunpack.c.l.b16 %v48
  %v82 = vunpack.c.l.b16 %v49
  %v83 = vunpack.c.l.b16 %v50
  %v84 = vunpack.c.l.b16 %v51
  %v85 = vunpack.c.l.b16 %v52
  %v86 = vunpack.c.l.b16 %v53
  %v87 = vunpack.c.l.b16 %v54
  %v88 = vunpack.c.l.b16 %v55
  %v89 = vunpack.c.l.b16 %v56
  %v90 = vunpack.c.l.b16 %v57
  %v91 = vunpack.c.l.b16 %v58
  %v92 = vunpack.c.l.b16 %v59
  %v93 = vpack.c.b16 %v78, %v77
  %v94 = vpack.c.b16 %v80, %v79
  %v95 = vpack.c.b16 %v82, %v81
  %v96 = vpack.c.b16 %v84, %v83
  %v97 = vpack.c.b16 %v86, %v85
  %v98 = vpack.c.b16 %v88, %v87
  %v99 = vpack.c.b16 %v90, %v89
  %v100 = vpack.c.b16 %v92, %v91
  %vm101 = vcmask 31744
  %v103 = vsel %vm101, %v93, 0
  %v106 = vsel %vm101, %v94, 0
  %v109 = vsel %vm101, %v95, 0
  %v112 = vsel %vm101, %v96, 0
  %v115 = vsel %vm101, %v97, 0
  %v118 = vsel %vm101, %v98, 0
  %v121 = vsel %vm101, %v99, 0
  %v124 = vsel %vm101, %v100, 0
  %vm126 = vcmask 1041408
  %v128 = vsel %vm126, %v60, 0
  %130 = vmatprep.subr.bf16.mxu0 0
  %131 = vmatpush1.bf16.msra.mxu0 %v128
  %132 = vmatprep.subr.bf16.mxu0 0
  %133 = vmatpush1.bf16.msra.mxu0 0
  %134 = vmatprep.subr.bf16.mxu0 0
  %135 = vmatpush1.bf16.msra.mxu0 0
  %136 = vmatprep.subr.bf16.mxu0 0
  %137 = vmatpush1.bf16.msra.mxu0 0
  %138 = vmatprep.subr.bf16.mxu0 0
  %139 = vmatpush1.bf16.msra.mxu0 0
  %140 = vmatprep.subr.bf16.mxu0 0
  %141 = vmatpush1.bf16.msra.mxu0 0
  %142 = vmatprep.subr.bf16.mxu0 0
  %143 = vmatpush1.bf16.msra.mxu0 0
  %144 = vmatprep.subr.bf16.mxu0 0
  %145 = vmatpush1.bf16.msra.mxu0 0
  %146 = vmatprep.subr.bf16.mxu0 0
  %147 = vmatpush1.bf16.msra.mxu0 0
  %148 = vmatprep.subr.bf16.mxu0 0
  %149 = vmatpush1.bf16.msra.mxu0 0
  %150 = vmatprep.subr.bf16.mxu0 0
  %151 = vmatpush1.bf16.msra.mxu0 0
  %152 = vmatprep.subr.bf16.mxu0 0
  %153 = vmatpush1.bf16.msra.mxu0 0
  %154 = vmatprep.subr.bf16.mxu0 0
  %155 = vmatpush1.bf16.msra.mxu0 0
  %156 = vmatprep.subr.bf16.mxu0 0
  %157 = vmatpush1.bf16.msra.mxu0 0
  %158 = vmatprep.subr.bf16.mxu0 0
  %159 = vmatpush1.bf16.msra.mxu0 0
  %160 = vmatprep.subr.bf16.mxu0 0
  %161 = vmatpush1.bf16.msra.mxu0 0
  %162 = vmatprep.mubr.bf16.mxu0 0
  %163 = vmatmul.mubr.bf16.gmra.mrb[0].mxu0 %v103
  %v164 = vpop.f32.mrb[0].mxu0
  %v165 = vadd.f32 0.0, %v164
  %v166 = vpop.f32.mrb[0].mxu0
  %v167 = vpop.f32.mrb[0].mxu0
  %v168 = vadd.f32 0.0, %v167
  %v169 = vpop.f32.mrb[0].mxu0
  %170 = vmatprep.mubr.bf16.mxu0 0
  %171 = vmatmul.mubr.bf16.gmra.mrb[0].mxu0 %v106
  %v172 = vpop.f32.mrb[0].mxu0
  %v173 = vadd.f32 0.0, %v172
  %v174 = vpop.f32.mrb[0].mxu0
  %v175 = vpop.f32.mrb[0].mxu0
  %v176 = vadd.f32 0.0, %v175
  %v177 = vpop.f32.mrb[0].mxu0
  %178 = vmatprep.mubr.bf16.mxu0 0
  %179 = vmatmul.mubr.bf16.gmra.mrb[0].mxu0 %v109
  %v180 = vpop.f32.mrb[0].mxu0
  %v181 = vadd.f32 0.0, %v180
  %v182 = vpop.f32.mrb[0].mxu0
  %v183 = vpop.f32.mrb[0].mxu0
  %v184 = vadd.f32 0.0, %v183
  %v185 = vpop.f32.mrb[0].mxu0
  %186 = vmatprep.mubr.bf16.mxu0 0
  %187 = vmatmul.mubr.bf16.gmra.mrb[0].mxu0 %v112
  %v188 = vpop.f32.mrb[0].mxu0
  %v189 = vadd.f32 0.0, %v188
  %v190 = vpop.f32.mrb[0].mxu0
  %v191 = vpop.f32.mrb[0].mxu0
  %v192 = vadd.f32 0.0, %v191
  %v193 = vpop.f32.mrb[0].mxu0
  %194 = vmatprep.mubr.bf16.mxu0 0
  %195 = vmatmul.mubr.bf16.gmra.mrb[0].mxu0 %v115
  %v196 = vpop.f32.mrb[0].mxu0
  %v197 = vadd.f32 0.0, %v196
  %v198 = vpop.f32.mrb[0].mxu0
  %v199 = vpop.f32.mrb[0].mxu0
  %v200 = vadd.f32 0.0, %v199
  %v201 = vpop.f32.mrb[0].mxu0
  %202 = vmatprep.mubr.bf16.mxu0 0
  %203 = vmatmul.mubr.bf16.gmra.mrb[0].mxu0 %v118
  %v204 = vpop.f32.mrb[0].mxu0
  %v205 = vadd.f32 0.0, %v204
  %v206 = vpop.f32.mrb[0].mxu0
  %v207 = vpop.f32.mrb[0].mxu0
  %v208 = vadd.f32 0.0, %v207
  %v209 = vpop.f32.mrb[0].mxu0
  %210 = vmatprep.mubr.bf16.mxu0 0
  %211 = vmatmul.mubr.bf16.gmra.mrb[0].mxu0 %v121
  %v212 = vpop.f32.mrb[0].mxu0
  %v213 = vadd.f32 0.0, %v212
  %v214 = vpop.f32.mrb[0].mxu0
  %v215 = vpop.f32.mrb[0].mxu0
  %v216 = vadd.f32 0.0, %v215
  %v217 = vpop.f32.mrb[0].mxu0
  %218 = vmatprep.mubr.bf16.mxu0 0
  %219 = vmatmul.mubr.bf16.gmra.mrb[0].mxu0 %v124
  %v220 = vpop.f32.mrb[0].mxu0
  %v221 = vadd.f32 0.0, %v220
  %v222 = vpop.f32.mrb[0].mxu0
  %v223 = vpop.f32.mrb[0].mxu0
  %v224 = vadd.f32 0.0, %v223
  %v225 = vpop.f32.mrb[0].mxu0
  %226 = vdwg.mxu0
  %v243 = vunpack.c.l.b16 %v27
  %v244 = vunpack.c.l.b16 %v28
  %v245 = vunpack.c.l.b16 %v29
  %v246 = vunpack.c.l.b16 %v30
  %v247 = vunpack.c.l.b16 %v31
  %v248 = vunpack.c.l.b16 %v32
  %v249 = vunpack.c.l.b16 %v33
  %v250 = vunpack.c.l.b16 %v34
  %v251 = vunpack.c.l.b16 %v35
  %v252 = vunpack.c.l.b16 %v36
  %v253 = vunpack.c.l.b16 %v37
  %v254 = vunpack.c.l.b16 %v38
  %v255 = vunpack.c.l.b16 %v39
  %v256 = vunpack.c.l.b16 %v40
  %v257 = vunpack.c.l.b16 %v41
  %v258 = vunpack.c.l.b16 %v42
  %v259 = vpack.c.b16 %v244, %v243
  %v260 = vpack.c.b16 %v246, %v245
  %v261 = vpack.c.b16 %v248, %v247
  %v262 = vpack.c.b16 %v250, %v249
  %v263 = vpack.c.b16 %v252, %v251
  %v264 = vpack.c.b16 %v254, %v253
  %v265 = vpack.c.b16 %v256, %v255
  %v266 = vpack.c.b16 %v258, %v257
  %vm267 = vcmask 64512
  %v269 = vsel %vm267, %v259, 0
  %v272 = vsel %vm267, %v260, 0
  %v275 = vsel %vm267, %v261, 0
  %v278 = vsel %vm267, %v262, 0
  %v281 = vsel %vm267, %v263, 0
  %v284 = vsel %vm267, %v264, 0
  %v287 = vsel %vm267, %v265, 0
  %v290 = vsel %vm267, %v266, 0
  %vm292 = vcmask 1043456
  %v294 = vsel %vm292, %v43, 0
  %296 = vmatprep.subr.bf16.mxu0 0
  %297 = vmatpush1.bf16.msra.mxu0 %v294
  %298 = vmatprep.subr.bf16.mxu0 0
  %299 = vmatpush1.bf16.msra.mxu0 0
  %300 = vmatprep.subr.bf16.mxu0 0
  %301 = vmatpush1.bf16.msra.mxu0 0
  %302 = vmatprep.subr.bf16.mxu0 0
  %303 = vmatpush1.bf16.msra.mxu0 0
  %304 = vmatprep.subr.bf16.mxu0 0
  %305 = vmatpush1.bf16.msra.mxu0 0
  %306 = vmatprep.subr.bf16.mxu0 0
  %307 = vmatpush1.bf16.msra.mxu0 0
  %308 = vmatprep.subr.bf16.mxu0 0
  %309 = vmatpush1.bf16.msra.mxu0 0
  %310 = vmatprep.subr.bf16.mxu0 0
  %311 = vmatpush1.bf16.msra.mxu0 0
  %312 = vmatprep.subr.bf16.mxu0 0
  %313 = vmatpush1.bf16.msra.mxu0 0
  %314 = vmatprep.subr.bf16.mxu0 0
  %315 = vmatpush1.bf16.msra.mxu0 0
  %316 = vmatprep.subr.bf16.mxu0 0
  %317 = vmatpush1.bf16.msra.mxu0 0
  %318 = vmatprep.subr.bf16.mxu0 0
  %319 = vmatpush1.bf16.msra.mxu0 0
  %320 = vmatprep.subr.bf16.mxu0 0
  %321 = vmatpush1.bf16.msra.mxu0 0
  %322 = vmatprep.subr.bf16.mxu0 0
  %323 = vmatpush1.bf16.msra.mxu0 0
  %324 = vmatprep.subr.bf16.mxu0 0
  %325 = vmatpush1.bf16.msra.mxu0 0
  %326 = vmatprep.subr.bf16.mxu0 0
  %327 = vmatpush1.bf16.msra.mxu0 0
  %328 = vmatprep.mubr.bf16.mxu0 0
  %329 = vmatmul.mubr.bf16.gmra.mrb[0].mxu0 %v269
  %v330 = vpop.f32.mrb[0].mxu0
  %v331 = vadd.f32 %v165, %v330
  %v332 = vpop.f32.mrb[0].mxu0
  %v333 = vpop.f32.mrb[0].mxu0
  %v334 = vadd.f32 %v168, %v333
  %v335 = vpop.f32.mrb[0].mxu0
  %336 = vmatprep.mubr.bf16.mxu0 0
  %337 = vmatmul.mubr.bf16.gmra.mrb[0].mxu0 %v272
  %v338 = vpop.f32.mrb[0].mxu0
  %v339 = vadd.f32 %v173, %v338
  %v340 = vpop.f32.mrb[0].mxu0
  %v341 = vpop.f32.mrb[0].mxu0
  %v342 = vadd.f32 %v176, %v341
  %v343 = vpop.f32.mrb[0].mxu0
  %344 = vmatprep.mubr.bf16.mxu0 0
  %345 = vmatmul.mubr.bf16.gmra.mrb[0].mxu0 %v275
  %v346 = vpop.f32.mrb[0].mxu0
  %v347 = vadd.f32 %v181, %v346
  %v348 = vpop.f32.mrb[0].mxu0
  %v349 = vpop.f32.mrb[0].mxu0
  %v350 = vadd.f32 %v184, %v349
  %v351 = vpop.f32.mrb[0].mxu0
  %352 = vmatprep.mubr.bf16.mxu0 0
  %353 = vmatmul.mubr.bf16.gmra.mrb[0].mxu0 %v278
  %v354 = vpop.f32.mrb[0].mxu0
  %v355 = vadd.f32 %v189, %v354
  %v356 = vpop.f32.mrb[0].mxu0
  %v357 = vpop.f32.mrb[0].mxu0
  %v358 = vadd.f32 %v192, %v357
  %v359 = vpop.f32.mrb[0].mxu0
  %360 = vmatprep.mubr.bf16.mxu0 0
  %361 = vmatmul.mubr.bf16.gmra.mrb[0].mxu0 %v281
  %v362 = vpop.f32.mrb[0].mxu0
  %v363 = vadd.f32 %v197, %v362
  %v364 = vpop.f32.mrb[0].mxu0
  %v365 = vpop.f32.mrb[0].mxu0
  %v366 = vadd.f32 %v200, %v365
  %v367 = vpop.f32.mrb[0].mxu0
  %368 = vmatprep.mubr.bf16.mxu0 0
  %369 = vmatmul.mubr.bf16.gmra.mrb[0].mxu0 %v284
  %v370 = vpop.f32.mrb[0].mxu0
  %v371 = vadd.f32 %v205, %v370
  %v372 = vpop.f32.mrb[0].mxu0
  %v373 = vpop.f32.mrb[0].mxu0
  %v374 = vadd.f32 %v208, %v373
  %v375 = vpop.f32.mrb[0].mxu0
  %376 = vmatprep.mubr.bf16.mxu0 0
  %377 = vmatmul.mubr.bf16.gmra.mrb[0].mxu0 %v287
  %v378 = vpop.f32.mrb[0].mxu0
  %v379 = vadd.f32 %v213, %v378
  %v380 = vpop.f32.mrb[0].mxu0
  %v381 = vpop.f32.mrb[0].mxu0
  %v382 = vadd.f32 %v216, %v381
  %v383 = vpop.f32.mrb[0].mxu0
  %384 = vmatprep.mubr.bf16.mxu0 0
  %385 = vmatmul.mubr.bf16.gmra.mrb[0].mxu0 %v290
  %v386 = vpop.f32.mrb[0].mxu0
  %v387 = vadd.f32 %v221, %v386
  %v388 = vpop.f32.mrb[0].mxu0
  %v389 = vpop.f32.mrb[0].mxu0
  %v390 = vadd.f32 %v224, %v389
  %v391 = vpop.f32.mrb[0].mxu0
  %392 = vdwg.mxu0
  %v393 = vld [vmem:[%s4] sm:$0x1]
  %v395 = vlaneseq
  %v396 = vshrl.u32 %v395, 7
  %v397 = vsub.s32 0, %v396
  %v398 = vrot.slane %v393, %v397
  %v400 = vadd.f32 %v331, %v398
  %v401 = vadd.f32 %v334, %v398
  %v402 = vadd.f32 %v339, %v398
  %v403 = vadd.f32 %v342, %v398
  %v404 = vadd.f32 %v347, %v398
  %v405 = vadd.f32 %v350, %v398
  %v406 = vadd.f32 %v355, %v398
  %v407 = vadd.f32 %v358, %v398
  %v408 = vadd.f32 %v363, %v398
  %v409 = vadd.f32 %v366, %v398
  %v410 = vadd.f32 %v371, %v398
  %v411 = vadd.f32 %v374, %v398
  %v412 = vadd.f32 %v379, %v398
  %v413 = vadd.f32 %v382, %v398
  %v414 = vadd.f32 %v387, %v398
  %v415 = vadd.f32 %v390, %v398
  %v416 = vxor.u32 %v400, 2147483648
  %v417 = vxor.u32 %v401, 2147483648
  %v418 = vxor.u32 %v402, 2147483648
  %v419 = vxor.u32 %v403, 2147483648
  %v420 = vxor.u32 %v404, 2147483648
  %v421 = vxor.u32 %v405, 2147483648
  %v422 = vxor.u32 %v406, 2147483648
  %v423 = vxor.u32 %v407, 2147483648
  %v424 = vxor.u32 %v408, 2147483648
  %v425 = vxor.u32 %v409, 2147483648
  %v426 = vxor.u32 %v410, 2147483648
  %v427 = vxor.u32 %v411, 2147483648
  %v428 = vxor.u32 %v412, 2147483648
  %v429 = vxor.u32 %v413, 2147483648
  %v430 = vxor.u32 %v414, 2147483648
  %v431 = vxor.u32 %v415, 2147483648
  %v432 = vmul.f32 %v416, 1.442695
  %v433 = vpow.pop %v432
  %v434 = vmul.f32 %v417, 1.442695
  %v435 = vpow.pop %v434
  %v436 = vmul.f32 %v418, 1.442695
  %v437 = vpow.pop %v436
  %v438 = vmul.f32 %v419, 1.442695
  %v439 = vpow.pop %v438
  %v440 = vmul.f32 %v420, 1.442695
  %v441 = vpow.pop %v440
  %v442 = vmul.f32 %v421, 1.442695
  %v443 = vpow.pop %v442
  %v444 = vmul.f32 %v422, 1.442695
  %v445 = vpow.pop %v444
  %v446 = vmul.f32 %v423, 1.442695
  %v447 = vpow.pop %v446
  %v448 = vmul.f32 %v424, 1.442695
  %v449 = vpow.pop %v448
  %v450 = vmul.f32 %v425, 1.442695
  %v451 = vpow.pop %v450
  %v452 = vmul.f32 %v426, 1.442695
  %v453 = vpow.pop %v452
  %v454 = vmul.f32 %v427, 1.442695
  %v455 = vpow.pop %v454
  %v456 = vmul.f32 %v428, 1.442695
  %v457 = vpow.pop %v456
  %v458 = vmul.f32 %v429, 1.442695
  %v459 = vpow.pop %v458
  %v460 = vmul.f32 %v430, 1.442695
  %v461 = vpow.pop %v460
  %v462 = vmul.f32 %v431, 1.442695
  %v463 = vpow.pop %v462
  %v464 = vadd.f32 %v433, 1.0
  %v465 = vadd.f32 %v435, 1.0
  %v466 = vadd.f32 %v437, 1.0
  %v467 = vadd.f32 %v439, 1.0
  %v468 = vadd.f32 %v441, 1.0
  %v469 = vadd.f32 %v443, 1.0
  %v470 = vadd.f32 %v445, 1.0
  %v471 = vadd.f32 %v447, 1.0
  %v472 = vadd.f32 %v449, 1.0
  %v473 = vadd.f32 %v451, 1.0
  %v474 = vadd.f32 %v453, 1.0
  %v475 = vadd.f32 %v455, 1.0
  %v476 = vadd.f32 %v457, 1.0
  %v477 = vadd.f32 %v459, 1.0
  %v478 = vadd.f32 %v461, 1.0
  %v479 = vadd.f32 %v463, 1.0
  %v480 = vrcp.pop %v464
  %v481 = vmul.f32 1.0, %v480
  %v482 = vrcp.pop %v465
  %v483 = vmul.f32 1.0, %v482
  %v484 = vrcp.pop %v466
  %v485 = vmul.f32 1.0, %v484
  %v486 = vrcp.pop %v467
  %v487 = vmul.f32 1.0, %v486
  %v488 = vrcp.pop %v468
  %v489 = vmul.f32 1.0, %v488
  %v490 = vrcp.pop %v469
  %v491 = vmul.f32 1.0, %v490
  %v492 = vrcp.pop %v470
  %v493 = vmul.f32 1.0, %v492
  %v494 = vrcp.pop %v471
  %v495 = vmul.f32 1.0, %v494
  %v496 = vrcp.pop %v472
  %v497 = vmul.f32 1.0, %v496
  %v498 = vrcp.pop %v473
  %v499 = vmul.f32 1.0, %v498
  %v500 = vrcp.pop %v474
  %v501 = vmul.f32 1.0, %v500
  %v502 = vrcp.pop %v475
  %v503 = vmul.f32 1.0, %v502
  %v504 = vrcp.pop %v476
  %v505 = vmul.f32 1.0, %v504
  %v506 = vrcp.pop %v477
  %v507 = vmul.f32 1.0, %v506
  %v508 = vrcp.pop %v478
  %v509 = vmul.f32 1.0, %v508
  %v510 = vrcp.pop %v479
  %v511 = vmul.f32 1.0, %v510
  %v512 = vmul.f32 %v400, %v481
  %v513 = vmul.f32 %v401, %v483
  %v514 = vmul.f32 %v402, %v485
  %v515 = vmul.f32 %v403, %v487
  %v516 = vmul.f32 %v404, %v489
  %v517 = vmul.f32 %v405, %v491
  %v518 = vmul.f32 %v406, %v493
  %v519 = vmul.f32 %v407, %v495
  %v520 = vmul.f32 %v408, %v497
  %v521 = vmul.f32 %v409, %v499
  %v522 = vmul.f32 %v410, %v501
  %v523 = vmul.f32 %v411, %v503
  %v524 = vmul.f32 %v412, %v505
  %v525 = vmul.f32 %v413, %v507
  %v526 = vmul.f32 %v414, %v509
  %v527 = vmul.f32 %v415, %v511
  %v528 = vpack.c.bf16 %v513, %v512
  %v529 = vpack.c.bf16 %v515, %v514
  %v530 = vpack.c.bf16 %v517, %v516
  %v531 = vpack.c.bf16 %v519, %v518
  %v532 = vpack.c.bf16 %v521, %v520
  %v533 = vpack.c.bf16 %v523, %v522
  %v534 = vpack.c.bf16 %v525, %v524
  %v535 = vpack.c.bf16 %v527, %v526
  %v536 = vld [vmem:[%s5] sm:$0xf]
  %v537 = vld [vmem:[%s5 + $0x4] sm:$0xf]
  %v538 = vld [vmem:[%s5 + $0x8] sm:$0xf]
  %v539 = vld [vmem:[%s5 + $0xc] sm:$0xf]
  %v540 = vld [vmem:[%s6] sm:$0x1]
  %v542 = vlaneseq
  %v543 = vshrl.u32 %v542, 7
  %v544 = vsub.s32 0, %v543
  %v545 = vrot.slane %v540, %v544
  %v551 = vunpack.c.l.b16 %v536
  %v552 = vunpack.c.l.b16 %v537
  %v553 = vunpack.c.l.b16 %v538
  %v554 = vunpack.c.l.b16 %v539
  %v555 = vpack.c.b16 %v552, %v551
  %v556 = vpack.c.b16 %v554, %v553
  %vm559 = vcmask 261120
  %v561 = vsel %vm559, %v528, 0
  %v564 = vsel %vm559, %v529, 0
  %v567 = vsel %vm559, %v530, 0
  %v570 = vsel %vm559, %v531, 0
  %v573 = vsel %vm559, %v532, 0
  %v576 = vsel %vm559, %v533, 0
  %v579 = vsel %vm559, %v534, 0
  %v582 = vsel %vm559, %v535, 0
  %584 = vmatprep.subr.bf16.mxu0 0
  %585 = vmatpush1.bf16.msra.mxu0 %v555
  %586 = vmatprep.subr.bf16.mxu0 0
  %587 = vmatpush1.bf16.msra.mxu0 %v556
  %588 = vmatprep.subr.bf16.mxu0 0
  %589 = vmatpush1.bf16.msra.mxu0 0
  %590 = vmatprep.subr.bf16.mxu0 0
  %591 = vmatpush1.bf16.msra.mxu0 0
  %592 = vmatprep.subr.bf16.mxu0 0
  %593 = vmatpush1.bf16.msra.mxu0 0
  %594 = vmatprep.subr.bf16.mxu0 0
  %595 = vmatpush1.bf16.msra.mxu0 0
  %596 = vmatprep.subr.bf16.mxu0 0
  %597 = vmatpush1.bf16.msra.mxu0 0
  %598 = vmatprep.subr.bf16.mxu0 0
  %599 = vmatpush1.bf16.msra.mxu0 0
  %600 = vmatprep.subr.bf16.mxu0 0
  %601 = vmatpush1.bf16.msra.mxu0 0
  %602 = vmatprep.subr.bf16.mxu0 0
  %603 = vmatpush1.bf16.msra.mxu0 0
  %604 = vmatprep.subr.bf16.mxu0 0
  %605 = vmatpush1.bf16.msra.mxu0 0
  %606 = vmatprep.subr.bf16.mxu0 0
  %607 = vmatpush1.bf16.msra.mxu0 0
  %608 = vmatprep.subr.bf16.mxu0 0
  %609 = vmatpush1.bf16.msra.mxu0 0
  %610 = vmatprep.subr.bf16.mxu0 0
  %611 = vmatpush1.bf16.msra.mxu0 0
  %612 = vmatprep.subr.bf16.mxu0 0
  %613 = vmatpush1.bf16.msra.mxu0 0
  %614 = vmatprep.subr.bf16.mxu0 0
  %615 = vmatpush1.bf16.msra.mxu0 0
  %616 = vmatprep.mubr.bf16.mxu0 0
  %617 = vmatmul.mubr.bf16.gmra.mrb[0].mxu0 %v561
  %v618 = vpop.f32.mrb[0].mxu0
  %v619 = vadd.f32 %v545, %v618
  %v620 = vpop.f32.mrb[0].mxu0
  %v621 = vpop.f32.mrb[0].mxu0
  %v622 = vadd.f32 %v545, %v621
  %v623 = vpop.f32.mrb[0].mxu0
  %624 = vmatprep.mubr.bf16.mxu0 0
  %625 = vmatmul.mubr.bf16.gmra.mrb[0].mxu0 %v564
  %v626 = vpop.f32.mrb[0].mxu0
  %v627 = vadd.f32 %v545, %v626
  %v628 = vpop.f32.mrb[0].mxu0
  %v629 = vpop.f32.mrb[0].mxu0
  %v630 = vadd.f32 %v545, %v629
  %v631 = vpop.f32.mrb[0].mxu0
  %632 = vmatprep.mubr.bf16.mxu0 0
  %633 = vmatmul.mubr.bf16.gmra.mrb[0].mxu0 %v567
  %v634 = vpop.f32.mrb[0].mxu0
  %v635 = vadd.f32 %v545, %v634
  %v636 = vpop.f32.mrb[0].mxu0
  %v637 = vpop.f32.mrb[0].mxu0
  %v638 = vadd.f32 %v545, %v637
  %v639 = vpop.f32.mrb[0].mxu0
  %640 = vmatprep.mubr.bf16.mxu0 0
  %641 = vmatmul.mubr.bf16.gmra.mrb[0].mxu0 %v570
  %v642 = vpop.f32.mrb[0].mxu0
  %v643 = vadd.f32 %v545, %v642
  %v644 = vpop.f32.mrb[0].mxu0
  %v645 = vpop.f32.mrb[0].mxu0
  %v646 = vadd.f32 %v545, %v645
  %v647 = vpop.f32.mrb[0].mxu0
  %648 = vmatprep.mubr.bf16.mxu0 0
  %649 = vmatmul.mubr.bf16.gmra.mrb[0].mxu0 %v573
  %v650 = vpop.f32.mrb[0].mxu0
  %v651 = vadd.f32 %v545, %v650
  %v652 = vpop.f32.mrb[0].mxu0
  %v653 = vpop.f32.mrb[0].mxu0
  %v654 = vadd.f32 %v545, %v653
  %v655 = vpop.f32.mrb[0].mxu0
  %656 = vmatprep.mubr.bf16.mxu0 0
  %657 = vmatmul.mubr.bf16.gmra.mrb[0].mxu0 %v576
  %v658 = vpop.f32.mrb[0].mxu0
  %v659 = vadd.f32 %v545, %v658
  %v660 = vpop.f32.mrb[0].mxu0
  %v661 = vpop.f32.mrb[0].mxu0
  %v662 = vadd.f32 %v545, %v661
  %v663 = vpop.f32.mrb[0].mxu0
  %664 = vmatprep.mubr.bf16.mxu0 0
  %665 = vmatmul.mubr.bf16.gmra.mrb[0].mxu0 %v579
  %v666 = vpop.f32.mrb[0].mxu0
  %v667 = vadd.f32 %v545, %v666
  %v668 = vpop.f32.mrb[0].mxu0
  %v669 = vpop.f32.mrb[0].mxu0
  %v670 = vadd.f32 %v545, %v669
  %v671 = vpop.f32.mrb[0].mxu0
  %672 = vmatprep.mubr.bf16.mxu0 0
  %673 = vmatmul.mubr.bf16.gmra.mrb[0].mxu0 %v582
  %v674 = vpop.f32.mrb[0].mxu0
  %v675 = vadd.f32 %v545, %v674
  %v676 = vpop.f32.mrb[0].mxu0
  %v677 = vpop.f32.mrb[0].mxu0
  %v678 = vadd.f32 %v545, %v677
  %v679 = vpop.f32.mrb[0].mxu0
  %680 = vdwg.mxu0
  %v681 = vpack.c.bf16 %v622, %v619
  %v682 = vpack.c.bf16 %v630, %v627
  %v683 = vpack.c.bf16 %v638, %v635
  %v684 = vpack.c.bf16 %v646, %v643
  %v685 = vpack.c.bf16 %v654, %v651
  %v686 = vpack.c.bf16 %v662, %v659
  %v687 = vpack.c.bf16 %v670, %v667
  %v688 = vpack.c.bf16 %v678, %v675
  %v697 = vunpack.c.l.b16 %v681
  %v698 = vunpack.c.h.b16 %v681
  %v699 = vunpack.c.l.b16 %v682
  %v700 = vunpack.c.h.b16 %v682
  %v701 = vunpack.c.l.b16 %v683
  %v702 = vunpack.c.h.b16 %v683
  %v703 = vunpack.c.l.b16 %v684
  %v704 = vunpack.c.h.b16 %v684
  %v705 = vunpack.c.l.b16 %v685
  %v706 = vunpack.c.h.b16 %v685
  %v707 = vunpack.c.l.b16 %v686
  %v708 = vunpack.c.h.b16 %v686
  %v709 = vunpack.c.l.b16 %v687
  %v710 = vunpack.c.h.b16 %v687
  %v711 = vunpack.c.l.b16 %v688
  %v712 = vunpack.c.h.b16 %v688
  %v713 = vpack.c.b16 %v697, %v697
  %v714 = vpack.c.b16 %v698, %v698
  %v715 = vpack.c.b16 %v699, %v699
  %v716 = vpack.c.b16 %v700, %v700
  %v717 = vpack.c.b16 %v701, %v701
  %v718 = vpack.c.b16 %v702, %v702
  %v719 = vpack.c.b16 %v703, %v703
  %v720 = vpack.c.b16 %v704, %v704
  %v721 = vpack.c.b16 %v705, %v705
  %v722 = vpack.c.b16 %v706, %v706
  %v723 = vpack.c.b16 %v707, %v707
  %v724 = vpack.c.b16 %v708, %v708
  %v725 = vpack.c.b16 %v709, %v709
  %v726 = vpack.c.b16 %v710, %v710
  %v727 = vpack.c.b16 %v711, %v711
  %v728 = vpack.c.b16 %v712, %v712
  %vm745 = vcmask 257024
  %746 = vst.msk [vmem:[%s7] sm:$0xf] %vm745, %v713
  %747 = vst.msk [vmem:[%s7 + $0x4] sm:$0xf] %vm745, %v714
  %748 = vst.msk [vmem:[%s7 + $0x8] sm:$0xf] %vm745, %v715
  %749 = vst.msk [vmem:[%s7 + $0xc] sm:$0xf] %vm745, %v716
  %750 = vst.msk [vmem:[%s7 + $0x10] sm:$0xf] %vm745, %v717
  %751 = vst.msk [vmem:[%s7 + $0x14] sm:$0xf] %vm745, %v718
  %752 = vst.msk [vmem:[%s7 + $0x18] sm:$0xf] %vm745, %v719
  %753 = vst.msk [vmem:[%s7 + $0x1c] sm:$0xf] %vm745, %v720
  %754 = vst.msk [vmem:[%s7 + $0x20] sm:$0xf] %vm745, %v721
  %755 = vst.msk [vmem:[%s7 + $0x24] sm:$0xf] %vm745, %v722
  %756 = vst.msk [vmem:[%s7 + $0x28] sm:$0xf] %vm745, %v723
  %757 = vst.msk [vmem:[%s7 + $0x2c] sm:$0xf] %vm745, %v724
  %758 = vst.msk [vmem:[%s7 + $0x30] sm:$0xf] %vm745, %v725
  %759 = vst.msk [vmem:[%s7 + $0x34] sm:$0xf] %vm745, %v726
  %760 = vst.msk [vmem:[%s7 + $0x38] sm:$0xf] %vm745, %v727
  %761 = vst.msk [vmem:[%s7 + $0x3c] sm:$0xf] %vm745, %v728
  // Predicated region
  $region30: #{gated_layer_forward.2} parent=0 // pred_check
    _
  $region31: #{gated_layer_forward.2} parent=0 // pred_check_branch
    %763 = sbr.rel (0) target = $region33
  $region32: #{gated_layer_forward.2} parent=0 // pred_region
    _
  $region33: #{gated_layer_forward.2} parent=0 // pred_fallthru
    _
  // Predicated region
  $region34: #{gated_layer_forward.2} parent=0 // pred_check
    _
  $region35: #{gated_layer_forward.2} parent=0 // pred_check_branch
    %765 = sbr.rel (0) target = $region37
  $region36: #{gated_layer_forward.2} parent=0 // pred_region
    _
  $region37: #{gated_layer_forward.2} parent=0 // pred_fallthru
    _

// kernel: gated_layer_forward.3
$region0: #{gated_layer_forward.3}
  #allocation0 [shape = 'u32[]', space=smem, size = 0x4, offset = 0x4, fixed_abs, tag = 'smem constant byte address 0x4 - core index']
  #allocation1 [shape = 'u32[144,128]{1,0:T(1,128)}', space=vmem, size = 0x12000, scoped, tag = 'internal scratch']
  #allocation2 [shape = 'f32[64,16]{1,0:T(8,128)}', space=vmem, size = 0x8000, scoped, tag = 'scratch operand']
  #allocation3 [shape = 'f32[64,16]{1,0:T(8,128)}', space=vmem, size = 0x8000, scoped, tag = 'scratch operand']
  #allocation4 [shape = 'f32[64,16]{1,0:T(8,128)}', space=vmem, size = 0x8000, scoped, tag = 'scratch operand']
  #allocation5 [shape = 'f32[64,16]{1,0:T(8,128)}', space=vmem, size = 0x8000, scoped, tag = 'scratch operand']
  #allocation6 [shape = 'f32[64,16]{1,0:T(8,128)}', space=vmem, size = 0x8000, scoped, tag = 'scratch operand']
  %s0 = inlined_call_operand.vmem [shape: bf16[2,64,32], index: 0, kind: input, shape index: {}]
  %s1 = inlined_call_operand.vmem [shape: f32[3,16], index: 1, kind: input, shape index: {}]
  %s2 = inlined_call_operand.vmem [shape: f32[1,16], index: 2, kind: input, shape index: {}]
  %s3 = inlined_call_operand.vmem [shape: bf16[16,32], index: 3, kind: input, shape index: {}]
  %s4 = inlined_call_operand.vmem [shape: f32[1,32], index: 4, kind: input, shape index: {}]
  %s5 = inlined_call_operand.vmem [shape: bf16[16,128], index: 5, kind: input, shape index: {}]
  %s6 = inlined_call_operand.vmem [shape: f32[1,128], index: 6, kind: input, shape index: {}]
  %s7 = inlined_call_operand.vmem [shape: f32[2,64,128], index: 7, kind: output, shape index: {}]
  %s8 = sld [smem:[#allocation0]]
  $region61: #{gated_layer_forward.3} parent=0
    _
  %s10 = ssub.s32 1, %s8
  %s11 = scalar_select 0, %s10, %s8
  loop: start=0, step=1, limit=4
  $region2: #{gated_layer_forward.3} parent=0 // loop_pre_header
    _
  $region3: #{gated_layer_forward.3} parent=0 // loop_header
    %s13 = sphi 0, %s17
    %p14 = scmp.ge.s32.totalorder %s13, 4
    %s23 = sphi 0, %s25
    %s26 = sphi 0, %s23
    %s27 = sphi 0, %s26
    %s43 = sphi 0, %s27
    %s47 = sphi 0, %s47
    %s49 = sphi 0, %s47
    %s50 = sphi 0, %s49
    %s64 = sphi 0, %s50
    %s68 = sphi 0, %s68
    %s70 = sphi 0, %s68
    %s71 = sphi 0, %s70
    %s85 = sphi 0, %s71
    %s89 = sphi 0, %s89
    %s91 = sphi 0, %s89
    %s92 = sphi 0, %s91
    %s106 = sphi 0, %s92
    %s110 = sphi 0, %s110
    %s112 = sphi 0, %s110
    %s113 = sphi 0, %s112
    %s127 = sphi 0, %s113
    %s131 = sphi 0, %s131
    %s133 = sphi 0, %s131
    %s134 = sphi 0, %s133
    %s148 = sphi 0, %s134
    %s152 = sphi 0, %s152
    %s154 = sphi 0, %s152
    %s155 = sphi 0, %s154
    %s169 = sphi 0, %s155
    %s175 = sphi 0, %s177
    %s178 = sphi 0, %s175
    %s179 = sphi 0, %s178
    %s195 = sphi 0, %s179
  $region4: #{gated_layer_forward.3} parent=0 // loop_header_branch
    %16 = sbr.rel (%p14) target = $region8
  $region5: #{gated_layer_forward.3} parent=0 // loop_body
    %s18 = ssub.s32 %s13, 1
    %s19 = ssub.s32 %s13, 2
    %s20 = sadd.s32 %s13, 1
    %s21 = ssub.s32 %s13, %s20
    %p22 = scmp.eq.s32.totalorder %s21, 0
    %s24 = sadd.s32 %s23, 1
    %s25 = scalar_select %p22, %s23, %s24
    %p28 = pneg %p22
    %p29 = scmp.eq.s32.totalorder %s13, 1
    %p30 = por %p28, %p29
    %p31 = scmp.ne.s32.totalorder %s23, %s26
    %p32 = scmp.eq.s32.totalorder %s13, 0
    %p33 = por %p31, %p32
    %p34 = scmp.ne.s32.totalorder %s23, %s26
    %p35 = scmp.eq.s32.totalorder %s18, 1
    %p36 = por %p34, %p35
    %p37 = scmp.ne.s32.totalorder %s26, %s27
    %p38 = scmp.eq.s32.totalorder %s18, 0
    %p39 = por %p37, %p38
    %p40 = scmp.ne.s32.totalorder %s26, %s27
    %p41 = scmp.eq.s32.totalorder %s19, 1
    %p42 = por %p40, %p41
    %p44 = scmp.ne.s32.totalorder %s27, %s43
    %p45 = scmp.eq.s32.totalorder %s19, 0
    %p46 = por %p44, %p45
    %s48 = sadd.s32 %s47, 1
    %p51 = scmp.eq.s32.totalorder %s13, 1
    %p52 = scmp.ne.s32.totalorder %s47, %s49
    %p53 = scmp.eq.s32.totalorder %s13, 0
    %p54 = por %p52, %p53
    %p55 = scmp.ne.s32.totalorder %s47, %s49
    %p56 = scmp.eq.s32.totalorder %s18, 1
    %p57 = por %p55, %p56
    %p58 = scmp.ne.s32.totalorder %s49, %s50
    %p59 = scmp.eq.s32.totalorder %s18, 0
    %p60 = por %p58, %p59
    %p61 = scmp.ne.s32.totalorder %s49, %s50
    %p62 = scmp.eq.s32.totalorder %s19, 1
    %p63 = por %p61, %p62
    %p65 = scmp.ne.s32.totalorder %s50, %s64
    %p66 = scmp.eq.s32.totalorder %s19, 0
    %p67 = por %p65, %p66
    %s69 = sadd.s32 %s68, 1
    %p72 = scmp.eq.s32.totalorder %s13, 1
    %p73 = scmp.ne.s32.totalorder %s68, %s70
    %p74 = scmp.eq.s32.totalorder %s13, 0
    %p75 = por %p73, %p74
    %p76 = scmp.ne.s32.totalorder %s68, %s70
    %p77 = scmp.eq.s32.totalorder %s18, 1
    %p78 = por %p76, %p77
    %p79 = scmp.ne.s32.totalorder %s70, %s71
    %p80 = scmp.eq.s32.totalorder %s18, 0
    %p81 = por %p79, %p80
    %p82 = scmp.ne.s32.totalorder %s70, %s71
    %p83 = scmp.eq.s32.totalorder %s19, 1
    %p84 = por %p82, %p83
    %p86 = scmp.ne.s32.totalorder %s71, %s85
    %p87 = scmp.eq.s32.totalorder %s19, 0
    %p88 = por %p86, %p87
    %s90 = sadd.s32 %s89, 1
    %p93 = scmp.eq.s32.totalorder %s13, 1
    %p94 = scmp.ne.s32.totalorder %s89, %s91
    %p95 = scmp.eq.s32.totalorder %s13, 0
    %p96 = por %p94, %p95
    %p97 = scmp.ne.s32.totalorder %s89, %s91
    %p98 = scmp.eq.s32.totalorder %s18, 1
    %p99 = por %p97, %p98
    %p100 = scmp.ne.s32.totalorder %s91, %s92
    %p101 = scmp.eq.s32.totalorder %s18, 0
    %p102 = por %p100, %p101
    %p103 = scmp.ne.s32.totalorder %s91, %s92
    %p104 = scmp.eq.s32.totalorder %s19, 1
    %p105 = por %p103, %p104
    %p107 = scmp.ne.s32.totalorder %s92, %s106
    %p108 = scmp.eq.s32.totalorder %s19, 0
    %p109 = por %p107, %p108
    %s111 = sadd.s32 %s110, 1
    %p114 = scmp.eq.s32.totalorder %s13, 1
    %p115 = scmp.ne.s32.totalorder %s110, %s112
    %p116 = scmp.eq.s32.totalorder %s13, 0
    %p117 = por %p115, %p116
    %p118 = scmp.ne.s32.totalorder %s110, %s112
    %p119 = scmp.eq.s32.totalorder %s18, 1
    %p120 = por %p118, %p119
    %p121 = scmp.ne.s32.totalorder %s112, %s113
    %p122 = scmp.eq.s32.totalorder %s18, 0
    %p123 = por %p121, %p122
    %p124 = scmp.ne.s32.totalorder %s112, %s113
    %p125 = scmp.eq.s32.totalorder %s19, 1
    %p126 = por %p124, %p125
    %p128 = scmp.ne.s32.totalorder %s113, %s127
    %p129 = scmp.eq.s32.totalorder %s19, 0
    %p130 = por %p128, %p129
    %s132 = sadd.s32 %s131, 1
    %p135 = scmp.eq.s32.totalorder %s13, 1
    %p136 = scmp.ne.s32.totalorder %s131, %s133
    %p137 = scmp.eq.s32.totalorder %s13, 0
    %p138 = por %p136, %p137
    %p139 = scmp.ne.s32.totalorder %s131, %s133
    %p140 = scmp.eq.s32.totalorder %s18, 1
    %p141 = por %p139, %p140
    %p142 = scmp.ne.s32.totalorder %s133, %s134
    %p143 = scmp.eq.s32.totalorder %s18, 0
    %p144 = por %p142, %p143
    %p145 = scmp.ne.s32.totalorder %s133, %s134
    %p146 = scmp.eq.s32.totalorder %s19, 1
    %p147 = por %p145, %p146
    %p149 = scmp.ne.s32.totalorder %s134, %s148
    %p150 = scmp.eq.s32.totalorder %s19, 0
    %p151 = por %p149, %p150
    %s153 = sadd.s32 %s152, 1
    %p156 = scmp.eq.s32.totalorder %s13, 1
    %p157 = scmp.ne.s32.totalorder %s152, %s154
    %p158 = scmp.eq.s32.totalorder %s13, 0
    %p159 = por %p157, %p158
    %p160 = scmp.ne.s32.totalorder %s152, %s154
    %p161 = scmp.eq.s32.totalorder %s18, 1
    %p162 = por %p160, %p161
    %p163 = scmp.ne.s32.totalorder %s154, %s155
    %p164 = scmp.eq.s32.totalorder %s18, 0
    %p165 = por %p163, %p164
    %p166 = scmp.ne.s32.totalorder %s154, %s155
    %p167 = scmp.eq.s32.totalorder %s19, 1
    %p168 = por %p166, %p167
    %p170 = scmp.ne.s32.totalorder %s155, %s169
    %p171 = scmp.eq.s32.totalorder %s19, 0
    %p172 = por %p170, %p171
    %s173 = ssub.s32 %s13, %s20
    %p174 = scmp.eq.s32.totalorder %s173, 0
    %s176 = sadd.s32 %s175, 1
    %s177 = scalar_select %p174, %s175, %s176
    %p180 = pneg %p174
    %p181 = scmp.eq.s32.totalorder %s13, 1
    %p182 = por %p180, %p181
    %p183 = scmp.ne.s32.totalorder %s175, %s178
    %p184 = scmp.eq.s32.totalorder %s13, 0
    %p185 = por %p183, %p184
    %p186 = scmp.ne.s32.totalorder %s175, %s178
    %p187 = scmp.eq.s32.totalorder %s18, 1
    %p188 = por %p186, %p187
    %p189 = scmp.ne.s32.totalorder %s178, %s179
    %p190 = scmp.eq.s32.totalorder %s18, 0
    %p191 = por %p189, %p190
    %p192 = scmp.ne.s32.totalorder %s178, %s179
    %p193 = scmp.eq.s32.totalorder %s19, 1
    %p194 = por %p192, %p193
    %p196 = scmp.ne.s32.totalorder %s179, %s195
    %p197 = scmp.eq.s32.totalorder %s19, 0
    %p198 = por %p196, %p197
    %p199 = scmp.le.s32.totalorder 1, %s13
    %p200 = scmp.lt.s32.totalorder %s13, 3
    %p201 = pnand %p199, %p200
    %p202 = pneg %p201
    // Predicated region
    $region9: #{gated_layer_forward.3} parent=5 // pred_check
      _
    $region10: #{gated_layer_forward.3} parent=5 // pred_check_branch
      %204 = sbr.rel (%p201) target = $region12
    $region11: #{gated_layer_forward.3} parent=5 // pred_region
      %s205 = ssub.s32 %s13, 1
      // Predicated region
      $region13: #{gated_layer_forward.3} parent=11 // pred_check
        %p206 = pneg %p60
      $region14: #{gated_layer_forward.3} parent=11 // pred_check_branch
        %208 = sbr.rel (%p206) target = $region16
      $region15: #{gated_layer_forward.3} parent=11 // pred_region
        _
      $region16: #{gated_layer_forward.3} parent=11 // pred_fallthru
        _
      // Predicated region
      $region17: #{gated_layer_forward.3} parent=11 // pred_check
        %p209 = pneg %p81
      $region18: #{gated_layer_forward.3} parent=11 // pred_check_branch
        %211 = sbr.rel (%p209) target = $region20
      $region19: #{gated_layer_forward.3} parent=11 // pred_region
        _
      $region20: #{gated_layer_forward.3} parent=11 // pred_fallthru
        _
      // Predicated region
      $region21: #{gated_layer_forward.3} parent=11 // pred_check
        %p212 = pneg %p102
      $region22: #{gated_layer_forward.3} parent=11 // pred_check_branch
        %214 = sbr.rel (%p212) target = $region24
      $region23: #{gated_layer_forward.3} parent=11 // pred_region
        _
      $region24: #{gated_layer_forward.3} parent=11 // pred_fallthru
        _
      // Predicated region
      $region25: #{gated_layer_forward.3} parent=11 // pred_check
        %p215 = pneg %p123
      $region26: #{gated_layer_forward.3} parent=11 // pred_check_branch
        %217 = sbr.rel (%p215) target = $region28
      $region27: #{gated_layer_forward.3} parent=11 // pred_region
        _
      $region28: #{gated_layer_forward.3} parent=11 // pred_fallthru
        _
      // Predicated region
      $region29: #{gated_layer_forward.3} parent=11 // pred_check
        %p218 = pneg %p144
      $region30: #{gated_layer_forward.3} parent=11 // pred_check_branch
        %220 = sbr.rel (%p218) target = $region32
      $region31: #{gated_layer_forward.3} parent=11 // pred_region
        _
      $region32: #{gated_layer_forward.3} parent=11 // pred_fallthru
        _
      // Predicated region
      $region33: #{gated_layer_forward.3} parent=11 // pred_check
        %p221 = pneg %p165
      $region34: #{gated_layer_forward.3} parent=11 // pred_check_branch
        %223 = sbr.rel (%p221) target = $region36
      $region35: #{gated_layer_forward.3} parent=11 // pred_region
        _
      $region36: #{gated_layer_forward.3} parent=11 // pred_fallthru
        _
    $region12: #{gated_layer_forward.3} parent=5 // pred_fallthru
      _
    %p224 = scmp.lt.s32.totalorder %s13, 2
    // Predicated region
    $region37: #{gated_layer_forward.3} parent=5 // pred_check
      %p225 = pneg %p224
    $region38: #{gated_layer_forward.3} parent=5 // pred_check_branch
      %227 = sbr.rel (%p225) target = $region40
    $region39: #{gated_layer_forward.3} parent=5 // pred_region
      // Predicated region
      $region41: #{gated_layer_forward.3} parent=39 // pred_check
        %p228 = pneg %p33
      $region42: #{gated_layer_forward.3} parent=39 // pred_check_branch
        %230 = sbr.rel (%p228) target = $region44
      $region43: #{gated_layer_forward.3} parent=39 // pred_region
        %p231 = scmp.lt.s32.totalorder %s13, 1
        %s232 = scalar_select %p231, %s13, 1
        %s233 = smul.addr %s232, 8
        %s234 = smul.addr %s233, 4
        %s235 = scalar_lea.vmem %s0, %s234
      $region44: #{gated_layer_forward.3} parent=39 // pred_fallthru
        _
    $region40: #{gated_layer_forward.3} parent=5 // pred_fallthru
      _
    %p236 = scmp.le.s32.totalorder 1, %s13
    %p237 = scmp.lt.s32.totalorder %s13, 3
    %p238 = pnand %p236, %p237
    %p239 = pneg %p238
    // Predicated region
    $region45: #{gated_layer_forward.3} parent=5 // pred_check
      _
    $region46: #{gated_layer_forward.3} parent=5 // pred_check_branch
      %241 = sbr.rel (%p238) target = $region48
    $region47: #{gated_layer_forward.3} parent=5 // pred_region
      %s242 = ssub.s32 %s13, 1
      %p243 = scmp.lt.s32.totalorder %s18, 1
      %s244 = scalar_select %p243, %s18, 1
      %s245 = smul.addr %s244, 8
      %s246 = smul.addr %s245, 4
      %s247 = scalar_lea.vmem %s0, %s246
      %p248 = pneg %p39
      %p249 = pneg %p36
      %p250 = pneg %p60
      %p251 = pneg %p57
      %p252 = pneg %p81
      %p253 = pneg %p78
      %p254 = pneg %p102
      %p255 = pneg %p99
      %p256 = pneg %p123
      %p257 = pneg %p120
      %p258 = pneg %p144
      %p259 = pneg %p141
      %p260 = pneg %p165
      %p261 = pneg %p162
      %p262 = pneg %p191
      %p263 = pneg %p188
      %p264 = scmp.lt.s32.totalorder %s18, 1
      %s265 = scalar_select %p264, %s18, 1
      %s266 = smul.addr %s265, 8
      %s267 = smul.addr %s266, 8
      %s268 = scalar_lea.vmem %s7, %s267
      %p269 = scmp.lt.s32.totalorder %s18, 1
      %s270 = scalar_select %p269, %s18, 1
      %s271 = smul.addr %s270, 8
      %s272 = smul.addr %s271, 4
      %s273 = scalar_lea.vmem %s0, %s272
      %p274 = scmp.lt.s32.totalorder %s18, 1
      %s275 = scalar_select %p274, %s18, 1
      %s276 = smul.addr %s275, 8
      %s277 = smul.addr %s276, 8
      %s278 = scalar_lea.vmem %s7, %s277
      %v280 = vlaneseq
      %v281 = vshrl.u32 %v280, 7
      %v282 = vadd.s32 %v281, 8
      %v283 = vadd.s32 %v281, 16
      %v284 = vadd.s32 %v281, 24
      %v285 = vadd.s32 %v281, 32
      %v286 = vadd.s32 %v281, 40
      %v287 = vadd.s32 %v281, 48
      %v288 = vadd.s32 %v281, 56
      %v289 = vand.u32 %v281, 63
      %v290 = vand.u32 %v282, 63
      %v291 = vand.u32 %v283, 63
      %v292 = vand.u32 %v284, 63
      %v293 = vand.u32 %v285, 63
      %v294 = vand.u32 %v286, 63
      %v295 = vand.u32 %v287, 63
      %v296 = vand.u32 %v288, 63
      %v297 = vld [vmem:[%s1] sm:$0x1]
      %v298 = vld [vmem:[%s1 + $0x1] sm:$0x1]
      %v299 = vld [vmem:[%s1 + $0x2] sm:$0x1]
      %v300 = vld [vmem:[%s2] sm:$0x1]
      %v301 = vld [vmem:[%s3] sm:$0xf]
      %v302 = vld [vmem:[%s3 + $0x4] sm:$0xf]
      %v303 = vld [vmem:[%s4] sm:$0x1]
      %vm304 = vcmp.lt.s32.totalorder %v281, 16
      %vm305 = vcmp.lt.s32.totalorder %v282, 16
      %vm306 = vcmp.lt.s32.totalorder %v283, 16
      %vm307 = vcmp.lt.s32.totalorder %v284, 16
      %vm308 = vcmp.lt.s32.totalorder %v285, 16
      %vm309 = vcmp.lt.s32.totalorder %v286, 16
      %vm310 = vcmp.lt.s32.totalorder %v287, 16
      %vm311 = vcmp.lt.s32.totalorder %v288, 16
      %v312 = vld [vmem:[%s273] sm:$0xf]
      %v313 = vld [vmem:[%s273 + $0x4] sm:$0xf]
      %v314 = vld [vmem:[%s273 + $0x8] sm:$0xf]
      %v315 = vld [vmem:[%s273 + $0xc] sm:$0xf]
      %v316 = vld [vmem:[%s273 + $0x10] sm:$0xf]
      %v317 = vld [vmem:[%s273 + $0x14] sm:$0xf]
      %v318 = vld [vmem:[%s273 + $0x18] sm:$0xf]
      %v319 = vld [vmem:[%s273 + $0x1c] sm:$0xf]
      %v320 = vunpack.c.l.bf16 %v312
      %v321 = vunpack.c.l.bf16 %v313
      %v322 = vunpack.c.l.bf16 %v314
      %v323 = vunpack.c.l.bf16 %v315
      %v324 = vunpack.c.l.bf16 %v316
      %v325 = vunpack.c.l.bf16 %v317
      %v326 = vunpack.c.l.bf16 %v318
      %v327 = vunpack.c.l.bf16 %v319
      %vm328 = vcmp.eq.s32.totalorder %v281, 0
      %vm329 = vcmp.eq.s32.totalorder %v282, 0
      %vm330 = vcmp.eq.s32.totalorder %v283, 0
      %vm331 = vcmp.eq.s32.totalorder %v284, 0
      %vm332 = vcmp.eq.s32.totalorder %v285, 0
      %vm333 = vcmp.eq.s32.totalorder %v286, 0
      %vm334 = vcmp.eq.s32.totalorder %v287, 0
      %vm335 = vcmp.eq.s32.totalorder %v288, 0
      %v336 = vrot.slane %v320, 7
      %v337 = vrot.slane %v321, 7
      %v338 = vrot.slane %v322, 7
      %v339 = vrot.slane %v323, 7
      %v340 = vrot.slane %v324, 7
      %v341 = vrot.slane %v325, 7
      %v342 = vrot.slane %v326, 7
      %v343 = vrot.slane %v327, 7
      %vm344 = vcmp.lt.s32.totalorder %v281, 1
      %v345 = vsel %vm344, %v342, %v343
      %v346 = vsel %vm344, %v341, %v342
      %v347 = vsel %vm344, %v340, %v341
      %v348 = vsel %vm344, %v339, %v340
      %v349 = vsel %vm344, %v338, %v339
      %v350 = vsel %vm344, %v337, %v338
      %v351 = vsel %vm344, %v336, %v337
      %v352 = vsel %vm344, %v343, %v336
      %v353 = vsel %vm328, 0.0, %v352
      %v354 = vsel %vm329, 0.0, %v351
      %v355 = vsel %vm330, 0.0, %v350
      %v356 = vsel %vm331, 0.0, %v349
      %v357 = vsel %vm332, 0.0, %v348
      %v358 = vsel %vm333, 0.0, %v347
      %v359 = vsel %vm334, 0.0, %v346
      %v360 = vsel %vm335, 0.0, %v345
      %vm361 = vcmp.eq.s32.totalorder %v281, 15
      %vm362 = vcmp.eq.s32.totalorder %v282, 15
      %vm363 = vcmp.eq.s32.totalorder %v283, 15
      %vm364 = vcmp.eq.s32.totalorder %v284, 15
      %vm365 = vcmp.eq.s32.totalorder %v285, 15
      %vm366 = vcmp.eq.s32.totalorder %v286, 15
      %vm367 = vcmp.eq.s32.totalorder %v287, 15
      %vm368 = vcmp.eq.s32.totalorder %v288, 15
      %v369 = vrot.slane %v320, 1
      %v370 = vrot.slane %v321, 1
      %v371 = vrot.slane %v322, 1
      %v372 = vrot.slane %v323, 1
      %v373 = vrot.slane %v324, 1
      %v374 = vrot.slane %v325, 1
      %v375 = vrot.slane %v326, 1
      %v376 = vrot.slane %v327, 1
      %vm377 = vcmp.lt.s32.totalorder %v281, 7
      %v378 = vsel %vm377, %v375, %v376
      %v379 = vsel %vm377, %v374, %v375
      %v380 = vsel %vm377, %v373, %v374
      %v381 = vsel %vm377, %v372, %v373
      %v382 = vsel %vm377, %v371, %v372
      %v383 = vsel %vm377, %v370, %v371
      %v384 = vsel %vm377, %v369, %v370
      %v385 = vsel %vm377, %v376, %v369
      %v386 = vsel %vm361, 0.0, %v384
      %v387 = vsel %vm362, 0.0, %v383
      %v388 = vsel %vm363, 0.0, %v382
      %v389 = vsel %vm364, 0.0, %v381
      %v390 = vsel %vm365, 0.0, %v380
      %v391 = vsel %vm366, 0.0, %v379
      %v392 = vsel %vm367, 0.0, %v378
      %v393 = vsel %vm368, 0.0, %v385
      %v394 = vlaneseq
      %v395 = vshrl.u32 %v394, 7
      %v396 = vsub.s32 0, %v395
      %v397 = vrot.slane %v297, %v396
      %v398 = vmul.f32 %v353, %v397
      %v399 = vmul.f32 %v354, %v397
      %v400 = vmul.f32 %v355, %v397
      %v401 = vmul.f32 %v356, %v397
      %v402 = vmul.f32 %v357, %v397
      %v403 = vmul.f32 %v358, %v397
      %v404 = vmul.f32 %v359, %v397
      %v405 = vmul.f32 %v360, %v397
      %v406 = vlaneseq
      %v407 = vshrl.u32 %v406, 7
      %v408 = vsub.s32 0, %v407
      %v409 = vrot.slane %v298, %v408
      %v410 = vmul.f32 %v320, %v409
      %v411 = vmul.f32 %v321, %v409
      %v412 = vmul.f32 %v322, %v409
      %v413 = vmul.f32 %v323, %v409
      %v414 = vmul.f32 %v324, %v409
      %v415 = vmul.f32 %v325, %v409
      %v416 = vmul.f32 %v326, %v409
      %v417 = vmul.f32 %v327, %v409
      %v418 = vadd.f32 %v398, %v410
      %v419 = vadd.f32 %v399, %v411
      %v420 = vadd.f32 %v400, %v412
      %v421 = vadd.f32 %v401, %v413
      %v422 = vadd.f32 %v402, %v414
      %v423 = vadd.f32 %v403, %v415
      %v424 = vadd.f32 %v404, %v416
      %v425 = vadd.f32 %v405, %v417
      %v426 = vlaneseq
      %v427 = vshrl.u32 %v426, 7
      %v428 = vsub.s32 0, %v427
      %v429 = vrot.slane %v299, %v428
      %v430 = vmul.f32 %v386, %v429
      %v431 = vmul.f32 %v387, %v429
      %v432 = vmul.f32 %v388, %v429
      %v433 = vmul.f32 %v389, %v429
      %v434 = vmul.f32 %v390, %v429
      %v435 = vmul.f32 %v391, %v429
      %v436 = vmul.f32 %v392, %v429
      %v437 = vmul.f32 %v393, %v429
      %v438 = vadd.f32 %v418, %v430
      %v439 = vadd.f32 %v419, %v431
      %v440 = vadd.f32 %v420, %v432
      %v441 = vadd.f32 %v421, %v433
      %v442 = vadd.f32 %v422, %v434
      %v443 = vadd.f32 %v423, %v435
      %v444 = vadd.f32 %v424, %v436
      %v445 = vadd.f32 %v425, %v437
      %v447 = vlaneseq
      %v448 = vshrl.u32 %v447, 7
      %v449 = vsub.s32 0, %v448
      %v450 = vrot.slane %v300, %v449
      %v452 = vadd.f32 %v438, %v450
      %v453 = vadd.f32 %v439, %v450
      %v454 = vadd.f32 %v440, %v450
      %v455 = vadd.f32 %v441, %v450
      %v456 = vadd.f32 %v442, %v450
      %v457 = vadd.f32 %v443, %v450
      %v458 = vadd.f32 %v444, %v450
      %v459 = vadd.f32 %v445, %v450
      %v460 = vxor.u32 %v452, 2147483648
      %v461 = vxor.u32 %v453, 2147483648
      %v462 = vxor.u32 %v454, 2147483648
      %v463 = vxor.u32 %v455, 2147483648
      %v464 = vxor.u32 %v456, 2147483648
      %v465 = vxor.u32 %v457, 2147483648
      %v466 = vxor.u32 %v458, 2147483648
      %v467 = vxor.u32 %v459, 2147483648
      %v468 = vmul.f32 %v460, 1.442695
      %v469 = vpow.pop %v468
      %v470 = vmul.f32 %v461, 1.442695
      %v471 = vpow.pop %v470
      %v472 = vmul.f32 %v462, 1.442695
      %v473 = vpow.pop %v472
      %v474 = vmul.f32 %v463, 1.442695
      %v475 = vpow.pop %v474
      %v476 = vmul.f32 %v464, 1.442695
      %v477 = vpow.pop %v476
      %v478 = vmul.f32 %v465, 1.442695
      %v479 = vpow.pop %v478
      %v480 = vmul.f32 %v466, 1.442695
      %v481 = vpow.pop %v480
      %v482 = vmul.f32 %v467, 1.442695
      %v483 = vpow.pop %v482
      %v484 = vadd.f32 %v469, 1.0
      %v485 = vadd.f32 %v471, 1.0
      %v486 = vadd.f32 %v473, 1.0
      %v487 = vadd.f32 %v475, 1.0
      %v488 = vadd.f32 %v477, 1.0
      %v489 = vadd.f32 %v479, 1.0
      %v490 = vadd.f32 %v481, 1.0
      %v491 = vadd.f32 %v483, 1.0
      %v492 = vrcp.pop %v484
      %v493 = vmul.f32 1.0, %v492
      %v494 = vrcp.pop %v485
      %v495 = vmul.f32 1.0, %v494
      %v496 = vrcp.pop %v486
      %v497 = vmul.f32 1.0, %v496
      %v498 = vrcp.pop %v487
      %v499 = vmul.f32 1.0, %v498
      %v500 = vrcp.pop %v488
      %v501 = vmul.f32 1.0, %v500
      %v502 = vrcp.pop %v489
      %v503 = vmul.f32 1.0, %v502
      %v504 = vrcp.pop %v490
      %v505 = vmul.f32 1.0, %v504
      %v506 = vrcp.pop %v491
      %v507 = vmul.f32 1.0, %v506
      %v508 = vmul.f32 %v452, %v493
      %v509 = vmul.f32 %v453, %v495
      %v510 = vmul.f32 %v454, %v497
      %v511 = vmul.f32 %v455, %v499
      %v512 = vmul.f32 %v456, %v501
      %v513 = vmul.f32 %v457, %v503
      %v514 = vmul.f32 %v458, %v505
      %v515 = vmul.f32 %v459, %v507
      %v516 = vpack.c.bf16 %v509, %v508
      %v517 = vpack.c.bf16 %v511, %v510
      %v518 = vpack.c.bf16 %v513, %v512
      %v519 = vpack.c.bf16 %v515, %v514
      %v521 = vlaneseq
      %v522 = vshrl.u32 %v521, 7
      %v523 = vsub.s32 0, %v522
      %v524 = vrot.slane %v303, %v523
      %v528 = vunpack.c.l.b16 %v301
      %v529 = vunpack.c.l.b16 %v302
      %v530 = vpack.c.b16 %v529, %v528
      %vm532 = vcmask 130048
      %v534 = vsel %vm532, %v516, 0
      %v537 = vsel %vm532, %v517, 0
      %v540 = vsel %vm532, %v518, 0
      %v543 = vsel %vm532, %v519, 0
      %545 = vmatprep.subr.bf16.mxu0 0
      %546 = vmatpush1.bf16.msra.mxu0 %v530
      %547 = vmatprep.subr.bf16.mxu0 0
      %548 = vmatpush1.bf16.msra.mxu0 0
      %549 = vmatprep.subr.bf16.mxu0 0
      %550 = vmatpush1.bf16.msra.mxu0 0
      %551 = vmatprep.subr.bf16.mxu0 0
      %552 = vmatpush1.bf16.msra.mxu0 0
      %553 = vmatprep.subr.bf16.mxu0 0
      %554 = vmatpush1.bf16.msra.mxu0 0
      %555 = vmatprep.subr.bf16.mxu0 0
      %556 = vmatpush1.bf16.msra.mxu0 0
      %557 = vmatprep.subr.bf16.mxu0 0
      %558 = vmatpush1.bf16.msra.mxu0 0
      %559 = vmatprep.subr.bf16.mxu0 0
      %560 = vmatpush1.bf16.msra.mxu0 0
      %561 = vmatprep.subr.bf16.mxu0 0
      %562 = vmatpush1.bf16.msra.mxu0 0
      %563 = vmatprep.subr.bf16.mxu0 0
      %564 = vmatpush1.bf16.msra.mxu0 0
      %565 = vmatprep.subr.bf16.mxu0 0
      %566 = vmatpush1.bf16.msra.mxu0 0
      %567 = vmatprep.subr.bf16.mxu0 0
      %568 = vmatpush1.bf16.msra.mxu0 0
      %569 = vmatprep.subr.bf16.mxu0 0
      %570 = vmatpush1.bf16.msra.mxu0 0
      %571 = vmatprep.subr.bf16.mxu0 0
      %572 = vmatpush1.bf16.msra.mxu0 0
      %573 = vmatprep.subr.bf16.mxu0 0
      %574 = vmatpush1.bf16.msra.mxu0 0
      %575 = vmatprep.subr.bf16.mxu0 0
      %576 = vmatpush1.bf16.msra.mxu0 0
      %577 = vmatprep.mubr.bf16.mxu0 0
      %578 = vmatmul.mubr.bf16.gmra.mrb[0].mxu0 %v534
      %v579 = vpop.f32.mrb[0].mxu0
      %v580 = vadd.f32 %v524, %v579
      %v581 = vpop.f32.mrb[0].mxu0
      %v582 = vpop.f32.mrb[0].mxu0
      %v583 = vadd.f32 %v524, %v582
      %v584 = vpop.f32.mrb[0].mxu0
      %585 = vmatprep.mubr.bf16.mxu0 0
      %586 = vmatmul.mubr.bf16.gmra.mrb[0].mxu0 %v537
      %v587 = vpop.f32.mrb[0].mxu0
      %v588 = vadd.f32 %v524, %v587
      %v589 = vpop.f32.mrb[0].mxu0
      %v590 = vpop.f32.mrb[0].mxu0
      %v591 = vadd.f32 %v524, %v590
      %v592 = vpop.f32.mrb[0].mxu0
      %593 = vmatprep.mubr.bf16.mxu0 0
      %594 = vmatmul.mubr.bf16.gmra.mrb[0].mxu0 %v540
      %v595 = vpop.f32.mrb[0].mxu0
      %v596 = vadd.f32 %v524, %v595
      %v597 = vpop.f32.mrb[0].mxu0
      %v598 = vpop.f32.mrb[0].mxu0
      %v599 = vadd.f32 %v524, %v598
      %v600 = vpop.f32.mrb[0].mxu0
      %601 = vmatprep.mubr.bf16.mxu0 0
      %602 = vmatmul.mubr.bf16.gmra.mrb[0].mxu0 %v543
      %v603 = vpop.f32.mrb[0].mxu0
      %v604 = vadd.f32 %v524, %v603
      %v605 = vpop.f32.mrb[0].mxu0
      %v606 = vpop.f32.mrb[0].mxu0
      %v607 = vadd.f32 %v524, %v606
      %v608 = vpop.f32.mrb[0].mxu0
      %609 = vdwg.mxu0
      %v610 = vxor.u32 %v580, 2147483648
      %v611 = vxor.u32 %v583, 2147483648
      %v612 = vxor.u32 %v588, 2147483648
      %v613 = vxor.u32 %v591, 2147483648
      %v614 = vxor.u32 %v596, 2147483648
      %v615 = vxor.u32 %v599, 2147483648
      %v616 = vxor.u32 %v604, 2147483648
      %v617 = vxor.u32 %v607, 2147483648
      %v618 = vmul.f32 %v610, 1.442695
      %v619 = vpow.pop %v618
      %v620 = vmul.f32 %v611, 1.442695
      %v621 = vpow.pop %v620
      %v622 = vmul.f32 %v612, 1.442695
      %v623 = vpow.pop %v622
      %v624 = vmul.f32 %v613, 1.442695
      %v625 = vpow.pop %v624
      %v626 = vmul.f32 %v614, 1.442695
      %v627 = vpow.pop %v626
      %v628 = vmul.f32 %v615, 1.442695
      %v629 = vpow.pop %v628
      %v630 = vmul.f32 %v616, 1.442695
      %v631 = vpow.pop %v630
      %v632 = vmul.f32 %v617, 1.442695
      %v633 = vpow.pop %v632
      %v634 = vadd.f32 %v619, 1.0
      %v635 = vadd.f32 %v621, 1.0
      %v636 = vadd.f32 %v623, 1.0
      %v637 = vadd.f32 %v625, 1.0
      %v638 = vadd.f32 %v627, 1.0
      %v639 = vadd.f32 %v629, 1.0
      %v640 = vadd.f32 %v631, 1.0
      %v641 = vadd.f32 %v633, 1.0
      %v642 = vrcp.pop %v634
      %v643 = vmul.f32 1.0, %v642
      %v644 = vrcp.pop %v635
      %v645 = vmul.f32 1.0, %v644
      %v646 = vrcp.pop %v636
      %v647 = vmul.f32 1.0, %v646
      %v648 = vrcp.pop %v637
      %v649 = vmul.f32 1.0, %v648
      %v650 = vrcp.pop %v638
      %v651 = vmul.f32 1.0, %v650
      %v652 = vrcp.pop %v639
      %v653 = vmul.f32 1.0, %v652
      %v654 = vrcp.pop %v640
      %v655 = vmul.f32 1.0, %v654
      %v656 = vrcp.pop %v641
      %v657 = vmul.f32 1.0, %v656
      %v658 = vsub.f32 1.0, %v643
      %v659 = vsub.f32 1.0, %v645
      %v660 = vsub.f32 1.0, %v647
      %v661 = vsub.f32 1.0, %v649
      %v662 = vsub.f32 1.0, %v651
      %v663 = vsub.f32 1.0, %v653
      %v664 = vsub.f32 1.0, %v655
      %v665 = vsub.f32 1.0, %v657
      %674 = vrot.lane.b32.xlu0 %v580, 16
      %v675 = vpop.permute.xlu0 %674
      %676 = vrot.lane.b32.xlu0 %v583, 16
      %v677 = vpop.permute.xlu0 %676
      %678 = vrot.lane.b32.xlu0 %v588, 16
      %v679 = vpop.permute.xlu0 %678
      %680 = vrot.lane.b32.xlu0 %v591, 16
      %v681 = vpop.permute.xlu0 %680
      %682 = vrot.lane.b32.xlu0 %v596, 16
      %v683 = vpop.permute.xlu0 %682
      %684 = vrot.lane.b32.xlu0 %v599, 16
      %v685 = vpop.permute.xlu0 %684
      %686 = vrot.lane.b32.xlu0 %v604, 16
      %v687 = vpop.permute.xlu0 %686
      %688 = vrot.lane.b32.xlu0 %v607, 16
      %v689 = vpop.permute.xlu0 %688
      %v698 = vmul.f32 %v643, %v675
      %v699 = vmul.f32 %v645, %v677
      %v700 = vmul.f32 %v647, %v679
      %v701 = vmul.f32 %v649, %v681
      %v702 = vmul.f32 %v651, %v683
      %v703 = vmul.f32 %v653, %v685
      %v704 = vmul.f32 %v655, %v687
      %v705 = vmul.f32 %v657, %v689
      %v706 = vsel %vm304, %v658, 0.0
      %v707 = vsel %vm305, %v659, 0.0
      %v708 = vsel %vm306, %v660, 0.0
      %v709 = vsel %vm307, %v661, 0.0
      %v710 = vsel %vm308, %v662, 0.0
      %v711 = vsel %vm309, %v663, 0.0
      %v712 = vsel %vm310, %v664, 0.0
      %v713 = vsel %vm311, %v665, 0.0
      %v714 = vsel %vm304, %v698, 0.0
      %v715 = vsel %vm305, %v699, 0.0
      %v716 = vsel %vm306, %v700, 0.0
      %v717 = vsel %vm307, %v701, 0.0
      %v718 = vsel %vm308, %v702, 0.0
      %v719 = vsel %vm309, %v703, 0.0
      %v720 = vsel %vm310, %v704, 0.0
      %v721 = vsel %vm311, %v705, 0.0
      %vm722 = vcmp.ge.s32.totalorder %v289, 1
      %vm723 = vcmp.ge.s32.totalorder %v290, 1
      %vm724 = vcmp.ge.s32.totalorder %v291, 1
      %vm725 = vcmp.ge.s32.totalorder %v292, 1
      %vm726 = vcmp.ge.s32.totalorder %v293, 1
      %vm727 = vcmp.ge.s32.totalorder %v294, 1
      %vm728 = vcmp.ge.s32.totalorder %v295, 1
      %vm729 = vcmp.ge.s32.totalorder %v296, 1
      %738 = vrot.lane.b32.xlu0 %v706, 112
      %v739 = vpop.permute.xlu0 %738
      %740 = vrot.lane.b32.xlu0 %v707, 112
      %v741 = vpop.permute.xlu0 %740
      %742 = vrot.lane.b32.xlu0 %v708, 112
      %v743 = vpop.permute.xlu0 %742
      %744 = vrot.lane.b32.xlu0 %v709, 112
      %v745 = vpop.permute.xlu0 %744
      %746 = vrot.lane.b32.xlu0 %v710, 112
      %v747 = vpop.permute.xlu0 %746
      %748 = vrot.lane.b32.xlu0 %v711, 112
      %v749 = vpop.permute.xlu0 %748
      %750 = vrot.lane.b32.xlu0 %v712, 112
      %v751 = vpop.permute.xlu0 %750
      %752 = vrot.lane.b32.xlu0 %v713, 112
      %v753 = vpop.permute.xlu0 %752
      %v762 = vrot.slane %v739, 7
      %v763 = vrot.slane %v741, 7
      %v764 = vrot.slane %v743, 7
      %v765 = vrot.slane %v745, 7
      %v766 = vrot.slane %v747, 7
      %v767 = vrot.slane %v749, 7
      %v768 = vrot.slane %v751, 7
      %v769 = vrot.slane %v753, 7
      %v770 = vsel %vm344, %v768, %v769
      %v771 = vsel %vm344, %v767, %v768
      %v772 = vsel %vm344, %v766, %v767
      %v773 = vsel %vm344, %v765, %v766
      %v774 = vsel %vm344, %v764, %v765
      %v775 = vsel %vm344, %v763, %v764
      %v776 = vsel %vm344, %v762, %v763
      %v777 = vsel %vm344, %v769, %v762
      %v778 = vsel %vm722, %v777, 1.0
      %v779 = vsel %vm723, %v776, 1.0
      %v780 = vsel %vm724, %v775, 1.0
      %v781 = vsel %vm725, %v774, 1.0
      %v782 = vsel %vm726, %v773, 1.0
      %v783 = vsel %vm727, %v772, 1.0
      %v784 = vsel %vm728, %v771, 1.0
      %v785 = vsel %vm729, %v770, 1.0
      %794 = vrot.lane.b32.xlu0 %v714, 112
      %v795 = vpop.permute.xlu0 %794
      %796 = vrot.lane.b32.xlu0 %v715, 112
      %v797 = vpop.permute.xlu0 %796
      %798 = vrot.lane.b32.xlu0 %v716, 112
      %v799 = vpop.permute.xlu0 %798
      %800 = vrot.lane.b32.xlu0 %v717, 112
      %v801 = vpop.permute.xlu0 %800
      %802 = vrot.lane.b32.xlu0 %v718, 112
      %v803 = vpop.permute.xlu0 %802
      %804 = vrot.lane.b32.xlu0 %v719, 112
      %v805 = vpop.permute.xlu0 %804
      %806 = vrot.lane.b32.xlu0 %v720, 112
      %v807 = vpop.permute.xlu0 %806
      %808 = vrot.lane.b32.xlu0 %v721, 112
      %v809 = vpop.permute.xlu0 %808
      %v818 = vrot.slane %v795, 7
      %v819 = vrot.slane %v797, 7
      %v820 = vrot.slane %v799, 7
      %v821 = vrot.slane %v801, 7
      %v822 = vrot.slane %v803, 7
      %v823 = vrot.slane %v805, 7
      %v824 = vrot.slane %v807, 7
      %v825 = vrot.slane %v809, 7
      %v826 = vsel %vm344, %v824, %v825
      %v827 = vsel %vm344, %v823, %v824
      %v828 = vsel %vm344, %v822, %v823
      %v829 = vsel %vm344, %v821, %v822
      %v830 = vsel %vm344, %v820, %v821
      %v831 = vsel %vm344, %v819, %v820
      %v832 = vsel %vm344, %v818, %v819
      %v833 = vsel %vm344, %v825, %v818
      %v834 = vsel %vm722, %v833, 0.0
      %v835 = vsel %vm723, %v832, 0.0
      %v836 = vsel %vm724, %v831, 0.0
      %v837 = vsel %vm725, %v830, 0.0
      %v838 = vsel %vm726, %v829, 0.0
      %v839 = vsel %vm727, %v828, 0.0
      %v840 = vsel %vm728, %v827, 0.0
      %v841 = vsel %vm729, %v826, 0.0
      %850 = vrot.lane.b32.xlu0 %v834, 16
      %v851 = vpop.permute.xlu0 %850
      %852 = vrot.lane.b32.xlu0 %v835, 16
      %v853 = vpop.permute.xlu0 %852
      %854 = vrot.lane.b32.xlu0 %v836, 16
      %v855 = vpop.permute.xlu0 %854
      %856 = vrot.lane.b32.xlu0 %v837, 16
      %v857 = vpop.permute.xlu0 %856
      %858 = vrot.lane.b32.xlu0 %v838, 16
      %v859 = vpop.permute.xlu0 %858
      %860 = vrot.lane.b32.xlu0 %v839, 16
      %v861 = vpop.permute.xlu0 %860
      %862 = vrot.lane.b32.xlu0 %v840, 16
      %v863 = vpop.permute.xlu0 %862
      %864 = vrot.lane.b32.xlu0 %v841, 16
      %v865 = vpop.permute.xlu0 %864
      %v874 = vmul.f32 %v706, %v851
      %v875 = vmul.f32 %v707, %v853
      %v876 = vmul.f32 %v708, %v855
      %v877 = vmul.f32 %v709, %v857
      %v878 = vmul.f32 %v710, %v859
      %v879 = vmul.f32 %v711, %v861
      %v880 = vmul.f32 %v712, %v863
      %v881 = vmul.f32 %v713, %v865
      %v882 = vadd.f32 %v714, %v874
      %v883 = vadd.f32 %v715, %v875
      %v884 = vadd.f32 %v716, %v876
      %v885 = vadd.f32 %v717, %v877
      %v886 = vadd.f32 %v718, %v878
      %v887 = vadd.f32 %v719, %v879
      %v888 = vadd.f32 %v720, %v880
      %v889 = vadd.f32 %v721, %v881
      %898 = vrot.lane.b32.xlu0 %v778, 16
      %v899 = vpop.permute.xlu0 %898
      %900 = vrot.lane.b32.xlu0 %v779, 16
      %v901 = vpop.permute.xlu0 %900
      %902 = vrot.lane.b32.xlu0 %v780, 16
      %v903 = vpop.permute.xlu0 %902
      %904 = vrot.lane.b32.xlu0 %v781, 16
      %v905 = vpop.permute.xlu0 %904
      %906 = vrot.lane.b32.xlu0 %v782, 16
      %v907 = vpop.permute.xlu0 %906
      %908 = vrot.lane.b32.xlu0 %v783, 16
      %v909 = vpop.permute.xlu0 %908
      %910 = vrot.lane.b32.xlu0 %v784, 16
      %v911 = vpop.permute.xlu0 %910
      %912 = vrot.lane.b32.xlu0 %v785, 16
      %v913 = vpop.permute.xlu0 %912
      %v922 = vmul.f32 %v706, %v899
      %v923 = vmul.f32 %v707, %v901
      %v924 = vmul.f32 %v708, %v903
      %v925 = vmul.f32 %v709, %v905
      %v926 = vmul.f32 %v710, %v907
      %v927 = vmul.f32 %v711, %v909
      %v928 = vmul.f32 %v712, %v911
      %v929 = vmul.f32 %v713, %v913
      %vm930 = vcmp.ge.s32.totalorder %v289, 2
      %vm931 = vcmp.ge.s32.totalorder %v290, 2
      %vm932 = vcmp.ge.s32.totalorder %v291, 2
      %vm933 = vcmp.ge.s32.totalorder %v292, 2
      %vm934 = vcmp.ge.s32.totalorder %v293, 2
      %vm935 = vcmp.ge.s32.totalorder %v294, 2
      %vm936 = vcmp.ge.s32.totalorder %v295, 2
      %vm937 = vcmp.ge.s32.totalorder %v296, 2
      %946 = vrot.lane.b32.xlu0 %v922, 112
      %v947 = vpop.permute.xlu0 %946
      %948 = vrot.lane.b32.xlu0 %v923, 112
      %v949 = vpop.permute.xlu0 %948
      %950 = vrot.lane.b32.xlu0 %v924, 112
      %v951 = vpop.permute.xlu0 %950
      %952 = vrot.lane.b32.xlu0 %v925, 112
      %v953 = vpop.permute.xlu0 %952
      %954 = vrot.lane.b32.xlu0 %v926, 112
      %v955 = vpop.permute.xlu0 %954
      %956 = vrot.lane.b32.xlu0 %v927, 112
      %v957 = vpop.permute.xlu0 %956
      %958 = vrot.lane.b32.xlu0 %v928, 112
      %v959 = vpop.permute.xlu0 %958
      %960 = vrot.lane.b32.xlu0 %v929, 112
      %v961 = vpop.permute.xlu0 %960
      %v970 = vrot.slane %v947, 6
      %v971 = vrot.slane %v949, 6
      %v972 = vrot.slane %v951, 6
      %v973 = vrot.slane %v953, 6
      %v974 = vrot.slane %v955, 6
      %v975 = vrot.slane %v957, 6
      %v976 = vrot.slane %v959, 6
      %v977 = vrot.slane %v961, 6
      %vm978 = vcmp.lt.s32.totalorder %v281, 2
      %v979 = vsel %vm978, %v976, %v977
      %v980 = vsel %vm978, %v975, %v976
      %v981 = vsel %vm978, %v974, %v975
      %v982 = vsel %vm978, %v973, %v974
      %v983 = vsel %vm978, %v972, %v973
      %v984 = vsel %vm978, %v971, %v972
      %v985 = vsel %vm978, %v970, %v971
      %v986 = vsel %vm978, %v977, %v970
      %v987 = vsel %vm930, %v986, 1.0
      %v988 = vsel %vm931, %v985, 1.0
      %v989 = vsel %vm932, %v984, 1.0
      %v990 = vsel %vm933, %v983, 1.0
      %v991 = vsel %vm934, %v982, 1.0
      %v992 = vsel %vm935, %v981, 1.0
      %v993 = vsel %vm936, %v980, 1.0
      %v994 = vsel %vm937, %v979, 1.0
      %1003 = vrot.lane.b32.xlu0 %v882, 112
      %v1004 = vpop.permute.xlu0 %1003
      %1005 = vrot.lane.b32.xlu0 %v883, 112
      %v1006 = vpop.permute.xlu0 %1005
      %1007 = vrot.lane.b32.xlu0 %v884, 112
      %v1008 = vpop.permute.xlu0 %1007
      %1009 = vrot.lane.b32.xlu0 %v885, 112
      %v1010 = vpop.permute.xlu0 %1009
      %1011 = vrot.lane.b32.xlu0 %v886, 112
      %v1012 = vpop.permute.xlu0 %1011
      %1013 = vrot.lane.b32.xlu0 %v887, 112
      %v1014 = vpop.permute.xlu0 %1013
      %1015 = vrot.lane.b32.xlu0 %v888, 112
      %v1016 = vpop.permute.xlu0 %1015
      %1017 = vrot.lane.b32.xlu0 %v889, 112
      %v1018 = vpop.permute.xlu0 %1017
      %v1027 = vrot.slane %v1004, 6
      %v1028 = vrot.slane %v1006, 6
      %v1029 = vrot.slane %v1008, 6
      %v1030 = vrot.slane %v1010, 6
      %v1031 = vrot.slane %v1012, 6
      %v1032 = vrot.slane %v1014, 6
      %v1033 = vrot.slane %v1016, 6
      %v1034 = vrot.slane %v1018, 6
      %v1035 = vsel %vm978, %v1033, %v1034
      %v1036 = vsel %vm978, %v1032, %v1033
      %v1037 = vsel %vm978, %v1031, %v1032
      %v1038 = vsel %vm978, %v1030, %v1031
      %v1039 = vsel %vm978, %v1029, %v1030
      %v1040 = vsel %vm978, %v1028, %v1029
      %v1041 = vsel %vm978, %v1027, %v1028
      %v1042 = vsel %vm978, %v1034, %v1027
      %v1043 = vsel %vm930, %v1042, 0.0
      %v1044 = vsel %vm931, %v1041, 0.0
      %v1045 = vsel %vm932, %v1040, 0.0
      %v1046 = vsel %vm933, %v1039, 0.0
      %v1047 = vsel %vm934, %v1038, 0.0
      %v1048 = vsel %vm935, %v1037, 0.0
      %v1049 = vsel %vm936, %v1036, 0.0
      %v1050 = vsel %vm937, %v1035, 0.0
      %1059 = vrot.lane.b32.xlu0 %v1043, 16
      %v1060 = vpop.permute.xlu0 %1059
      %1061 = vrot.lane.b32.xlu0 %v1044, 16
      %v1062 = vpop.permute.xlu0 %1061
      %1063 = vrot.lane.b32.xlu0 %v1045, 16
      %v1064 = vpop.permute.xlu0 %1063
      %1065 = vrot.lane.b32.xlu0 %v1046, 16
      %v1066 = vpop.permute.xlu0 %1065
      %1067 = vrot.lane.b32.xlu0 %v1047, 16
      %v1068 = vpop.permute.xlu0 %1067
      %1069 = vrot.lane.b32.xlu0 %v1048, 16
      %v1070 = vpop.permute.xlu0 %1069
      %1071 = vrot.lane.b32.xlu0 %v1049, 16
      %v1072 = vpop.permute.xlu0 %1071
      %1073 = vrot.lane.b32.xlu0 %v1050, 16
      %v1074 = vpop.permute.xlu0 %1073
      %v1083 = vmul.f32 %v922, %v1060
      %v1084 = vmul.f32 %v923, %v1062
      %v1085 = vmul.f32 %v924, %v1064
      %v1086 = vmul.f32 %v925, %v1066
      %v1087 = vmul.f32 %v926, %v1068
      %v1088 = vmul.f32 %v927, %v1070
      %v1089 = vmul.f32 %v928, %v1072
      %v1090 = vmul.f32 %v929, %v1074
      %v1091 = vadd.f32 %v882, %v1083
      %v1092 = vadd.f32 %v883, %v1084
      %v1093 = vadd.f32 %v884, %v1085
      %v1094 = vadd.f32 %v885, %v1086
      %v1095 = vadd.f32 %v886, %v1087
      %v1096 = vadd.f32 %v887, %v1088
      %v1097 = vadd.f32 %v888, %v1089
      %v1098 = vadd.f32 %v889, %v1090
      %1107 = vrot.lane.b32.xlu0 %v987, 16
      %v1108 = vpop.permute.xlu0 %1107
      %1109 = vrot.lane.b32.xlu0 %v988, 16
      %v1110 = vpop.permute.xlu0 %1109
      %1111 = vrot.lane.b32.xlu0 %v989, 16
      %v1112 = vpop.permute.xlu0 %1111
      %1113 = vrot.lane.b32.xlu0 %v990, 16
      %v1114 = vpop.permute.xlu0 %1113
      %1115 = vrot.lane.b32.xlu0 %v991, 16
      %v1116 = vpop.permute.xlu0 %1115
      %1117 = vrot.lane.b32.xlu0 %v992, 16
      %v1118 = vpop.permute.xlu0 %1117
      %1119 = vrot.lane.b32.xlu0 %v993, 16
      %v1120 = vpop.permute.xlu0 %1119
      %1121 = vrot.lane.b32.xlu0 %v994, 16
      %v1122 = vpop.permute.xlu0 %1121
      %v1131 = vmul.f32 %v922, %v1108
      %v1132 = vmul.f32 %v923, %v1110
      %v1133 = vmul.f32 %v924, %v1112
      %v1134 = vmul.f32 %v925, %v1114
      %v1135 = vmul.f32 %v926, %v1116
      %v1136 = vmul.f32 %v927, %v1118
      %v1137 = vmul.f32 %v928, %v1120
      %v1138 = vmul.f32 %v929, %v1122
      %vm1139 = vcmp.ge.s32.totalorder %v289, 4
      %vm1140 = vcmp.ge.s32.totalorder %v290, 4
      %vm1141 = vcmp.ge.s32.totalorder %v291, 4
      %vm1142 = vcmp.ge.s32.totalorder %v292, 4
      %vm1143 = vcmp.ge.s32.totalorder %v293, 4
      %vm1144 = vcmp.ge.s32.totalorder %v294, 4
      %vm1145 = vcmp.ge.s32.totalorder %v295, 4
      %vm1146 = vcmp.ge.s32.totalorder %v296, 4
      %1155 = vrot.lane.b32.xlu0 %v1131, 112
      %v1156 = vpop.permute.xlu0 %1155
      %1157 = vrot.lane.b32.xlu0 %v1132, 112
      %v1158 = vpop.permute.xlu0 %1157
      %1159 = vrot.lane.b32.xlu0 %v1133, 112
      %v1160 = vpop.permute.xlu0 %1159
      %1161 = vrot.lane.b32.xlu0 %v1134, 112
      %v1162 = vpop.permute.xlu0 %1161
      %1163 = vrot.lane.b32.xlu0 %v1135, 112
      %v1164 = vpop.permute.xlu0 %1163
      %1165 = vrot.lane.b32.xlu0 %v1136, 112
      %v1166 = vpop.permute.xlu0 %1165
      %1167 = vrot.lane.b32.xlu0 %v1137, 112
      %v1168 = vpop.permute.xlu0 %1167
      %1169 = vrot.lane.b32.xlu0 %v1138, 112
      %v1170 = vpop.permute.xlu0 %1169
      %v1179 = vrot.slane %v1156, 4
      %v1180 = vrot.slane %v1158, 4
      %v1181 = vrot.slane %v1160, 4
      %v1182 = vrot.slane %v1162, 4
      %v1183 = vrot.slane %v1164, 4
      %v1184 = vrot.slane %v1166, 4
      %v1185 = vrot.slane %v1168, 4
      %v1186 = vrot.slane %v1170, 4
      %vm1187 = vcmp.lt.s32.totalorder %v281, 4
      %v1188 = vsel %vm1187, %v1185, %v1186
      %v1189 = vsel %vm1187, %v1184, %v1185
      %v1190 = vsel %vm1187, %v1183, %v1184
      %v1191 = vsel %vm1187, %v1182, %v1183
      %v1192 = vsel %vm1187, %v1181, %v1182
      %v1193 = vsel %vm1187, %v1180, %v1181
      %v1194 = vsel %vm1187, %v1179, %v1180
      %v1195 = vsel %vm1187, %v1186, %v1179
      %v1196 = vsel %vm1139, %v1195, 1.0
      %v1197 = vsel %vm1140, %v1194, 1.0
      %v1198 = vsel %vm1141, %v1193, 1.0
      %v1199 = vsel %vm1142, %v1192, 1.0
      %v1200 = vsel %vm1143, %v1191, 1.0
      %v1201 = vsel %vm1144, %v1190, 1.0
      %v1202 = vsel %vm1145, %v1189, 1.0
      %v1203 = vsel %vm1146, %v1188, 1.0
      %1212 = vrot.lane.b32.xlu0 %v1091, 112
      %v1213 = vpop.permute.xlu0 %1212
      %1214 = vrot.lane.b32.xlu0 %v1092, 112
      %v1215 = vpop.permute.xlu0 %1214
      %1216 = vrot.lane.b32.xlu0 %v1093, 112
      %v1217 = vpop.permute.xlu0 %1216
      %1218 = vrot.lane.b32.xlu0 %v1094, 112
      %v1219 = vpop.permute.xlu0 %1218
      %1220 = vrot.lane.b32.xlu0 %v1095, 112
      %v1221 = vpop.permute.xlu0 %1220
      %1222 = vrot.lane.b32.xlu0 %v1096, 112
      %v1223 = vpop.permute.xlu0 %1222
      %1224 = vrot.lane.b32.xlu0 %v1097, 112
      %v1225 = vpop.permute.xlu0 %1224
      %1226 = vrot.lane.b32.xlu0 %v1098, 112
      %v1227 = vpop.permute.xlu0 %1226
      %v1236 = vrot.slane %v1213, 4
      %v1237 = vrot.slane %v1215, 4
      %v1238 = vrot.slane %v1217, 4
      %v1239 = vrot.slane %v1219, 4
      %v1240 = vrot.slane %v1221, 4
      %v1241 = vrot.slane %v1223, 4
      %v1242 = vrot.slane %v1225, 4
      %v1243 = vrot.slane %v1227, 4
      %v1244 = vsel %vm1187, %v1242, %v1243
      %v1245 = vsel %vm1187, %v1241, %v1242
      %v1246 = vsel %vm1187, %v1240, %v1241
      %v1247 = vsel %vm1187, %v1239, %v1240
      %v1248 = vsel %vm1187, %v1238, %v1239
      %v1249 = vsel %vm1187, %v1237, %v1238
      %v1250 = vsel %vm1187, %v1236, %v1237
      %v1251 = vsel %vm1187, %v1243, %v1236
      %v1252 = vsel %vm1139, %v1251, 0.0
      %v1253 = vsel %vm1140, %v1250, 0.0
      %v1254 = vsel %vm1141, %v1249, 0.0
      %v1255 = vsel %vm1142, %v1248, 0.0
      %v1256 = vsel %vm1143, %v1247, 0.0
      %v1257 = vsel %vm1144, %v1246, 0.0
      %v1258 = vsel %vm1145, %v1245, 0.0
      %v1259 = vsel %vm1146, %v1244, 0.0
      %1268 = vrot.lane.b32.xlu0 %v1252, 16
      %v1269 = vpop.permute.xlu0 %1268
      %1270 = vrot.lane.b32.xlu0 %v1253, 16
      %v1271 = vpop.permute.xlu0 %1270
      %1272 = vrot.lane.b32.xlu0 %v1254, 16
      %v1273 = vpop.permute.xlu0 %1272
      %1274 = vrot.lane.b32.xlu0 %v1255, 16
      %v1275 = vpop.permute.xlu0 %1274
      %1276 = vrot.lane.b32.xlu0 %v1256, 16
      %v1277 = vpop.permute.xlu0 %1276
      %1278 = vrot.lane.b32.xlu0 %v1257, 16
      %v1279 = vpop.permute.xlu0 %1278
      %1280 = vrot.lane.b32.xlu0 %v1258, 16
      %v1281 = vpop.permute.xlu0 %1280
      %1282 = vrot.lane.b32.xlu0 %v1259, 16
      %v1283 = vpop.permute.xlu0 %1282
      %v1292 = vmul.f32 %v1131, %v1269
      %v1293 = vmul.f32 %v1132, %v1271
      %v1294 = vmul.f32 %v1133, %v1273
      %v1295 = vmul.f32 %v1134, %v1275
      %v1296 = vmul.f32 %v1135, %v1277
      %v1297 = vmul.f32 %v1136, %v1279
      %v1298 = vmul.f32 %v1137, %v1281
      %v1299 = vmul.f32 %v1138, %v1283
      %v1300 = vadd.f32 %v1091, %v1292
      %v1301 = vadd.f32 %v1092, %v1293
      %v1302 = vadd.f32 %v1093, %v1294
      %v1303 = vadd.f32 %v1094, %v1295
      %v1304 = vadd.f32 %v1095, %v1296
      %v1305 = vadd.f32 %v1096, %v1297
      %v1306 = vadd.f32 %v1097, %v1298
      %v1307 = vadd.f32 %v1098, %v1299
      %1316 = vrot.lane.b32.xlu0 %v1196, 16
      %v1317 = vpop.permute.xlu0 %1316
      %1318 = vrot.lane.b32.xlu0 %v1197, 16
      %v1319 = vpop.permute.xlu0 %1318
      %1320 = vrot.lane.b32.xlu0 %v1198, 16
      %v1321 = vpop.permute.xlu0 %1320
      %1322 = vrot.lane.b32.xlu0 %v1199, 16
      %v1323 = vpop.permute.xlu0 %1322
      %1324 = vrot.lane.b32.xlu0 %v1200, 16
      %v1325 = vpop.permute.xlu0 %1324
      %1326 = vrot.lane.b32.xlu0 %v1201, 16
      %v1327 = vpop.permute.xlu0 %1326
      %1328 = vrot.lane.b32.xlu0 %v1202, 16
      %v1329 = vpop.permute.xlu0 %1328
      %1330 = vrot.lane.b32.xlu0 %v1203, 16
      %v1331 = vpop.permute.xlu0 %1330
      %v1340 = vmul.f32 %v1131, %v1317
      %v1341 = vmul.f32 %v1132, %v1319
      %v1342 = vmul.f32 %v1133, %v1321
      %v1343 = vmul.f32 %v1134, %v1323
      %v1344 = vmul.f32 %v1135, %v1325
      %v1345 = vmul.f32 %v1136, %v1327
      %v1346 = vmul.f32 %v1137, %v1329
      %v1347 = vmul.f32 %v1138, %v1331
      %vm1348 = vcmp.ge.s32.totalorder %v289, 8
      %vm1349 = vcmp.ge.s32.totalorder %v290, 8
      %vm1350 = vcmp.ge.s32.totalorder %v291, 8
      %vm1351 = vcmp.ge.s32.totalorder %v292, 8
      %vm1352 = vcmp.ge.s32.totalorder %v293, 8
      %vm1353 = vcmp.ge.s32.totalorder %v294, 8
      %vm1354 = vcmp.ge.s32.totalorder %v295, 8
      %vm1355 = vcmp.ge.s32.totalorder %v296, 8
      %1364 = vrot.lane.b32.xlu0 %v1340, 112
      %v1365 = vpop.permute.xlu0 %1364
      %1366 = vrot.lane.b32.xlu0 %v1341, 112
      %v1367 = vpop.permute.xlu0 %1366
      %1368 = vrot.lane.b32.xlu0 %v1342, 112
      %v1369 = vpop.permute.xlu0 %1368
      %1370 = vrot.lane.b32.xlu0 %v1343, 112
      %v1371 = vpop.permute.xlu0 %1370
      %1372 = vrot.lane.b32.xlu0 %v1344, 112
      %v1373 = vpop.permute.xlu0 %1372
      %1374 = vrot.lane.b32.xlu0 %v1345, 112
      %v1375 = vpop.permute.xlu0 %1374
      %1376 = vrot.lane.b32.xlu0 %v1346, 112
      %v1377 = vpop.permute.xlu0 %1376
      %1378 = vrot.lane.b32.xlu0 %v1347, 112
      %v1379 = vpop.permute.xlu0 %1378
      %v1388 = vsel %vm1348, %v1379, 1.0
      %v1389 = vsel %vm1349, %v1365, 1.0
      %v1390 = vsel %vm1350, %v1367, 1.0
      %v1391 = vsel %vm1351, %v1369, 1.0
      %v1392 = vsel %vm1352, %v1371, 1.0
      %v1393 = vsel %vm1353, %v1373, 1.0
      %v1394 = vsel %vm1354, %v1375, 1.0
      %v1395 = vsel %vm1355, %v1377, 1.0
      %1404 = vrot.lane.b32.xlu0 %v1300, 112
      %v1405 = vpop.permute.xlu0 %1404
      %1406 = vrot.lane.b32.xlu0 %v1301, 112
      %v1407 = vpop.permute.xlu0 %1406
      %1408 = vrot.lane.b32.xlu0 %v1302, 112
      %v1409 = vpop.permute.xlu0 %1408
      %1410 = vrot.lane.b32.xlu0 %v1303, 112
      %v1411 = vpop.permute.xlu0 %1410
      %1412 = vrot.lane.b32.xlu0 %v1304, 112
      %v1413 = vpop.permute.xlu0 %1412
      %1414 = vrot.lane.b32.xlu0 %v1305, 112
      %v1415 = vpop.permute.xlu0 %1414
      %1416 = vrot.lane.b32.xlu0 %v1306, 112
      %v1417 = vpop.permute.xlu0 %1416
      %1418 = vrot.lane.b32.xlu0 %v1307, 112
      %v1419 = vpop.permute.xlu0 %1418
      %v1428 = vsel %vm1348, %v1419, 0.0
      %v1429 = vsel %vm1349, %v1405, 0.0
      %v1430 = vsel %vm1350, %v1407, 0.0
      %v1431 = vsel %vm1351, %v1409, 0.0
      %v1432 = vsel %vm1352, %v1411, 0.0
      %v1433 = vsel %vm1353, %v1413, 0.0
      %v1434 = vsel %vm1354, %v1415, 0.0
      %v1435 = vsel %vm1355, %v1417, 0.0
      %1444 = vrot.lane.b32.xlu0 %v1428, 16
      %v1445 = vpop.permute.xlu0 %1444
      %1446 = vrot.lane.b32.xlu0 %v1429, 16
      %v1447 = vpop.permute.xlu0 %1446
      %1448 = vrot.lane.b32.xlu0 %v1430, 16
      %v1449 = vpop.permute.xlu0 %1448
      %1450 = vrot.lane.b32.xlu0 %v1431, 16
      %v1451 = vpop.permute.xlu0 %1450
      %1452 = vrot.lane.b32.xlu0 %v1432, 16
      %v1453 = vpop.permute.xlu0 %1452
      %1454 = vrot.lane.b32.xlu0 %v1433, 16
      %v1455 = vpop.permute.xlu0 %1454
      %1456 = vrot.lane.b32.xlu0 %v1434, 16
      %v1457 = vpop.permute.xlu0 %1456
      %1458 = vrot.lane.b32.xlu0 %v1435, 16
      %v1459 = vpop.permute.xlu0 %1458
      %v1468 = vmul.f32 %v1340, %v1445
      %v1469 = vmul.f32 %v1341, %v1447
      %v1470 = vmul.f32 %v1342, %v1449
      %v1471 = vmul.f32 %v1343, %v1451
      %v1472 = vmul.f32 %v1344, %v1453
      %v1473 = vmul.f32 %v1345, %v1455
      %v1474 = vmul.f32 %v1346, %v1457
      %v1475 = vmul.f32 %v1347, %v1459
      %v1476 = vadd.f32 %v1300, %v1468
      %v1477 = vadd.f32 %v1301, %v1469
      %v1478 = vadd.f32 %v1302, %v1470
      %v1479 = vadd.f32 %v1303, %v1471
      %v1480 = vadd.f32 %v1304, %v1472
      %v1481 = vadd.f32 %v1305, %v1473
      %v1482 = vadd.f32 %v1306, %v1474
      %v1483 = vadd.f32 %v1307, %v1475
      %1492 = vrot.lane.b32.xlu0 %v1388, 16
      %v1493 = vpop.permute.xlu0 %1492
      %1494 = vrot.lane.b32.xlu0 %v1389, 16
      %v1495 = vpop.permute.xlu0 %1494
      %1496 = vrot.lane.b32.xlu0 %v1390, 16
      %v1497 = vpop.permute.xlu0 %1496
      %1498 = vrot.lane.b32.xlu0 %v1391, 16
      %v1499 = vpop.permute.xlu0 %1498
      %1500 = vrot.lane.b32.xlu0 %v1392, 16
      %v1501 = vpop.permute.xlu0 %1500
      %1502 = vrot.lane.b32.xlu0 %v1393, 16
      %v1503 = vpop.permute.xlu0 %1502
      %1504 = vrot.lane.b32.xlu0 %v1394, 16
      %v1505 = vpop.permute.xlu0 %1504
      %1506 = vrot.lane.b32.xlu0 %v1395, 16
      %v1507 = vpop.permute.xlu0 %1506
      %v1516 = vmul.f32 %v1340, %v1493
      %v1517 = vmul.f32 %v1341, %v1495
      %v1518 = vmul.f32 %v1342, %v1497
      %v1519 = vmul.f32 %v1343, %v1499
      %v1520 = vmul.f32 %v1344, %v1501
      %v1521 = vmul.f32 %v1345, %v1503
      %v1522 = vmul.f32 %v1346, %v1505
      %v1523 = vmul.f32 %v1347, %v1507
      %vm1524 = vcmp.ge.s32.totalorder %v289, 16
      %vm1525 = vcmp.ge.s32.totalorder %v290, 16
      %vm1526 = vcmp.ge.s32.totalorder %v291, 16
      %vm1527 = vcmp.ge.s32.totalorder %v292, 16
      %vm1528 = vcmp.ge.s32.totalorder %v293, 16
      %vm1529 = vcmp.ge.s32.totalorder %v294, 16
      %vm1530 = vcmp.ge.s32.totalorder %v295, 16
      %vm1531 = vcmp.ge.s32.totalorder %v296, 16
      %1540 = vrot.lane.b32.xlu0 %v1516, 112
      %v1541 = vpop.permute.xlu0 %1540
      %1542 = vrot.lane.b32.xlu0 %v1517, 112
      %v1543 = vpop.permute.xlu0 %1542
      %1544 = vrot.lane.b32.xlu0 %v1518, 112
      %v1545 = vpop.permute.xlu0 %1544
      %1546 = vrot.lane.b32.xlu0 %v1519, 112
      %v1547 = vpop.permute.xlu0 %1546
      %1548 = vrot.lane.b32.xlu0 %v1520, 112
      %v1549 = vpop.permute.xlu0 %1548
      %1550 = vrot.lane.b32.xlu0 %v1521, 112
      %v1551 = vpop.permute.xlu0 %1550
      %1552 = vrot.lane.b32.xlu0 %v1522, 112
      %v1553 = vpop.permute.xlu0 %1552
      %1554 = vrot.lane.b32.xlu0 %v1523, 112
      %v1555 = vpop.permute.xlu0 %1554
      %v1564 = vsel %vm1524, %v1553, 1.0
      %v1565 = vsel %vm1525, %v1555, 1.0
      %v1566 = vsel %vm1526, %v1541, 1.0
      %v1567 = vsel %vm1527, %v1543, 1.0
      %v1568 = vsel %vm1528, %v1545, 1.0
      %v1569 = vsel %vm1529, %v1547, 1.0
      %v1570 = vsel %vm1530, %v1549, 1.0
      %v1571 = vsel %vm1531, %v1551, 1.0
      %1580 = vrot.lane.b32.xlu0 %v1476, 112
      %v1581 = vpop.permute.xlu0 %1580
      %1582 = vrot.lane.b32.xlu0 %v1477, 112
      %v1583 = vpop.permute.xlu0 %1582
      %1584 = vrot.lane.b32.xlu0 %v1478, 112
      %v1585 = vpop.permute.xlu0 %1584
      %1586 = vrot.lane.b32.xlu0 %v1479, 112
      %v1587 = vpop.permute.xlu0 %1586
      %1588 = vrot.lane.b32.xlu0 %v1480, 112
      %v1589 = vpop.permute.xlu0 %1588
      %1590 = vrot.lane.b32.xlu0 %v1481, 112
      %v1591 = vpop.permute.xlu0 %1590
      %1592 = vrot.lane.b32.xlu0 %v1482, 112
      %v1593 = vpop.permute.xlu0 %1592
      %1594 = vrot.lane.b32.xlu0 %v1483, 112
      %v1595 = vpop.permute.xlu0 %1594
      %v1604 = vsel %vm1524, %v1593, 0.0
      %v1605 = vsel %vm1525, %v1595, 0.0
      %v1606 = vsel %vm1526, %v1581, 0.0
      %v1607 = vsel %vm1527, %v1583, 0.0
      %v1608 = vsel %vm1528, %v1585, 0.0
      %v1609 = vsel %vm1529, %v1587, 0.0
      %v1610 = vsel %vm1530, %v1589, 0.0
      %v1611 = vsel %vm1531, %v1591, 0.0
      %1620 = vrot.lane.b32.xlu0 %v1604, 16
      %v1621 = vpop.permute.xlu0 %1620
      %1622 = vrot.lane.b32.xlu0 %v1605, 16
      %v1623 = vpop.permute.xlu0 %1622
      %1624 = vrot.lane.b32.xlu0 %v1606, 16
      %v1625 = vpop.permute.xlu0 %1624
      %1626 = vrot.lane.b32.xlu0 %v1607, 16
      %v1627 = vpop.permute.xlu0 %1626
      %1628 = vrot.lane.b32.xlu0 %v1608, 16
      %v1629 = vpop.permute.xlu0 %1628
      %1630 = vrot.lane.b32.xlu0 %v1609, 16
      %v1631 = vpop.permute.xlu0 %1630
      %1632 = vrot.lane.b32.xlu0 %v1610, 16
      %v1633 = vpop.permute.xlu0 %1632
      %1634 = vrot.lane.b32.xlu0 %v1611, 16
      %v1635 = vpop.permute.xlu0 %1634
      %v1644 = vmul.f32 %v1516, %v1621
      %v1645 = vmul.f32 %v1517, %v1623
      %v1646 = vmul.f32 %v1518, %v1625
      %v1647 = vmul.f32 %v1519, %v1627
      %v1648 = vmul.f32 %v1520, %v1629
      %v1649 = vmul.f32 %v1521, %v1631
      %v1650 = vmul.f32 %v1522, %v1633
      %v1651 = vmul.f32 %v1523, %v1635
      %v1652 = vadd.f32 %v1476, %v1644
      %v1653 = vadd.f32 %v1477, %v1645
      %v1654 = vadd.f32 %v1478, %v1646
      %v1655 = vadd.f32 %v1479, %v1647
      %v1656 = vadd.f32 %v1480, %v1648
      %v1657 = vadd.f32 %v1481, %v1649
      %v1658 = vadd.f32 %v1482, %v1650
      %v1659 = vadd.f32 %v1483, %v1651
      %1668 = vrot.lane.b32.xlu0 %v1564, 16
      %v1669 = vpop.permute.xlu0 %1668
      %1670 = vrot.lane.b32.xlu0 %v1565, 16
      %v1671 = vpop.permute.xlu0 %1670
      %1672 = vrot.lane.b32.xlu0 %v1566, 16
      %v1673 = vpop.permute.xlu0 %1672
      %1674 = vrot.lane.b32.xlu0 %v1567, 16
      %v1675 = vpop.permute.xlu0 %1674
      %1676 = vrot.lane.b32.xlu0 %v1568, 16
      %v1677 = vpop.permute.xlu0 %1676
      %1678 = vrot.lane.b32.xlu0 %v1569, 16
      %v1679 = vpop.permute.xlu0 %1678
      %1680 = vrot.lane.b32.xlu0 %v1570, 16
      %v1681 = vpop.permute.xlu0 %1680
      %1682 = vrot.lane.b32.xlu0 %v1571, 16
      %v1683 = vpop.permute.xlu0 %1682
      %v1692 = vmul.f32 %v1516, %v1669
      %v1693 = vmul.f32 %v1517, %v1671
      %v1694 = vmul.f32 %v1518, %v1673
      %v1695 = vmul.f32 %v1519, %v1675
      %v1696 = vmul.f32 %v1520, %v1677
      %v1697 = vmul.f32 %v1521, %v1679
      %v1698 = vmul.f32 %v1522, %v1681
      %v1699 = vmul.f32 %v1523, %v1683
      %vm1700 = vcmp.ge.s32.totalorder %v289, 32
      %vm1701 = vcmp.ge.s32.totalorder %v290, 32
      %vm1702 = vcmp.ge.s32.totalorder %v291, 32
      %vm1703 = vcmp.ge.s32.totalorder %v292, 32
      %vm1704 = vcmp.ge.s32.totalorder %v293, 32
      %vm1705 = vcmp.ge.s32.totalorder %v294, 32
      %vm1706 = vcmp.ge.s32.totalorder %v295, 32
      %vm1707 = vcmp.ge.s32.totalorder %v296, 32
      %1716 = vrot.lane.b32.xlu0 %v1692, 112
      %v1717 = vpop.permute.xlu0 %1716
      %1718 = vrot.lane.b32.xlu0 %v1693, 112
      %v1719 = vpop.permute.xlu0 %1718
      %1720 = vrot.lane.b32.xlu0 %v1694, 112
      %v1721 = vpop.permute.xlu0 %1720
      %1722 = vrot.lane.b32.xlu0 %v1695, 112
      %v1723 = vpop.permute.xlu0 %1722
      %1724 = vrot.lane.b32.xlu0 %v1696, 112
      %v1725 = vpop.permute.xlu0 %1724
      %1726 = vrot.lane.b32.xlu0 %v1697, 112
      %v1727 = vpop.permute.xlu0 %1726
      %1728 = vrot.lane.b32.xlu0 %v1698, 112
      %v1729 = vpop.permute.xlu0 %1728
      %1730 = vrot.lane.b32.xlu0 %v1699, 112
      %v1731 = vpop.permute.xlu0 %1730
      %v1740 = vsel %vm1700, %v1725, 1.0
      %v1741 = vsel %vm1701, %v1727, 1.0
      %v1742 = vsel %vm1702, %v1729, 1.0
      %v1743 = vsel %vm1703, %v1731, 1.0
      %v1744 = vsel %vm1704, %v1717, 1.0
      %v1745 = vsel %vm1705, %v1719, 1.0
      %v1746 = vsel %vm1706, %v1721, 1.0
      %v1747 = vsel %vm1707, %v1723, 1.0
      %1756 = vrot.lane.b32.xlu0 %v1652, 112
      %v1757 = vpop.permute.xlu0 %1756
      %1758 = vrot.lane.b32.xlu0 %v1653, 112
      %v1759 = vpop.permute.xlu0 %1758
      %1760 = vrot.lane.b32.xlu0 %v1654, 112
      %v1761 = vpop.permute.xlu0 %1760
      %1762 = vrot.lane.b32.xlu0 %v1655, 112
      %v1763 = vpop.permute.xlu0 %1762
      %1764 = vrot.lane.b32.xlu0 %v1656, 112
      %v1765 = vpop.permute.xlu0 %1764
      %1766 = vrot.lane.b32.xlu0 %v1657, 112
      %v1767 = vpop.permute.xlu0 %1766
      %1768 = vrot.lane.b32.xlu0 %v1658, 112
      %v1769 = vpop.permute.xlu0 %1768
      %1770 = vrot.lane.b32.xlu0 %v1659, 112
      %v1771 = vpop.permute.xlu0 %1770
      %v1780 = vsel %vm1700, %v1765, 0.0
      %v1781 = vsel %vm1701, %v1767, 0.0
      %v1782 = vsel %vm1702, %v1769, 0.0
      %v1783 = vsel %vm1703, %v1771, 0.0
      %v1784 = vsel %vm1704, %v1757, 0.0
      %v1785 = vsel %vm1705, %v1759, 0.0
      %v1786 = vsel %vm1706, %v1761, 0.0
      %v1787 = vsel %vm1707, %v1763, 0.0
      %1796 = vrot.lane.b32.xlu0 %v1780, 16
      %v1797 = vpop.permute.xlu0 %1796
      %1798 = vrot.lane.b32.xlu0 %v1781, 16
      %v1799 = vpop.permute.xlu0 %1798
      %1800 = vrot.lane.b32.xlu0 %v1782, 16
      %v1801 = vpop.permute.xlu0 %1800
      %1802 = vrot.lane.b32.xlu0 %v1783, 16
      %v1803 = vpop.permute.xlu0 %1802
      %1804 = vrot.lane.b32.xlu0 %v1784, 16
      %v1805 = vpop.permute.xlu0 %1804
      %1806 = vrot.lane.b32.xlu0 %v1785, 16
      %v1807 = vpop.permute.xlu0 %1806
      %1808 = vrot.lane.b32.xlu0 %v1786, 16
      %v1809 = vpop.permute.xlu0 %1808
      %1810 = vrot.lane.b32.xlu0 %v1787, 16
      %v1811 = vpop.permute.xlu0 %1810
      %v1820 = vmul.f32 %v1692, %v1797
      %v1821 = vmul.f32 %v1693, %v1799
      %v1822 = vmul.f32 %v1694, %v1801
      %v1823 = vmul.f32 %v1695, %v1803
      %v1824 = vmul.f32 %v1696, %v1805
      %v1825 = vmul.f32 %v1697, %v1807
      %v1826 = vmul.f32 %v1698, %v1809
      %v1827 = vmul.f32 %v1699, %v1811
      %v1828 = vadd.f32 %v1652, %v1820
      %v1829 = vadd.f32 %v1653, %v1821
      %v1830 = vadd.f32 %v1654, %v1822
      %v1831 = vadd.f32 %v1655, %v1823
      %v1832 = vadd.f32 %v1656, %v1824
      %v1833 = vadd.f32 %v1657, %v1825
      %v1834 = vadd.f32 %v1658, %v1826
      %v1835 = vadd.f32 %v1659, %v1827
      %1844 = vrot.lane.b32.xlu0 %v1740, 16
      %v1845 = vpop.permute.xlu0 %1844
      %1846 = vrot.lane.b32.xlu0 %v1741, 16
      %v1847 = vpop.permute.xlu0 %1846
      %1848 = vrot.lane.b32.xlu0 %v1742, 16
      %v1849 = vpop.permute.xlu0 %1848
      %1850 = vrot.lane.b32.xlu0 %v1743, 16
      %v1851 = vpop.permute.xlu0 %1850
      %1852 = vrot.lane.b32.xlu0 %v1744, 16
      %v1853 = vpop.permute.xlu0 %1852
      %1854 = vrot.lane.b32.xlu0 %v1745, 16
      %v1855 = vpop.permute.xlu0 %1854
      %1856 = vrot.lane.b32.xlu0 %v1746, 16
      %v1857 = vpop.permute.xlu0 %1856
      %1858 = vrot.lane.b32.xlu0 %v1747, 16
      %v1859 = vpop.permute.xlu0 %1858
      %v1868 = vmul.f32 %v1692, %v1845
      %v1869 = vmul.f32 %v1693, %v1847
      %v1870 = vmul.f32 %v1694, %v1849
      %v1871 = vmul.f32 %v1695, %v1851
      %v1872 = vmul.f32 %v1696, %v1853
      %v1873 = vmul.f32 %v1697, %v1855
      %v1874 = vmul.f32 %v1698, %v1857
      %v1875 = vmul.f32 %v1699, %v1859
      %1884 = vrot.lane.b32.xlu0 %v1868, 112
      %v1885 = vpop.permute.xlu0 %1884
      %1886 = vrot.lane.b32.xlu0 %v1869, 112
      %v1887 = vpop.permute.xlu0 %1886
      %1888 = vrot.lane.b32.xlu0 %v1870, 112
      %v1889 = vpop.permute.xlu0 %1888
      %1890 = vrot.lane.b32.xlu0 %v1871, 112
      %v1891 = vpop.permute.xlu0 %1890
      %1892 = vrot.lane.b32.xlu0 %v1872, 112
      %v1893 = vpop.permute.xlu0 %1892
      %1894 = vrot.lane.b32.xlu0 %v1873, 112
      %v1895 = vpop.permute.xlu0 %1894
      %1896 = vrot.lane.b32.xlu0 %v1874, 112
      %v1897 = vpop.permute.xlu0 %1896
      %1898 = vrot.lane.b32.xlu0 %v1875, 112
      %v1899 = vpop.permute.xlu0 %1898
      %1908 = vst.msk [vmem:[#allocation2] sm:$0xff] %vm532, %v1885
      %1909 = vst.msk [vmem:[#allocation2 + $0x8] sm:$0xff] %vm532, %v1887
      %1910 = vst.msk [vmem:[#allocation2 + $0x10] sm:$0xff] %vm532, %v1889
      %1911 = vst.msk [vmem:[#allocation2 + $0x18] sm:$0xff] %vm532, %v1891
      %1912 = vst.msk [vmem:[#allocation2 + $0x20] sm:$0xff] %vm532, %v1893
      %1913 = vst.msk [vmem:[#allocation2 + $0x28] sm:$0xff] %vm532, %v1895
      %1914 = vst.msk [vmem:[#allocation2 + $0x30] sm:$0xff] %vm532, %v1897
      %1915 = vst.msk [vmem:[#allocation2 + $0x38] sm:$0xff] %vm532, %v1899
      %1924 = vrot.lane.b32.xlu0 %v1828, 112
      %v1925 = vpop.permute.xlu0 %1924
      %1926 = vrot.lane.b32.xlu0 %v1829, 112
      %v1927 = vpop.permute.xlu0 %1926
      %1928 = vrot.lane.b32.xlu0 %v1830, 112
      %v1929 = vpop.permute.xlu0 %1928
      %1930 = vrot.lane.b32.xlu0 %v1831, 112
      %v1931 = vpop.permute.xlu0 %1930
      %1932 = vrot.lane.b32.xlu0 %v1832, 112
      %v1933 = vpop.permute.xlu0 %1932
      %1934 = vrot.lane.b32.xlu0 %v1833, 112
      %v1935 = vpop.permute.xlu0 %1934
      %1936 = vrot.lane.b32.xlu0 %v1834, 112
      %v1937 = vpop.permute.xlu0 %1936
      %1938 = vrot.lane.b32.xlu0 %v1835, 112
      %v1939 = vpop.permute.xlu0 %1938
      %1948 = vst.msk [vmem:[#allocation3] sm:$0xff] %vm532, %v1925
      %1949 = vst.msk [vmem:[#allocation3 + $0x8] sm:$0xff] %vm532, %v1927
      %1950 = vst.msk [vmem:[#allocation3 + $0x10] sm:$0xff] %vm532, %v1929
      %1951 = vst.msk [vmem:[#allocation3 + $0x18] sm:$0xff] %vm532, %v1931
      %1952 = vst.msk [vmem:[#allocation3 + $0x20] sm:$0xff] %vm532, %v1933
      %1953 = vst.msk [vmem:[#allocation3 + $0x28] sm:$0xff] %vm532, %v1935
      %1954 = vst.msk [vmem:[#allocation3 + $0x30] sm:$0xff] %vm532, %v1937
      %1955 = vst.msk [vmem:[#allocation3 + $0x38] sm:$0xff] %vm532, %v1939
      %vm1956 = vcmp.lt.s32.totalorder %v289, 63
      %vm1957 = vcmp.lt.s32.totalorder %v290, 63
      %vm1958 = vcmp.lt.s32.totalorder %v291, 63
      %vm1959 = vcmp.lt.s32.totalorder %v292, 63
      %vm1960 = vcmp.lt.s32.totalorder %v293, 63
      %vm1961 = vcmp.lt.s32.totalorder %v294, 63
      %vm1962 = vcmp.lt.s32.totalorder %v295, 63
      %vm1963 = vcmp.lt.s32.totalorder %v296, 63
      %v1964 = vrot.slane %v739, 1
      %v1965 = vrot.slane %v741, 1
      %v1966 = vrot.slane %v743, 1
      %v1967 = vrot.slane %v745, 1
      %v1968 = vrot.slane %v747, 1
      %v1969 = vrot.slane %v749, 1
      %v1970 = vrot.slane %v751, 1
      %v1971 = vrot.slane %v753, 1
      %v1972 = vsel %vm377, %v1970, %v1971
      %v1973 = vsel %vm377, %v1969, %v1970
      %v1974 = vsel %vm377, %v1968, %v1969
      %v1975 = vsel %vm377, %v1967, %v1968
      %v1976 = vsel %vm377, %v1966, %v1967
      %v1977 = vsel %vm377, %v1965, %v1966
      %v1978 = vsel %vm377, %v1964, %v1965
      %v1979 = vsel %vm377, %v1971, %v1964
      %v1980 = vsel %vm1956, %v1978, 1.0
      %v1981 = vsel %vm1957, %v1977, 1.0
      %v1982 = vsel %vm1958, %v1976, 1.0
      %v1983 = vsel %vm1959, %v1975, 1.0
      %v1984 = vsel %vm1960, %v1974, 1.0
      %v1985 = vsel %vm1961, %v1973, 1.0
      %v1986 = vsel %vm1962, %v1972, 1.0
      %v1987 = vsel %vm1963, %v1979, 1.0
      %v1988 = vrot.slane %v795, 1
      %v1989 = vrot.slane %v797, 1
      %v1990 = vrot.slane %v799, 1
      %v1991 = vrot.slane %v801, 1
      %v1992 = vrot.slane %v803, 1
      %v1993 = vrot.slane %v805, 1
      %v1994 = vrot.slane %v807, 1
      %v1995 = vrot.slane %v809, 1
      %v1996 = vsel %vm377, %v1994, %v1995
      %v1997 = vsel %vm377, %v1993, %v1994
      %v1998 = vsel %vm377, %v1992, %v1993
      %v1999 = vsel %vm377, %v1991, %v1992
      %v2000 = vsel %vm377, %v1990, %v1991
      %v2001 = vsel %vm377, %v1989, %v1990
      %v2002 = vsel %vm377, %v1988, %v1989
      %v2003 = vsel %vm377, %v1995, %v1988
      %v2004 = vsel %vm1956, %v2002, 0.0
      %v2005 = vsel %vm1957, %v2001, 0.0
      %v2006 = vsel %vm1958, %v2000, 0.0
      %v2007 = vsel %vm1959, %v1999, 0.0
      %v2008 = vsel %vm1960, %v1998, 0.0
      %v2009 = vsel %vm1961, %v1997, 0.0
      %v2010 = vsel %vm1962, %v1996, 0.0
      %v2011 = vsel %vm1963, %v2003, 0.0
      %2020 = vrot.lane.b32.xlu0 %v2004, 16
      %v2021 = vpop.permute.xlu0 %2020
      %2022 = vrot.lane.b32.xlu0 %v2005, 16
      %v2023 = vpop.permute.xlu0 %2022
      %2024 = vrot.lane.b32.xlu0 %v2006, 16
      %v2025 = vpop.permute.xlu0 %2024
      %2026 = vrot.lane.b32.xlu0 %v2007, 16
      %v2027 = vpop.permute.xlu0 %2026
      %2028 = vrot.lane.b32.xlu0 %v2008, 16
      %v2029 = vpop.permute.xlu0 %2028
      %2030 = vrot.lane.b32.xlu0 %v2009, 16
      %v2031 = vpop.permute.xlu0 %2030
      %2032 = vrot.lane.b32.xlu0 %v2010, 16
      %v2033 = vpop.permute.xlu0 %2032
      %2034 = vrot.lane.b32.xlu0 %v2011, 16
      %v2035 = vpop.permute.xlu0 %2034
      %v2044 = vmul.f32 %v706, %v2021
      %v2045 = vmul.f32 %v707, %v2023
      %v2046 = vmul.f32 %v708, %v2025
      %v2047 = vmul.f32 %v709, %v2027
      %v2048 = vmul.f32 %v710, %v2029
      %v2049 = vmul.f32 %v711, %v2031
      %v2050 = vmul.f32 %v712, %v2033
      %v2051 = vmul.f32 %v713, %v2035
      %v2052 = vadd.f32 %v714, %v2044
      %v2053 = vadd.f32 %v715, %v2045
      %v2054 = vadd.f32 %v716, %v2046
      %v2055 = vadd.f32 %v717, %v2047
      %v2056 = vadd.f32 %v718, %v2048
      %v2057 = vadd.f32 %v719, %v2049
      %v2058 = vadd.f32 %v720, %v2050
      %v2059 = vadd.f32 %v721, %v2051
      %2068 = vrot.lane.b32.xlu0 %v1980, 16
      %v2069 = vpop.permute.xlu0 %2068
      %2070 = vrot.lane.b32.xlu0 %v1981, 16
      %v2071 = vpop.permute.xlu0 %2070
      %2072 = vrot.lane.b32.xlu0 %v1982, 16
      %v2073 = vpop.permute.xlu0 %2072
      %2074 = vrot.lane.b32.xlu0 %v1983, 16
      %v2075 = vpop.permute.xlu0 %2074
      %2076 = vrot.lane.b32.xlu0 %v1984, 16
      %v2077 = vpop.permute.xlu0 %2076
      %2078 = vrot.lane.b32.xlu0 %v1985, 16
      %v2079 = vpop.permute.xlu0 %2078
      %2080 = vrot.lane.b32.xlu0 %v1986, 16
      %v2081 = vpop.permute.xlu0 %2080
      %2082 = vrot.lane.b32.xlu0 %v1987, 16
      %v2083 = vpop.permute.xlu0 %2082
      %v2092 = vmul.f32 %v706, %v2069
      %v2093 = vmul.f32 %v707, %v2071
      %v2094 = vmul.f32 %v708, %v2073
      %v2095 = vmul.f32 %v709, %v2075
      %v2096 = vmul.f32 %v710, %v2077
      %v2097 = vmul.f32 %v711, %v2079
      %v2098 = vmul.f32 %v712, %v2081
      %v2099 = vmul.f32 %v713, %v2083
      %vm2100 = vcmp.lt.s32.totalorder %v289, 62
      %vm2101 = vcmp.lt.s32.totalorder %v290, 62
      %vm2102 = vcmp.lt.s32.totalorder %v291, 62
      %vm2103 = vcmp.lt.s32.totalorder %v292, 62
      %vm2104 = vcmp.lt.s32.totalorder %v293, 62
      %vm2105 = vcmp.lt.s32.totalorder %v294, 62
      %vm2106 = vcmp.lt.s32.totalorder %v295, 62
      %vm2107 = vcmp.lt.s32.totalorder %v296, 62
      %2116 = vrot.lane.b32.xlu0 %v2092, 112
      %v2117 = vpop.permute.xlu0 %2116
      %2118 = vrot.lane.b32.xlu0 %v2093, 112
      %v2119 = vpop.permute.xlu0 %2118
      %2120 = vrot.lane.b32.xlu0 %v2094, 112
      %v2121 = vpop.permute.xlu0 %2120
      %2122 = vrot.lane.b32.xlu0 %v2095, 112
      %v2123 = vpop.permute.xlu0 %2122
      %2124 = vrot.lane.b32.xlu0 %v2096, 112
      %v2125 = vpop.permute.xlu0 %2124
      %2126 = vrot.lane.b32.xlu0 %v2097, 112
      %v2127 = vpop.permute.xlu0 %2126
      %2128 = vrot.lane.b32.xlu0 %v2098, 112
      %v2129 = vpop.permute.xlu0 %2128
      %2130 = vrot.lane.b32.xlu0 %v2099, 112
      %v2131 = vpop.permute.xlu0 %2130
      %v2140 = vrot.slane %v2117, 2
      %v2141 = vrot.slane %v2119, 2
      %v2142 = vrot.slane %v2121, 2
      %v2143 = vrot.slane %v2123, 2
      %v2144 = vrot.slane %v2125, 2
      %v2145 = vrot.slane %v2127, 2
      %v2146 = vrot.slane %v2129, 2
      %v2147 = vrot.slane %v2131, 2
      %vm2148 = vcmp.lt.s32.totalorder %v281, 6
      %v2149 = vsel %vm2148, %v2146, %v2147
      %v2150 = vsel %vm2148, %v2145, %v2146
      %v2151 = vsel %vm2148, %v2144, %v2145
      %v2152 = vsel %vm2148, %v2143, %v2144
      %v2153 = vsel %vm2148, %v2142, %v2143
      %v2154 = vsel %vm2148, %v2141, %v2142
      %v2155 = vsel %vm2148, %v2140, %v2141
      %v2156 = vsel %vm2148, %v2147, %v2140
      %v2157 = vsel %vm2100, %v2155, 1.0
      %v2158 = vsel %vm2101, %v2154, 1.0
      %v2159 = vsel %vm2102, %v2153, 1.0
      %v2160 = vsel %vm2103, %v2152, 1.0
      %v2161 = vsel %vm2104, %v2151, 1.0
      %v2162 = vsel %vm2105, %v2150, 1.0
      %v2163 = vsel %vm2106, %v2149, 1.0
      %v2164 = vsel %vm2107, %v2156, 1.0
      %2173 = vrot.lane.b32.xlu0 %v2052, 112
      %v2174 = vpop.permute.xlu0 %2173
      %2175 = vrot.lane.b32.xlu0 %v2053, 112
      %v2176 = vpop.permute.xlu0 %2175
      %2177 = vrot.lane.b32.xlu0 %v2054, 112
      %v2178 = vpop.permute.xlu0 %2177
      %2179 = vrot.lane.b32.xlu0 %v2055, 112
      %v2180 = vpop.permute.xlu0 %2179
      %2181 = vrot.lane.b32.xlu0 %v2056, 112
      %v2182 = vpop.permute.xlu0 %2181
      %2183 = vrot.lane.b32.xlu0 %v2057, 112
      %v2184 = vpop.permute.xlu0 %2183
      %2185 = vrot.lane.b32.xlu0 %v2058, 112
      %v2186 = vpop.permute.xlu0 %2185
      %2187 = vrot.lane.b32.xlu0 %v2059, 112
      %v2188 = vpop.permute.xlu0 %2187
      %v2197 = vrot.slane %v2174, 2
      %v2198 = vrot.slane %v2176, 2
      %v2199 = vrot.slane %v2178, 2
      %v2200 = vrot.slane %v2180, 2
      %v2201 = vrot.slane %v2182, 2
      %v2202 = vrot.slane %v2184, 2
      %v2203 = vrot.slane %v2186, 2
      %v2204 = vrot.slane %v2188, 2
      %v2205 = vsel %vm2148, %v2203, %v2204
      %v2206 = vsel %vm2148, %v2202, %v2203
      %v2207 = vsel %vm2148, %v2201, %v2202
      %v2208 = vsel %vm2148, %v2200, %v2201
      %v2209 = vsel %vm2148, %v2199, %v2200
      %v2210 = vsel %vm2148, %v2198, %v2199
      %v2211 = vsel %vm2148, %v2197, %v2198
      %v2212 = vsel %vm2148, %v2204, %v2197
      %v2213 = vsel %vm2100, %v2211, 0.0
      %v2214 = vsel %vm2101, %v2210, 0.0
      %v2215 = vsel %vm2102, %v2209, 0.0
      %v2216 = vsel %vm2103, %v2208, 0.0
      %v2217 = vsel %vm2104, %v2207, 0.0
      %v2218 = vsel %vm2105, %v2206, 0.0
      %v2219 = vsel %vm2106, %v2205, 0.0
      %v2220 = vsel %vm2107, %v2212, 0.0
      %2229 = vrot.lane.b32.xlu0 %v2213, 16
      %v2230 = vpop.permute.xlu0 %2229
      %2231 = vrot.lane.b32.xlu0 %v2214, 16
      %v2232 = vpop.permute.xlu0 %2231
      %2233 = vrot.lane.b32.xlu0 %v2215, 16
      %v2234 = vpop.permute.xlu0 %2233
      %2235 = vrot.lane.b32.xlu0 %v2216, 16
      %v2236 = vpop.permute.xlu0 %2235
      %2237 = vrot.lane.b32.xlu0 %v2217, 16
      %v2238 = vpop.permute.xlu0 %2237
      %2239 = vrot.lane.b32.xlu0 %v2218, 16
      %v2240 = vpop.permute.xlu0 %2239
      %2241 = vrot.lane.b32.xlu0 %v2219, 16
      %v2242 = vpop.permute.xlu0 %2241
      %2243 = vrot.lane.b32.xlu0 %v2220, 16
      %v2244 = vpop.permute.xlu0 %2243
      %v2253 = vmul.f32 %v2092, %v2230
      %v2254 = vmul.f32 %v2093, %v2232
      %v2255 = vmul.f32 %v2094, %v2234
      %v2256 = vmul.f32 %v2095, %v2236
      %v2257 = vmul.f32 %v2096, %v2238
      %v2258 = vmul.f32 %v2097, %v2240
      %v2259 = vmul.f32 %v2098, %v2242
      %v2260 = vmul.f32 %v2099, %v2244
      %v2261 = vadd.f32 %v2052, %v2253
      %v2262 = vadd.f32 %v2053, %v2254
      %v2263 = vadd.f32 %v2054, %v2255
      %v2264 = vadd.f32 %v2055, %v2256
      %v2265 = vadd.f32 %v2056, %v2257
      %v2266 = vadd.f32 %v2057, %v2258
      %v2267 = vadd.f32 %v2058, %v2259
      %v2268 = vadd.f32 %v2059, %v2260
      %2277 = vrot.lane.b32.xlu0 %v2157, 16
      %v2278 = vpop.permute.xlu0 %2277
      %2279 = vrot.lane.b32.xlu0 %v2158, 16
      %v2280 = vpop.permute.xlu0 %2279
      %2281 = vrot.lane.b32.xlu0 %v2159, 16
      %v2282 = vpop.permute.xlu0 %2281
      %2283 = vrot.lane.b32.xlu0 %v2160, 16
      %v2284 = vpop.permute.xlu0 %2283
      %2285 = vrot.lane.b32.xlu0 %v2161, 16
      %v2286 = vpop.permute.xlu0 %2285
      %2287 = vrot.lane.b32.xlu0 %v2162, 16
      %v2288 = vpop.permute.xlu0 %2287
      %2289 = vrot.lane.b32.xlu0 %v2163, 16
      %v2290 = vpop.permute.xlu0 %2289
      %2291 = vrot.lane.b32.xlu0 %v2164, 16
      %v2292 = vpop.permute.xlu0 %2291
      %v2301 = vmul.f32 %v2092, %v2278
      %v2302 = vmul.f32 %v2093, %v2280
      %v2303 = vmul.f32 %v2094, %v2282
      %v2304 = vmul.f32 %v2095, %v2284
      %v2305 = vmul.f32 %v2096, %v2286
      %v2306 = vmul.f32 %v2097, %v2288
      %v2307 = vmul.f32 %v2098, %v2290
      %v2308 = vmul.f32 %v2099, %v2292
      %vm2309 = vcmp.lt.s32.totalorder %v289, 60
      %vm2310 = vcmp.lt.s32.totalorder %v290, 60
      %vm2311 = vcmp.lt.s32.totalorder %v291, 60
      %vm2312 = vcmp.lt.s32.totalorder %v292, 60
      %vm2313 = vcmp.lt.s32.totalorder %v293, 60
      %vm2314 = vcmp.lt.s32.totalorder %v294, 60
      %vm2315 = vcmp.lt.s32.totalorder %v295, 60
      %vm2316 = vcmp.lt.s32.totalorder %v296, 60
      %2325 = vrot.lane.b32.xlu0 %v2301, 112
      %v2326 = vpop.permute.xlu0 %2325
      %2327 = vrot.lane.b32.xlu0 %v2302, 112
      %v2328 = vpop.permute.xlu0 %2327
      %2329 = vrot.lane.b32.xlu0 %v2303, 112
      %v2330 = vpop.permute.xlu0 %2329
      %2331 = vrot.lane.b32.xlu0 %v2304, 112
      %v2332 = vpop.permute.xlu0 %2331
      %2333 = vrot.lane.b32.xlu0 %v2305, 112
      %v2334 = vpop.permute.xlu0 %2333
      %2335 = vrot.lane.b32.xlu0 %v2306, 112
      %v2336 = vpop.permute.xlu0 %2335
      %2337 = vrot.lane.b32.xlu0 %v2307, 112
      %v2338 = vpop.permute.xlu0 %2337
      %2339 = vrot.lane.b32.xlu0 %v2308, 112
      %v2340 = vpop.permute.xlu0 %2339
      %v2349 = vrot.slane %v2326, 4
      %v2350 = vrot.slane %v2328, 4
      %v2351 = vrot.slane %v2330, 4
      %v2352 = vrot.slane %v2332, 4
      %v2353 = vrot.slane %v2334, 4
      %v2354 = vrot.slane %v2336, 4
      %v2355 = vrot.slane %v2338, 4
      %v2356 = vrot.slane %v2340, 4
      %v2357 = vsel %vm1187, %v2355, %v2356
      %v2358 = vsel %vm1187, %v2354, %v2355
      %v2359 = vsel %vm1187, %v2353, %v2354
      %v2360 = vsel %vm1187, %v2352, %v2353
      %v2361 = vsel %vm1187, %v2351, %v2352
      %v2362 = vsel %vm1187, %v2350, %v2351
      %v2363 = vsel %vm1187, %v2349, %v2350
      %v2364 = vsel %vm1187, %v2356, %v2349
      %v2365 = vsel %vm2309, %v2363, 1.0
      %v2366 = vsel %vm2310, %v2362, 1.0
      %v2367 = vsel %vm2311, %v2361, 1.0
      %v2368 = vsel %vm2312, %v2360, 1.0
      %v2369 = vsel %vm2313, %v2359, 1.0
      %v2370 = vsel %vm2314, %v2358, 1.0
      %v2371 = vsel %vm2315, %v2357, 1.0
      %v2372 = vsel %vm2316, %v2364, 1.0
      %2381 = vrot.lane.b32.xlu0 %v2261, 112
      %v2382 = vpop.permute.xlu0 %2381
      %2383 = vrot.lane.b32.xlu0 %v2262, 112
      %v2384 = vpop.permute.xlu0 %2383
      %2385 = vrot.lane.b32.xlu0 %v2263, 112
      %v2386 = vpop.permute.xlu0 %2385
      %2387 = vrot.lane.b32.xlu0 %v2264, 112
      %v2388 = vpop.permute.xlu0 %2387
      %2389 = vrot.lane.b32.xlu0 %v2265, 112
      %v2390 = vpop.permute.xlu0 %2389
      %2391 = vrot.lane.b32.xlu0 %v2266, 112
      %v2392 = vpop.permute.xlu0 %2391
      %2393 = vrot.lane.b32.xlu0 %v2267, 112
      %v2394 = vpop.permute.xlu0 %2393
      %2395 = vrot.lane.b32.xlu0 %v2268, 112
      %v2396 = vpop.permute.xlu0 %2395
      %v2405 = vrot.slane %v2382, 4
      %v2406 = vrot.slane %v2384, 4
      %v2407 = vrot.slane %v2386, 4
      %v2408 = vrot.slane %v2388, 4
      %v2409 = vrot.slane %v2390, 4
      %v2410 = vrot.slane %v2392, 4
      %v2411 = vrot.slane %v2394, 4
      %v2412 = vrot.slane %v2396, 4
      %v2413 = vsel %vm1187, %v2411, %v2412
      %v2414 = vsel %vm1187, %v2410, %v2411
      %v2415 = vsel %vm1187, %v2409, %v2410
      %v2416 = vsel %vm1187, %v2408, %v2409
      %v2417 = vsel %vm1187, %v2407, %v2408
      %v2418 = vsel %vm1187, %v2406, %v2407
      %v2419 = vsel %vm1187, %v2405, %v2406
      %v2420 = vsel %vm1187, %v2412, %v2405
      %v2421 = vsel %vm2309, %v2419, 0.0
      %v2422 = vsel %vm2310, %v2418, 0.0
      %v2423 = vsel %vm2311, %v2417, 0.0
      %v2424 = vsel %vm2312, %v2416, 0.0
      %v2425 = vsel %vm2313, %v2415, 0.0
      %v2426 = vsel %vm2314, %v2414, 0.0
      %v2427 = vsel %vm2315, %v2413, 0.0
      %v2428 = vsel %vm2316, %v2420, 0.0
      %2437 = vrot.lane.b32.xlu0 %v2421, 16
      %v2438 = vpop.permute.xlu0 %2437
      %2439 = vrot.lane.b32.xlu0 %v2422, 16
      %v2440 = vpop.permute.xlu0 %2439
      %2441 = vrot.lane.b32.xlu0 %v2423, 16
      %v2442 = vpop.permute.xlu0 %2441
      %2443 = vrot.lane.b32.xlu0 %v2424, 16
      %v2444 = vpop.permute.xlu0 %2443
      %2445 = vrot.lane.b32.xlu0 %v2425, 16
      %v2446 = vpop.permute.xlu0 %2445
      %2447 = vrot.lane.b32.xlu0 %v2426, 16
      %v2448 = vpop.permute.xlu0 %2447
      %2449 = vrot.lane.b32.xlu0 %v2427, 16
      %v2450 = vpop.permute.xlu0 %2449
      %2451 = vrot.lane.b32.xlu0 %v2428, 16
      %v2452 = vpop.permute.xlu0 %2451
      %v2461 = vmul.f32 %v2301, %v2438
      %v2462 = vmul.f32 %v2302, %v2440
      %v2463 = vmul.f32 %v2303, %v2442
      %v2464 = vmul.f32 %v2304, %v2444
      %v2465 = vmul.f32 %v2305, %v2446
      %v2466 = vmul.f32 %v2306, %v2448
      %v2467 = vmul.f32 %v2307, %v2450
      %v2468 = vmul.f32 %v2308, %v2452
      %v2469 = vadd.f32 %v2261, %v2461
      %v2470 = vadd.f32 %v2262, %v2462
      %v2471 = vadd.f32 %v2263, %v2463
      %v2472 = vadd.f32 %v2264, %v2464
      %v2473 = vadd.f32 %v2265, %v2465
      %v2474 = vadd.f32 %v2266, %v2466
      %v2475 = vadd.f32 %v2267, %v2467
      %v2476 = vadd.f32 %v2268, %v2468
      %2485 = vrot.lane.b32.xlu0 %v2365, 16
      %v2486 = vpop.permute.xlu0 %2485
      %2487 = vrot.lane.b32.xlu0 %v2366, 16
      %v2488 = vpop.permute.xlu0 %2487
      %2489 = vrot.lane.b32.xlu0 %v2367, 16
      %v2490 = vpop.permute.xlu0 %2489
      %2491 = vrot.lane.b32.xlu0 %v2368, 16
      %v2492 = vpop.permute.xlu0 %2491
      %2493 = vrot.lane.b32.xlu0 %v2369, 16
      %v2494 = vpop.permute.xlu0 %2493
      %2495 = vrot.lane.b32.xlu0 %v2370, 16
      %v2496 = vpop.permute.xlu0 %2495
      %2497 = vrot.lane.b32.xlu0 %v2371, 16
      %v2498 = vpop.permute.xlu0 %2497
      %2499 = vrot.lane.b32.xlu0 %v2372, 16
      %v2500 = vpop.permute.xlu0 %2499
      %v2509 = vmul.f32 %v2301, %v2486
      %v2510 = vmul.f32 %v2302, %v2488
      %v2511 = vmul.f32 %v2303, %v2490
      %v2512 = vmul.f32 %v2304, %v2492
      %v2513 = vmul.f32 %v2305, %v2494
      %v2514 = vmul.f32 %v2306, %v2496
      %v2515 = vmul.f32 %v2307, %v2498
      %v2516 = vmul.f32 %v2308, %v2500
      %vm2517 = vcmp.lt.s32.totalorder %v289, 56
      %vm2518 = vcmp.lt.s32.totalorder %v290, 56
      %vm2519 = vcmp.lt.s32.totalorder %v291, 56
      %vm2520 = vcmp.lt.s32.totalorder %v292, 56
      %vm2521 = vcmp.lt.s32.totalorder %v293, 56
      %vm2522 = vcmp.lt.s32.totalorder %v294, 56
      %vm2523 = vcmp.lt.s32.totalorder %v295, 56
      %vm2524 = vcmp.lt.s32.totalorder %v296, 56
      %2533 = vrot.lane.b32.xlu0 %v2509, 112
      %v2534 = vpop.permute.xlu0 %2533
      %2535 = vrot.lane.b32.xlu0 %v2510, 112
      %v2536 = vpop.permute.xlu0 %2535
      %2537 = vrot.lane.b32.xlu0 %v2511, 112
      %v2538 = vpop.permute.xlu0 %2537
      %2539 = vrot.lane.b32.xlu0 %v2512, 112
      %v2540 = vpop.permute.xlu0 %2539
      %2541 = vrot.lane.b32.xlu0 %v2513, 112
      %v2542 = vpop.permute.xlu0 %2541
      %2543 = vrot.lane.b32.xlu0 %v2514, 112
      %v2544 = vpop.permute.xlu0 %2543
      %2545 = vrot.lane.b32.xlu0 %v2515, 112
      %v2546 = vpop.permute.xlu0 %2545
      %2547 = vrot.lane.b32.xlu0 %v2516, 112
      %v2548 = vpop.permute.xlu0 %2547
      %v2557 = vsel %vm2517, %v2536, 1.0
      %v2558 = vsel %vm2518, %v2538, 1.0
      %v2559 = vsel %vm2519, %v2540, 1.0
      %v2560 = vsel %vm2520, %v2542, 1.0
      %v2561 = vsel %vm2521, %v2544, 1.0
      %v2562 = vsel %vm2522, %v2546, 1.0
      %v2563 = vsel %vm2523, %v2548, 1.0
      %v2564 = vsel %vm2524, %v2534, 1.0
      %2573 = vrot.lane.b32.xlu0 %v2469, 112
      %v2574 = vpop.permute.xlu0 %2573
      %2575 = vrot.lane.b32.xlu0 %v2470, 112
      %v2576 = vpop.permute.xlu0 %2575
      %2577 = vrot.lane.b32.xlu0 %v2471, 112
      %v2578 = vpop.permute.xlu0 %2577
      %2579 = vrot.lane.b32.xlu0 %v2472, 112
      %v2580 = vpop.permute.xlu0 %2579
      %2581 = vrot.lane.b32.xlu0 %v2473, 112
      %v2582 = vpop.permute.xlu0 %2581
      %2583 = vrot.lane.b32.xlu0 %v2474, 112
      %v2584 = vpop.permute.xlu0 %2583
      %2585 = vrot.lane.b32.xlu0 %v2475, 112
      %v2586 = vpop.permute.xlu0 %2585
      %2587 = vrot.lane.b32.xlu0 %v2476, 112
      %v2588 = vpop.permute.xlu0 %2587
      %v2597 = vsel %vm2517, %v2576, 0.0
      %v2598 = vsel %vm2518, %v2578, 0.0
      %v2599 = vsel %vm2519, %v2580, 0.0
      %v2600 = vsel %vm2520, %v2582, 0.0
      %v2601 = vsel %vm2521, %v2584, 0.0
      %v2602 = vsel %vm2522, %v2586, 0.0
      %v2603 = vsel %vm2523, %v2588, 0.0
      %v2604 = vsel %vm2524, %v2574, 0.0
      %2613 = vrot.lane.b32.xlu0 %v2597, 16
      %v2614 = vpop.permute.xlu0 %2613
      %2615 = vrot.lane.b32.xlu0 %v2598, 16
      %v2616 = vpop.permute.xlu0 %2615
      %2617 = vrot.lane.b32.xlu0 %v2599, 16
      %v2618 = vpop.permute.xlu0 %2617
      %2619 = vrot.lane.b32.xlu0 %v2600, 16
      %v2620 = vpop.permute.xlu0 %2619
      %2621 = vrot.lane.b32.xlu0 %v2601, 16
      %v2622 = vpop.permute.xlu0 %2621
      %2623 = vrot.lane.b32.xlu0 %v2602, 16
      %v2624 = vpop.permute.xlu0 %2623
      %2625 = vrot.lane.b32.xlu0 %v2603, 16
      %v2626 = vpop.permute.xlu0 %2625
      %2627 = vrot.lane.b32.xlu0 %v2604, 16
      %v2628 = vpop.permute.xlu0 %2627
      %v2637 = vmul.f32 %v2509, %v2614
      %v2638 = vmul.f32 %v2510, %v2616
      %v2639 = vmul.f32 %v2511, %v2618
      %v2640 = vmul.f32 %v2512, %v2620
      %v2641 = vmul.f32 %v2513, %v2622
      %v2642 = vmul.f32 %v2514, %v2624
      %v2643 = vmul.f32 %v2515, %v2626
      %v2644 = vmul.f32 %v2516, %v2628
      %v2645 = vadd.f32 %v2469, %v2637
      %v2646 = vadd.f32 %v2470, %v2638
      %v2647 = vadd.f32 %v2471, %v2639
      %v2648 = vadd.f32 %v2472, %v2640
      %v2649 = vadd.f32 %v2473, %v2641
      %v2650 = vadd.f32 %v2474, %v2642
      %v2651 = vadd.f32 %v2475, %v2643
      %v2652 = vadd.f32 %v2476, %v2644
      %2661 = vrot.lane.b32.xlu0 %v2557, 16
      %v2662 = vpop.permute.xlu0 %2661
      %2663 = vrot.lane.b32.xlu0 %v2558, 16
      %v2664 = vpop.permute.xlu0 %2663
      %2665 = vrot.lane.b32.xlu0 %v2559, 16
      %v2666 = vpop.permute.xlu0 %2665
      %2667 = vrot.lane.b32.xlu0 %v2560, 16
      %v2668 = vpop.permute.xlu0 %2667
      %2669 = vrot.lane.b32.xlu0 %v2561, 16
      %v2670 = vpop.permute.xlu0 %2669
      %2671 = vrot.lane.b32.xlu0 %v2562, 16
      %v2672 = vpop.permute.xlu0 %2671
      %2673 = vrot.lane.b32.xlu0 %v2563, 16
      %v2674 = vpop.permute.xlu0 %2673
      %2675 = vrot.lane.b32.xlu0 %v2564, 16
      %v2676 = vpop.permute.xlu0 %2675
      %v2685 = vmul.f32 %v2509, %v2662
      %v2686 = vmul.f32 %v2510, %v2664
      %v2687 = vmul.f32 %v2511, %v2666
      %v2688 = vmul.f32 %v2512, %v2668
      %v2689 = vmul.f32 %v2513, %v2670
      %v2690 = vmul.f32 %v2514, %v2672
      %v2691 = vmul.f32 %v2515, %v2674
      %v2692 = vmul.f32 %v2516, %v2676
      %vm2693 = vcmp.lt.s32.totalorder %v289, 48
      %vm2694 = vcmp.lt.s32.totalorder %v290, 48
      %vm2695 = vcmp.lt.s32.totalorder %v291, 48
      %vm2696 = vcmp.lt.s32.totalorder %v292, 48
      %vm2697 = vcmp.lt.s32.totalorder %v293, 48
      %vm2698 = vcmp.lt.s32.totalorder %v294, 48
      %vm2699 = vcmp.lt.s32.totalorder %v295, 48
      %vm2700 = vcmp.lt.s32.totalorder %v296, 48
      %2709 = vrot.lane.b32.xlu0 %v2685, 112
      %v2710 = vpop.permute.xlu0 %2709
      %2711 = vrot.lane.b32.xlu0 %v2686, 112
      %v2712 = vpop.permute.xlu0 %2711
      %2713 = vrot.lane.b32.xlu0 %v2687, 112
      %v2714 = vpop.permute.xlu0 %2713
      %2715 = vrot.lane.b32.xlu0 %v2688, 112
      %v2716 = vpop.permute.xlu0 %2715
      %2717 = vrot.lane.b32.xlu0 %v2689, 112
      %v2718 = vpop.permute.xlu0 %2717
      %2719 = vrot.lane.b32.xlu0 %v2690, 112
      %v2720 = vpop.permute.xlu0 %2719
      %2721 = vrot.lane.b32.xlu0 %v2691, 112
      %v2722 = vpop.permute.xlu0 %2721
      %2723 = vrot.lane.b32.xlu0 %v2692, 112
      %v2724 = vpop.permute.xlu0 %2723
      %v2733 = vsel %vm2693, %v2714, 1.0
      %v2734 = vsel %vm2694, %v2716, 1.0
      %v2735 = vsel %vm2695, %v2718, 1.0
      %v2736 = vsel %vm2696, %v2720, 1.0
      %v2737 = vsel %vm2697, %v2722, 1.0
      %v2738 = vsel %vm2698, %v2724, 1.0
      %v2739 = vsel %vm2699, %v2710, 1.0
      %v2740 = vsel %vm2700, %v2712, 1.0
      %2749 = vrot.lane.b32.xlu0 %v2645, 112
      %v2750 = vpop.permute.xlu0 %2749
      %2751 = vrot.lane.b32.xlu0 %v2646, 112
      %v2752 = vpop.permute.xlu0 %2751
      %2753 = vrot.lane.b32.xlu0 %v2647, 112
      %v2754 = vpop.permute.xlu0 %2753
      %2755 = vrot.lane.b32.xlu0 %v2648, 112
      %v2756 = vpop.permute.xlu0 %2755
      %2757 = vrot.lane.b32.xlu0 %v2649, 112
      %v2758 = vpop.permute.xlu0 %2757
      %2759 = vrot.lane.b32.xlu0 %v2650, 112
      %v2760 = vpop.permute.xlu0 %2759
      %2761 = vrot.lane.b32.xlu0 %v2651, 112
      %v2762 = vpop.permute.xlu0 %2761
      %2763 = vrot.lane.b32.xlu0 %v2652, 112
      %v2764 = vpop.permute.xlu0 %2763
      %v2773 = vsel %vm2693, %v2754, 0.0
      %v2774 = vsel %vm2694, %v2756, 0.0
      %v2775 = vsel %vm2695, %v2758, 0.0
      %v2776 = vsel %vm2696, %v2760, 0.0
      %v2777 = vsel %vm2697, %v2762, 0.0
      %v2778 = vsel %vm2698, %v2764, 0.0
      %v2779 = vsel %vm2699, %v2750, 0.0
      %v2780 = vsel %vm2700, %v2752, 0.0
      %2789 = vrot.lane.b32.xlu0 %v2773, 16
      %v2790 = vpop.permute.xlu0 %2789
      %2791 = vrot.lane.b32.xlu0 %v2774, 16
      %v2792 = vpop.permute.xlu0 %2791
      %2793 = vrot.lane.b32.xlu0 %v2775, 16
      %v2794 = vpop.permute.xlu0 %2793
      %2795 = vrot.lane.b32.xlu0 %v2776, 16
      %v2796 = vpop.permute.xlu0 %2795
      %2797 = vrot.lane.b32.xlu0 %v2777, 16
      %v2798 = vpop.permute.xlu0 %2797
      %2799 = vrot.lane.b32.xlu0 %v2778, 16
      %v2800 = vpop.permute.xlu0 %2799
      %2801 = vrot.lane.b32.xlu0 %v2779, 16
      %v2802 = vpop.permute.xlu0 %2801
      %2803 = vrot.lane.b32.xlu0 %v2780, 16
      %v2804 = vpop.permute.xlu0 %2803
      %v2813 = vmul.f32 %v2685, %v2790
      %v2814 = vmul.f32 %v2686, %v2792
      %v2815 = vmul.f32 %v2687, %v2794
      %v2816 = vmul.f32 %v2688, %v2796
      %v2817 = vmul.f32 %v2689, %v2798
      %v2818 = vmul.f32 %v2690, %v2800
      %v2819 = vmul.f32 %v2691, %v2802
      %v2820 = vmul.f32 %v2692, %v2804
      %v2821 = vadd.f32 %v2645, %v2813
      %v2822 = vadd.f32 %v2646, %v2814
      %v2823 = vadd.f32 %v2647, %v2815
      %v2824 = vadd.f32 %v2648, %v2816
      %v2825 = vadd.f32 %v2649, %v2817
      %v2826 = vadd.f32 %v2650, %v2818
      %v2827 = vadd.f32 %v2651, %v2819
      %v2828 = vadd.f32 %v2652, %v2820
      %2837 = vrot.lane.b32.xlu0 %v2733, 16
      %v2838 = vpop.permute.xlu0 %2837
      %2839 = vrot.lane.b32.xlu0 %v2734, 16
      %v2840 = vpop.permute.xlu0 %2839
      %2841 = vrot.lane.b32.xlu0 %v2735, 16
      %v2842 = vpop.permute.xlu0 %2841
      %2843 = vrot.lane.b32.xlu0 %v2736, 16
      %v2844 = vpop.permute.xlu0 %2843
      %2845 = vrot.lane.b32.xlu0 %v2737, 16
      %v2846 = vpop.permute.xlu0 %2845
      %2847 = vrot.lane.b32.xlu0 %v2738, 16
      %v2848 = vpop.permute.xlu0 %2847
      %2849 = vrot.lane.b32.xlu0 %v2739, 16
      %v2850 = vpop.permute.xlu0 %2849
      %2851 = vrot.lane.b32.xlu0 %v2740, 16
      %v2852 = vpop.permute.xlu0 %2851
      %v2861 = vmul.f32 %v2685, %v2838
      %v2862 = vmul.f32 %v2686, %v2840
      %v2863 = vmul.f32 %v2687, %v2842
      %v2864 = vmul.f32 %v2688, %v2844
      %v2865 = vmul.f32 %v2689, %v2846
      %v2866 = vmul.f32 %v2690, %v2848
      %v2867 = vmul.f32 %v2691, %v2850
      %v2868 = vmul.f32 %v2692, %v2852
      %vm2869 = vcmp.lt.s32.totalorder %v289, 32
      %vm2870 = vcmp.lt.s32.totalorder %v290, 32
      %vm2871 = vcmp.lt.s32.totalorder %v291, 32
      %vm2872 = vcmp.lt.s32.totalorder %v292, 32
      %vm2873 = vcmp.lt.s32.totalorder %v293, 32
      %vm2874 = vcmp.lt.s32.totalorder %v294, 32
      %vm2875 = vcmp.lt.s32.totalorder %v295, 32
      %vm2876 = vcmp.lt.s32.totalorder %v296, 32
      %2885 = vrot.lane.b32.xlu0 %v2861, 112
      %v2886 = vpop.permute.xlu0 %2885
      %2887 = vrot.lane.b32.xlu0 %v2862, 112
      %v2888 = vpop.permute.xlu0 %2887
      %2889 = vrot.lane.b32.xlu0 %v2863, 112
      %v2890 = vpop.permute.xlu0 %2889
      %2891 = vrot.lane.b32.xlu0 %v2864, 112
      %v2892 = vpop.permute.xlu0 %2891
      %2893 = vrot.lane.b32.xlu0 %v2865, 112
      %v2894 = vpop.permute.xlu0 %2893
      %2895 = vrot.lane.b32.xlu0 %v2866, 112
      %v2896 = vpop.permute.xlu0 %2895
      %2897 = vrot.lane.b32.xlu0 %v2867, 112
      %v2898 = vpop.permute.xlu0 %2897
      %2899 = vrot.lane.b32.xlu0 %v2868, 112
      %v2900 = vpop.permute.xlu0 %2899
      %v2909 = vsel %vm2869, %v2894, 1.0
      %v2910 = vsel %vm2870, %v2896, 1.0
      %v2911 = vsel %vm2871, %v2898, 1.0
      %v2912 = vsel %vm2872, %v2900, 1.0
      %v2913 = vsel %vm2873, %v2886, 1.0
      %v2914 = vsel %vm2874, %v2888, 1.0
      %v2915 = vsel %vm2875, %v2890, 1.0
      %v2916 = vsel %vm2876, %v2892, 1.0
      %2925 = vrot.lane.b32.xlu0 %v2821, 112
      %v2926 = vpop.permute.xlu0 %2925
      %2927 = vrot.lane.b32.xlu0 %v2822, 112
      %v2928 = vpop.permute.xlu0 %2927
      %2929 = vrot.lane.b32.xlu0 %v2823, 112
      %v2930 = vpop.permute.xlu0 %2929
      %2931 = vrot.lane.b32.xlu0 %v2824, 112
      %v2932 = vpop.permute.xlu0 %2931
      %2933 = vrot.lane.b32.xlu0 %v2825, 112
      %v2934 = vpop.permute.xlu0 %2933
      %2935 = vrot.lane.b32.xlu0 %v2826, 112
      %v2936 = vpop.permute.xlu0 %2935
      %2937 = vrot.lane.b32.xlu0 %v2827, 112
      %v2938 = vpop.permute.xlu0 %2937
      %2939 = vrot.lane.b32.xlu0 %v2828, 112
      %v2940 = vpop.permute.xlu0 %2939
      %v2949 = vsel %vm2869, %v2934, 0.0
      %v2950 = vsel %vm2870, %v2936, 0.0
      %v2951 = vsel %vm2871, %v2938, 0.0
      %v2952 = vsel %vm2872, %v2940, 0.0
      %v2953 = vsel %vm2873, %v2926, 0.0
      %v2954 = vsel %vm2874, %v2928, 0.0
      %v2955 = vsel %vm2875, %v2930, 0.0
      %v2956 = vsel %vm2876, %v2932, 0.0
      %2965 = vrot.lane.b32.xlu0 %v2949, 16
      %v2966 = vpop.permute.xlu0 %2965
      %2967 = vrot.lane.b32.xlu0 %v2950, 16
      %v2968 = vpop.permute.xlu0 %2967
      %2969 = vrot.lane.b32.xlu0 %v2951, 16
      %v2970 = vpop.permute.xlu0 %2969
      %2971 = vrot.lane.b32.xlu0 %v2952, 16
      %v2972 = vpop.permute.xlu0 %2971
      %2973 = vrot.lane.b32.xlu0 %v2953, 16
      %v2974 = vpop.permute.xlu0 %2973
      %2975 = vrot.lane.b32.xlu0 %v2954, 16
      %v2976 = vpop.permute.xlu0 %2975
      %2977 = vrot.lane.b32.xlu0 %v2955, 16
      %v2978 = vpop.permute.xlu0 %2977
      %2979 = vrot.lane.b32.xlu0 %v2956, 16
      %v2980 = vpop.permute.xlu0 %2979
      %v2989 = vmul.f32 %v2861, %v2966
      %v2990 = vmul.f32 %v2862, %v2968
      %v2991 = vmul.f32 %v2863, %v2970
      %v2992 = vmul.f32 %v2864, %v2972
      %v2993 = vmul.f32 %v2865, %v2974
      %v2994 = vmul.f32 %v2866, %v2976
      %v2995 = vmul.f32 %v2867, %v2978
      %v2996 = vmul.f32 %v2868, %v2980
      %v2997 = vadd.f32 %v2821, %v2989
      %v2998 = vadd.f32 %v2822, %v2990
      %v2999 = vadd.f32 %v2823, %v2991
      %v3000 = vadd.f32 %v2824, %v2992
      %v3001 = vadd.f32 %v2825, %v2993
      %v3002 = vadd.f32 %v2826, %v2994
      %v3003 = vadd.f32 %v2827, %v2995
      %v3004 = vadd.f32 %v2828, %v2996
      %3013 = vrot.lane.b32.xlu0 %v2909, 16
      %v3014 = vpop.permute.xlu0 %3013
      %3015 = vrot.lane.b32.xlu0 %v2910, 16
      %v3016 = vpop.permute.xlu0 %3015
      %3017 = vrot.lane.b32.xlu0 %v2911, 16
      %v3018 = vpop.permute.xlu0 %3017
      %3019 = vrot.lane.b32.xlu0 %v2912, 16
      %v3020 = vpop.permute.xlu0 %3019
      %3021 = vrot.lane.b32.xlu0 %v2913, 16
      %v3022 = vpop.permute.xlu0 %3021
      %3023 = vrot.lane.b32.xlu0 %v2914, 16
      %v3024 = vpop.permute.xlu0 %3023
      %3025 = vrot.lane.b32.xlu0 %v2915, 16
      %v3026 = vpop.permute.xlu0 %3025
      %3027 = vrot.lane.b32.xlu0 %v2916, 16
      %v3028 = vpop.permute.xlu0 %3027
      %v3037 = vmul.f32 %v2861, %v3014
      %v3038 = vmul.f32 %v2862, %v3016
      %v3039 = vmul.f32 %v2863, %v3018
      %v3040 = vmul.f32 %v2864, %v3020
      %v3041 = vmul.f32 %v2865, %v3022
      %v3042 = vmul.f32 %v2866, %v3024
      %v3043 = vmul.f32 %v2867, %v3026
      %v3044 = vmul.f32 %v2868, %v3028
      %3053 = vrot.lane.b32.xlu0 %v3037, 112
      %v3054 = vpop.permute.xlu0 %3053
      %3055 = vrot.lane.b32.xlu0 %v3038, 112
      %v3056 = vpop.permute.xlu0 %3055
      %3057 = vrot.lane.b32.xlu0 %v3039, 112
      %v3058 = vpop.permute.xlu0 %3057
      %3059 = vrot.lane.b32.xlu0 %v3040, 112
      %v3060 = vpop.permute.xlu0 %3059
      %3061 = vrot.lane.b32.xlu0 %v3041, 112
      %v3062 = vpop.permute.xlu0 %3061
      %3063 = vrot.lane.b32.xlu0 %v3042, 112
      %v3064 = vpop.permute.xlu0 %3063
      %3065 = vrot.lane.b32.xlu0 %v3043, 112
      %v3066 = vpop.permute.xlu0 %3065
      %3067 = vrot.lane.b32.xlu0 %v3044, 112
      %v3068 = vpop.permute.xlu0 %3067
      %3077 = vst.msk [vmem:[#allocation4] sm:$0xff] %vm532, %v3054
      %3078 = vst.msk [vmem:[#allocation4 + $0x8] sm:$0xff] %vm532, %v3056
      %3079 = vst.msk [vmem:[#allocation4 + $0x10] sm:$0xff] %vm532, %v3058
      %3080 = vst.msk [vmem:[#allocation4 + $0x18] sm:$0xff] %vm532, %v3060
      %3081 = vst.msk [vmem:[#allocation4 + $0x20] sm:$0xff] %vm532, %v3062
      %3082 = vst.msk [vmem:[#allocation4 + $0x28] sm:$0xff] %vm532, %v3064
      %3083 = vst.msk [vmem:[#allocation4 + $0x30] sm:$0xff] %vm532, %v3066
      %3084 = vst.msk [vmem:[#allocation4 + $0x38] sm:$0xff] %vm532, %v3068
      %3093 = vrot.lane.b32.xlu0 %v2997, 112
      %v3094 = vpop.permute.xlu0 %3093
      %3095 = vrot.lane.b32.xlu0 %v2998, 112
      %v3096 = vpop.permute.xlu0 %3095
      %3097 = vrot.lane.b32.xlu0 %v2999, 112
      %v3098 = vpop.permute.xlu0 %3097
      %3099 = vrot.lane.b32.xlu0 %v3000, 112
      %v3100 = vpop.permute.xlu0 %3099
      %3101 = vrot.lane.b32.xlu0 %v3001, 112
      %v3102 = vpop.permute.xlu0 %3101
      %3103 = vrot.lane.b32.xlu0 %v3002, 112
      %v3104 = vpop.permute.xlu0 %3103
      %3105 = vrot.lane.b32.xlu0 %v3003, 112
      %v3106 = vpop.permute.xlu0 %3105
      %3107 = vrot.lane.b32.xlu0 %v3004, 112
      %v3108 = vpop.permute.xlu0 %3107
      %3117 = vst.msk [vmem:[#allocation5] sm:$0xff] %vm532, %v3094
      %3118 = vst.msk [vmem:[#allocation5 + $0x8] sm:$0xff] %vm532, %v3096
      %3119 = vst.msk [vmem:[#allocation5 + $0x10] sm:$0xff] %vm532, %v3098
      %3120 = vst.msk [vmem:[#allocation5 + $0x18] sm:$0xff] %vm532, %v3100
      %3121 = vst.msk [vmem:[#allocation5 + $0x20] sm:$0xff] %vm532, %v3102
      %3122 = vst.msk [vmem:[#allocation5 + $0x28] sm:$0xff] %vm532, %v3104
      %3123 = vst.msk [vmem:[#allocation5 + $0x30] sm:$0xff] %vm532, %v3106
      %3124 = vst.msk [vmem:[#allocation5 + $0x38] sm:$0xff] %vm532, %v3108
      %v3125 = vld [vmem:[#allocation2] sm:$0xff]
      %v3126 = vld [vmem:[#allocation2 + $0x8] sm:$0xff]
      %v3127 = vld [vmem:[#allocation2 + $0x10] sm:$0xff]
      %v3128 = vld [vmem:[#allocation2 + $0x18] sm:$0xff]
      %v3129 = vld [vmem:[#allocation2 + $0x20] sm:$0xff]
      %v3130 = vld [vmem:[#allocation2 + $0x28] sm:$0xff]
      %v3131 = vld [vmem:[#allocation2 + $0x30] sm:$0xff]
      %v3132 = vld [vmem:[#allocation2 + $0x38] sm:$0xff]
      %v3133 = vmul.f32 %v3125, 0.0
      %v3134 = vmul.f32 %v3126, 0.0
      %v3135 = vmul.f32 %v3127, 0.0
      %v3136 = vmul.f32 %v3128, 0.0
      %v3137 = vmul.f32 %v3129, 0.0
      %v3138 = vmul.f32 %v3130, 0.0
      %v3139 = vmul.f32 %v3131, 0.0
      %v3140 = vmul.f32 %v3132, 0.0
      %v3141 = vld [vmem:[#allocation3] sm:$0xff]
      %v3142 = vld [vmem:[#allocation3 + $0x8] sm:$0xff]
      %v3143 = vld [vmem:[#allocation3 + $0x10] sm:$0xff]
      %v3144 = vld [vmem:[#allocation3 + $0x18] sm:$0xff]
      %v3145 = vld [vmem:[#allocation3 + $0x20] sm:$0xff]
      %v3146 = vld [vmem:[#allocation3 + $0x28] sm:$0xff]
      %v3147 = vld [vmem:[#allocation3 + $0x30] sm:$0xff]
      %v3148 = vld [vmem:[#allocation3 + $0x38] sm:$0xff]
      %v3149 = vadd.f32 %v3133, %v3141
      %v3150 = vadd.f32 %v3134, %v3142
      %v3151 = vadd.f32 %v3135, %v3143
      %v3152 = vadd.f32 %v3136, %v3144
      %v3153 = vadd.f32 %v3137, %v3145
      %v3154 = vadd.f32 %v3138, %v3146
      %v3155 = vadd.f32 %v3139, %v3147
      %v3156 = vadd.f32 %v3140, %v3148
      %3157 = vst.msk [vmem:[#allocation2] sm:$0xff] %vm532, %v3149
      %3158 = vst.msk [vmem:[#allocation2 + $0x8] sm:$0xff] %vm532, %v3150
      %3159 = vst.msk [vmem:[#allocation2 + $0x10] sm:$0xff] %vm532, %v3151
      %3160 = vst.msk [vmem:[#allocation2 + $0x18] sm:$0xff] %vm532, %v3152
      %3161 = vst.msk [vmem:[#allocation2 + $0x20] sm:$0xff] %vm532, %v3153
      %3162 = vst.msk [vmem:[#allocation2 + $0x28] sm:$0xff] %vm532, %v3154
      %3163 = vst.msk [vmem:[#allocation2 + $0x30] sm:$0xff] %vm532, %v3155
      %3164 = vst.msk [vmem:[#allocation2 + $0x38] sm:$0xff] %vm532, %v3156
      %v3165 = vld [vmem:[#allocation4] sm:$0xff]
      %v3166 = vld [vmem:[#allocation4 + $0x8] sm:$0xff]
      %v3167 = vld [vmem:[#allocation4 + $0x10] sm:$0xff]
      %v3168 = vld [vmem:[#allocation4 + $0x18] sm:$0xff]
      %v3169 = vld [vmem:[#allocation4 + $0x20] sm:$0xff]
      %v3170 = vld [vmem:[#allocation4 + $0x28] sm:$0xff]
      %v3171 = vld [vmem:[#allocation4 + $0x30] sm:$0xff]
      %v3172 = vld [vmem:[#allocation4 + $0x38] sm:$0xff]
      %v3173 = vmul.f32 %v3165, 0.0
      %v3174 = vmul.f32 %v3166, 0.0
      %v3175 = vmul.f32 %v3167, 0.0
      %v3176 = vmul.f32 %v3168, 0.0
      %v3177 = vmul.f32 %v3169, 0.0
      %v3178 = vmul.f32 %v3170, 0.0
      %v3179 = vmul.f32 %v3171, 0.0
      %v3180 = vmul.f32 %v3172, 0.0
      %v3181 = vld [vmem:[#allocation5] sm:$0xff]
      %v3182 = vld [vmem:[#allocation5 + $0x8] sm:$0xff]
      %v3183 = vld [vmem:[#allocation5 + $0x10] sm:$0xff]
      %v3184 = vld [vmem:[#allocation5 + $0x18] sm:$0xff]
      %v3185 = vld [vmem:[#allocation5 + $0x20] sm:$0xff]
      %v3186 = vld [vmem:[#allocation5 + $0x28] sm:$0xff]
      %v3187 = vld [vmem:[#allocation5 + $0x30] sm:$0xff]
      %v3188 = vld [vmem:[#allocation5 + $0x38] sm:$0xff]
      %v3189 = vadd.f32 %v3173, %v3181
      %v3190 = vadd.f32 %v3174, %v3182
      %v3191 = vadd.f32 %v3175, %v3183
      %v3192 = vadd.f32 %v3176, %v3184
      %v3193 = vadd.f32 %v3177, %v3185
      %v3194 = vadd.f32 %v3178, %v3186
      %v3195 = vadd.f32 %v3179, %v3187
      %v3196 = vadd.f32 %v3180, %v3188
      %v3197 = vld [vmem:[%s273] sm:$0xf]
      %v3198 = vld [vmem:[%s273 + $0x4] sm:$0xf]
      %v3199 = vld [vmem:[%s273 + $0x8] sm:$0xf]
      %v3200 = vld [vmem:[%s273 + $0xc] sm:$0xf]
      %v3201 = vld [vmem:[%s273 + $0x10] sm:$0xf]
      %v3202 = vld [vmem:[%s273 + $0x14] sm:$0xf]
      %v3203 = vld [vmem:[%s273 + $0x18] sm:$0xf]
      %v3204 = vld [vmem:[%s273 + $0x1c] sm:$0xf]
      %v3205 = vunpack.c.l.bf16 %v3197
      %v3206 = vunpack.c.l.bf16 %v3198
      %v3207 = vunpack.c.l.bf16 %v3199
      %v3208 = vunpack.c.l.bf16 %v3200
      %v3209 = vunpack.c.l.bf16 %v3201
      %v3210 = vunpack.c.l.bf16 %v3202
      %v3211 = vunpack.c.l.bf16 %v3203
      %v3212 = vunpack.c.l.bf16 %v3204
      %v3213 = vld [vmem:[#allocation2] sm:$0xff]
      %v3214 = vld [vmem:[#allocation2 + $0x8] sm:$0xff]
      %v3215 = vld [vmem:[#allocation2 + $0x10] sm:$0xff]
      %v3216 = vld [vmem:[#allocation2 + $0x18] sm:$0xff]
      %v3217 = vld [vmem:[#allocation2 + $0x20] sm:$0xff]
      %v3218 = vld [vmem:[#allocation2 + $0x28] sm:$0xff]
      %v3219 = vld [vmem:[#allocation2 + $0x30] sm:$0xff]
      %v3220 = vld [vmem:[#allocation2 + $0x38] sm:$0xff]
      %v3221 = vadd.f32 %v3213, %v3189
      %v3222 = vadd.f32 %v3214, %v3190
      %v3223 = vadd.f32 %v3215, %v3191
      %v3224 = vadd.f32 %v3216, %v3192
      %v3225 = vadd.f32 %v3217, %v3193
      %v3226 = vadd.f32 %v3218, %v3194
      %v3227 = vadd.f32 %v3219, %v3195
      %v3228 = vadd.f32 %v3220, %v3196
      %v3229 = vxor.u32 %v3205, 2147483648
      %v3230 = vxor.u32 %v3206, 2147483648
      %v3231 = vxor.u32 %v3207, 2147483648
      %v3232 = vxor.u32 %v3208, 2147483648
      %v3233 = vxor.u32 %v3209, 2147483648
      %v3234 = vxor.u32 %v3210, 2147483648
      %v3235 = vxor.u32 %v3211, 2147483648
      %v3236 = vxor.u32 %v3212, 2147483648
      %v3237 = vmul.f32 %v3229, 1.442695
      %v3238 = vpow.pop %v3237
      %v3239 = vmul.f32 %v3230, 1.442695
      %v3240 = vpow.pop %v3239
      %v3241 = vmul.f32 %v3231, 1.442695
      %v3242 = vpow.pop %v3241
      %v3243 = vmul.f32 %v3232, 1.442695
      %v3244 = vpow.pop %v3243
      %v3245 = vmul.f32 %v3233, 1.442695
      %v3246 = vpow.pop %v3245
      %v3247 = vmul.f32 %v3234, 1.442695
      %v3248 = vpow.pop %v3247
      %v3249 = vmul.f32 %v3235, 1.442695
      %v3250 = vpow.pop %v3249
      %v3251 = vmul.f32 %v3236, 1.442695
      %v3252 = vpow.pop %v3251
      %v3253 = vadd.f32 %v3238, 1.0
      %v3254 = vadd.f32 %v3240, 1.0
      %v3255 = vadd.f32 %v3242, 1.0
      %v3256 = vadd.f32 %v3244, 1.0
      %v3257 = vadd.f32 %v3246, 1.0
      %v3258 = vadd.f32 %v3248, 1.0
      %v3259 = vadd.f32 %v3250, 1.0
      %v3260 = vadd.f32 %v3252, 1.0
      %v3261 = vrcp.pop %v3253
      %v3262 = vmul.f32 1.0, %v3261
      %v3263 = vrcp.pop %v3254
      %v3264 = vmul.f32 1.0, %v3263
      %v3265 = vrcp.pop %v3255
      %v3266 = vmul.f32 1.0, %v3265
      %v3267 = vrcp.pop %v3256
      %v3268 = vmul.f32 1.0, %v3267
      %v3269 = vrcp.pop %v3257
      %v3270 = vmul.f32 1.0, %v3269
      %v3271 = vrcp.pop %v3258
      %v3272 = vmul.f32 1.0, %v3271
      %v3273 = vrcp.pop %v3259
      %v3274 = vmul.f32 1.0, %v3273
      %v3275 = vrcp.pop %v3260
      %v3276 = vmul.f32 1.0, %v3275
      %v3277 = vmul.f32 %v3205, %v3262
      %v3278 = vmul.f32 %v3206, %v3264
      %v3279 = vmul.f32 %v3207, %v3266
      %v3280 = vmul.f32 %v3208, %v3268
      %v3281 = vmul.f32 %v3209, %v3270
      %v3282 = vmul.f32 %v3210, %v3272
      %v3283 = vmul.f32 %v3211, %v3274
      %v3284 = vmul.f32 %v3212, %v3276
      %3293 = vrot.lane.b32.xlu0 %v3277, 112
      %v3294 = vpop.permute.xlu0 %3293
      %3295 = vrot.lane.b32.xlu0 %v3278, 112
      %v3296 = vpop.permute.xlu0 %3295
      %3297 = vrot.lane.b32.xlu0 %v3279, 112
      %v3298 = vpop.permute.xlu0 %3297
      %3299 = vrot.lane.b32.xlu0 %v3280, 112
      %v3300 = vpop.permute.xlu0 %3299
      %3301 = vrot.lane.b32.xlu0 %v3281, 112
      %v3302 = vpop.permute.xlu0 %3301
      %3303 = vrot.lane.b32.xlu0 %v3282, 112
      %v3304 = vpop.permute.xlu0 %3303
      %3305 = vrot.lane.b32.xlu0 %v3283, 112
      %v3306 = vpop.permute.xlu0 %3305
      %3307 = vrot.lane.b32.xlu0 %v3284, 112
      %v3308 = vpop.permute.xlu0 %3307
      %v3317 = vmul.f32 %v3221, %v3294
      %v3318 = vmul.f32 %v3222, %v3296
      %v3319 = vmul.f32 %v3223, %v3298
      %v3320 = vmul.f32 %v3224, %v3300
      %v3321 = vmul.f32 %v3225, %v3302
      %v3322 = vmul.f32 %v3226, %v3304
      %v3323 = vmul.f32 %v3227, %v3306
      %v3324 = vmul.f32 %v3228, %v3308
      %3325 = vst.msk [vmem:[#allocation6] sm:$0xff] %vm532, %v3317
      %3326 = vst.msk [vmem:[#allocation6 + $0x8] sm:$0xff] %vm532, %v3318
      %3327 = vst.msk [vmem:[#allocation6 + $0x10] sm:$0xff] %vm532, %v3319
      %3328 = vst.msk [vmem:[#allocation6 + $0x18] sm:$0xff] %vm532, %v3320
      %3329 = vst.msk [vmem:[#allocation6 + $0x20] sm:$0xff] %vm532, %v3321
      %3330 = vst.msk [vmem:[#allocation6 + $0x28] sm:$0xff] %vm532, %v3322
      %3331 = vst.msk [vmem:[#allocation6 + $0x30] sm:$0xff] %vm532, %v3323
      %3332 = vst.msk [vmem:[#allocation6 + $0x38] sm:$0xff] %vm532, %v3324
      %v3333 = vld [vmem:[%s273] sm:$0xf]
      %v3334 = vld [vmem:[%s273 + $0x4] sm:$0xf]
      %v3335 = vld [vmem:[%s273 + $0x8] sm:$0xf]
      %v3336 = vld [vmem:[%s273 + $0xc] sm:$0xf]
      %v3337 = vld [vmem:[%s273 + $0x10] sm:$0xf]
      %v3338 = vld [vmem:[%s273 + $0x14] sm:$0xf]
      %v3339 = vld [vmem:[%s273 + $0x18] sm:$0xf]
      %v3340 = vld [vmem:[%s273 + $0x1c] sm:$0xf]
      %v3341 = vunpack.c.l.bf16 %v3333
      %v3342 = vunpack.c.l.bf16 %v3334
      %v3343 = vunpack.c.l.bf16 %v3335
      %v3344 = vunpack.c.l.bf16 %v3336
      %v3345 = vunpack.c.l.bf16 %v3337
      %v3346 = vunpack.c.l.bf16 %v3338
      %v3347 = vunpack.c.l.bf16 %v3339
      %v3348 = vunpack.c.l.bf16 %v3340
      %3357 = vrot.lane.b32.xlu0 %v3341, 112
      %v3358 = vpop.permute.xlu0 %3357
      %3359 = vrot.lane.b32.xlu0 %v3342, 112
      %v3360 = vpop.permute.xlu0 %3359
      %3361 = vrot.lane.b32.xlu0 %v3343, 112
      %v3362 = vpop.permute.xlu0 %3361
      %3363 = vrot.lane.b32.xlu0 %v3344, 112
      %v3364 = vpop.permute.xlu0 %3363
      %3365 = vrot.lane.b32.xlu0 %v3345, 112
      %v3366 = vpop.permute.xlu0 %3365
      %3367 = vrot.lane.b32.xlu0 %v3346, 112
      %v3368 = vpop.permute.xlu0 %3367
      %3369 = vrot.lane.b32.xlu0 %v3347, 112
      %v3370 = vpop.permute.xlu0 %3369
      %3371 = vrot.lane.b32.xlu0 %v3348, 112
      %v3372 = vpop.permute.xlu0 %3371
      %v3381 = vrot.slane %v3358, 7
      %v3382 = vrot.slane %v3360, 7
      %v3383 = vrot.slane %v3362, 7
      %v3384 = vrot.slane %v3364, 7
      %v3385 = vrot.slane %v3366, 7
      %v3386 = vrot.slane %v3368, 7
      %v3387 = vrot.slane %v3370, 7
      %v3388 = vrot.slane %v3372, 7
      %v3389 = vsel %vm344, %v3387, %v3388
      %v3390 = vsel %vm344, %v3386, %v3387
      %v3391 = vsel %vm344, %v3385, %v3386
      %v3392 = vsel %vm344, %v3384, %v3385
      %v3393 = vsel %vm344, %v3383, %v3384
      %v3394 = vsel %vm344, %v3382, %v3383
      %v3395 = vsel %vm344, %v3381, %v3382
      %v3396 = vsel %vm344, %v3388, %v3381
      %v3397 = vsel %vm328, 0.0, %v3396
      %v3398 = vsel %vm329, 0.0, %v3395
      %v3399 = vsel %vm330, 0.0, %v3394
      %v3400 = vsel %vm331, 0.0, %v3393
      %v3401 = vsel %vm332, 0.0, %v3392
      %v3402 = vsel %vm333, 0.0, %v3391
      %v3403 = vsel %vm334, 0.0, %v3390
      %v3404 = vsel %vm335, 0.0, %v3389
      %v3405 = vrot.slane %v3358, 1
      %v3406 = vrot.slane %v3360, 1
      %v3407 = vrot.slane %v3362, 1
      %v3408 = vrot.slane %v3364, 1
      %v3409 = vrot.slane %v3366, 1
      %v3410 = vrot.slane %v3368, 1
      %v3411 = vrot.slane %v3370, 1
      %v3412 = vrot.slane %v3372, 1
      %v3413 = vsel %vm377, %v3411, %v3412
      %v3414 = vsel %vm377, %v3410, %v3411
      %v3415 = vsel %vm377, %v3409, %v3410
      %v3416 = vsel %vm377, %v3408, %v3409
      %v3417 = vsel %vm377, %v3407, %v3408
      %v3418 = vsel %vm377, %v3406, %v3407
      %v3419 = vsel %vm377, %v3405, %v3406
      %v3420 = vsel %vm377, %v3412, %v3405
      %v3421 = vsel %vm361, 0.0, %v3419
      %v3422 = vsel %vm362, 0.0, %v3418
      %v3423 = vsel %vm363, 0.0, %v3417
      %v3424 = vsel %vm364, 0.0, %v3416
      %v3425 = vsel %vm365, 0.0, %v3415
      %v3426 = vsel %vm366, 0.0, %v3414
      %v3427 = vsel %vm367, 0.0, %v3413
      %v3428 = vsel %vm368, 0.0, %v3420
      %v3429 = vmul.f32 %v3397, %v397
      %v3430 = vmul.f32 %v3398, %v397
      %v3431 = vmul.f32 %v3399, %v397
      %v3432 = vmul.f32 %v3400, %v397
      %v3433 = vmul.f32 %v3401, %v397
      %v3434 = vmul.f32 %v3402, %v397
      %v3435 = vmul.f32 %v3403, %v397
      %v3436 = vmul.f32 %v3404, %v397
      %3438 = vrot.lane.b32.xlu0 %v409, 16
      %v3439 = vpop.permute.xlu0 %3438
      %v3441 = vmul.f32 %v3341, %v3439
      %v3442 = vmul.f32 %v3342, %v3439
      %v3443 = vmul.f32 %v3343, %v3439
      %v3444 = vmul.f32 %v3344, %v3439
      %v3445 = vmul.f32 %v3345, %v3439
      %v3446 = vmul.f32 %v3346, %v3439
      %v3447 = vmul.f32 %v3347, %v3439
      %v3448 = vmul.f32 %v3348, %v3439
      %3457 = vrot.lane.b32.xlu0 %v3441, 112
      %v3458 = vpop.permute.xlu0 %3457
      %3459 = vrot.lane.b32.xlu0 %v3442, 112
      %v3460 = vpop.permute.xlu0 %3459
      %3461 = vrot.lane.b32.xlu0 %v3443, 112
      %v3462 = vpop.permute.xlu0 %3461
      %3463 = vrot.lane.b32.xlu0 %v3444, 112
      %v3464 = vpop.permute.xlu0 %3463
      %3465 = vrot.lane.b32.xlu0 %v3445, 112
      %v3466 = vpop.permute.xlu0 %3465
      %3467 = vrot.lane.b32.xlu0 %v3446, 112
      %v3468 = vpop.permute.xlu0 %3467
      %3469 = vrot.lane.b32.xlu0 %v3447, 112
      %v3470 = vpop.permute.xlu0 %3469
      %3471 = vrot.lane.b32.xlu0 %v3448, 112
      %v3472 = vpop.permute.xlu0 %3471
      %v3481 = vadd.f32 %v3429, %v3458
      %v3482 = vadd.f32 %v3430, %v3460
      %v3483 = vadd.f32 %v3431, %v3462
      %v3484 = vadd.f32 %v3432, %v3464
      %v3485 = vadd.f32 %v3433, %v3466
      %v3486 = vadd.f32 %v3434, %v3468
      %v3487 = vadd.f32 %v3435, %v3470
      %v3488 = vadd.f32 %v3436, %v3472
      %v3489 = vmul.f32 %v3421, %v429
      %v3490 = vmul.f32 %v3422, %v429
      %v3491 = vmul.f32 %v3423, %v429
      %v3492 = vmul.f32 %v3424, %v429
      %v3493 = vmul.f32 %v3425, %v429
      %v3494 = vmul.f32 %v3426, %v429
      %v3495 = vmul.f32 %v3427, %v429
      %v3496 = vmul.f32 %v3428, %v429
      %v3497 = vadd.f32 %v3481, %v3489
      %v3498 = vadd.f32 %v3482, %v3490
      %v3499 = vadd.f32 %v3483, %v3491
      %v3500 = vadd.f32 %v3484, %v3492
      %v3501 = vadd.f32 %v3485, %v3493
      %v3502 = vadd.f32 %v3486, %v3494
      %v3503 = vadd.f32 %v3487, %v3495
      %v3504 = vadd.f32 %v3488, %v3496
      %v3505 = vadd.f32 %v3497, %v450
      %v3506 = vadd.f32 %v3498, %v450
      %v3507 = vadd.f32 %v3499, %v450
      %v3508 = vadd.f32 %v3500, %v450
      %v3509 = vadd.f32 %v3501, %v450
      %v3510 = vadd.f32 %v3502, %v450
      %v3511 = vadd.f32 %v3503, %v450
      %v3512 = vadd.f32 %v3504, %v450
      %v3513 = vxor.u32 %v3505, 2147483648
      %v3514 = vxor.u32 %v3506, 2147483648
      %v3515 = vxor.u32 %v3507, 2147483648
      %v3516 = vxor.u32 %v3508, 2147483648
      %v3517 = vxor.u32 %v3509, 2147483648
      %v3518 = vxor.u32 %v3510, 2147483648
      %v3519 = vxor.u32 %v3511, 2147483648
      %v3520 = vxor.u32 %v3512, 2147483648
      %v3521 = vmul.f32 %v3513, 1.442695
      %v3522 = vpow.pop %v3521
      %v3523 = vmul.f32 %v3514, 1.442695
      %v3524 = vpow.pop %v3523
      %v3525 = vmul.f32 %v3515, 1.442695
      %v3526 = vpow.pop %v3525
      %v3527 = vmul.f32 %v3516, 1.442695
      %v3528 = vpow.pop %v3527
      %v3529 = vmul.f32 %v3517, 1.442695
      %v3530 = vpow.pop %v3529
      %v3531 = vmul.f32 %v3518, 1.442695
      %v3532 = vpow.pop %v3531
      %v3533 = vmul.f32 %v3519, 1.442695
      %v3534 = vpow.pop %v3533
      %v3535 = vmul.f32 %v3520, 1.442695
      %v3536 = vpow.pop %v3535
      %v3537 = vadd.f32 %v3522, 1.0
      %v3538 = vadd.f32 %v3524, 1.0
      %v3539 = vadd.f32 %v3526, 1.0
      %v3540 = vadd.f32 %v3528, 1.0
      %v3541 = vadd.f32 %v3530, 1.0
      %v3542 = vadd.f32 %v3532, 1.0
      %v3543 = vadd.f32 %v3534, 1.0
      %v3544 = vadd.f32 %v3536, 1.0
      %v3545 = vrcp.pop %v3537
      %v3546 = vmul.f32 1.0, %v3545
      %v3547 = vrcp.pop %v3538
      %v3548 = vmul.f32 1.0, %v3547
      %v3549 = vrcp.pop %v3539
      %v3550 = vmul.f32 1.0, %v3549
      %v3551 = vrcp.pop %v3540
      %v3552 = vmul.f32 1.0, %v3551
      %v3553 = vrcp.pop %v3541
      %v3554 = vmul.f32 1.0, %v3553
      %v3555 = vrcp.pop %v3542
      %v3556 = vmul.f32 1.0, %v3555
      %v3557 = vrcp.pop %v3543
      %v3558 = vmul.f32 1.0, %v3557
      %v3559 = vrcp.pop %v3544
      %v3560 = vmul.f32 1.0, %v3559
      %v3561 = vmul.f32 %v3505, %v3546
      %v3562 = vmul.f32 %v3506, %v3548
      %v3563 = vmul.f32 %v3507, %v3550
      %v3564 = vmul.f32 %v3508, %v3552
      %v3565 = vmul.f32 %v3509, %v3554
      %v3566 = vmul.f32 %v3510, %v3556
      %v3567 = vmul.f32 %v3511, %v3558
      %v3568 = vmul.f32 %v3512, %v3560
      %v3569 = vpack.c.bf16 %v3562, %v3561
      %v3570 = vpack.c.bf16 %v3564, %v3563
      %v3571 = vpack.c.bf16 %v3566, %v3565
      %v3572 = vpack.c.bf16 %v3568, %v3567
      %v3574 = vsel %vm532, %v3569, 0
      %v3577 = vsel %vm532, %v3570, 0
      %v3580 = vsel %vm532, %v3571, 0
      %v3583 = vsel %vm532, %v3572, 0
      %3585 = vmatprep.subr.bf16.mxu0 0
      %3586 = vmatpush1.bf16.msra.mxu0 %v530
      %3587 = vmatprep.subr.bf16.mxu0 0
      %3588 = vmatpush1.bf16.msra.mxu0 0
      %3589 = vmatprep.subr.bf16.mxu0 0
      %3590 = vmatpush1.bf16.msra.mxu0 0
      %3591 = vmatprep.subr.bf16.mxu0 0
      %3592 = vmatpush1.bf16.msra.mxu0 0
      %3593 = vmatprep.subr.bf16.mxu0 0
      %3594 = vmatpush1.bf16.msra.mxu0 0
      %3595 = vmatprep.subr.bf16.mxu0 0
      %3596 = vmatpush1.bf16.msra.mxu0 0
      %3597 = vmatprep.subr.bf16.mxu0 0
      %3598 = vmatpush1.bf16.msra.mxu0 0
      %3599 = vmatprep.subr.bf16.mxu0 0
      %3600 = vmatpush1.bf16.msra.mxu0 0
      %3601 = vmatprep.subr.bf16.mxu0 0
      %3602 = vmatpush1.bf16.msra.mxu0 0
      %3603 = vmatprep.subr.bf16.mxu0 0
      %3604 = vmatpush1.bf16.msra.mxu0 0
      %3605 = vmatprep.subr.bf16.mxu0 0
      %3606 = vmatpush1.bf16.msra.mxu0 0
      %3607 = vmatprep.subr.bf16.mxu0 0
      %3608 = vmatpush1.bf16.msra.mxu0 0
      %3609 = vmatprep.subr.bf16.mxu0 0
      %3610 = vmatpush1.bf16.msra.mxu0 0
      %3611 = vmatprep.subr.bf16.mxu0 0
      %3612 = vmatpush1.bf16.msra.mxu0 0
      %3613 = vmatprep.subr.bf16.mxu0 0
      %3614 = vmatpush1.bf16.msra.mxu0 0
      %3615 = vmatprep.subr.bf16.mxu0 0
      %3616 = vmatpush1.bf16.msra.mxu0 0
      %3617 = vmatprep.mubr.bf16.mxu0 0
      %3618 = vmatmul.mubr.bf16.gmra.mrb[0].mxu0 %v3574
      %v3619 = vpop.f32.mrb[0].mxu0
      %v3620 = vadd.f32 %v524, %v3619
      %v3621 = vpop.f32.mrb[0].mxu0
      %v3622 = vpop.f32.mrb[0].mxu0
      %v3623 = vadd.f32 %v524, %v3622
      %v3624 = vpop.f32.mrb[0].mxu0
      %3625 = vmatprep.mubr.bf16.mxu0 0
      %3626 = vmatmul.mubr.bf16.gmra.mrb[0].mxu0 %v3577
      %v3627 = vpop.f32.mrb[0].mxu0
      %v3628 = vadd.f32 %v524, %v3627
      %v3629 = vpop.f32.mrb[0].mxu0
      %v3630 = vpop.f32.mrb[0].mxu0
      %v3631 = vadd.f32 %v524, %v3630
      %v3632 = vpop.f32.mrb[0].mxu0
      %3633 = vmatprep.mubr.bf16.mxu0 0
      %3634 = vmatmul.mubr.bf16.gmra.mrb[0].mxu0 %v3580
      %v3635 = vpop.f32.mrb[0].mxu0
      %v3636 = vadd.f32 %v524, %v3635
      %v3637 = vpop.f32.mrb[0].mxu0
      %v3638 = vpop.f32.mrb[0].mxu0
      %v3639 = vadd.f32 %v524, %v3638
      %v3640 = vpop.f32.mrb[0].mxu0
      %3641 = vmatprep.mubr.bf16.mxu0 0
      %3642 = vmatmul.mubr.bf16.gmra.mrb[0].mxu0 %v3583
      %v3643 = vpop.f32.mrb[0].mxu0
      %v3644 = vadd.f32 %v524, %v3643
      %v3645 = vpop.f32.mrb[0].mxu0
      %v3646 = vpop.f32.mrb[0].mxu0
      %v3647 = vadd.f32 %v524, %v3646
      %v3648 = vpop.f32.mrb[0].mxu0
      %3649 = vdwg.mxu0
      %v3650 = vxor.u32 %v3620, 2147483648
      %v3651 = vxor.u32 %v3623, 2147483648
      %v3652 = vxor.u32 %v3628, 2147483648
      %v3653 = vxor.u32 %v3631, 2147483648
      %v3654 = vxor.u32 %v3636, 2147483648
      %v3655 = vxor.u32 %v3639, 2147483648
      %v3656 = vxor.u32 %v3644, 2147483648
      %v3657 = vxor.u32 %v3647, 2147483648
      %v3658 = vmul.f32 %v3650, 1.442695
      %v3659 = vpow.pop %v3658
      %v3660 = vmul.f32 %v3651, 1.442695
      %v3661 = vpow.pop %v3660
      %v3662 = vmul.f32 %v3652, 1.442695
      %v3663 = vpow.pop %v3662
      %v3664 = vmul.f32 %v3653, 1.442695
      %v3665 = vpow.pop %v3664
      %v3666 = vmul.f32 %v3654, 1.442695
      %v3667 = vpow.pop %v3666
      %v3668 = vmul.f32 %v3655, 1.442695
      %v3669 = vpow.pop %v3668
      %v3670 = vmul.f32 %v3656, 1.442695
      %v3671 = vpow.pop %v3670
      %v3672 = vmul.f32 %v3657, 1.442695
      %v3673 = vpow.pop %v3672
      %v3674 = vadd.f32 %v3659, 1.0
      %v3675 = vadd.f32 %v3661, 1.0
      %v3676 = vadd.f32 %v3663, 1.0
      %v3677 = vadd.f32 %v3665, 1.0
      %v3678 = vadd.f32 %v3667, 1.0
      %v3679 = vadd.f32 %v3669, 1.0
      %v3680 = vadd.f32 %v3671, 1.0
      %v3681 = vadd.f32 %v3673, 1.0
      %v3682 = vrcp.pop %v3674
      %v3683 = vmul.f32 1.0, %v3682
      %v3684 = vrcp.pop %v3675
      %v3685 = vmul.f32 1.0, %v3684
      %v3686 = vrcp.pop %v3676
      %v3687 = vmul.f32 1.0, %v3686
      %v3688 = vrcp.pop %v3677
      %v3689 = vmul.f32 1.0, %v3688
      %v3690 = vrcp.pop %v3678
      %v3691 = vmul.f32 1.0, %v3690
      %v3692 = vrcp.pop %v3679
      %v3693 = vmul.f32 1.0, %v3692
      %v3694 = vrcp.pop %v3680
      %v3695 = vmul.f32 1.0, %v3694
      %v3696 = vrcp.pop %v3681
      %v3697 = vmul.f32 1.0, %v3696
      %v3698 = vsub.f32 1.0, %v3683
      %v3699 = vsub.f32 1.0, %v3685
      %v3700 = vsub.f32 1.0, %v3687
      %v3701 = vsub.f32 1.0, %v3689
      %v3702 = vsub.f32 1.0, %v3691
      %v3703 = vsub.f32 1.0, %v3693
      %v3704 = vsub.f32 1.0, %v3695
      %v3705 = vsub.f32 1.0, %v3697
      %3714 = vrot.lane.b32.xlu0 %v3620, 16
      %v3715 = vpop.permute.xlu0 %3714
      %3716 = vrot.lane.b32.xlu0 %v3623, 16
      %v3717 = vpop.permute.xlu0 %3716
      %3718 = vrot.lane.b32.xlu0 %v3628, 16
      %v3719 = vpop.permute.xlu0 %3718
      %3720 = vrot.lane.b32.xlu0 %v3631, 16
      %v3721 = vpop.permute.xlu0 %3720
      %3722 = vrot.lane.b32.xlu0 %v3636, 16
      %v3723 = vpop.permute.xlu0 %3722
      %3724 = vrot.lane.b32.xlu0 %v3639, 16
      %v3725 = vpop.permute.xlu0 %3724
      %3726 = vrot.lane.b32.xlu0 %v3644, 16
      %v3727 = vpop.permute.xlu0 %3726
      %3728 = vrot.lane.b32.xlu0 %v3647, 16
      %v3729 = vpop.permute.xlu0 %3728
      %v3738 = vmul.f32 %v3683, %v3715
      %v3739 = vmul.f32 %v3685, %v3717
      %v3740 = vmul.f32 %v3687, %v3719
      %v3741 = vmul.f32 %v3689, %v3721
      %v3742 = vmul.f32 %v3691, %v3723
      %v3743 = vmul.f32 %v3693, %v3725
      %v3744 = vmul.f32 %v3695, %v3727
      %v3745 = vmul.f32 %v3697, %v3729
      %v3746 = vsel %vm304, %v3698, 0.0
      %v3747 = vsel %vm305, %v3699, 0.0
      %v3748 = vsel %vm306, %v3700, 0.0
      %v3749 = vsel %vm307, %v3701, 0.0
      %v3750 = vsel %vm308, %v3702, 0.0
      %v3751 = vsel %vm309, %v3703, 0.0
      %v3752 = vsel %vm310, %v3704, 0.0
      %v3753 = vsel %vm311, %v3705, 0.0
      %v3754 = vsel %vm304, %v3738, 0.0
      %v3755 = vsel %vm305, %v3739, 0.0
      %v3756 = vsel %vm306, %v3740, 0.0
      %v3757 = vsel %vm307, %v3741, 0.0
      %v3758 = vsel %vm308, %v3742, 0.0
      %v3759 = vsel %vm309, %v3743, 0.0
      %v3760 = vsel %vm310, %v3744, 0.0
      %v3761 = vsel %vm311, %v3745, 0.0
      %3770 = vrot.lane.b32.xlu0 %v3746, 112
      %v3771 = vpop.permute.xlu0 %3770
      %3772 = vrot.lane.b32.xlu0 %v3747, 112
      %v3773 = vpop.permute.xlu0 %3772
      %3774 = vrot.lane.b32.xlu0 %v3748, 112
      %v3775 = vpop.permute.xlu0 %3774
      %3776 = vrot.lane.b32.xlu0 %v3749, 112
      %v3777 = vpop.permute.xlu0 %3776
      %3778 = vrot.lane.b32.xlu0 %v3750, 112
      %v3779 = vpop.permute.xlu0 %3778
      %3780 = vrot.lane.b32.xlu0 %v3751, 112
      %v3781 = vpop.permute.xlu0 %3780
      %3782 = vrot.lane.b32.xlu0 %v3752, 112
      %v3783 = vpop.permute.xlu0 %3782
      %3784 = vrot.lane.b32.xlu0 %v3753, 112
      %v3785 = vpop.permute.xlu0 %3784
      %v3794 = vrot.slane %v3771, 7
      %v3795 = vrot.slane %v3773, 7
      %v3796 = vrot.slane %v3775, 7
      %v3797 = vrot.slane %v3777, 7
      %v3798 = vrot.slane %v3779, 7
      %v3799 = vrot.slane %v3781, 7
      %v3800 = vrot.slane %v3783, 7
      %v3801 = vrot.slane %v3785, 7
      %v3802 = vsel %vm344, %v3800, %v3801
      %v3803 = vsel %vm344, %v3799, %v3800
      %v3804 = vsel %vm344, %v3798, %v3799
      %v3805 = vsel %vm344, %v3797, %v3798
      %v3806 = vsel %vm344, %v3796, %v3797
      %v3807 = vsel %vm344, %v3795, %v3796
      %v3808 = vsel %vm344, %v3794, %v3795
      %v3809 = vsel %vm344, %v3801, %v3794
      %v3810 = vsel %vm722, %v3809, 1.0
      %v3811 = vsel %vm723, %v3808, 1.0
      %v3812 = vsel %vm724, %v3807, 1.0
      %v3813 = vsel %vm725, %v3806, 1.0
      %v3814 = vsel %vm726, %v3805, 1.0
      %v3815 = vsel %vm727, %v3804, 1.0
      %v3816 = vsel %vm728, %v3803, 1.0
      %v3817 = vsel %vm729, %v3802, 1.0
      %3826 = vrot.lane.b32.xlu0 %v3754, 112
      %v3827 = vpop.permute.xlu0 %3826
      %3828 = vrot.lane.b32.xlu0 %v3755, 112
      %v3829 = vpop.permute.xlu0 %3828
      %3830 = vrot.lane.b32.xlu0 %v3756, 112
      %v3831 = vpop.permute.xlu0 %3830
      %3832 = vrot.lane.b32.xlu0 %v3757, 112
      %v3833 = vpop.permute.xlu0 %3832
      %3834 = vrot.lane.b32.xlu0 %v3758, 112
      %v3835 = vpop.permute.xlu0 %3834
      %3836 = vrot.lane.b32.xlu0 %v3759, 112
      %v3837 = vpop.permute.xlu0 %3836
      %3838 = vrot.lane.b32.xlu0 %v3760, 112
      %v3839 = vpop.permute.xlu0 %3838
      %3840 = vrot.lane.b32.xlu0 %v3761, 112
      %v3841 = vpop.permute.xlu0 %3840
      %v3850 = vrot.slane %v3827, 7
      %v3851 = vrot.slane %v3829, 7
      %v3852 = vrot.slane %v3831, 7
      %v3853 = vrot.slane %v3833, 7
      %v3854 = vrot.slane %v3835, 7
      %v3855 = vrot.slane %v3837, 7
      %v3856 = vrot.slane %v3839, 7
      %v3857 = vrot.slane %v3841, 7
      %v3858 = vsel %vm344, %v3856, %v3857
      %v3859 = vsel %vm344, %v3855, %v3856
      %v3860 = vsel %vm344, %v3854, %v3855
      %v3861 = vsel %vm344, %v3853, %v3854
      %v3862 = vsel %vm344, %v3852, %v3853
      %v3863 = vsel %vm344, %v3851, %v3852
      %v3864 = vsel %vm344, %v3850, %v3851
      %v3865 = vsel %vm344, %v3857, %v3850
      %v3866 = vsel %vm722, %v3865, 0.0
      %v3867 = vsel %vm723, %v3864, 0.0
      %v3868 = vsel %vm724, %v3863, 0.0
      %v3869 = vsel %vm725, %v3862, 0.0
      %v3870 = vsel %vm726, %v3861, 0.0
      %v3871 = vsel %vm727, %v3860, 0.0
      %v3872 = vsel %vm728, %v3859, 0.0
      %v3873 = vsel %vm729, %v3858, 0.0
      %3882 = vrot.lane.b32.xlu0 %v3866, 16
      %v3883 = vpop.permute.xlu0 %3882
      %3884 = vrot.lane.b32.xlu0 %v3867, 16
      %v3885 = vpop.permute.xlu0 %3884
      %3886 = vrot.lane.b32.xlu0 %v3868, 16
      %v3887 = vpop.permute.xlu0 %3886
      %3888 = vrot.lane.b32.xlu0 %v3869, 16
      %v3889 = vpop.permute.xlu0 %3888
      %3890 = vrot.lane.b32.xlu0 %v3870, 16
      %v3891 = vpop.permute.xlu0 %3890
      %3892 = vrot.lane.b32.xlu0 %v3871, 16
      %v3893 = vpop.permute.xlu0 %3892
      %3894 = vrot.lane.b32.xlu0 %v3872, 16
      %v3895 = vpop.permute.xlu0 %3894
      %3896 = vrot.lane.b32.xlu0 %v3873, 16
      %v3897 = vpop.permute.xlu0 %3896
      %v3906 = vmul.f32 %v3746, %v3883
      %v3907 = vmul.f32 %v3747, %v3885
      %v3908 = vmul.f32 %v3748, %v3887
      %v3909 = vmul.f32 %v3749, %v3889
      %v3910 = vmul.f32 %v3750, %v3891
      %v3911 = vmul.f32 %v3751, %v3893
      %v3912 = vmul.f32 %v3752, %v3895
      %v3913 = vmul.f32 %v3753, %v3897
      %v3914 = vadd.f32 %v3754, %v3906
      %v3915 = vadd.f32 %v3755, %v3907
      %v3916 = vadd.f32 %v3756, %v3908
      %v3917 = vadd.f32 %v3757, %v3909
      %v3918 = vadd.f32 %v3758, %v3910
      %v3919 = vadd.f32 %v3759, %v3911
      %v3920 = vadd.f32 %v3760, %v3912
      %v3921 = vadd.f32 %v3761, %v3913
      %3930 = vrot.lane.b32.xlu0 %v3810, 16
      %v3931 = vpop.permute.xlu0 %3930
      %3932 = vrot.lane.b32.xlu0 %v3811, 16
      %v3933 = vpop.permute.xlu0 %3932
      %3934 = vrot.lane.b32.xlu0 %v3812, 16
      %v3935 = vpop.permute.xlu0 %3934
      %3936 = vrot.lane.b32.xlu0 %v3813, 16
      %v3937 = vpop.permute.xlu0 %3936
      %3938 = vrot.lane.b32.xlu0 %v3814, 16
      %v3939 = vpop.permute.xlu0 %3938
      %3940 = vrot.lane.b32.xlu0 %v3815, 16
      %v3941 = vpop.permute.xlu0 %3940
      %3942 = vrot.lane.b32.xlu0 %v3816, 16
      %v3943 = vpop.permute.xlu0 %3942
      %3944 = vrot.lane.b32.xlu0 %v3817, 16
      %v3945 = vpop.permute.xlu0 %3944
      %v3954 = vmul.f32 %v3746, %v3931
      %v3955 = vmul.f32 %v3747, %v3933
      %v3956 = vmul.f32 %v3748, %v3935
      %v3957 = vmul.f32 %v3749, %v3937
      %v3958 = vmul.f32 %v3750, %v3939
      %v3959 = vmul.f32 %v3751, %v3941
      %v3960 = vmul.f32 %v3752, %v3943
      %v3961 = vmul.f32 %v3753, %v3945
      %3970 = vrot.lane.b32.xlu0 %v3954, 112
      %v3971 = vpop.permute.xlu0 %3970
      %3972 = vrot.lane.b32.xlu0 %v3955, 112
      %v3973 = vpop.permute.xlu0 %3972
      %3974 = vrot.lane.b32.xlu0 %v3956, 112
      %v3975 = vpop.permute.xlu0 %3974
      %3976 = vrot.lane.b32.xlu0 %v3957, 112
      %v3977 = vpop.permute.xlu0 %3976
      %3978 = vrot.lane.b32.xlu0 %v3958, 112
      %v3979 = vpop.permute.xlu0 %3978
      %3980 = vrot.lane.b32.xlu0 %v3959, 112
      %v3981 = vpop.permute.xlu0 %3980
      %3982 = vrot.lane.b32.xlu0 %v3960, 112
      %v3983 = vpop.permute.xlu0 %3982
      %3984 = vrot.lane.b32.xlu0 %v3961, 112
      %v3985 = vpop.permute.xlu0 %3984
      %v3994 = vrot.slane %v3971, 6
      %v3995 = vrot.slane %v3973, 6
      %v3996 = vrot.slane %v3975, 6
      %v3997 = vrot.slane %v3977, 6
      %v3998 = vrot.slane %v3979, 6
      %v3999 = vrot.slane %v3981, 6
      %v4000 = vrot.slane %v3983, 6
      %v4001 = vrot.slane %v3985, 6
      %v4002 = vsel %vm978, %v4000, %v4001
      %v4003 = vsel %vm978, %v3999, %v4000
      %v4004 = vsel %vm978, %v3998, %v3999
      %v4005 = vsel %vm978, %v3997, %v3998
      %v4006 = vsel %vm978, %v3996, %v3997
      %v4007 = vsel %vm978, %v3995, %v3996
      %v4008 = vsel %vm978, %v3994, %v3995
      %v4009 = vsel %vm978, %v4001, %v3994
      %v4010 = vsel %vm930, %v4009, 1.0
      %v4011 = vsel %vm931, %v4008, 1.0
      %v4012 = vsel %vm932, %v4007, 1.0
      %v4013 = vsel %vm933, %v4006, 1.0
      %v4014 = vsel %vm934, %v4005, 1.0
      %v4015 = vsel %vm935, %v4004, 1.0
      %v4016 = vsel %vm936, %v4003, 1.0
      %v4017 = vsel %vm937, %v4002, 1.0
      %4026 = vrot.lane.b32.xlu0 %v3914, 112
      %v4027 = vpop.permute.xlu0 %4026
      %4028 = vrot.lane.b32.xlu0 %v3915, 112
      %v4029 = vpop.permute.xlu0 %4028
      %4030 = vrot.lane.b32.xlu0 %v3916, 112
      %v4031 = vpop.permute.xlu0 %4030
      %4032 = vrot.lane.b32.xlu0 %v3917, 112
      %v4033 = vpop.permute.xlu0 %4032
      %4034 = vrot.lane.b32.xlu0 %v3918, 112
      %v4035 = vpop.permute.xlu0 %4034
      %4036 = vrot.lane.b32.xlu0 %v3919, 112
      %v4037 = vpop.permute.xlu0 %4036
      %4038 = vrot.lane.b32.xlu0 %v3920, 112
      %v4039 = vpop.permute.xlu0 %4038
      %4040 = vrot.lane.b32.xlu0 %v3921, 112
      %v4041 = vpop.permute.xlu0 %4040
      %v4050 = vrot.slane %v4027, 6
      %v4051 = vrot.slane %v4029, 6
      %v4052 = vrot.slane %v4031, 6
      %v4053 = vrot.slane %v4033, 6
      %v4054 = vrot.slane %v4035, 6
      %v4055 = vrot.slane %v4037, 6
      %v4056 = vrot.slane %v4039, 6
      %v4057 = vrot.slane %v4041, 6
      %v4058 = vsel %vm978, %v4056, %v4057
      %v4059 = vsel %vm978, %v4055, %v4056
      %v4060 = vsel %vm978, %v4054, %v4055
      %v4061 = vsel %vm978, %v4053, %v4054
      %v4062 = vsel %vm978, %v4052, %v4053
      %v4063 = vsel %vm978, %v4051, %v4052
      %v4064 = vsel %vm978, %v4050, %v4051
      %v4065 = vsel %vm978, %v4057, %v4050
      %v4066 = vsel %vm930, %v4065, 0.0
      %v4067 = vsel %vm931, %v4064, 0.0
      %v4068 = vsel %vm932, %v4063, 0.0
      %v4069 = vsel %vm933, %v4062, 0.0
      %v4070 = vsel %vm934, %v4061, 0.0
      %v4071 = vsel %vm935, %v4060, 0.0
      %v4072 = vsel %vm936, %v4059, 0.0
      %v4073 = vsel %vm937, %v4058, 0.0
      %4082 = vrot.lane.b32.xlu0 %v4066, 16
      %v4083 = vpop.permute.xlu0 %4082
      %4084 = vrot.lane.b32.xlu0 %v4067, 16
      %v4085 = vpop.permute.xlu0 %4084
      %4086 = vrot.lane.b32.xlu0 %v4068, 16
      %v4087 = vpop.permute.xlu0 %4086
      %4088 = vrot.lane.b32.xlu0 %v4069, 16
      %v4089 = vpop.permute.xlu0 %4088
      %4090 = vrot.lane.b32.xlu0 %v4070, 16
      %v4091 = vpop.permute.xlu0 %4090
      %4092 = vrot.lane.b32.xlu0 %v4071, 16
      %v4093 = vpop.permute.xlu0 %4092
      %4094 = vrot.lane.b32.xlu0 %v4072, 16
      %v4095 = vpop.permute.xlu0 %4094
      %4096 = vrot.lane.b32.xlu0 %v4073, 16
      %v4097 = vpop.permute.xlu0 %4096
      %v4106 = vmul.f32 %v3954, %v4083
      %v4107 = vmul.f32 %v3955, %v4085
      %v4108 = vmul.f32 %v3956, %v4087
      %v4109 = vmul.f32 %v3957, %v4089
      %v4110 = vmul.f32 %v3958, %v4091
      %v4111 = vmul.f32 %v3959, %v4093
      %v4112 = vmul.f32 %v3960, %v4095
      %v4113 = vmul.f32 %v3961, %v4097
      %v4114 = vadd.f32 %v3914, %v4106
      %v4115 = vadd.f32 %v3915, %v4107
      %v4116 = vadd.f32 %v3916, %v4108
      %v4117 = vadd.f32 %v3917, %v4109
      %v4118 = vadd.f32 %v3918, %v4110
      %v4119 = vadd.f32 %v3919, %v4111
      %v4120 = vadd.f32 %v3920, %v4112
      %v4121 = vadd.f32 %v3921, %v4113
      %4130 = vrot.lane.b32.xlu0 %v4010, 16
      %v4131 = vpop.permute.xlu0 %4130
      %4132 = vrot.lane.b32.xlu0 %v4011, 16
      %v4133 = vpop.permute.xlu0 %4132
      %4134 = vrot.lane.b32.xlu0 %v4012, 16
      %v4135 = vpop.permute.xlu0 %4134
      %4136 = vrot.lane.b32.xlu0 %v4013, 16
      %v4137 = vpop.permute.xlu0 %4136
      %4138 = vrot.lane.b32.xlu0 %v4014, 16
      %v4139 = vpop.permute.xlu0 %4138
      %4140 = vrot.lane.b32.xlu0 %v4015, 16
      %v4141 = vpop.permute.xlu0 %4140
      %4142 = vrot.lane.b32.xlu0 %v4016, 16
      %v4143 = vpop.permute.xlu0 %4142
      %4144 = vrot.lane.b32.xlu0 %v4017, 16
      %v4145 = vpop.permute.xlu0 %4144
      %v4154 = vmul.f32 %v3954, %v4131
      %v4155 = vmul.f32 %v3955, %v4133
      %v4156 = vmul.f32 %v3956, %v4135
      %v4157 = vmul.f32 %v3957, %v4137
      %v4158 = vmul.f32 %v3958, %v4139
      %v4159 = vmul.f32 %v3959, %v4141
      %v4160 = vmul.f32 %v3960, %v4143
      %v4161 = vmul.f32 %v3961, %v4145
      %4170 = vrot.lane.b32.xlu0 %v4154, 112
      %v4171 = vpop.permute.xlu0 %4170
      %4172 = vrot.lane.b32.xlu0 %v4155, 112
      %v4173 = vpop.permute.xlu0 %4172
      %4174 = vrot.lane.b32.xlu0 %v4156, 112
      %v4175 = vpop.permute.xlu0 %4174
      %4176 = vrot.lane.b32.xlu0 %v4157, 112
      %v4177 = vpop.permute.xlu0 %4176
      %4178 = vrot.lane.b32.xlu0 %v4158, 112
      %v4179 = vpop.permute.xlu0 %4178
      %4180 = vrot.lane.b32.xlu0 %v4159, 112
      %v4181 = vpop.permute.xlu0 %4180
      %4182 = vrot.lane.b32.xlu0 %v4160, 112
      %v4183 = vpop.permute.xlu0 %4182
      %4184 = vrot.lane.b32.xlu0 %v4161, 112
      %v4185 = vpop.permute.xlu0 %4184
      %v4194 = vrot.slane %v4171, 4
      %v4195 = vrot.slane %v4173, 4
      %v4196 = vrot.slane %v4175, 4
      %v4197 = vrot.slane %v4177, 4
      %v4198 = vrot.slane %v4179, 4
      %v4199 = vrot.slane %v4181, 4
      %v4200 = vrot.slane %v4183, 4
      %v4201 = vrot.slane %v4185, 4
      %v4202 = vsel %vm1187, %v4200, %v4201
      %v4203 = vsel %vm1187, %v4199, %v4200
      %v4204 = vsel %vm1187, %v4198, %v4199
      %v4205 = vsel %vm1187, %v4197, %v4198
      %v4206 = vsel %vm1187, %v4196, %v4197
      %v4207 = vsel %vm1187, %v4195, %v4196
      %v4208 = vsel %vm1187, %v4194, %v4195
      %v4209 = vsel %vm1187, %v4201, %v4194
      %v4210 = vsel %vm1139, %v4209, 1.0
      %v4211 = vsel %vm1140, %v4208, 1.0
      %v4212 = vsel %vm1141, %v4207, 1.0
      %v4213 = vsel %vm1142, %v4206, 1.0
      %v4214 = vsel %vm1143, %v4205, 1.0
      %v4215 = vsel %vm1144, %v4204, 1.0
      %v4216 = vsel %vm1145, %v4203, 1.0
      %v4217 = vsel %vm1146, %v4202, 1.0
      %4226 = vrot.lane.b32.xlu0 %v4114, 112
      %v4227 = vpop.permute.xlu0 %4226
      %4228 = vrot.lane.b32.xlu0 %v4115, 112
      %v4229 = vpop.permute.xlu0 %4228
      %4230 = vrot.lane.b32.xlu0 %v4116, 112
      %v4231 = vpop.permute.xlu0 %4230
      %4232 = vrot.lane.b32.xlu0 %v4117, 112
      %v4233 = vpop.permute.xlu0 %4232
      %4234 = vrot.lane.b32.xlu0 %v4118, 112
      %v4235 = vpop.permute.xlu0 %4234
      %4236 = vrot.lane.b32.xlu0 %v4119, 112
      %v4237 = vpop.permute.xlu0 %4236
      %4238 = vrot.lane.b32.xlu0 %v4120, 112
      %v4239 = vpop.permute.xlu0 %4238
      %4240 = vrot.lane.b32.xlu0 %v4121, 112
      %v4241 = vpop.permute.xlu0 %4240
      %v4250 = vrot.slane %v4227, 4
      %v4251 = vrot.slane %v4229, 4
      %v4252 = vrot.slane %v4231, 4
      %v4253 = vrot.slane %v4233, 4
      %v4254 = vrot.slane %v4235, 4
      %v4255 = vrot.slane %v4237, 4
      %v4256 = vrot.slane %v4239, 4
      %v4257 = vrot.slane %v4241, 4
      %v4258 = vsel %vm1187, %v4256, %v4257
      %v4259 = vsel %vm1187, %v4255, %v4256
      %v4260 = vsel %vm1187, %v4254, %v4255
      %v4261 = vsel %vm1187, %v4253, %v4254
      %v4262 = vsel %vm1187, %v4252, %v4253
      %v4263 = vsel %vm1187, %v4251, %v4252
      %v4264 = vsel %vm1187, %v4250, %v4251
      %v4265 = vsel %vm1187, %v4257, %v4250
      %v4266 = vsel %vm1139, %v4265, 0.0
      %v4267 = vsel %vm1140, %v4264, 0.0
      %v4268 = vsel %vm1141, %v4263, 0.0
      %v4269 = vsel %vm1142, %v4262, 0.0
      %v4270 = vsel %vm1143, %v4261, 0.0
      %v4271 = vsel %vm1144, %v4260, 0.0
      %v4272 = vsel %vm1145, %v4259, 0.0
      %v4273 = vsel %vm1146, %v4258, 0.0
      %4282 = vrot.lane.b32.xlu0 %v4266, 16
      %v4283 = vpop.permute.xlu0 %4282
      %4284 = vrot.lane.b32.xlu0 %v4267, 16
      %v4285 = vpop.permute.xlu0 %4284
      %4286 = vrot.lane.b32.xlu0 %v4268, 16
      %v4287 = vpop.permute.xlu0 %4286
      %4288 = vrot.lane.b32.xlu0 %v4269, 16
      %v4289 = vpop.permute.xlu0 %4288
      %4290 = vrot.lane.b32.xlu0 %v4270, 16
      %v4291 = vpop.permute.xlu0 %4290
      %4292 = vrot.lane.b32.xlu0 %v4271, 16
      %v4293 = vpop.permute.xlu0 %4292
      %4294 = vrot.lane.b32.xlu0 %v4272, 16
      %v4295 = vpop.permute.xlu0 %4294
      %4296 = vrot.lane.b32.xlu0 %v4273, 16
      %v4297 = vpop.permute.xlu0 %4296
      %v4306 = vmul.f32 %v4154, %v4283
      %v4307 = vmul.f32 %v4155, %v4285
      %v4308 = vmul.f32 %v4156, %v4287
      %v4309 = vmul.f32 %v4157, %v4289
      %v4310 = vmul.f32 %v4158, %v4291
      %v4311 = vmul.f32 %v4159, %v4293
      %v4312 = vmul.f32 %v4160, %v4295
      %v4313 = vmul.f32 %v4161, %v4297
      %v4314 = vadd.f32 %v4114, %v4306
      %v4315 = vadd.f32 %v4115, %v4307
      %v4316 = vadd.f32 %v4116, %v4308
      %v4317 = vadd.f32 %v4117, %v4309
      %v4318 = vadd.f32 %v4118, %v4310
      %v4319 = vadd.f32 %v4119, %v4311
      %v4320 = vadd.f32 %v4120, %v4312
      %v4321 = vadd.f32 %v4121, %v4313
      %4330 = vrot.lane.b32.xlu0 %v4210, 16
      %v4331 = vpop.permute.xlu0 %4330
      %4332 = vrot.lane.b32.xlu0 %v4211, 16
      %v4333 = vpop.permute.xlu0 %4332
      %4334 = vrot.lane.b32.xlu0 %v4212, 16
      %v4335 = vpop.permute.xlu0 %4334
      %4336 = vrot.lane.b32.xlu0 %v4213, 16
      %v4337 = vpop.permute.xlu0 %4336
      %4338 = vrot.lane.b32.xlu0 %v4214, 16
      %v4339 = vpop.permute.xlu0 %4338
      %4340 = vrot.lane.b32.xlu0 %v4215, 16
      %v4341 = vpop.permute.xlu0 %4340
      %4342 = vrot.lane.b32.xlu0 %v4216, 16
      %v4343 = vpop.permute.xlu0 %4342
      %4344 = vrot.lane.b32.xlu0 %v4217, 16
      %v4345 = vpop.permute.xlu0 %4344
      %v4354 = vmul.f32 %v4154, %v4331
      %v4355 = vmul.f32 %v4155, %v4333
      %v4356 = vmul.f32 %v4156, %v4335
      %v4357 = vmul.f32 %v4157, %v4337
      %v4358 = vmul.f32 %v4158, %v4339
      %v4359 = vmul.f32 %v4159, %v4341
      %v4360 = vmul.f32 %v4160, %v4343
      %v4361 = vmul.f32 %v4161, %v4345
      %4370 = vrot.lane.b32.xlu0 %v4354, 112
      %v4371 = vpop.permute.xlu0 %4370
      %4372 = vrot.lane.b32.xlu0 %v4355, 112
      %v4373 = vpop.permute.xlu0 %4372
      %4374 = vrot.lane.b32.xlu0 %v4356, 112
      %v4375 = vpop.permute.xlu0 %4374
      %4376 = vrot.lane.b32.xlu0 %v4357, 112
      %v4377 = vpop.permute.xlu0 %4376
      %4378 = vrot.lane.b32.xlu0 %v4358, 112
      %v4379 = vpop.permute.xlu0 %4378
      %4380 = vrot.lane.b32.xlu0 %v4359, 112
      %v4381 = vpop.permute.xlu0 %4380
      %4382 = vrot.lane.b32.xlu0 %v4360, 112
      %v4383 = vpop.permute.xlu0 %4382
      %4384 = vrot.lane.b32.xlu0 %v4361, 112
      %v4385 = vpop.permute.xlu0 %4384
      %v4394 = vsel %vm1348, %v4385, 1.0
      %v4395 = vsel %vm1349, %v4371, 1.0
      %v4396 = vsel %vm1350, %v4373, 1.0
      %v4397 = vsel %vm1351, %v4375, 1.0
      %v4398 = vsel %vm1352, %v4377, 1.0
      %v4399 = vsel %vm1353, %v4379, 1.0
      %v4400 = vsel %vm1354, %v4381, 1.0
      %v4401 = vsel %vm1355, %v4383, 1.0
      %4410 = vrot.lane.b32.xlu0 %v4314, 112
      %v4411 = vpop.permute.xlu0 %4410
      %4412 = vrot.lane.b32.xlu0 %v4315, 112
      %v4413 = vpop.permute.xlu0 %4412
      %4414 = vrot.lane.b32.xlu0 %v4316, 112
      %v4415 = vpop.permute.xlu0 %4414
      %4416 = vrot.lane.b32.xlu0 %v4317, 112
      %v4417 = vpop.permute.xlu0 %4416
      %4418 = vrot.lane.b32.xlu0 %v4318, 112
      %v4419 = vpop.permute.xlu0 %4418
      %4420 = vrot.lane.b32.xlu0 %v4319, 112
      %v4421 = vpop.permute.xlu0 %4420
      %4422 = vrot.lane.b32.xlu0 %v4320, 112
      %v4423 = vpop.permute.xlu0 %4422
      %4424 = vrot.lane.b32.xlu0 %v4321, 112
      %v4425 = vpop.permute.xlu0 %4424
      %v4434 = vsel %vm1348, %v4425, 0.0
      %v4435 = vsel %vm1349, %v4411, 0.0
      %v4436 = vsel %vm1350, %v4413, 0.0
      %v4437 = vsel %vm1351, %v4415, 0.0
      %v4438 = vsel %vm1352, %v4417, 0.0
      %v4439 = vsel %vm1353, %v4419, 0.0
      %v4440 = vsel %vm1354, %v4421, 0.0
      %v4441 = vsel %vm1355, %v4423, 0.0
      %4450 = vrot.lane.b32.xlu0 %v4434, 16
      %v4451 = vpop.permute.xlu0 %4450
      %4452 = vrot.lane.b32.xlu0 %v4435, 16
      %v4453 = vpop.permute.xlu0 %4452
      %4454 = vrot.lane.b32.xlu0 %v4436, 16
      %v4455 = vpop.permute.xlu0 %4454
      %4456 = vrot.lane.b32.xlu0 %v4437, 16
      %v4457 = vpop.permute.xlu0 %4456
      %4458 = vrot.lane.b32.xlu0 %v4438, 16
      %v4459 = vpop.permute.xlu0 %4458
      %4460 = vrot.lane.b32.xlu0 %v4439, 16
      %v4461 = vpop.permute.xlu0 %4460
      %4462 = vrot.lane.b32.xlu0 %v4440, 16
      %v4463 = vpop.permute.xlu0 %4462
      %4464 = vrot.lane.b32.xlu0 %v4441, 16
      %v4465 = vpop.permute.xlu0 %4464
      %v4474 = vmul.f32 %v4354, %v4451
      %v4475 = vmul.f32 %v4355, %v4453
      %v4476 = vmul.f32 %v4356, %v4455
      %v4477 = vmul.f32 %v4357, %v4457
      %v4478 = vmul.f32 %v4358, %v4459
      %v4479 = vmul.f32 %v4359, %v4461
      %v4480 = vmul.f32 %v4360, %v4463
      %v4481 = vmul.f32 %v4361, %v4465
      %v4482 = vadd.f32 %v4314, %v4474
      %v4483 = vadd.f32 %v4315, %v4475
      %v4484 = vadd.f32 %v4316, %v4476
      %v4485 = vadd.f32 %v4317, %v4477
      %v4486 = vadd.f32 %v4318, %v4478
      %v4487 = vadd.f32 %v4319, %v4479
      %v4488 = vadd.f32 %v4320, %v4480
      %v4489 = vadd.f32 %v4321, %v4481
      %4498 = vrot.lane.b32.xlu0 %v4394, 16
      %v4499 = vpop.permute.xlu0 %4498
      %4500 = vrot.lane.b32.xlu0 %v4395, 16
      %v4501 = vpop.permute.xlu0 %4500
      %4502 = vrot.lane.b32.xlu0 %v4396, 16
      %v4503 = vpop.permute.xlu0 %4502
      %4504 = vrot.lane.b32.xlu0 %v4397, 16
      %v4505 = vpop.permute.xlu0 %4504
      %4506 = vrot.lane.b32.xlu0 %v4398, 16
      %v4507 = vpop.permute.xlu0 %4506
      %4508 = vrot.lane.b32.xlu0 %v4399, 16
      %v4509 = vpop.permute.xlu0 %4508
      %4510 = vrot.lane.b32.xlu0 %v4400, 16
      %v4511 = vpop.permute.xlu0 %4510
      %4512 = vrot.lane.b32.xlu0 %v4401, 16
      %v4513 = vpop.permute.xlu0 %4512
      %v4522 = vmul.f32 %v4354, %v4499
      %v4523 = vmul.f32 %v4355, %v4501
      %v4524 = vmul.f32 %v4356, %v4503
      %v4525 = vmul.f32 %v4357, %v4505
      %v4526 = vmul.f32 %v4358, %v4507
      %v4527 = vmul.f32 %v4359, %v4509
      %v4528 = vmul.f32 %v4360, %v4511
      %v4529 = vmul.f32 %v4361, %v4513
      %4538 = vrot.lane.b32.xlu0 %v4522, 112
      %v4539 = vpop.permute.xlu0 %4538
      %4540 = vrot.lane.b32.xlu0 %v4523, 112
      %v4541 = vpop.permute.xlu0 %4540
      %4542 = vrot.lane.b32.xlu0 %v4524, 112
      %v4543 = vpop.permute.xlu0 %4542
      %4544 = vrot.lane.b32.xlu0 %v4525, 112
      %v4545 = vpop.permute.xlu0 %4544
      %4546 = vrot.lane.b32.xlu0 %v4526, 112
      %v4547 = vpop.permute.xlu0 %4546
      %4548 = vrot.lane.b32.xlu0 %v4527, 112
      %v4549 = vpop.permute.xlu0 %4548
      %4550 = vrot.lane.b32.xlu0 %v4528, 112
      %v4551 = vpop.permute.xlu0 %4550
      %4552 = vrot.lane.b32.xlu0 %v4529, 112
      %v4553 = vpop.permute.xlu0 %4552
      %v4562 = vsel %vm1524, %v4551, 1.0
      %v4563 = vsel %vm1525, %v4553, 1.0
      %v4564 = vsel %vm1526, %v4539, 1.0
      %v4565 = vsel %vm1527, %v4541, 1.0
      %v4566 = vsel %vm1528, %v4543, 1.0
      %v4567 = vsel %vm1529, %v4545, 1.0
      %v4568 = vsel %vm1530, %v4547, 1.0
      %v4569 = vsel %vm1531, %v4549, 1.0
      %4578 = vrot.lane.b32.xlu0 %v4482, 112
      %v4579 = vpop.permute.xlu0 %4578
      %4580 = vrot.lane.b32.xlu0 %v4483, 112
      %v4581 = vpop.permute.xlu0 %4580
      %4582 = vrot.lane.b32.xlu0 %v4484, 112
      %v4583 = vpop.permute.xlu0 %4582
      %4584 = vrot.lane.b32.xlu0 %v4485, 112
      %v4585 = vpop.permute.xlu0 %4584
      %4586 = vrot.lane.b32.xlu0 %v4486, 112
      %v4587 = vpop.permute.xlu0 %4586
      %4588 = vrot.lane.b32.xlu0 %v4487, 112
      %v4589 = vpop.permute.xlu0 %4588
      %4590 = vrot.lane.b32.xlu0 %v4488, 112
      %v4591 = vpop.permute.xlu0 %4590
      %4592 = vrot.lane.b32.xlu0 %v4489, 112
      %v4593 = vpop.permute.xlu0 %4592
      %v4602 = vsel %vm1524, %v4591, 0.0
      %v4603 = vsel %vm1525, %v4593, 0.0
      %v4604 = vsel %vm1526, %v4579, 0.0
      %v4605 = vsel %vm1527, %v4581, 0.0
      %v4606 = vsel %vm1528, %v4583, 0.0
      %v4607 = vsel %vm1529, %v4585, 0.0
      %v4608 = vsel %vm1530, %v4587, 0.0
      %v4609 = vsel %vm1531, %v4589, 0.0
      %4618 = vrot.lane.b32.xlu0 %v4602, 16
      %v4619 = vpop.permute.xlu0 %4618
      %4620 = vrot.lane.b32.xlu0 %v4603, 16
      %v4621 = vpop.permute.xlu0 %4620
      %4622 = vrot.lane.b32.xlu0 %v4604, 16
      %v4623 = vpop.permute.xlu0 %4622
      %4624 = vrot.lane.b32.xlu0 %v4605, 16
      %v4625 = vpop.permute.xlu0 %4624
      %4626 = vrot.lane.b32.xlu0 %v4606, 16
      %v4627 = vpop.permute.xlu0 %4626
      %4628 = vrot.lane.b32.xlu0 %v4607, 16
      %v4629 = vpop.permute.xlu0 %4628
      %4630 = vrot.lane.b32.xlu0 %v4608, 16
      %v4631 = vpop.permute.xlu0 %4630
      %4632 = vrot.lane.b32.xlu0 %v4609, 16
      %v4633 = vpop.permute.xlu0 %4632
      %v4642 = vmul.f32 %v4522, %v4619
      %v4643 = vmul.f32 %v4523, %v4621
      %v4644 = vmul.f32 %v4524, %v4623
      %v4645 = vmul.f32 %v4525, %v4625
      %v4646 = vmul.f32 %v4526, %v4627
      %v4647 = vmul.f32 %v4527, %v4629
      %v4648 = vmul.f32 %v4528, %v4631
      %v4649 = vmul.f32 %v4529, %v4633
      %v4650 = vadd.f32 %v4482, %v4642
      %v4651 = vadd.f32 %v4483, %v4643
      %v4652 = vadd.f32 %v4484, %v4644
      %v4653 = vadd.f32 %v4485, %v4645
      %v4654 = vadd.f32 %v4486, %v4646
      %v4655 = vadd.f32 %v4487, %v4647
      %v4656 = vadd.f32 %v4488, %v4648
      %v4657 = vadd.f32 %v4489, %v4649
      %4666 = vrot.lane.b32.xlu0 %v4562, 16
      %v4667 = vpop.permute.xlu0 %4666
      %4668 = vrot.lane.b32.xlu0 %v4563, 16
      %v4669 = vpop.permute.xlu0 %4668
      %4670 = vrot.lane.b32.xlu0 %v4564, 16
      %v4671 = vpop.permute.xlu0 %4670
      %4672 = vrot.lane.b32.xlu0 %v4565, 16
      %v4673 = vpop.permute.xlu0 %4672
      %4674 = vrot.lane.b32.xlu0 %v4566, 16
      %v4675 = vpop.permute.xlu0 %4674
      %4676 = vrot.lane.b32.xlu0 %v4567, 16
      %v4677 = vpop.permute.xlu0 %4676
      %4678 = vrot.lane.b32.xlu0 %v4568, 16
      %v4679 = vpop.permute.xlu0 %4678
      %4680 = vrot.lane.b32.xlu0 %v4569, 16
      %v4681 = vpop.permute.xlu0 %4680
      %v4690 = vmul.f32 %v4522, %v4667
      %v4691 = vmul.f32 %v4523, %v4669
      %v4692 = vmul.f32 %v4524, %v4671
      %v4693 = vmul.f32 %v4525, %v4673
      %v4694 = vmul.f32 %v4526, %v4675
      %v4695 = vmul.f32 %v4527, %v4677
      %v4696 = vmul.f32 %v4528, %v4679
      %v4697 = vmul.f32 %v4529, %v4681
      %4706 = vrot.lane.b32.xlu0 %v4690, 112
      %v4707 = vpop.permute.xlu0 %4706
      %4708 = vrot.lane.b32.xlu0 %v4691, 112
      %v4709 = vpop.permute.xlu0 %4708
      %4710 = vrot.lane.b32.xlu0 %v4692, 112
      %v4711 = vpop.permute.xlu0 %4710
      %4712 = vrot.lane.b32.xlu0 %v4693, 112
      %v4713 = vpop.permute.xlu0 %4712
      %4714 = vrot.lane.b32.xlu0 %v4694, 112
      %v4715 = vpop.permute.xlu0 %4714
      %4716 = vrot.lane.b32.xlu0 %v4695, 112
      %v4717 = vpop.permute.xlu0 %4716
      %4718 = vrot.lane.b32.xlu0 %v4696, 112
      %v4719 = vpop.permute.xlu0 %4718
      %4720 = vrot.lane.b32.xlu0 %v4697, 112
      %v4721 = vpop.permute.xlu0 %4720
      %v4730 = vsel %vm1700, %v4715, 1.0
      %v4731 = vsel %vm1701, %v4717, 1.0
      %v4732 = vsel %vm1702, %v4719, 1.0
      %v4733 = vsel %vm1703, %v4721, 1.0
      %v4734 = vsel %vm1704, %v4707, 1.0
      %v4735 = vsel %vm1705, %v4709, 1.0
      %v4736 = vsel %vm1706, %v4711, 1.0
      %v4737 = vsel %vm1707, %v4713, 1.0
      %4746 = vrot.lane.b32.xlu0 %v4650, 112
      %v4747 = vpop.permute.xlu0 %4746
      %4748 = vrot.lane.b32.xlu0 %v4651, 112
      %v4749 = vpop.permute.xlu0 %4748
      %4750 = vrot.lane.b32.xlu0 %v4652, 112
      %v4751 = vpop.permute.xlu0 %4750
      %4752 = vrot.lane.b32.xlu0 %v4653, 112
      %v4753 = vpop.permute.xlu0 %4752
      %4754 = vrot.lane.b32.xlu0 %v4654, 112
      %v4755 = vpop.permute.xlu0 %4754
      %4756 = vrot.lane.b32.xlu0 %v4655, 112
      %v4757 = vpop.permute.xlu0 %4756
      %4758 = vrot.lane.b32.xlu0 %v4656, 112
      %v4759 = vpop.permute.xlu0 %4758
      %4760 = vrot.lane.b32.xlu0 %v4657, 112
      %v4761 = vpop.permute.xlu0 %4760
      %v4770 = vsel %vm1700, %v4755, 0.0
      %v4771 = vsel %vm1701, %v4757, 0.0
      %v4772 = vsel %vm1702, %v4759, 0.0
      %v4773 = vsel %vm1703, %v4761, 0.0
      %v4774 = vsel %vm1704, %v4747, 0.0
      %v4775 = vsel %vm1705, %v4749, 0.0
      %v4776 = vsel %vm1706, %v4751, 0.0
      %v4777 = vsel %vm1707, %v4753, 0.0
      %4786 = vrot.lane.b32.xlu0 %v4770, 16
      %v4787 = vpop.permute.xlu0 %4786
      %4788 = vrot.lane.b32.xlu0 %v4771, 16
      %v4789 = vpop.permute.xlu0 %4788
      %4790 = vrot.lane.b32.xlu0 %v4772, 16
      %v4791 = vpop.permute.xlu0 %4790
      %4792 = vrot.lane.b32.xlu0 %v4773, 16
      %v4793 = vpop.permute.xlu0 %4792
      %4794 = vrot.lane.b32.xlu0 %v4774, 16
      %v4795 = vpop.permute.xlu0 %4794
      %4796 = vrot.lane.b32.xlu0 %v4775, 16
      %v4797 = vpop.permute.xlu0 %4796
      %4798 = vrot.lane.b32.xlu0 %v4776, 16
      %v4799 = vpop.permute.xlu0 %4798
      %4800 = vrot.lane.b32.xlu0 %v4777, 16
      %v4801 = vpop.permute.xlu0 %4800
      %v4810 = vmul.f32 %v4690, %v4787
      %v4811 = vmul.f32 %v4691, %v4789
      %v4812 = vmul.f32 %v4692, %v4791
      %v4813 = vmul.f32 %v4693, %v4793
      %v4814 = vmul.f32 %v4694, %v4795
      %v4815 = vmul.f32 %v4695, %v4797
      %v4816 = vmul.f32 %v4696, %v4799
      %v4817 = vmul.f32 %v4697, %v4801
      %v4818 = vadd.f32 %v4650, %v4810
      %v4819 = vadd.f32 %v4651, %v4811
      %v4820 = vadd.f32 %v4652, %v4812
      %v4821 = vadd.f32 %v4653, %v4813
      %v4822 = vadd.f32 %v4654, %v4814
      %v4823 = vadd.f32 %v4655, %v4815
      %v4824 = vadd.f32 %v4656, %v4816
      %v4825 = vadd.f32 %v4657, %v4817
      %4834 = vrot.lane.b32.xlu0 %v4730, 16
      %v4835 = vpop.permute.xlu0 %4834
      %4836 = vrot.lane.b32.xlu0 %v4731, 16
      %v4837 = vpop.permute.xlu0 %4836
      %4838 = vrot.lane.b32.xlu0 %v4732, 16
      %v4839 = vpop.permute.xlu0 %4838
      %4840 = vrot.lane.b32.xlu0 %v4733, 16
      %v4841 = vpop.permute.xlu0 %4840
      %4842 = vrot.lane.b32.xlu0 %v4734, 16
      %v4843 = vpop.permute.xlu0 %4842
      %4844 = vrot.lane.b32.xlu0 %v4735, 16
      %v4845 = vpop.permute.xlu0 %4844
      %4846 = vrot.lane.b32.xlu0 %v4736, 16
      %v4847 = vpop.permute.xlu0 %4846
      %4848 = vrot.lane.b32.xlu0 %v4737, 16
      %v4849 = vpop.permute.xlu0 %4848
      %v4858 = vmul.f32 %v4690, %v4835
      %v4859 = vmul.f32 %v4691, %v4837
      %v4860 = vmul.f32 %v4692, %v4839
      %v4861 = vmul.f32 %v4693, %v4841
      %v4862 = vmul.f32 %v4694, %v4843
      %v4863 = vmul.f32 %v4695, %v4845
      %v4864 = vmul.f32 %v4696, %v4847
      %v4865 = vmul.f32 %v4697, %v4849
      %4874 = vrot.lane.b32.xlu0 %v4858, 112
      %v4875 = vpop.permute.xlu0 %4874
      %4876 = vrot.lane.b32.xlu0 %v4859, 112
      %v4877 = vpop.permute.xlu0 %4876
      %4878 = vrot.lane.b32.xlu0 %v4860, 112
      %v4879 = vpop.permute.xlu0 %4878
      %4880 = vrot.lane.b32.xlu0 %v4861, 112
      %v4881 = vpop.permute.xlu0 %4880
      %4882 = vrot.lane.b32.xlu0 %v4862, 112
      %v4883 = vpop.permute.xlu0 %4882
      %4884 = vrot.lane.b32.xlu0 %v4863, 112
      %v4885 = vpop.permute.xlu0 %4884
      %4886 = vrot.lane.b32.xlu0 %v4864, 112
      %v4887 = vpop.permute.xlu0 %4886
      %4888 = vrot.lane.b32.xlu0 %v4865, 112
      %v4889 = vpop.permute.xlu0 %4888
      %4898 = vst.msk [vmem:[#allocation2] sm:$0xff] %vm532, %v4875
      %4899 = vst.msk [vmem:[#allocation2 + $0x8] sm:$0xff] %vm532, %v4877
      %4900 = vst.msk [vmem:[#allocation2 + $0x10] sm:$0xff] %vm532, %v4879
      %4901 = vst.msk [vmem:[#allocation2 + $0x18] sm:$0xff] %vm532, %v4881
      %4902 = vst.msk [vmem:[#allocation2 + $0x20] sm:$0xff] %vm532, %v4883
      %4903 = vst.msk [vmem:[#allocation2 + $0x28] sm:$0xff] %vm532, %v4885
      %4904 = vst.msk [vmem:[#allocation2 + $0x30] sm:$0xff] %vm532, %v4887
      %4905 = vst.msk [vmem:[#allocation2 + $0x38] sm:$0xff] %vm532, %v4889
      %4914 = vrot.lane.b32.xlu0 %v4818, 112
      %v4915 = vpop.permute.xlu0 %4914
      %4916 = vrot.lane.b32.xlu0 %v4819, 112
      %v4917 = vpop.permute.xlu0 %4916
      %4918 = vrot.lane.b32.xlu0 %v4820, 112
      %v4919 = vpop.permute.xlu0 %4918
      %4920 = vrot.lane.b32.xlu0 %v4821, 112
      %v4921 = vpop.permute.xlu0 %4920
      %4922 = vrot.lane.b32.xlu0 %v4822, 112
      %v4923 = vpop.permute.xlu0 %4922
      %4924 = vrot.lane.b32.xlu0 %v4823, 112
      %v4925 = vpop.permute.xlu0 %4924
      %4926 = vrot.lane.b32.xlu0 %v4824, 112
      %v4927 = vpop.permute.xlu0 %4926
      %4928 = vrot.lane.b32.xlu0 %v4825, 112
      %v4929 = vpop.permute.xlu0 %4928
      %4938 = vst.msk [vmem:[#allocation3] sm:$0xff] %vm532, %v4915
      %4939 = vst.msk [vmem:[#allocation3 + $0x8] sm:$0xff] %vm532, %v4917
      %4940 = vst.msk [vmem:[#allocation3 + $0x10] sm:$0xff] %vm532, %v4919
      %4941 = vst.msk [vmem:[#allocation3 + $0x18] sm:$0xff] %vm532, %v4921
      %4942 = vst.msk [vmem:[#allocation3 + $0x20] sm:$0xff] %vm532, %v4923
      %4943 = vst.msk [vmem:[#allocation3 + $0x28] sm:$0xff] %vm532, %v4925
      %4944 = vst.msk [vmem:[#allocation3 + $0x30] sm:$0xff] %vm532, %v4927
      %4945 = vst.msk [vmem:[#allocation3 + $0x38] sm:$0xff] %vm532, %v4929
      %v4946 = vrot.slane %v3771, 1
      %v4947 = vrot.slane %v3773, 1
      %v4948 = vrot.slane %v3775, 1
      %v4949 = vrot.slane %v3777, 1
      %v4950 = vrot.slane %v3779, 1
      %v4951 = vrot.slane %v3781, 1
      %v4952 = vrot.slane %v3783, 1
      %v4953 = vrot.slane %v3785, 1
      %v4954 = vsel %vm377, %v4952, %v4953
      %v4955 = vsel %vm377, %v4951, %v4952
      %v4956 = vsel %vm377, %v4950, %v4951
      %v4957 = vsel %vm377, %v4949, %v4950
      %v4958 = vsel %vm377, %v4948, %v4949
      %v4959 = vsel %vm377, %v4947, %v4948
      %v4960 = vsel %vm377, %v4946, %v4947
      %v4961 = vsel %vm377, %v4953, %v4946
      %v4962 = vsel %vm1956, %v4960, 1.0
      %v4963 = vsel %vm1957, %v4959, 1.0
      %v4964 = vsel %vm1958, %v4958, 1.0
      %v4965 = vsel %vm1959, %v4957, 1.0
      %v4966 = vsel %vm1960, %v4956, 1.0
      %v4967 = vsel %vm1961, %v4955, 1.0
      %v4968 = vsel %vm1962, %v4954, 1.0
      %v4969 = vsel %vm1963, %v4961, 1.0
      %v4970 = vrot.slane %v3827, 1
      %v4971 = vrot.slane %v3829, 1
      %v4972 = vrot.slane %v3831, 1
      %v4973 = vrot.slane %v3833, 1
      %v4974 = vrot.slane %v3835, 1
      %v4975 = vrot.slane %v3837, 1
      %v4976 = vrot.slane %v3839, 1
      %v4977 = vrot.slane %v3841, 1
      %v4978 = vsel %vm377, %v4976, %v4977
      %v4979 = vsel %vm377, %v4975, %v4976
      %v4980 = vsel %vm377, %v4974, %v4975
      %v4981 = vsel %vm377, %v4973, %v4974
      %v4982 = vsel %vm377, %v4972, %v4973
      %v4983 = vsel %vm377, %v4971, %v4972
      %v4984 = vsel %vm377, %v4970, %v4971
      %v4985 = vsel %vm377, %v4977, %v4970
      %v4986 = vsel %vm1956, %v4984, 0.0
      %v4987 = vsel %vm1957, %v4983, 0.0
      %v4988 = vsel %vm1958, %v4982, 0.0
      %v4989 = vsel %vm1959, %v4981, 0.0
      %v4990 = vsel %vm1960, %v4980, 0.0
      %v4991 = vsel %vm1961, %v4979, 0.0
      %v4992 = vsel %vm1962, %v4978, 0.0
      %v4993 = vsel %vm1963, %v4985, 0.0
      %5002 = vrot.lane.b32.xlu0 %v4986, 16
      %v5003 = vpop.permute.xlu0 %5002
      %5004 = vrot.lane.b32.xlu0 %v4987, 16
      %v5005 = vpop.permute.xlu0 %5004
      %5006 = vrot.lane.b32.xlu0 %v4988, 16
      %v5007 = vpop.permute.xlu0 %5006
      %5008 = vrot.lane.b32.xlu0 %v4989, 16
      %v5009 = vpop.permute.xlu0 %5008
      %5010 = vrot.lane.b32.xlu0 %v4990, 16
      %v5011 = vpop.permute.xlu0 %5010
      %5012 = vrot.lane.b32.xlu0 %v4991, 16
      %v5013 = vpop.permute.xlu0 %5012
      %5014 = vrot.lane.b32.xlu0 %v4992, 16
      %v5015 = vpop.permute.xlu0 %5014
      %5016 = vrot.lane.b32.xlu0 %v4993, 16
      %v5017 = vpop.permute.xlu0 %5016
      %v5026 = vmul.f32 %v3746, %v5003
      %v5027 = vmul.f32 %v3747, %v5005
      %v5028 = vmul.f32 %v3748, %v5007
      %v5029 = vmul.f32 %v3749, %v5009
      %v5030 = vmul.f32 %v3750, %v5011
      %v5031 = vmul.f32 %v3751, %v5013
      %v5032 = vmul.f32 %v3752, %v5015
      %v5033 = vmul.f32 %v3753, %v5017
      %v5034 = vadd.f32 %v3754, %v5026
      %v5035 = vadd.f32 %v3755, %v5027
      %v5036 = vadd.f32 %v3756, %v5028
      %v5037 = vadd.f32 %v3757, %v5029
      %v5038 = vadd.f32 %v3758, %v5030
      %v5039 = vadd.f32 %v3759, %v5031
      %v5040 = vadd.f32 %v3760, %v5032
      %v5041 = vadd.f32 %v3761, %v5033
      %5050 = vrot.lane.b32.xlu0 %v4962, 16
      %v5051 = vpop.permute.xlu0 %5050
      %5052 = vrot.lane.b32.xlu0 %v4963, 16
      %v5053 = vpop.permute.xlu0 %5052
      %5054 = vrot.lane.b32.xlu0 %v4964, 16
      %v5055 = vpop.permute.xlu0 %5054
      %5056 = vrot.lane.b32.xlu0 %v4965, 16
      %v5057 = vpop.permute.xlu0 %5056
      %5058 = vrot.lane.b32.xlu0 %v4966, 16
      %v5059 = vpop.permute.xlu0 %5058
      %5060 = vrot.lane.b32.xlu0 %v4967, 16
      %v5061 = vpop.permute.xlu0 %5060
      %5062 = vrot.lane.b32.xlu0 %v4968, 16
      %v5063 = vpop.permute.xlu0 %5062
      %5064 = vrot.lane.b32.xlu0 %v4969, 16
      %v5065 = vpop.permute.xlu0 %5064
      %v5074 = vmul.f32 %v3746, %v5051
      %v5075 = vmul.f32 %v3747, %v5053
      %v5076 = vmul.f32 %v3748, %v5055
      %v5077 = vmul.f32 %v3749, %v5057
      %v5078 = vmul.f32 %v3750, %v5059
      %v5079 = vmul.f32 %v3751, %v5061
      %v5080 = vmul.f32 %v3752, %v5063
      %v5081 = vmul.f32 %v3753, %v5065
      %5090 = vrot.lane.b32.xlu0 %v5074, 112
      %v5091 = vpop.permute.xlu0 %5090
      %5092 = vrot.lane.b32.xlu0 %v5075, 112
      %v5093 = vpop.permute.xlu0 %5092
      %5094 = vrot.lane.b32.xlu0 %v5076, 112
      %v5095 = vpop.permute.xlu0 %5094
      %5096 = vrot.lane.b32.xlu0 %v5077, 112
      %v5097 = vpop.permute.xlu0 %5096
      %5098 = vrot.lane.b32.xlu0 %v5078, 112
      %v5099 = vpop.permute.xlu0 %5098
      %5100 = vrot.lane.b32.xlu0 %v5079, 112
      %v5101 = vpop.permute.xlu0 %5100
      %5102 = vrot.lane.b32.xlu0 %v5080, 112
      %v5103 = vpop.permute.xlu0 %5102
      %5104 = vrot.lane.b32.xlu0 %v5081, 112
      %v5105 = vpop.permute.xlu0 %5104
      %v5114 = vrot.slane %v5091, 2
      %v5115 = vrot.slane %v5093, 2
      %v5116 = vrot.slane %v5095, 2
      %v5117 = vrot.slane %v5097, 2
      %v5118 = vrot.slane %v5099, 2
      %v5119 = vrot.slane %v5101, 2
      %v5120 = vrot.slane %v5103, 2
      %v5121 = vrot.slane %v5105, 2
      %v5122 = vsel %vm2148, %v5120, %v5121
      %v5123 = vsel %vm2148, %v5119, %v5120
      %v5124 = vsel %vm2148, %v5118, %v5119
      %v5125 = vsel %vm2148, %v5117, %v5118
      %v5126 = vsel %vm2148, %v5116, %v5117
      %v5127 = vsel %vm2148, %v5115, %v5116
      %v5128 = vsel %vm2148, %v5114, %v5115
      %v5129 = vsel %vm2148, %v5121, %v5114
      %v5130 = vsel %vm2100, %v5128, 1.0
      %v5131 = vsel %vm2101, %v5127, 1.0
      %v5132 = vsel %vm2102, %v5126, 1.0
      %v5133 = vsel %vm2103, %v5125, 1.0
      %v5134 = vsel %vm2104, %v5124, 1.0
      %v5135 = vsel %vm2105, %v5123, 1.0
      %v5136 = vsel %vm2106, %v5122, 1.0
      %v5137 = vsel %vm2107, %v5129, 1.0
      %5146 = vrot.lane.b32.xlu0 %v5034, 112
      %v5147 = vpop.permute.xlu0 %5146
      %5148 = vrot.lane.b32.xlu0 %v5035, 112
      %v5149 = vpop.permute.xlu0 %5148
      %5150 = vrot.lane.b32.xlu0 %v5036, 112
      %v5151 = vpop.permute.xlu0 %5150
      %5152 = vrot.lane.b32.xlu0 %v5037, 112
      %v5153 = vpop.permute.xlu0 %5152
      %5154 = vrot.lane.b32.xlu0 %v5038, 112
      %v5155 = vpop.permute.xlu0 %5154
      %5156 = vrot.lane.b32.xlu0 %v5039, 112
      %v5157 = vpop.permute.xlu0 %5156
      %5158 = vrot.lane.b32.xlu0 %v5040, 112
      %v5159 = vpop.permute.xlu0 %5158
      %5160 = vrot.lane.b32.xlu0 %v5041, 112
      %v5161 = vpop.permute.xlu0 %5160
      %v5170 = vrot.slane %v5147, 2
      %v5171 = vrot.slane %v5149, 2
      %v5172 = vrot.slane %v5151, 2
      %v5173 = vrot.slane %v5153, 2
      %v5174 = vrot.slane %v5155, 2
      %v5175 = vrot.slane %v5157, 2
      %v5176 = vrot.slane %v5159, 2
      %v5177 = vrot.slane %v5161, 2
      %v5178 = vsel %vm2148, %v5176, %v5177
      %v5179 = vsel %vm2148, %v5175, %v5176
      %v5180 = vsel %vm2148, %v5174, %v5175
      %v5181 = vsel %vm2148, %v5173, %v5174
      %v5182 = vsel %vm2148, %v5172, %v5173
      %v5183 = vsel %vm2148, %v5171, %v5172
      %v5184 = vsel %vm2148, %v5170, %v5171
      %v5185 = vsel %vm2148, %v5177, %v5170
      %v5186 = vsel %vm2100, %v5184, 0.0
      %v5187 = vsel %vm2101, %v5183, 0.0
      %v5188 = vsel %vm2102, %v5182, 0.0
      %v5189 = vsel %vm2103, %v5181, 0.0
      %v5190 = vsel %vm2104, %v5180, 0.0
      %v5191 = vsel %vm2105, %v5179, 0.0
      %v5192 = vsel %vm2106, %v5178, 0.0
      %v5193 = vsel %vm2107, %v5185, 0.0
      %5202 = vrot.lane.b32.xlu0 %v5186, 16
      %v5203 = vpop.permute.xlu0 %5202
      %5204 = vrot.lane.b32.xlu0 %v5187, 16
      %v5205 = vpop.permute.xlu0 %5204
      %5206 = vrot.lane.b32.xlu0 %v5188, 16
      %v5207 = vpop.permute.xlu0 %5206
      %5208 = vrot.lane.b32.xlu0 %v5189, 16
      %v5209 = vpop.permute.xlu0 %5208
      %5210 = vrot.lane.b32.xlu0 %v5190, 16
      %v5211 = vpop.permute.xlu0 %5210
      %5212 = vrot.lane.b32.xlu0 %v5191, 16
      %v5213 = vpop.permute.xlu0 %5212
      %5214 = vrot.lane.b32.xlu0 %v5192, 16
      %v5215 = vpop.permute.xlu0 %5214
      %5216 = vrot.lane.b32.xlu0 %v5193, 16
      %v5217 = vpop.permute.xlu0 %5216
      %v5226 = vmul.f32 %v5074, %v5203
      %v5227 = vmul.f32 %v5075, %v5205
      %v5228 = vmul.f32 %v5076, %v5207
      %v5229 = vmul.f32 %v5077, %v5209
      %v5230 = vmul.f32 %v5078, %v5211
      %v5231 = vmul.f32 %v5079, %v5213
      %v5232 = vmul.f32 %v5080, %v5215
      %v5233 = vmul.f32 %v5081, %v5217
      %v5234 = vadd.f32 %v5034, %v5226
      %v5235 = vadd.f32 %v5035, %v5227
      %v5236 = vadd.f32 %v5036, %v5228
      %v5237 = vadd.f32 %v5037, %v5229
      %v5238 = vadd.f32 %v5038, %v5230
      %v5239 = vadd.f32 %v5039, %v5231
      %v5240 = vadd.f32 %v5040, %v5232
      %v5241 = vadd.f32 %v5041, %v5233
      %5250 = vrot.lane.b32.xlu0 %v5130, 16
      %v5251 = vpop.permute.xlu0 %5250
      %5252 = vrot.lane.b32.xlu0 %v5131, 16
      %v5253 = vpop.permute.xlu0 %5252
      %5254 = vrot.lane.b32.xlu0 %v5132, 16
      %v5255 = vpop.permute.xlu0 %5254
      %5256 = vrot.lane.b32.xlu0 %v5133, 16
      %v5257 = vpop.permute.xlu0 %5256
      %5258 = vrot.lane.b32.xlu0 %v5134, 16
      %v5259 = vpop.permute.xlu0 %5258
      %5260 = vrot.lane.b32.xlu0 %v5135, 16
      %v5261 = vpop.permute.xlu0 %5260
      %5262 = vrot.lane.b32.xlu0 %v5136, 16
      %v5263 = vpop.permute.xlu0 %5262
      %5264 = vrot.lane.b32.xlu0 %v5137, 16
      %v5265 = vpop.permute.xlu0 %5264
      %v5274 = vmul.f32 %v5074, %v5251
      %v5275 = vmul.f32 %v5075, %v5253
      %v5276 = vmul.f32 %v5076, %v5255
      %v5277 = vmul.f32 %v5077, %v5257
      %v5278 = vmul.f32 %v5078, %v5259
      %v5279 = vmul.f32 %v5079, %v5261
      %v5280 = vmul.f32 %v5080, %v5263
      %v5281 = vmul.f32 %v5081, %v5265
      %5290 = vrot.lane.b32.xlu0 %v5274, 112
      %v5291 = vpop.permute.xlu0 %5290
      %5292 = vrot.lane.b32.xlu0 %v5275, 112
      %v5293 = vpop.permute.xlu0 %5292
      %5294 = vrot.lane.b32.xlu0 %v5276, 112
      %v5295 = vpop.permute.xlu0 %5294
      %5296 = vrot.lane.b32.xlu0 %v5277, 112
      %v5297 = vpop.permute.xlu0 %5296
      %5298 = vrot.lane.b32.xlu0 %v5278, 112
      %v5299 = vpop.permute.xlu0 %5298
      %5300 = vrot.lane.b32.xlu0 %v5279, 112
      %v5301 = vpop.permute.xlu0 %5300
      %5302 = vrot.lane.b32.xlu0 %v5280, 112
      %v5303 = vpop.permute.xlu0 %5302
      %5304 = vrot.lane.b32.xlu0 %v5281, 112
      %v5305 = vpop.permute.xlu0 %5304
      %v5314 = vrot.slane %v5291, 4
      %v5315 = vrot.slane %v5293, 4
      %v5316 = vrot.slane %v5295, 4
      %v5317 = vrot.slane %v5297, 4
      %v5318 = vrot.slane %v5299, 4
      %v5319 = vrot.slane %v5301, 4
      %v5320 = vrot.slane %v5303, 4
      %v5321 = vrot.slane %v5305, 4
      %v5322 = vsel %vm1187, %v5320, %v5321
      %v5323 = vsel %vm1187, %v5319, %v5320
      %v5324 = vsel %vm1187, %v5318, %v5319
      %v5325 = vsel %vm1187, %v5317, %v5318
      %v5326 = vsel %vm1187, %v5316, %v5317
      %v5327 = vsel %vm1187, %v5315, %v5316
      %v5328 = vsel %vm1187, %v5314, %v5315
      %v5329 = vsel %vm1187, %v5321, %v5314
      %v5330 = vsel %vm2309, %v5328, 1.0
      %v5331 = vsel %vm2310, %v5327, 1.0
      %v5332 = vsel %vm2311, %v5326, 1.0
      %v5333 = vsel %vm2312, %v5325, 1.0
      %v5334 = vsel %vm2313, %v5324, 1.0
      %v5335 = vsel %vm2314, %v5323, 1.0
      %v5336 = vsel %vm2315, %v5322, 1.0
      %v5337 = vsel %vm2316, %v5329, 1.0
      %5346 = vrot.lane.b32.xlu0 %v5234, 112
      %v5347 = vpop.permute.xlu0 %5346
      %5348 = vrot.lane.b32.xlu0 %v5235, 112
      %v5349 = vpop.permute.xlu0 %5348
      %5350 = vrot.lane.b32.xlu0 %v5236, 112
      %v5351 = vpop.permute.xlu0 %5350
      %5352 = vrot.lane.b32.xlu0 %v5237, 112
      %v5353 = vpop.permute.xlu0 %5352
      %5354 = vrot.lane.b32.xlu0 %v5238, 112
      %v5355 = vpop.permute.xlu0 %5354
      %5356 = vrot.lane.b32.xlu0 %v5239, 112
      %v5357 = vpop.permute.xlu0 %5356
      %5358 = vrot.lane.b32.xlu0 %v5240, 112
      %v5359 = vpop.permute.xlu0 %5358
      %5360 = vrot.lane.b32.xlu0 %v5241, 112
      %v5361 = vpop.permute.xlu0 %5360
      %v5370 = vrot.slane %v5347, 4
      %v5371 = vrot.slane %v5349, 4
      %v5372 = vrot.slane %v5351, 4
      %v5373 = vrot.slane %v5353, 4
      %v5374 = vrot.slane %v5355, 4
      %v5375 = vrot.slane %v5357, 4
      %v5376 = vrot.slane %v5359, 4
      %v5377 = vrot.slane %v5361, 4
      %v5378 = vsel %vm1187, %v5376, %v5377
      %v5379 = vsel %vm1187, %v5375, %v5376
      %v5380 = vsel %vm1187, %v5374, %v5375
      %v5381 = vsel %vm1187, %v5373, %v5374
      %v5382 = vsel %vm1187, %v5372, %v5373
      %v5383 = vsel %vm1187, %v5371, %v5372
      %v5384 = vsel %vm1187, %v5370, %v5371
      %v5385 = vsel %vm1187, %v5377, %v5370
      %v5386 = vsel %vm2309, %v5384, 0.0
      %v5387 = vsel %vm2310, %v5383, 0.0
      %v5388 = vsel %vm2311, %v5382, 0.0
      %v5389 = vsel %vm2312, %v5381, 0.0
      %v5390 = vsel %vm2313, %v5380, 0.0
      %v5391 = vsel %vm2314, %v5379, 0.0
      %v5392 = vsel %vm2315, %v5378, 0.0
      %v5393 = vsel %vm2316, %v5385, 0.0
      %5402 = vrot.lane.b32.xlu0 %v5386, 16
      %v5403 = vpop.permute.xlu0 %5402
      %5404 = vrot.lane.b32.xlu0 %v5387, 16
      %v5405 = vpop.permute.xlu0 %5404
      %5406 = vrot.lane.b32.xlu0 %v5388, 16
      %v5407 = vpop.permute.xlu0 %5406
      %5408 = vrot.lane.b32.xlu0 %v5389, 16
      %v5409 = vpop.permute.xlu0 %5408
      %5410 = vrot.lane.b32.xlu0 %v5390, 16
      %v5411 = vpop.permute.xlu0 %5410
      %5412 = vrot.lane.b32.xlu0 %v5391, 16
      %v5413 = vpop.permute.xlu0 %5412
      %5414 = vrot.lane.b32.xlu0 %v5392, 16
      %v5415 = vpop.permute.xlu0 %5414
      %5416 = vrot.lane.b32.xlu0 %v5393, 16
      %v5417 = vpop.permute.xlu0 %5416
      %v5426 = vmul.f32 %v5274, %v5403
      %v5427 = vmul.f32 %v5275, %v5405
      %v5428 = vmul.f32 %v5276, %v5407
      %v5429 = vmul.f32 %v5277, %v5409
      %v5430 = vmul.f32 %v5278, %v5411
      %v5431 = vmul.f32 %v5279, %v5413
      %v5432 = vmul.f32 %v5280, %v5415
      %v5433 = vmul.f32 %v5281, %v5417
      %v5434 = vadd.f32 %v5234, %v5426
      %v5435 = vadd.f32 %v5235, %v5427
      %v5436 = vadd.f32 %v5236, %v5428
      %v5437 = vadd.f32 %v5237, %v5429
      %v5438 = vadd.f32 %v5238, %v5430
      %v5439 = vadd.f32 %v5239, %v5431
      %v5440 = vadd.f32 %v5240, %v5432
      %v5441 = vadd.f32 %v5241, %v5433
      %5450 = vrot.lane.b32.xlu0 %v5330, 16
      %v5451 = vpop.permute.xlu0 %5450
      %5452 = vrot.lane.b32.xlu0 %v5331, 16
      %v5453 = vpop.permute.xlu0 %5452
      %5454 = vrot.lane.b32.xlu0 %v5332, 16
      %v5455 = vpop.permute.xlu0 %5454
      %5456 = vrot.lane.b32.xlu0 %v5333, 16
      %v5457 = vpop.permute.xlu0 %5456
      %5458 = vrot.lane.b32.xlu0 %v5334, 16
      %v5459 = vpop.permute.xlu0 %5458
      %5460 = vrot.lane.b32.xlu0 %v5335, 16
      %v5461 = vpop.permute.xlu0 %5460
      %5462 = vrot.lane.b32.xlu0 %v5336, 16
      %v5463 = vpop.permute.xlu0 %5462
      %5464 = vrot.lane.b32.xlu0 %v5337, 16
      %v5465 = vpop.permute.xlu0 %5464
      %v5474 = vmul.f32 %v5274, %v5451
      %v5475 = vmul.f32 %v5275, %v5453
      %v5476 = vmul.f32 %v5276, %v5455
      %v5477 = vmul.f32 %v5277, %v5457
      %v5478 = vmul.f32 %v5278, %v5459
      %v5479 = vmul.f32 %v5279, %v5461
      %v5480 = vmul.f32 %v5280, %v5463
      %v5481 = vmul.f32 %v5281, %v5465
      %5490 = vrot.lane.b32.xlu0 %v5474, 112
      %v5491 = vpop.permute.xlu0 %5490
      %5492 = vrot.lane.b32.xlu0 %v5475, 112
      %v5493 = vpop.permute.xlu0 %5492
      %5494 = vrot.lane.b32.xlu0 %v5476, 112
      %v5495 = vpop.permute.xlu0 %5494
      %5496 = vrot.lane.b32.xlu0 %v5477, 112
      %v5497 = vpop.permute.xlu0 %5496
      %5498 = vrot.lane.b32.xlu0 %v5478, 112
      %v5499 = vpop.permute.xlu0 %5498
      %5500 = vrot.lane.b32.xlu0 %v5479, 112
      %v5501 = vpop.permute.xlu0 %5500
      %5502 = vrot.lane.b32.xlu0 %v5480, 112
      %v5503 = vpop.permute.xlu0 %5502
      %5504 = vrot.lane.b32.xlu0 %v5481, 112
      %v5505 = vpop.permute.xlu0 %5504
      %v5514 = vsel %vm2517, %v5493, 1.0
      %v5515 = vsel %vm2518, %v5495, 1.0
      %v5516 = vsel %vm2519, %v5497, 1.0
      %v5517 = vsel %vm2520, %v5499, 1.0
      %v5518 = vsel %vm2521, %v5501, 1.0
      %v5519 = vsel %vm2522, %v5503, 1.0
      %v5520 = vsel %vm2523, %v5505, 1.0
      %v5521 = vsel %vm2524, %v5491, 1.0
      %5530 = vrot.lane.b32.xlu0 %v5434, 112
      %v5531 = vpop.permute.xlu0 %5530
      %5532 = vrot.lane.b32.xlu0 %v5435, 112
      %v5533 = vpop.permute.xlu0 %5532
      %5534 = vrot.lane.b32.xlu0 %v5436, 112
      %v5535 = vpop.permute.xlu0 %5534
      %5536 = vrot.lane.b32.xlu0 %v5437, 112
      %v5537 = vpop.permute.xlu0 %5536
      %5538 = vrot.lane.b32.xlu0 %v5438, 112
      %v5539 = vpop.permute.xlu0 %5538
      %5540 = vrot.lane.b32.xlu0 %v5439, 112
      %v5541 = vpop.permute.xlu0 %5540
      %5542 = vrot.lane.b32.xlu0 %v5440, 112
      %v5543 = vpop.permute.xlu0 %5542
      %5544 = vrot.lane.b32.xlu0 %v5441, 112
      %v5545 = vpop.permute.xlu0 %5544
      %v5554 = vsel %vm2517, %v5533, 0.0
      %v5555 = vsel %vm2518, %v5535, 0.0
      %v5556 = vsel %vm2519, %v5537, 0.0
      %v5557 = vsel %vm2520, %v5539, 0.0
      %v5558 = vsel %vm2521, %v5541, 0.0
      %v5559 = vsel %vm2522, %v5543, 0.0
      %v5560 = vsel %vm2523, %v5545, 0.0
      %v5561 = vsel %vm2524, %v5531, 0.0
      %5570 = vrot.lane.b32.xlu0 %v5554, 16
      %v5571 = vpop.permute.xlu0 %5570
      %5572 = vrot.lane.b32.xlu0 %v5555, 16
      %v5573 = vpop.permute.xlu0 %5572
      %5574 = vrot.lane.b32.xlu0 %v5556, 16
      %v5575 = vpop.permute.xlu0 %5574
      %5576 = vrot.lane.b32.xlu0 %v5557, 16
      %v5577 = vpop.permute.xlu0 %5576
      %5578 = vrot.lane.b32.xlu0 %v5558, 16
      %v5579 = vpop.permute.xlu0 %5578
      %5580 = vrot.lane.b32.xlu0 %v5559, 16
      %v5581 = vpop.permute.xlu0 %5580
      %5582 = vrot.lane.b32.xlu0 %v5560, 16
      %v5583 = vpop.permute.xlu0 %5582
      %5584 = vrot.lane.b32.xlu0 %v5561, 16
      %v5585 = vpop.permute.xlu0 %5584
      %v5594 = vmul.f32 %v5474, %v5571
      %v5595 = vmul.f32 %v5475, %v5573
      %v5596 = vmul.f32 %v5476, %v5575
      %v5597 = vmul.f32 %v5477, %v5577
      %v5598 = vmul.f32 %v5478, %v5579
      %v5599 = vmul.f32 %v5479, %v5581
      %v5600 = vmul.f32 %v5480, %v5583
      %v5601 = vmul.f32 %v5481, %v5585
      %v5602 = vadd.f32 %v5434, %v5594
      %v5603 = vadd.f32 %v5435, %v5595
      %v5604 = vadd.f32 %v5436, %v5596
      %v5605 = vadd.f32 %v5437, %v5597
      %v5606 = vadd.f32 %v5438, %v5598
      %v5607 = vadd.f32 %v5439, %v5599
      %v5608 = vadd.f32 %v5440, %v5600
      %v5609 = vadd.f32 %v5441, %v5601
      %5618 = vrot.lane.b32.xlu0 %v5514, 16
      %v5619 = vpop.permute.xlu0 %5618
      %5620 = vrot.lane.b32.xlu0 %v5515, 16
      %v5621 = vpop.permute.xlu0 %5620
      %5622 = vrot.lane.b32.xlu0 %v5516, 16
      %v5623 = vpop.permute.xlu0 %5622
      %5624 = vrot.lane.b32.xlu0 %v5517, 16
      %v5625 = vpop.permute.xlu0 %5624
      %5626 = vrot.lane.b32.xlu0 %v5518, 16
      %v5627 = vpop.permute.xlu0 %5626
      %5628 = vrot.lane.b32.xlu0 %v5519, 16
      %v5629 = vpop.permute.xlu0 %5628
      %5630 = vrot.lane.b32.xlu0 %v5520, 16
      %v5631 = vpop.permute.xlu0 %5630
      %5632 = vrot.lane.b32.xlu0 %v5521, 16
      %v5633 = vpop.permute.xlu0 %5632
      %v5642 = vmul.f32 %v5474, %v5619
      %v5643 = vmul.f32 %v5475, %v5621
      %v5644 = vmul.f32 %v5476, %v5623
      %v5645 = vmul.f32 %v5477, %v5625
      %v5646 = vmul.f32 %v5478, %v5627
      %v5647 = vmul.f32 %v5479, %v5629
      %v5648 = vmul.f32 %v5480, %v5631
      %v5649 = vmul.f32 %v5481, %v5633
      %5658 = vrot.lane.b32.xlu0 %v5642, 112
      %v5659 = vpop.permute.xlu0 %5658
      %5660 = vrot.lane.b32.xlu0 %v5643, 112
      %v5661 = vpop.permute.xlu0 %5660
      %5662 = vrot.lane.b32.xlu0 %v5644, 112
      %v5663 = vpop.permute.xlu0 %5662
      %5664 = vrot.lane.b32.xlu0 %v5645, 112
      %v5665 = vpop.permute.xlu0 %5664
      %5666 = vrot.lane.b32.xlu0 %v5646, 112
      %v5667 = vpop.permute.xlu0 %5666
      %5668 = vrot.lane.b32.xlu0 %v5647, 112
      %v5669 = vpop.permute.xlu0 %5668
      %5670 = vrot.lane.b32.xlu0 %v5648, 112
      %v5671 = vpop.permute.xlu0 %5670
      %5672 = vrot.lane.b32.xlu0 %v5649, 112
      %v5673 = vpop.permute.xlu0 %5672
      %v5682 = vsel %vm2693, %v5663, 1.0
      %v5683 = vsel %vm2694, %v5665, 1.0
      %v5684 = vsel %vm2695, %v5667, 1.0
      %v5685 = vsel %vm2696, %v5669, 1.0
      %v5686 = vsel %vm2697, %v5671, 1.0
      %v5687 = vsel %vm2698, %v5673, 1.0
      %v5688 = vsel %vm2699, %v5659, 1.0
      %v5689 = vsel %vm2700, %v5661, 1.0
      %5698 = vrot.lane.b32.xlu0 %v5602, 112
      %v5699 = vpop.permute.xlu0 %5698
      %5700 = vrot.lane.b32.xlu0 %v5603, 112
      %v5701 = vpop.permute.xlu0 %5700
      %5702 = vrot.lane.b32.xlu0 %v5604, 112
      %v5703 = vpop.permute.xlu0 %5702
      %5704 = vrot.lane.b32.xlu0 %v5605, 112
      %v5705 = vpop.permute.xlu0 %5704
      %5706 = vrot.lane.b32.xlu0 %v5606, 112
      %v5707 = vpop.permute.xlu0 %5706
      %5708 = vrot.lane.b32.xlu0 %v5607, 112
      %v5709 = vpop.permute.xlu0 %5708
      %5710 = vrot.lane.b32.xlu0 %v5608, 112
      %v5711 = vpop.permute.xlu0 %5710
      %5712 = vrot.lane.b32.xlu0 %v5609, 112
      %v5713 = vpop.permute.xlu0 %5712
      %v5722 = vsel %vm2693, %v5703, 0.0
      %v5723 = vsel %vm2694, %v5705, 0.0
      %v5724 = vsel %vm2695, %v5707, 0.0
      %v5725 = vsel %vm2696, %v5709, 0.0
      %v5726 = vsel %vm2697, %v5711, 0.0
      %v5727 = vsel %vm2698, %v5713, 0.0
      %v5728 = vsel %vm2699, %v5699, 0.0
      %v5729 = vsel %vm2700, %v5701, 0.0
      %5738 = vrot.lane.b32.xlu0 %v5722, 16
      %v5739 = vpop.permute.xlu0 %5738
      %5740 = vrot.lane.b32.xlu0 %v5723, 16
      %v5741 = vpop.permute.xlu0 %5740
      %5742 = vrot.lane.b32.xlu0 %v5724, 16
      %v5743 = vpop.permute.xlu0 %5742
      %5744 = vrot.lane.b32.xlu0 %v5725, 16
      %v5745 = vpop.permute.xlu0 %5744
      %5746 = vrot.lane.b32.xlu0 %v5726, 16
      %v5747 = vpop.permute.xlu0 %5746
      %5748 = vrot.lane.b32.xlu0 %v5727, 16
      %v5749 = vpop.permute.xlu0 %5748
      %5750 = vrot.lane.b32.xlu0 %v5728, 16
      %v5751 = vpop.permute.xlu0 %5750
      %5752 = vrot.lane.b32.xlu0 %v5729, 16
      %v5753 = vpop.permute.xlu0 %5752
      %v5762 = vmul.f32 %v5642, %v5739
      %v5763 = vmul.f32 %v5643, %v5741
      %v5764 = vmul.f32 %v5644, %v5743
      %v5765 = vmul.f32 %v5645, %v5745
      %v5766 = vmul.f32 %v5646, %v5747
      %v5767 = vmul.f32 %v5647, %v5749
      %v5768 = vmul.f32 %v5648, %v5751
      %v5769 = vmul.f32 %v5649, %v5753
      %v5770 = vadd.f32 %v5602, %v5762
      %v5771 = vadd.f32 %v5603, %v5763
      %v5772 = vadd.f32 %v5604, %v5764
      %v5773 = vadd.f32 %v5605, %v5765
      %v5774 = vadd.f32 %v5606, %v5766
      %v5775 = vadd.f32 %v5607, %v5767
      %v5776 = vadd.f32 %v5608, %v5768
      %v5777 = vadd.f32 %v5609, %v5769
      %5786 = vrot.lane.b32.xlu0 %v5682, 16
      %v5787 = vpop.permute.xlu0 %5786
      %5788 = vrot.lane.b32.xlu0 %v5683, 16
      %v5789 = vpop.permute.xlu0 %5788
      %5790 = vrot.lane.b32.xlu0 %v5684, 16
      %v5791 = vpop.permute.xlu0 %5790
      %5792 = vrot.lane.b32.xlu0 %v5685, 16
      %v5793 = vpop.permute.xlu0 %5792
      %5794 = vrot.lane.b32.xlu0 %v5686, 16
      %v5795 = vpop.permute.xlu0 %5794
      %5796 = vrot.lane.b32.xlu0 %v5687, 16
      %v5797 = vpop.permute.xlu0 %5796
      %5798 = vrot.lane.b32.xlu0 %v5688, 16
      %v5799 = vpop.permute.xlu0 %5798
      %5800 = vrot.lane.b32.xlu0 %v5689, 16
      %v5801 = vpop.permute.xlu0 %5800
      %v5810 = vmul.f32 %v5642, %v5787
      %v5811 = vmul.f32 %v5643, %v5789
      %v5812 = vmul.f32 %v5644, %v5791
      %v5813 = vmul.f32 %v5645, %v5793
      %v5814 = vmul.f32 %v5646, %v5795
      %v5815 = vmul.f32 %v5647, %v5797
      %v5816 = vmul.f32 %v5648, %v5799
      %v5817 = vmul.f32 %v5649, %v5801
      %5826 = vrot.lane.b32.xlu0 %v5810, 112
      %v5827 = vpop.permute.xlu0 %5826
      %5828 = vrot.lane.b32.xlu0 %v5811, 112
      %v5829 = vpop.permute.xlu0 %5828
      %5830 = vrot.lane.b32.xlu0 %v5812, 112
      %v5831 = vpop.permute.xlu0 %5830
      %5832 = vrot.lane.b32.xlu0 %v5813, 112
      %v5833 = vpop.permute.xlu0 %5832
      %5834 = vrot.lane.b32.xlu0 %v5814, 112
      %v5835 = vpop.permute.xlu0 %5834
      %5836 = vrot.lane.b32.xlu0 %v5815, 112
      %v5837 = vpop.permute.xlu0 %5836
      %5838 = vrot.lane.b32.xlu0 %v5816, 112
      %v5839 = vpop.permute.xlu0 %5838
      %5840 = vrot.lane.b32.xlu0 %v5817, 112
      %v5841 = vpop.permute.xlu0 %5840
      %v5850 = vsel %vm2869, %v5835, 1.0
      %v5851 = vsel %vm2870, %v5837, 1.0
      %v5852 = vsel %vm2871, %v5839, 1.0
      %v5853 = vsel %vm2872, %v5841, 1.0
      %v5854 = vsel %vm2873, %v5827, 1.0
      %v5855 = vsel %vm2874, %v5829, 1.0
      %v5856 = vsel %vm2875, %v5831, 1.0
      %v5857 = vsel %vm2876, %v5833, 1.0
      %5866 = vrot.lane.b32.xlu0 %v5770, 112
      %v5867 = vpop.permute.xlu0 %5866
      %5868 = vrot.lane.b32.xlu0 %v5771, 112
      %v5869 = vpop.permute.xlu0 %5868
      %5870 = vrot.lane.b32.xlu0 %v5772, 112
      %v5871 = vpop.permute.xlu0 %5870
      %5872 = vrot.lane.b32.xlu0 %v5773, 112
      %v5873 = vpop.permute.xlu0 %5872
      %5874 = vrot.lane.b32.xlu0 %v5774, 112
      %v5875 = vpop.permute.xlu0 %5874
      %5876 = vrot.lane.b32.xlu0 %v5775, 112
      %v5877 = vpop.permute.xlu0 %5876
      %5878 = vrot.lane.b32.xlu0 %v5776, 112
      %v5879 = vpop.permute.xlu0 %5878
      %5880 = vrot.lane.b32.xlu0 %v5777, 112
      %v5881 = vpop.permute.xlu0 %5880
      %v5890 = vsel %vm2869, %v5875, 0.0
      %v5891 = vsel %vm2870, %v5877, 0.0
      %v5892 = vsel %vm2871, %v5879, 0.0
      %v5893 = vsel %vm2872, %v5881, 0.0
      %v5894 = vsel %vm2873, %v5867, 0.0
      %v5895 = vsel %vm2874, %v5869, 0.0
      %v5896 = vsel %vm2875, %v5871, 0.0
      %v5897 = vsel %vm2876, %v5873, 0.0
      %5906 = vrot.lane.b32.xlu0 %v5890, 16
      %v5907 = vpop.permute.xlu0 %5906
      %5908 = vrot.lane.b32.xlu0 %v5891, 16
      %v5909 = vpop.permute.xlu0 %5908
      %5910 = vrot.lane.b32.xlu0 %v5892, 16
      %v5911 = vpop.permute.xlu0 %5910
      %5912 = vrot.lane.b32.xlu0 %v5893, 16
      %v5913 = vpop.permute.xlu0 %5912
      %5914 = vrot.lane.b32.xlu0 %v5894, 16
      %v5915 = vpop.permute.xlu0 %5914
      %5916 = vrot.lane.b32.xlu0 %v5895, 16
      %v5917 = vpop.permute.xlu0 %5916
      %5918 = vrot.lane.b32.xlu0 %v5896, 16
      %v5919 = vpop.permute.xlu0 %5918
      %5920 = vrot.lane.b32.xlu0 %v5897, 16
      %v5921 = vpop.permute.xlu0 %5920
      %v5930 = vmul.f32 %v5810, %v5907
      %v5931 = vmul.f32 %v5811, %v5909
      %v5932 = vmul.f32 %v5812, %v5911
      %v5933 = vmul.f32 %v5813, %v5913
      %v5934 = vmul.f32 %v5814, %v5915
      %v5935 = vmul.f32 %v5815, %v5917
      %v5936 = vmul.f32 %v5816, %v5919
      %v5937 = vmul.f32 %v5817, %v5921
      %v5938 = vadd.f32 %v5770, %v5930
      %v5939 = vadd.f32 %v5771, %v5931
      %v5940 = vadd.f32 %v5772, %v5932
      %v5941 = vadd.f32 %v5773, %v5933
      %v5942 = vadd.f32 %v5774, %v5934
      %v5943 = vadd.f32 %v5775, %v5935
      %v5944 = vadd.f32 %v5776, %v5936
      %v5945 = vadd.f32 %v5777, %v5937
      %5954 = vrot.lane.b32.xlu0 %v5850, 16
      %v5955 = vpop.permute.xlu0 %5954
      %5956 = vrot.lane.b32.xlu0 %v5851, 16
      %v5957 = vpop.permute.xlu0 %5956
      %5958 = vrot.lane.b32.xlu0 %v5852, 16
      %v5959 = vpop.permute.xlu0 %5958
      %5960 = vrot.lane.b32.xlu0 %v5853, 16
      %v5961 = vpop.permute.xlu0 %5960
      %5962 = vrot.lane.b32.xlu0 %v5854, 16
      %v5963 = vpop.permute.xlu0 %5962
      %5964 = vrot.lane.b32.xlu0 %v5855, 16
      %v5965 = vpop.permute.xlu0 %5964
      %5966 = vrot.lane.b32.xlu0 %v5856, 16
      %v5967 = vpop.permute.xlu0 %5966
      %5968 = vrot.lane.b32.xlu0 %v5857, 16
      %v5969 = vpop.permute.xlu0 %5968
      %v5978 = vmul.f32 %v5810, %v5955
      %v5979 = vmul.f32 %v5811, %v5957
      %v5980 = vmul.f32 %v5812, %v5959
      %v5981 = vmul.f32 %v5813, %v5961
      %v5982 = vmul.f32 %v5814, %v5963
      %v5983 = vmul.f32 %v5815, %v5965
      %v5984 = vmul.f32 %v5816, %v5967
      %v5985 = vmul.f32 %v5817, %v5969
      %5994 = vrot.lane.b32.xlu0 %v5978, 112
      %v5995 = vpop.permute.xlu0 %5994
      %5996 = vrot.lane.b32.xlu0 %v5979, 112
      %v5997 = vpop.permute.xlu0 %5996
      %5998 = vrot.lane.b32.xlu0 %v5980, 112
      %v5999 = vpop.permute.xlu0 %5998
      %6000 = vrot.lane.b32.xlu0 %v5981, 112
      %v6001 = vpop.permute.xlu0 %6000
      %6002 = vrot.lane.b32.xlu0 %v5982, 112
      %v6003 = vpop.permute.xlu0 %6002
      %6004 = vrot.lane.b32.xlu0 %v5983, 112
      %v6005 = vpop.permute.xlu0 %6004
      %6006 = vrot.lane.b32.xlu0 %v5984, 112
      %v6007 = vpop.permute.xlu0 %6006
      %6008 = vrot.lane.b32.xlu0 %v5985, 112
      %v6009 = vpop.permute.xlu0 %6008
      %6018 = vst.msk [vmem:[#allocation4] sm:$0xff] %vm532, %v5995
      %6019 = vst.msk [vmem:[#allocation4 + $0x8] sm:$0xff] %vm532, %v5997
      %6020 = vst.msk [vmem:[#allocation4 + $0x10] sm:$0xff] %vm532, %v5999
      %6021 = vst.msk [vmem:[#allocation4 + $0x18] sm:$0xff] %vm532, %v6001
      %6022 = vst.msk [vmem:[#allocation4 + $0x20] sm:$0xff] %vm532, %v6003
      %6023 = vst.msk [vmem:[#allocation4 + $0x28] sm:$0xff] %vm532, %v6005
      %6024 = vst.msk [vmem:[#allocation4 + $0x30] sm:$0xff] %vm532, %v6007
      %6025 = vst.msk [vmem:[#allocation4 + $0x38] sm:$0xff] %vm532, %v6009
      %6034 = vrot.lane.b32.xlu0 %v5938, 112
      %v6035 = vpop.permute.xlu0 %6034
      %6036 = vrot.lane.b32.xlu0 %v5939, 112
      %v6037 = vpop.permute.xlu0 %6036
      %6038 = vrot.lane.b32.xlu0 %v5940, 112
      %v6039 = vpop.permute.xlu0 %6038
      %6040 = vrot.lane.b32.xlu0 %v5941, 112
      %v6041 = vpop.permute.xlu0 %6040
      %6042 = vrot.lane.b32.xlu0 %v5942, 112
      %v6043 = vpop.permute.xlu0 %6042
      %6044 = vrot.lane.b32.xlu0 %v5943, 112
      %v6045 = vpop.permute.xlu0 %6044
      %6046 = vrot.lane.b32.xlu0 %v5944, 112
      %v6047 = vpop.permute.xlu0 %6046
      %6048 = vrot.lane.b32.xlu0 %v5945, 112
      %v6049 = vpop.permute.xlu0 %6048
      %6058 = vst.msk [vmem:[#allocation5] sm:$0xff] %vm532, %v6035
      %6059 = vst.msk [vmem:[#allocation5 + $0x8] sm:$0xff] %vm532, %v6037
      %6060 = vst.msk [vmem:[#allocation5 + $0x10] sm:$0xff] %vm532, %v6039
      %6061 = vst.msk [vmem:[#allocation5 + $0x18] sm:$0xff] %vm532, %v6041
      %6062 = vst.msk [vmem:[#allocation5 + $0x20] sm:$0xff] %vm532, %v6043
      %6063 = vst.msk [vmem:[#allocation5 + $0x28] sm:$0xff] %vm532, %v6045
      %6064 = vst.msk [vmem:[#allocation5 + $0x30] sm:$0xff] %vm532, %v6047
      %6065 = vst.msk [vmem:[#allocation5 + $0x38] sm:$0xff] %vm532, %v6049
      %v6066 = vld [vmem:[#allocation2] sm:$0xff]
      %v6067 = vld [vmem:[#allocation2 + $0x8] sm:$0xff]
      %v6068 = vld [vmem:[#allocation2 + $0x10] sm:$0xff]
      %v6069 = vld [vmem:[#allocation2 + $0x18] sm:$0xff]
      %v6070 = vld [vmem:[#allocation2 + $0x20] sm:$0xff]
      %v6071 = vld [vmem:[#allocation2 + $0x28] sm:$0xff]
      %v6072 = vld [vmem:[#allocation2 + $0x30] sm:$0xff]
      %v6073 = vld [vmem:[#allocation2 + $0x38] sm:$0xff]
      %v6074 = vmul.f32 %v6066, 0.0
      %v6075 = vmul.f32 %v6067, 0.0
      %v6076 = vmul.f32 %v6068, 0.0
      %v6077 = vmul.f32 %v6069, 0.0
      %v6078 = vmul.f32 %v6070, 0.0
      %v6079 = vmul.f32 %v6071, 0.0
      %v6080 = vmul.f32 %v6072, 0.0
      %v6081 = vmul.f32 %v6073, 0.0
      %v6082 = vld [vmem:[#allocation3] sm:$0xff]
      %v6083 = vld [vmem:[#allocation3 + $0x8] sm:$0xff]
      %v6084 = vld [vmem:[#allocation3 + $0x10] sm:$0xff]
      %v6085 = vld [vmem:[#allocation3 + $0x18] sm:$0xff]
      %v6086 = vld [vmem:[#allocation3 + $0x20] sm:$0xff]
      %v6087 = vld [vmem:[#allocation3 + $0x28] sm:$0xff]
      %v6088 = vld [vmem:[#allocation3 + $0x30] sm:$0xff]
      %v6089 = vld [vmem:[#allocation3 + $0x38] sm:$0xff]
      %v6090 = vadd.f32 %v6074, %v6082
      %v6091 = vadd.f32 %v6075, %v6083
      %v6092 = vadd.f32 %v6076, %v6084
      %v6093 = vadd.f32 %v6077, %v6085
      %v6094 = vadd.f32 %v6078, %v6086
      %v6095 = vadd.f32 %v6079, %v6087
      %v6096 = vadd.f32 %v6080, %v6088
      %v6097 = vadd.f32 %v6081, %v6089
      %6098 = vst.msk [vmem:[#allocation2] sm:$0xff] %vm532, %v6090
      %6099 = vst.msk [vmem:[#allocation2 + $0x8] sm:$0xff] %vm532, %v6091
      %6100 = vst.msk [vmem:[#allocation2 + $0x10] sm:$0xff] %vm532, %v6092
      %6101 = vst.msk [vmem:[#allocation2 + $0x18] sm:$0xff] %vm532, %v6093
      %6102 = vst.msk [vmem:[#allocation2 + $0x20] sm:$0xff] %vm532, %v6094
      %6103 = vst.msk [vmem:[#allocation2 + $0x28] sm:$0xff] %vm532, %v6095
      %6104 = vst.msk [vmem:[#allocation2 + $0x30] sm:$0xff] %vm532, %v6096
      %6105 = vst.msk [vmem:[#allocation2 + $0x38] sm:$0xff] %vm532, %v6097
      %v6106 = vld [vmem:[#allocation4] sm:$0xff]
      %v6107 = vld [vmem:[#allocation4 + $0x8] sm:$0xff]
      %v6108 = vld [vmem:[#allocation4 + $0x10] sm:$0xff]
      %v6109 = vld [vmem:[#allocation4 + $0x18] sm:$0xff]
      %v6110 = vld [vmem:[#allocation4 + $0x20] sm:$0xff]
      %v6111 = vld [vmem:[#allocation4 + $0x28] sm:$0xff]
      %v6112 = vld [vmem:[#allocation4 + $0x30] sm:$0xff]
      %v6113 = vld [vmem:[#allocation4 + $0x38] sm:$0xff]
      %v6114 = vmul.f32 %v6106, 0.0
      %v6115 = vmul.f32 %v6107, 0.0
      %v6116 = vmul.f32 %v6108, 0.0
      %v6117 = vmul.f32 %v6109, 0.0
      %v6118 = vmul.f32 %v6110, 0.0
      %v6119 = vmul.f32 %v6111, 0.0
      %v6120 = vmul.f32 %v6112, 0.0
      %v6121 = vmul.f32 %v6113, 0.0
      %v6122 = vld [vmem:[#allocation5] sm:$0xff]
      %v6123 = vld [vmem:[#allocation5 + $0x8] sm:$0xff]
      %v6124 = vld [vmem:[#allocation5 + $0x10] sm:$0xff]
      %v6125 = vld [vmem:[#allocation5 + $0x18] sm:$0xff]
      %v6126 = vld [vmem:[#allocation5 + $0x20] sm:$0xff]
      %v6127 = vld [vmem:[#allocation5 + $0x28] sm:$0xff]
      %v6128 = vld [vmem:[#allocation5 + $0x30] sm:$0xff]
      %v6129 = vld [vmem:[#allocation5 + $0x38] sm:$0xff]
      %v6130 = vadd.f32 %v6114, %v6122
      %v6131 = vadd.f32 %v6115, %v6123
      %v6132 = vadd.f32 %v6116, %v6124
      %v6133 = vadd.f32 %v6117, %v6125
      %v6134 = vadd.f32 %v6118, %v6126
      %v6135 = vadd.f32 %v6119, %v6127
      %v6136 = vadd.f32 %v6120, %v6128
      %v6137 = vadd.f32 %v6121, %v6129
      %v6138 = vld [vmem:[%s273] sm:$0xf]
      %v6139 = vld [vmem:[%s273 + $0x4] sm:$0xf]
      %v6140 = vld [vmem:[%s273 + $0x8] sm:$0xf]
      %v6141 = vld [vmem:[%s273 + $0xc] sm:$0xf]
      %v6142 = vld [vmem:[%s273 + $0x10] sm:$0xf]
      %v6143 = vld [vmem:[%s273 + $0x14] sm:$0xf]
      %v6144 = vld [vmem:[%s273 + $0x18] sm:$0xf]
      %v6145 = vld [vmem:[%s273 + $0x1c] sm:$0xf]
      %v6146 = vunpack.c.l.bf16 %v6138
      %v6147 = vunpack.c.l.bf16 %v6139
      %v6148 = vunpack.c.l.bf16 %v6140
      %v6149 = vunpack.c.l.bf16 %v6141
      %v6150 = vunpack.c.l.bf16 %v6142
      %v6151 = vunpack.c.l.bf16 %v6143
      %v6152 = vunpack.c.l.bf16 %v6144
      %v6153 = vunpack.c.l.bf16 %v6145
      %v6154 = vld [vmem:[#allocation2] sm:$0xff]
      %v6155 = vld [vmem:[#allocation2 + $0x8] sm:$0xff]
      %v6156 = vld [vmem:[#allocation2 + $0x10] sm:$0xff]
      %v6157 = vld [vmem:[#allocation2 + $0x18] sm:$0xff]
      %v6158 = vld [vmem:[#allocation2 + $0x20] sm:$0xff]
      %v6159 = vld [vmem:[#allocation2 + $0x28] sm:$0xff]
      %v6160 = vld [vmem:[#allocation2 + $0x30] sm:$0xff]
      %v6161 = vld [vmem:[#allocation2 + $0x38] sm:$0xff]
      %v6162 = vadd.f32 %v6154, %v6130
      %v6163 = vadd.f32 %v6155, %v6131
      %v6164 = vadd.f32 %v6156, %v6132
      %v6165 = vadd.f32 %v6157, %v6133
      %v6166 = vadd.f32 %v6158, %v6134
      %v6167 = vadd.f32 %v6159, %v6135
      %v6168 = vadd.f32 %v6160, %v6136
      %v6169 = vadd.f32 %v6161, %v6137
      %v6170 = vxor.u32 %v6146, 2147483648
      %v6171 = vxor.u32 %v6147, 2147483648
      %v6172 = vxor.u32 %v6148, 2147483648
      %v6173 = vxor.u32 %v6149, 2147483648
      %v6174 = vxor.u32 %v6150, 2147483648
      %v6175 = vxor.u32 %v6151, 2147483648
      %v6176 = vxor.u32 %v6152, 2147483648
      %v6177 = vxor.u32 %v6153, 2147483648
      %v6178 = vmul.f32 %v6170, 1.442695
      %v6179 = vpow.pop %v6178
      %v6180 = vmul.f32 %v6171, 1.442695
      %v6181 = vpow.pop %v6180
      %v6182 = vmul.f32 %v6172, 1.442695
      %v6183 = vpow.pop %v6182
      %v6184 = vmul.f32 %v6173, 1.442695
      %v6185 = vpow.pop %v6184
      %v6186 = vmul.f32 %v6174, 1.442695
      %v6187 = vpow.pop %v6186
      %v6188 = vmul.f32 %v6175, 1.442695
      %v6189 = vpow.pop %v6188
      %v6190 = vmul.f32 %v6176, 1.442695
      %v6191 = vpow.pop %v6190
      %v6192 = vmul.f32 %v6177, 1.442695
      %v6193 = vpow.pop %v6192
      %v6194 = vadd.f32 %v6179, 1.0
      %v6195 = vadd.f32 %v6181, 1.0
      %v6196 = vadd.f32 %v6183, 1.0
      %v6197 = vadd.f32 %v6185, 1.0
      %v6198 = vadd.f32 %v6187, 1.0
      %v6199 = vadd.f32 %v6189, 1.0
      %v6200 = vadd.f32 %v6191, 1.0
      %v6201 = vadd.f32 %v6193, 1.0
      %v6202 = vrcp.pop %v6194
      %v6203 = vmul.f32 1.0, %v6202
      %v6204 = vrcp.pop %v6195
      %v6205 = vmul.f32 1.0, %v6204
      %v6206 = vrcp.pop %v6196
      %v6207 = vmul.f32 1.0, %v6206
      %v6208 = vrcp.pop %v6197
      %v6209 = vmul.f32 1.0, %v6208
      %v6210 = vrcp.pop %v6198
      %v6211 = vmul.f32 1.0, %v6210
      %v6212 = vrcp.pop %v6199
      %v6213 = vmul.f32 1.0, %v6212
      %v6214 = vrcp.pop %v6200
      %v6215 = vmul.f32 1.0, %v6214
      %v6216 = vrcp.pop %v6201
      %v6217 = vmul.f32 1.0, %v6216
      %v6218 = vmul.f32 %v6146, %v6203
      %v6219 = vmul.f32 %v6147, %v6205
      %v6220 = vmul.f32 %v6148, %v6207
      %v6221 = vmul.f32 %v6149, %v6209
      %v6222 = vmul.f32 %v6150, %v6211
      %v6223 = vmul.f32 %v6151, %v6213
      %v6224 = vmul.f32 %v6152, %v6215
      %v6225 = vmul.f32 %v6153, %v6217
      %v6226 = vmul.f32 %v6162, %v6218
      %v6227 = vmul.f32 %v6163, %v6219
      %v6228 = vmul.f32 %v6164, %v6220
      %v6229 = vmul.f32 %v6165, %v6221
      %v6230 = vmul.f32 %v6166, %v6222
      %v6231 = vmul.f32 %v6167, %v6223
      %v6232 = vmul.f32 %v6168, %v6224
      %v6233 = vmul.f32 %v6169, %v6225
      %v6234 = vld [vmem:[#allocation6] sm:$0xff]
      %v6235 = vld [vmem:[#allocation6 + $0x8] sm:$0xff]
      %v6236 = vld [vmem:[#allocation6 + $0x10] sm:$0xff]
      %v6237 = vld [vmem:[#allocation6 + $0x18] sm:$0xff]
      %v6238 = vld [vmem:[#allocation6 + $0x20] sm:$0xff]
      %v6239 = vld [vmem:[#allocation6 + $0x28] sm:$0xff]
      %v6240 = vld [vmem:[#allocation6 + $0x30] sm:$0xff]
      %v6241 = vld [vmem:[#allocation6 + $0x38] sm:$0xff]
      %v6242 = vadd.f32 %v6234, %v6226
      %v6243 = vadd.f32 %v6235, %v6227
      %v6244 = vadd.f32 %v6236, %v6228
      %v6245 = vadd.f32 %v6237, %v6229
      %v6246 = vadd.f32 %v6238, %v6230
      %v6247 = vadd.f32 %v6239, %v6231
      %v6248 = vadd.f32 %v6240, %v6232
      %v6249 = vadd.f32 %v6241, %v6233
      %6250 = vst.msk [vmem:[#allocation6] sm:$0xff] %vm532, %v6242
      %6251 = vst.msk [vmem:[#allocation6 + $0x8] sm:$0xff] %vm532, %v6243
      %6252 = vst.msk [vmem:[#allocation6 + $0x10] sm:$0xff] %vm532, %v6244
      %6253 = vst.msk [vmem:[#allocation6 + $0x18] sm:$0xff] %vm532, %v6245
      %6254 = vst.msk [vmem:[#allocation6 + $0x20] sm:$0xff] %vm532, %v6246
      %6255 = vst.msk [vmem:[#allocation6 + $0x28] sm:$0xff] %vm532, %v6247
      %6256 = vst.msk [vmem:[#allocation6 + $0x30] sm:$0xff] %vm532, %v6248
      %6257 = vst.msk [vmem:[#allocation6 + $0x38] sm:$0xff] %vm532, %v6249
      %v6258 = vld [vmem:[#allocation6] sm:$0xff]
      %v6259 = vld [vmem:[#allocation6 + $0x8] sm:$0xff]
      %v6260 = vld [vmem:[#allocation6 + $0x10] sm:$0xff]
      %v6261 = vld [vmem:[#allocation6 + $0x18] sm:$0xff]
      %v6262 = vld [vmem:[#allocation6 + $0x20] sm:$0xff]
      %v6263 = vld [vmem:[#allocation6 + $0x28] sm:$0xff]
      %v6264 = vld [vmem:[#allocation6 + $0x30] sm:$0xff]
      %v6265 = vld [vmem:[#allocation6 + $0x38] sm:$0xff]
      %v6266 = vpack.c.bf16 %v6259, %v6258
      %v6267 = vpack.c.bf16 %v6261, %v6260
      %v6268 = vpack.c.bf16 %v6263, %v6262
      %v6269 = vpack.c.bf16 %v6265, %v6264
      %v6270 = vld [vmem:[%s5] sm:$0xf]
      %v6271 = vld [vmem:[%s5 + $0x4] sm:$0xf]
      %v6272 = vld [vmem:[%s6] sm:$0x1]
      %v6274 = vlaneseq
      %v6275 = vshrl.u32 %v6274, 7
      %v6276 = vsub.s32 0, %v6275
      %v6277 = vrot.slane %v6272, %v6276
      %v6281 = vunpack.c.l.b16 %v6270
      %v6282 = vunpack.c.l.b16 %v6271
      %v6283 = vpack.c.b16 %v6282, %v6281
      %v6286 = vsel %vm532, %v6266, 0
      %v6289 = vsel %vm532, %v6267, 0
      %v6292 = vsel %vm532, %v6268, 0
      %v6295 = vsel %vm532, %v6269, 0
      %6297 = vmatprep.subr.bf16.mxu0 0
      %6298 = vmatpush1.bf16.msra.mxu0 %v6283
      %6299 = vmatprep.subr.bf16.mxu0 0
      %6300 = vmatpush1.bf16.msra.mxu0 0
      %6301 = vmatprep.subr.bf16.mxu0 0
      %6302 = vmatpush1.bf16.msra.mxu0 0
      %6303 = vmatprep.subr.bf16.mxu0 0
      %6304 = vmatpush1.bf16.msra.mxu0 0
      %6305 = vmatprep.subr.bf16.mxu0 0
      %6306 = vmatpush1.bf16.msra.mxu0 0
      %6307 = vmatprep.subr.bf16.mxu0 0
      %6308 = vmatpush1.bf16.msra.mxu0 0
      %6309 = vmatprep.subr.bf16.mxu0 0
      %6310 = vmatpush1.bf16.msra.mxu0 0
      %6311 = vmatprep.subr.bf16.mxu0 0
      %6312 = vmatpush1.bf16.msra.mxu0 0
      %6313 = vmatprep.subr.bf16.mxu0 0
      %6314 = vmatpush1.bf16.msra.mxu0 0
      %6315 = vmatprep.subr.bf16.mxu0 0
      %6316 = vmatpush1.bf16.msra.mxu0 0
      %6317 = vmatprep.subr.bf16.mxu0 0
      %6318 = vmatpush1.bf16.msra.mxu0 0
      %6319 = vmatprep.subr.bf16.mxu0 0
      %6320 = vmatpush1.bf16.msra.mxu0 0
      %6321 = vmatprep.subr.bf16.mxu0 0
      %6322 = vmatpush1.bf16.msra.mxu0 0
      %6323 = vmatprep.subr.bf16.mxu0 0
      %6324 = vmatpush1.bf16.msra.mxu0 0
      %6325 = vmatprep.subr.bf16.mxu0 0
      %6326 = vmatpush1.bf16.msra.mxu0 0
      %6327 = vmatprep.subr.bf16.mxu0 0
      %6328 = vmatpush1.bf16.msra.mxu0 0
      %6329 = vmatprep.mubr.bf16.mxu0 0
      %6330 = vmatmul.mubr.bf16.gmra.mrb[0].mxu0 %v6286
      %v6331 = vpop.f32.mrb[0].mxu0
      %v6332 = vadd.f32 %v6277, %v6331
      %v6333 = vpop.f32.mrb[0].mxu0
      %v6334 = vpop.f32.mrb[0].mxu0
      %v6335 = vadd.f32 %v6277, %v6334
      %v6336 = vpop.f32.mrb[0].mxu0
      %6337 = vmatprep.mubr.bf16.mxu0 0
      %6338 = vmatmul.mubr.bf16.gmra.mrb[0].mxu0 %v6289
      %v6339 = vpop.f32.mrb[0].mxu0
      %v6340 = vadd.f32 %v6277, %v6339
      %v6341 = vpop.f32.mrb[0].mxu0
      %v6342 = vpop.f32.mrb[0].mxu0
      %v6343 = vadd.f32 %v6277, %v6342
      %v6344 = vpop.f32.mrb[0].mxu0
      %6345 = vmatprep.mubr.bf16.mxu0 0
      %6346 = vmatmul.mubr.bf16.gmra.mrb[0].mxu0 %v6292
      %v6347 = vpop.f32.mrb[0].mxu0
      %v6348 = vadd.f32 %v6277, %v6347
      %v6349 = vpop.f32.mrb[0].mxu0
      %v6350 = vpop.f32.mrb[0].mxu0
      %v6351 = vadd.f32 %v6277, %v6350
      %v6352 = vpop.f32.mrb[0].mxu0
      %6353 = vmatprep.mubr.bf16.mxu0 0
      %6354 = vmatmul.mubr.bf16.gmra.mrb[0].mxu0 %v6295
      %v6355 = vpop.f32.mrb[0].mxu0
      %v6356 = vadd.f32 %v6277, %v6355
      %v6357 = vpop.f32.mrb[0].mxu0
      %v6358 = vpop.f32.mrb[0].mxu0
      %v6359 = vadd.f32 %v6277, %v6358
      %v6360 = vpop.f32.mrb[0].mxu0
      %6361 = vdwg.mxu0
      %6362 = vst [vmem:[%s278] sm:$0xff] %v6332
      %6363 = vst [vmem:[%s278 + $0x8] sm:$0xff] %v6335
      %6364 = vst [vmem:[%s278 + $0x10] sm:$0xff] %v6340
      %6365 = vst [vmem:[%s278 + $0x18] sm:$0xff] %v6343
      %6366 = vst [vmem:[%s278 + $0x20] sm:$0xff] %v6348
      %6367 = vst [vmem:[%s278 + $0x28] sm:$0xff] %v6351
      %6368 = vst [vmem:[%s278 + $0x30] sm:$0xff] %v6356
      %6369 = vst [vmem:[%s278 + $0x38] sm:$0xff] %v6359
      %p6370 = scmp.lt.s32.totalorder %s18, 1
      %s6371 = scalar_select %p6370, %s18, 1
      %s6372 = smul.addr %s6371, 8
      %s6373 = smul.addr %s6372, 8
      %s6374 = scalar_lea.vmem %s7, %s6373
      // Predicated region
      $region49: #{gated_layer_forward.3} parent=47 // pred_check
        %p6375 = pneg %p188
      $region50: #{gated_layer_forward.3} parent=47 // pred_check_branch
        %6377 = sbr.rel (%p6375) target = $region52
      $region51: #{gated_layer_forward.3} parent=47 // pred_region
        _
      $region52: #{gated_layer_forward.3} parent=47 // pred_fallthru
        _
    $region48: #{gated_layer_forward.3} parent=5 // pred_fallthru
      _
    %p6378 = scmp.le.s32.totalorder 2, %s13
    // Predicated region
    $region53: #{gated_layer_forward.3} parent=5 // pred_check
      %p6379 = pneg %p6378
    $region54: #{gated_layer_forward.3} parent=5 // pred_check_branch
      %6381 = sbr.rel (%p6379) target = $region56
    $region55: #{gated_layer_forward.3} parent=5 // pred_region
      %s6382 = ssub.s32 %s13, 2
      // Predicated region
      $region57: #{gated_layer_forward.3} parent=55 // pred_check
        %p6383 = pneg %p194
      $region58: #{gated_layer_forward.3} parent=55 // pred_check_branch
        %6385 = sbr.rel (%p6383) target = $region60
      $region59: #{gated_layer_forward.3} parent=55 // pred_region
        %p6386 = scmp.lt.s32.totalorder %s19, 1
        %s6387 = scalar_select %p6386, %s19, 1
        %s6388 = smul.addr %s6387, 8
        %s6389 = smul.addr %s6388, 8
        %s6390 = scalar_lea.vmem %s7, %s6389
      $region60: #{gated_layer_forward.3} parent=55 // pred_fallthru
        _
    $region56: #{gated_layer_forward.3} parent=5 // pred_fallthru
      _
  $region6: #{gated_layer_forward.3} parent=0 // loop_footer
    %s17 = sadd.s32 1, %s13
  $region7: #{gated_layer_forward.3} parent=0 // loop_footer_branch
    %12 = sbr.rel target = $region3
  $region8: #{gated_layer_forward.3} parent=0 // loop_exit
    _

</llo_original>
